<compile_context>
chip_gen: v7x
topology: tpu7x:2x2x1
jax: 0.10.0
libtpu: 0.0.40
codegen_flags: <defaults>
</compile_context>

<pallas_src>
import numpy as np

import jax
import jax.numpy as jnp
from jax.experimental import pallas as pl
from jax.experimental.pallas import tpu as pltpu

# ---------------- configuration (scaled down from the PyTorch module) --------
B = 2                 # batch
IMG_C, IMG_H, IMG_W = 3, 16, 16
ENC_POOL = 2          # encoded_image_size (scaled from 14)
C1 = 16               # conv1 channels (synthetic backbone)
D_MODEL = 32          # scaled from 512
NHEAD = 4             # scaled from 8
DH = D_MODEL // NHEAD
NUM_LAYERS = 2        # scaled from 6
D_FF = 64             # scaled from 2048
VOCAB = 64
MAX_SEQ = 16          # scaled from 512
SEQ = 8


# ---------------- fused CNN encoder kernel -----------------------------------
def _encoder_kernel(p1_ref, w1_ref, b1_ref, g2_ref, w2_ref, b2_ref, pool_ref,
                    mem_ref):
    # conv1 (as im2col matmul) + ReLU     -> (B*H1*W1, C1)
    h1 = jnp.dot(p1_ref[...], w1_ref[...],
                 preferred_element_type=jnp.float32) + b1_ref[...]
    h1 = jnp.maximum(h1, 0.0)

    # conv2 + ReLU via 9 tap-selection matmuls (in-kernel im2col)
    n2 = g2_ref.shape[1]
    acc = jnp.zeros((n2, D_MODEL), jnp.float32)
    for t in range(9):
        taps = jnp.dot(g2_ref[t], h1,
                       preferred_element_type=jnp.float32)          # (n2, C1)
        wt = w2_ref[pl.ds(t * C1, C1), :]                            # (C1, D)
        acc = acc + jnp.dot(taps, wt, preferred_element_type=jnp.float32)
    h2 = jnp.maximum(acc + b2_ref[...], 0.0)                         # (n2, D)

    # adaptive average pool expressed as a constant matmul -> memory rows
    mem_ref[...] = jnp.dot(pool_ref[...], h2,
                           preferred_element_type=jnp.float32)


# ---------------- fused transformer decoder kernel ---------------------------
def _decoder_kernel(x_ref, mem_ref, mask_ref,
                    sa_wqkv_ref, sa_bqkv_ref, sa_wo_ref, sa_bo_ref,
                    ca_wq_ref, ca_bq_ref, ca_wkv_ref, ca_bkv_ref,
                    ca_wo_ref, ca_bo_ref,
                    ln1_g_ref, ln1_b_ref, ln2_g_ref, ln2_b_ref,
                    ln3_g_ref, ln3_b_ref,
                    ff_w1_ref, ff_b1_ref, ff_w2_ref, ff_b2_ref,
                    fc_w_ref, fc_b_ref,
                    out_ref, attn_ref):
    D = D_MODEL
    S = mask_ref.shape[0]
    Bn = x_ref.shape[0] // S
    L = sa_wqkv_ref.shape[0]
    scale = 1.0 / float(DH) ** 0.5

    x = x_ref[...]                      # (B*S, D)
    mask = mask_ref[...]                # (S, S) additive causal mask

    def layer_norm(y, g, b):
        mu = jnp.mean(y, axis=-1, keepdims=True)
        yc = y - mu
        var = jnp.mean(yc * yc, axis=-1, keepdims=True)
        return yc * jax.lax.rsqrt(var + 1e-5) * g + b

    def softmax_rows(s):
        s = s - jnp.max(s, axis=-1, keepdims=True)
        p = jnp.exp(s)
        denom = jnp.sum(p, axis=-1, keepdims=True)
        return p * pl.reciprocal(denom, approx=True)

    for l in range(L):
        # ---------------- self-attention (fused QKV projection) -------------
        qkv = jnp.dot(x, sa_wqkv_ref[l],
                      preferred_element_type=jnp.float32) + sa_bqkv_ref[l]
        for b in range(Bn):
            q_b = qkv[b * S:(b + 1) * S, 0 * D:1 * D]
            k_b = qkv[b * S:(b + 1) * S, 1 * D:2 * D]
            v_b = qkv[b * S:(b + 1) * S, 2 * D:3 * D]
            for h in range(NHEAD):
                qh = q_b[:, h * DH:(h + 1) * DH]
                kh = k_b[:, h * DH:(h + 1) * DH]
                vh = v_b[:, h * DH:(h + 1) * DH]
                s = jnp.dot(qh, kh.T,
                            preferred_element_type=jnp.float32) * scale + mask
                p = softmax_rows(s)
                attn_ref[pl.ds(b * S, S), pl.ds(h * DH, DH)] = jnp.dot(
                    p, vh, preferred_element_type=jnp.float32)
        sa = jnp.dot(attn_ref[...], sa_wo_ref[l],
                     preferred_element_type=jnp.float32) + sa_bo_ref[l]
        x = layer_norm(x + sa, ln1_g_ref[l], ln1_b_ref[l])

        # ---------------- cross-attention (fused KV, no mask) ---------------
        q_all = jnp.dot(x, ca_wq_ref[l],
                        preferred_element_type=jnp.float32) + ca_bq_ref[l]
        for b in range(Bn):
            kv_b = jnp.dot(mem_ref[b], ca_wkv_ref[l],
                           preferred_element_type=jnp.float32) + ca_bkv_ref[l]
            q_b = q_all[b * S:(b + 1) * S, :]
            for h in range(NHEAD):
                qh = q_b[:, h * DH:(h + 1) * DH]
                kh = kv_b[:, h * DH:(h + 1) * DH]
                vh = kv_b[:, D + h * DH:D + (h + 1) * DH]
                s = jnp.dot(qh, kh.T,
                            preferred_element_type=jnp.float32) * scale
                p = softmax_rows(s)
                attn_ref[pl.ds(b * S, S), pl.ds(h * DH, DH)] = jnp.dot(
                    p, vh, preferred_element_type=jnp.float32)
        ca = jnp.dot(attn_ref[...], ca_wo_ref[l],
                     preferred_element_type=jnp.float32) + ca_bo_ref[l]
        x = layer_norm(x + ca, ln2_g_ref[l], ln2_b_ref[l])

        # ---------------- feed-forward ---------------------------------------
        h1 = jnp.maximum(
            jnp.dot(x, ff_w1_ref[l],
                    preferred_element_type=jnp.float32) + ff_b1_ref[l], 0.0)
        h2 = jnp.dot(h1, ff_w2_ref[l],
                     preferred_element_type=jnp.float32) + ff_b2_ref[l]
        x = layer_norm(x + h2, ln3_g_ref[l], ln3_b_ref[l])

    # final vocab projection fused into the same kernel
    out_ref[...] = jnp.dot(x, fc_w_ref[...],
                           preferred_element_type=jnp.float32) + fc_b_ref[...]


# ---------------- JAX-level glue (layout plumbing only) ----------------------
def im2col(x, kh, kw, stride, pad):
    """x: (B, H, W, C) NHWC -> (B*Ho*Wo, kh*kw*C)."""
    Bn, H, W, C = x.shape
    xp = jnp.pad(x, ((0, 0), (pad, pad), (pad, pad), (0, 0)))
    Ho = (H + 2 * pad - kh) // stride + 1
    Wo = (W + 2 * pad - kw) // stride + 1
    cols = []
    for i in range(kh):
        for j in range(kw):
            cols.append(xp[:, i:i + stride * Ho:stride, j:j + stride * Wo:stride, :])
    patches = jnp.concatenate(cols, axis=-1)       # (B, Ho, Wo, kh*kw*C)
    return patches.reshape(Bn * Ho * Wo, kh * kw * C)


def cnn_encoder(params, images):
    # images: (B, C, H, W) NCHW -> NHWC, then pre-packed conv1 patches.
    x = jnp.transpose(images, (0, 2, 3, 1)).astype(jnp.float32)
    p1 = im2col(x, 3, 3, stride=2, pad=1)          # (B*H1*W1, 9*IMG_C)
    mem_flat = pl.pallas_call(
        _encoder_kernel,
        out_shape=jax.ShapeDtypeStruct((B * ENC_POOL * ENC_POOL, D_MODEL),
                                       jnp.float32),
    )(p1, params["conv1_w"], params["conv1_b"], params["g2"],
      params["conv2_w"], params["conv2_b"], params["pool"])
    # memory.view(B, -1, C) contract (already in (b, py, px) order)
    return mem_flat.reshape(B, ENC_POOL * ENC_POOL, D_MODEL)


def transformer_decoder(params, tgt, memory, tgt_mask):
    Bn, S = tgt.shape
    x = jnp.take(params["emb"], tgt, axis=0) + params["pos"][:, :S, :]
    x = x.reshape(Bn * S, D_MODEL)
    out = pl.pallas_call(
        _decoder_kernel,
        out_shape=jax.ShapeDtypeStruct((Bn * S, VOCAB), jnp.float32),
        scratch_shapes=[pltpu.VMEM((Bn * S, D_MODEL), jnp.float32)],
    )(x, memory, tgt_mask,
      params["sa_wqkv"], params["sa_bqkv"], params["sa_wo"], params["sa_bo"],
      params["ca_wq"], params["ca_bq"], params["ca_wkv"], params["ca_bkv"],
      params["ca_wo"], params["ca_bo"],
      params["ln1_g"], params["ln1_b"], params["ln2_g"], params["ln2_b"],
      params["ln3_g"], params["ln3_b"],
      params["ff_w1"], params["ff_b1"], params["ff_w2"], params["ff_b2"],
      params["fc_w"], params["fc_b"])
    return out.reshape(Bn, S, VOCAB)


def image_to_html_forward(params, images, tgt, tgt_mask=None):
    memory = cnn_encoder(params, images)
    if tgt_mask is None:
        tgt_mask = jnp.zeros((tgt.shape[1], tgt.shape[1]), jnp.float32)
    return transformer_decoder(params, tgt, memory, tgt_mask)


# ---------------- constants (conv2 im2col selectors + pooling matrix) ---------
def _build_encoder_constants():
    H1, W1 = IMG_H // 2, IMG_W // 2          # conv1 output spatial (stride 2)
    H2, W2 = H1 // 2, W1 // 2                # conv2 output spatial (stride 2)
    g2 = np.zeros((9, B * H2 * W2, B * H1 * W1), np.float32)
    for t in range(9):
        ki, kj = t // 3, t % 3
        for b in range(B):
            for y2 in range(H2):
                for x2 in range(W2):
                    y = 2 * y2 - 1 + ki
                    x = 2 * x2 - 1 + kj
                    if 0 <= y < H1 and 0 <= x < W1:
                        g2[t, b * H2 * W2 + y2 * W2 + x2,
                           b * H1 * W1 + y * W1 + x] = 1.0
    ph, pw = H2 // ENC_POOL, W2 // ENC_POOL
    pool = np.zeros((B * ENC_POOL * ENC_POOL, B * H2 * W2), np.float32)
    for b in range(B):
        for py in range(ENC_POOL):
            for px in range(ENC_POOL):
                for dy in range(ph):
                    for dx in range(pw):
                        pool[b * ENC_POOL * ENC_POOL + py * ENC_POOL + px,
                             b * H2 * W2 + (py * ph + dy) * W2 + (px * pw + dx)] = \
                            1.0 / float(ph * pw)
    return jnp.asarray(g2), jnp.asarray(pool)


# ---------------- deterministic parameter init --------------------------------
def init_params(key):
    keys = iter(jax.random.split(key, 32))

    def w(shape, scale=0.05):
        return jax.random.normal(next(keys), shape, jnp.float32) * scale

    L, D, F, V = NUM_LAYERS, D_MODEL, D_FF, VOCAB
    params = {
        "conv1_w": w((3 * 3 * IMG_C, C1)),
        "conv1_b": jnp.zeros((1, C1), jnp.float32),
        "conv2_w": w((3 * 3 * C1, D)),
        "conv2_b": jnp.zeros((1, D), jnp.float32),
        "emb": w((V, D), 0.1),
        "pos": jnp.zeros((1, MAX_SEQ, D), jnp.float32),   # nn.Parameter(zeros)
        "fc_w": w((D, V)),
        "fc_b": jnp.zeros((1, V), jnp.float32),
        # stacked decoder-layer weights (layer axis first), QKV / KV fused
        "sa_wqkv": w((L, D, 3 * D)), "sa_bqkv": jnp.zeros((L, 1, 3 * D), jnp.float32),
        "sa_wo": w((L, D, D)),       "sa_bo": jnp.zeros((L, 1, D), jnp.float32),
        "ca_wq": w((L, D, D)),       "ca_bq": jnp.zeros((L, 1, D), jnp.float32),
        "ca_wkv": w((L, D, 2 * D)),  "ca_bkv": jnp.zeros((L, 1, 2 * D), jnp.float32),
        "ca_wo": w((L, D, D)),       "ca_bo": jnp.zeros((L, 1, D), jnp.float32),
        "ln1_g": jnp.ones((L, 1, D), jnp.float32), "ln1_b": jnp.zeros((L, 1, D), jnp.float32),
        "ln2_g": jnp.ones((L, 1, D), jnp.float32), "ln2_b": jnp.zeros((L, 1, D), jnp.float32),
        "ln3_g": jnp.ones((L, 1, D), jnp.float32), "ln3_b": jnp.zeros((L, 1, D), jnp.float32),
        "ff_w1": w((L, D, F)), "ff_b1": jnp.zeros((L, 1, F), jnp.float32),
        "ff_w2": w((L, F, D)), "ff_b2": jnp.zeros((L, 1, D), jnp.float32),
    }
    g2, pool = _build_encoder_constants()
    params["g2"] = g2
    params["pool"] = pool
    return params


# ---------------- main ---------------------------------------------------------
if __name__ == "__main__":
    key = jax.random.PRNGKey(0)
    pk, ik, tk = jax.random.split(key, 3)
    params = init_params(pk)
    images = jax.random.normal(ik, (B, IMG_C, IMG_H, IMG_W), jnp.float32)
    tgt = jax.random.randint(tk, (B, SEQ), 0, VOCAB)
    # causal tgt_mask (float additive, like nn.Transformer's square-subsequent mask)
    causal = jnp.where(jnp.tril(jnp.ones((SEQ, SEQ), bool)), 0.0, -1e9).astype(jnp.float32)

    out = jax.jit(image_to_html_forward)(params, images, tgt, causal)
    out = jax.block_until_ready(out)
    assert out.shape == (B, SEQ, VOCAB), out.shape
    assert jnp.all(jnp.isfinite(out))
    print("KERNEL_OK")
</pallas_src>

<mosaic_0001>
module attributes {stable_mosaic.version = 11 : i64} {
  func.func @_encoder_kernel(%arg0: memref<128x27xf32, #tpu.memory_space<vmem>>, %arg1: memref<27x16xf32, #tpu.memory_space<vmem>>, %arg2: memref<1x16xf32, #tpu.memory_space<vmem>>, %arg3: memref<9x32x128xf32, #tpu.memory_space<vmem>>, %arg4: memref<144x32xf32, #tpu.memory_space<vmem>>, %arg5: memref<1x32xf32, #tpu.memory_space<vmem>>, %arg6: memref<8x32xf32, #tpu.memory_space<vmem>>, %arg7: memref<8x32xf32, #tpu.memory_space<vmem>>) attributes {dimension_semantics = [], scalar_prefetch = 0 : i64, scratch_operands = 0 : i64, tpu.core_type = #tpu.core_type<tc>} {
    %c0 = arith.constant 0 : index
    %c0_0 = arith.constant 0 : index
    %0 = vector.load %arg0[%c0, %c0_0] : memref<128x27xf32, #tpu.memory_space<vmem>>, vector<128x27xf32>
    %c0_1 = arith.constant 0 : index
    %c0_2 = arith.constant 0 : index
    %1 = vector.load %arg1[%c0_1, %c0_2] : memref<27x16xf32, #tpu.memory_space<vmem>>, vector<27x16xf32>
    %cst = arith.constant dense<0.000000e+00> : vector<128x16xf32>
    %2 = tpu.matmul %0, %1, %cst {dimension_numbers = #tpu.dot_dimension_numbers<[1], [0], [0], [1], [0, 0, 1, 1], [], []>} : vector<128x27xf32>, vector<27x16xf32>, vector<128x16xf32> -> vector<128x16xf32>
    %c0_3 = arith.constant 0 : index
    %c0_4 = arith.constant 0 : index
    %3 = vector.load %arg2[%c0_3, %c0_4] : memref<1x16xf32, #tpu.memory_space<vmem>>, vector<1x16xf32>
    %4 = vector.broadcast %3 : vector<1x16xf32> to vector<128x16xf32>
    %5 = arith.addf %2, %4 : vector<128x16xf32>
    %cst_5 = arith.constant 0.000000e+00 : f32
    %6 = vector.broadcast %cst_5 : f32 to vector<128x16xf32>
    %7 = arith.maximumf %5, %6 : vector<128x16xf32>
    %cst_6 = arith.constant 0.000000e+00 : f32
    %8 = vector.broadcast %cst_6 : f32 to vector<32x32xf32>
    %c0_7 = arith.constant 0 : index
    %c0_8 = arith.constant 0 : index
    %c0_9 = arith.constant 0 : index
    %9 = vector.load %arg3[%c0_7, %c0_8, %c0_9] : memref<9x32x128xf32, #tpu.memory_space<vmem>>, vector<1x32x128xf32>
    %10 = vector.shape_cast %9 : vector<1x32x128xf32> to vector<32x128xf32>
    %cst_10 = arith.constant dense<0.000000e+00> : vector<32x16xf32>
    %11 = tpu.matmul %10, %7, %cst_10 {dimension_numbers = #tpu.dot_dimension_numbers<[1], [0], [0], [1], [0, 0, 1, 1], [], []>} : vector<32x128xf32>, vector<128x16xf32>, vector<32x16xf32> -> vector<32x16xf32>
    %c0_11 = arith.constant 0 : index
    %c0_12 = arith.constant 0 : index
    %12 = vector.load %arg4[%c0_11, %c0_12] : memref<144x32xf32, #tpu.memory_space<vmem>>, vector<16x32xf32>
    %cst_13 = arith.constant dense<0.000000e+00> : vector<32x32xf32>
    %13 = tpu.matmul %11, %12, %cst_13 {dimension_numbers = #tpu.dot_dimension_numbers<[1], [0], [0], [1], [0, 0, 1, 1], [], []>} : vector<32x16xf32>, vector<16x32xf32>, vector<32x32xf32> -> vector<32x32xf32>
    %14 = arith.addf %8, %13 : vector<32x32xf32>
    %c1 = arith.constant 1 : index
    %c0_14 = arith.constant 0 : index
    %c0_15 = arith.constant 0 : index
    %15 = vector.load %arg3[%c1, %c0_14, %c0_15] : memref<9x32x128xf32, #tpu.memory_space<vmem>>, vector<1x32x128xf32>
    %16 = vector.shape_cast %15 : vector<1x32x128xf32> to vector<32x128xf32>
    %cst_16 = arith.constant dense<0.000000e+00> : vector<32x16xf32>
    %17 = tpu.matmul %16, %7, %cst_16 {dimension_numbers = #tpu.dot_dimension_numbers<[1], [0], [0], [1], [0, 0, 1, 1], [], []>} : vector<32x128xf32>, vector<128x16xf32>, vector<32x16xf32> -> vector<32x16xf32>
    %c16 = arith.constant 16 : index
    %c0_17 = arith.constant 0 : index
    %18 = vector.load %arg4[%c16, %c0_17] : memref<144x32xf32, #tpu.memory_space<vmem>>, vector<16x32xf32>
    %cst_18 = arith.constant dense<0.000000e+00> : vector<32x32xf32>
    %19 = tpu.matmul %17, %18, %cst_18 {dimension_numbers = #tpu.dot_dimension_numbers<[1], [0], [0], [1], [0, 0, 1, 1], [], []>} : vector<32x16xf32>, vector<16x32xf32>, vector<32x32xf32> -> vector<32x32xf32>
    %20 = arith.addf %14, %19 : vector<32x32xf32>
    %c2 = arith.constant 2 : index
    %c0_19 = arith.constant 0 : index
    %c0_20 = arith.constant 0 : index
    %21 = vector.load %arg3[%c2, %c0_19, %c0_20] : memref<9x32x128xf32, #tpu.memory_space<vmem>>, vector<1x32x128xf32>
    %22 = vector.shape_cast %21 : vector<1x32x128xf32> to vector<32x128xf32>
    %cst_21 = arith.constant dense<0.000000e+00> : vector<32x16xf32>
    %23 = tpu.matmul %22, %7, %cst_21 {dimension_numbers = #tpu.dot_dimension_numbers<[1], [0], [0], [1], [0, 0, 1, 1], [], []>} : vector<32x128xf32>, vector<128x16xf32>, vector<32x16xf32> -> vector<32x16xf32>
    %c32 = arith.constant 32 : index
    %c0_22 = arith.constant 0 : index
    %24 = vector.load %arg4[%c32, %c0_22] : memref<144x32xf32, #tpu.memory_space<vmem>>, vector<16x32xf32>
    %cst_23 = arith.constant dense<0.000000e+00> : vector<32x32xf32>
    %25 = tpu.matmul %23, %24, %cst_23 {dimension_numbers = #tpu.dot_dimension_numbers<[1], [0], [0], [1], [0, 0, 1, 1], [], []>} : vector<32x16xf32>, vector<16x32xf32>, vector<32x32xf32> -> vector<32x32xf32>
    %26 = arith.addf %20, %25 : vector<32x32xf32>
    %c3 = arith.constant 3 : index
    %c0_24 = arith.constant 0 : index
    %c0_25 = arith.constant 0 : index
    %27 = vector.load %arg3[%c3, %c0_24, %c0_25] : memref<9x32x128xf32, #tpu.memory_space<vmem>>, vector<1x32x128xf32>
    %28 = vector.shape_cast %27 : vector<1x32x128xf32> to vector<32x128xf32>
    %cst_26 = arith.constant dense<0.000000e+00> : vector<32x16xf32>
    %29 = tpu.matmul %28, %7, %cst_26 {dimension_numbers = #tpu.dot_dimension_numbers<[1], [0], [0], [1], [0, 0, 1, 1], [], []>} : vector<32x128xf32>, vector<128x16xf32>, vector<32x16xf32> -> vector<32x16xf32>
    %c48 = arith.constant 48 : index
    %c0_27 = arith.constant 0 : index
    %30 = vector.load %arg4[%c48, %c0_27] : memref<144x32xf32, #tpu.memory_space<vmem>>, vector<16x32xf32>
    %cst_28 = arith.constant dense<0.000000e+00> : vector<32x32xf32>
    %31 = tpu.matmul %29, %30, %cst_28 {dimension_numbers = #tpu.dot_dimension_numbers<[1], [0], [0], [1], [0, 0, 1, 1], [], []>} : vector<32x16xf32>, vector<16x32xf32>, vector<32x32xf32> -> vector<32x32xf32>
    %32 = arith.addf %26, %31 : vector<32x32xf32>
    %c4 = arith.constant 4 : index
    %c0_29 = arith.constant 0 : index
    %c0_30 = arith.constant 0 : index
    %33 = vector.load %arg3[%c4, %c0_29, %c0_30] : memref<9x32x128xf32, #tpu.memory_space<vmem>>, vector<1x32x128xf32>
    %34 = vector.shape_cast %33 : vector<1x32x128xf32> to vector<32x128xf32>
    %cst_31 = arith.constant dense<0.000000e+00> : vector<32x16xf32>
    %35 = tpu.matmul %34, %7, %cst_31 {dimension_numbers = #tpu.dot_dimension_numbers<[1], [0], [0], [1], [0, 0, 1, 1], [], []>} : vector<32x128xf32>, vector<128x16xf32>, vector<32x16xf32> -> vector<32x16xf32>
    %c64 = arith.constant 64 : index
    %c0_32 = arith.constant 0 : index
    %36 = vector.load %arg4[%c64, %c0_32] : memref<144x32xf32, #tpu.memory_space<vmem>>, vector<16x32xf32>
    %cst_33 = arith.constant dense<0.000000e+00> : vector<32x32xf32>
    %37 = tpu.matmul %35, %36, %cst_33 {dimension_numbers = #tpu.dot_dimension_numbers<[1], [0], [0], [1], [0, 0, 1, 1], [], []>} : vector<32x16xf32>, vector<16x32xf32>, vector<32x32xf32> -> vector<32x32xf32>
    %38 = arith.addf %32, %37 : vector<32x32xf32>
    %c5 = arith.constant 5 : index
    %c0_34 = arith.constant 0 : index
    %c0_35 = arith.constant 0 : index
    %39 = vector.load %arg3[%c5, %c0_34, %c0_35] : memref<9x32x128xf32, #tpu.memory_space<vmem>>, vector<1x32x128xf32>
    %40 = vector.shape_cast %39 : vector<1x32x128xf32> to vector<32x128xf32>
    %cst_36 = arith.constant dense<0.000000e+00> : vector<32x16xf32>
    %41 = tpu.matmul %40, %7, %cst_36 {dimension_numbers = #tpu.dot_dimension_numbers<[1], [0], [0], [1], [0, 0, 1, 1], [], []>} : vector<32x128xf32>, vector<128x16xf32>, vector<32x16xf32> -> vector<32x16xf32>
    %c80 = arith.constant 80 : index
    %c0_37 = arith.constant 0 : index
    %42 = vector.load %arg4[%c80, %c0_37] : memref<144x32xf32, #tpu.memory_space<vmem>>, vector<16x32xf32>
    %cst_38 = arith.constant dense<0.000000e+00> : vector<32x32xf32>
    %43 = tpu.matmul %41, %42, %cst_38 {dimension_numbers = #tpu.dot_dimension_numbers<[1], [0], [0], [1], [0, 0, 1, 1], [], []>} : vector<32x16xf32>, vector<16x32xf32>, vector<32x32xf32> -> vector<32x32xf32>
    %44 = arith.addf %38, %43 : vector<32x32xf32>
    %c6 = arith.constant 6 : index
    %c0_39 = arith.constant 0 : index
    %c0_40 = arith.constant 0 : index
    %45 = vector.load %arg3[%c6, %c0_39, %c0_40] : memref<9x32x128xf32, #tpu.memory_space<vmem>>, vector<1x32x128xf32>
    %46 = vector.shape_cast %45 : vector<1x32x128xf32> to vector<32x128xf32>
    %cst_41 = arith.constant dense<0.000000e+00> : vector<32x16xf32>
    %47 = tpu.matmul %46, %7, %cst_41 {dimension_numbers = #tpu.dot_dimension_numbers<[1], [0], [0], [1], [0, 0, 1, 1], [], []>} : vector<32x128xf32>, vector<128x16xf32>, vector<32x16xf32> -> vector<32x16xf32>
    %c96 = arith.constant 96 : index
    %c0_42 = arith.constant 0 : index
    %48 = vector.load %arg4[%c96, %c0_42] : memref<144x32xf32, #tpu.memory_space<vmem>>, vector<16x32xf32>
    %cst_43 = arith.constant dense<0.000000e+00> : vector<32x32xf32>
    %49 = tpu.matmul %47, %48, %cst_43 {dimension_numbers = #tpu.dot_dimension_numbers<[1], [0], [0], [1], [0, 0, 1, 1], [], []>} : vector<32x16xf32>, vector<16x32xf32>, vector<32x32xf32> -> vector<32x32xf32>
    %50 = arith.addf %44, %49 : vector<32x32xf32>
    %c7 = arith.constant 7 : index
    %c0_44 = arith.constant 0 : index
    %c0_45 = arith.constant 0 : index
    %51 = vector.load %arg3[%c7, %c0_44, %c0_45] : memref<9x32x128xf32, #tpu.memory_space<vmem>>, vector<1x32x128xf32>
    %52 = vector.shape_cast %51 : vector<1x32x128xf32> to vector<32x128xf32>
    %cst_46 = arith.constant dense<0.000000e+00> : vector<32x16xf32>
    %53 = tpu.matmul %52, %7, %cst_46 {dimension_numbers = #tpu.dot_dimension_numbers<[1], [0], [0], [1], [0, 0, 1, 1], [], []>} : vector<32x128xf32>, vector<128x16xf32>, vector<32x16xf32> -> vector<32x16xf32>
    %c112 = arith.constant 112 : index
    %c0_47 = arith.constant 0 : index
    %54 = vector.load %arg4[%c112, %c0_47] : memref<144x32xf32, #tpu.memory_space<vmem>>, vector<16x32xf32>
    %cst_48 = arith.constant dense<0.000000e+00> : vector<32x32xf32>
    %55 = tpu.matmul %53, %54, %cst_48 {dimension_numbers = #tpu.dot_dimension_numbers<[1], [0], [0], [1], [0, 0, 1, 1], [], []>} : vector<32x16xf32>, vector<16x32xf32>, vector<32x32xf32> -> vector<32x32xf32>
    %56 = arith.addf %50, %55 : vector<32x32xf32>
    %c8 = arith.constant 8 : index
    %c0_49 = arith.constant 0 : index
    %c0_50 = arith.constant 0 : index
    %57 = vector.load %arg3[%c8, %c0_49, %c0_50] : memref<9x32x128xf32, #tpu.memory_space<vmem>>, vector<1x32x128xf32>
    %58 = vector.shape_cast %57 : vector<1x32x128xf32> to vector<32x128xf32>
    %cst_51 = arith.constant dense<0.000000e+00> : vector<32x16xf32>
    %59 = tpu.matmul %58, %7, %cst_51 {dimension_numbers = #tpu.dot_dimension_numbers<[1], [0], [0], [1], [0, 0, 1, 1], [], []>} : vector<32x128xf32>, vector<128x16xf32>, vector<32x16xf32> -> vector<32x16xf32>
    %c128 = arith.constant 128 : index
    %c0_52 = arith.constant 0 : index
    %60 = vector.load %arg4[%c128, %c0_52] : memref<144x32xf32, #tpu.memory_space<vmem>>, vector<16x32xf32>
    %cst_53 = arith.constant dense<0.000000e+00> : vector<32x32xf32>
    %61 = tpu.matmul %59, %60, %cst_53 {dimension_numbers = #tpu.dot_dimension_numbers<[1], [0], [0], [1], [0, 0, 1, 1], [], []>} : vector<32x16xf32>, vector<16x32xf32>, vector<32x32xf32> -> vector<32x32xf32>
    %62 = arith.addf %56, %61 : vector<32x32xf32>
    %c0_54 = arith.constant 0 : index
    %c0_55 = arith.constant 0 : index
    %63 = vector.load %arg5[%c0_54, %c0_55] : memref<1x32xf32, #tpu.memory_space<vmem>>, vector<1x32xf32>
    %64 = vector.broadcast %63 : vector<1x32xf32> to vector<32x32xf32>
    %65 = arith.addf %62, %64 : vector<32x32xf32>
    %cst_56 = arith.constant 0.000000e+00 : f32
    %66 = vector.broadcast %cst_56 : f32 to vector<32x32xf32>
    %67 = arith.maximumf %65, %66 : vector<32x32xf32>
    %c0_57 = arith.constant 0 : index
    %c0_58 = arith.constant 0 : index
    %68 = vector.load %arg6[%c0_57, %c0_58] : memref<8x32xf32, #tpu.memory_space<vmem>>, vector<8x32xf32>
    %cst_59 = arith.constant dense<0.000000e+00> : vector<8x32xf32>
    %69 = tpu.matmul %68, %67, %cst_59 {dimension_numbers = #tpu.dot_dimension_numbers<[1], [0], [0], [1], [0, 0, 1, 1], [], []>} : vector<8x32xf32>, vector<32x32xf32>, vector<8x32xf32> -> vector<8x32xf32>
    %c0_60 = arith.constant 0 : index
    %c0_61 = arith.constant 0 : index
    %70 = vector.load %arg7[%c0_60, %c0_61] : memref<8x32xf32, #tpu.memory_space<vmem>>, vector<8x32xf32>
    tpu.vector_store %arg7[%c0_60, %c0_61], %69 {strides = array<i32>} : memref<8x32xf32, #tpu.memory_space<vmem>>, vector<8x32xf32>,
    return
  }
}

module attributes {stable_mosaic.version = 11 : i64} {
  func.func @_decoder_kernel(%arg0: memref<16x32xf32, #tpu.memory_space<vmem>>, %arg1: memref<2x4x32xf32, #tpu.memory_space<vmem>>, %arg2: memref<8x8xf32, #tpu.memory_space<vmem>>, %arg3: memref<2x32x96xf32, #tpu.memory_space<vmem>>, %arg4: memref<2x1x96xf32, #tpu.memory_space<vmem>>, %arg5: memref<2x32x32xf32, #tpu.memory_space<vmem>>, %arg6: memref<2x1x32xf32, #tpu.memory_space<vmem>>, %arg7: memref<2x32x32xf32, #tpu.memory_space<vmem>>, %arg8: memref<2x1x32xf32, #tpu.memory_space<vmem>>, %arg9: memref<2x32x64xf32, #tpu.memory_space<vmem>>, %arg10: memref<2x1x64xf32, #tpu.memory_space<vmem>>, %arg11: memref<2x32x32xf32, #tpu.memory_space<vmem>>, %arg12: memref<2x1x32xf32, #tpu.memory_space<vmem>>, %arg13: memref<2x1x32xf32, #tpu.memory_space<vmem>>, %arg14: memref<2x1x32xf32, #tpu.memory_space<vmem>>, %arg15: memref<2x1x32xf32, #tpu.memory_space<vmem>>, %arg16: memref<2x1x32xf32, #tpu.memory_space<vmem>>, %arg17: memref<2x1x32xf32, #tpu.memory_space<vmem>>, %arg18: memref<2x1x32xf32, #tpu.memory_space<vmem>>, %arg19: memref<2x32x64xf32, #tpu.memory_space<vmem>>, %arg20: memref<2x1x64xf32, #tpu.memory_space<vmem>>, %arg21: memref<2x64x32xf32, #tpu.memory_space<vmem>>, %arg22: memref<2x1x32xf32, #tpu.memory_space<vmem>>, %arg23: memref<32x64xf32, #tpu.memory_space<vmem>>, %arg24: memref<1x64xf32, #tpu.memory_space<vmem>>, %arg25: memref<16x64xf32, #tpu.memory_space<vmem>>, %arg26: memref<16x32xf32, #tpu.memory_space<vmem>>) attributes {dimension_semantics = [], scalar_prefetch = 0 : i64, scratch_operands = 1 : i64, tpu.core_type = #tpu.core_type<tc>} {
    %c0 = arith.constant 0 : index
    %c0_0 = arith.constant 0 : index
    %0 = vector.load %arg0[%c0, %c0_0] : memref<16x32xf32, #tpu.memory_space<vmem>>, vector<16x32xf32>
    %c0_1 = arith.constant 0 : index
    %c0_2 = arith.constant 0 : index
    %1 = vector.load %arg2[%c0_1, %c0_2] : memref<8x8xf32, #tpu.memory_space<vmem>>, vector<8x8xf32>
    %c0_3 = arith.constant 0 : index
    %c0_4 = arith.constant 0 : index
    %c0_5 = arith.constant 0 : index
    %2 = vector.load %arg3[%c0_3, %c0_4, %c0_5] : memref<2x32x96xf32, #tpu.memory_space<vmem>>, vector<1x32x96xf32>
    %3 = vector.shape_cast %2 : vector<1x32x96xf32> to vector<32x96xf32>
    %cst = arith.constant dense<0.000000e+00> : vector<16x96xf32>
    %4 = tpu.matmul %0, %3, %cst {dimension_numbers = #tpu.dot_dimension_numbers<[1], [0], [0], [1], [0, 0, 1, 1], [], []>} : vector<16x32xf32>, vector<32x96xf32>, vector<16x96xf32> -> vector<16x96xf32>
    %c0_6 = arith.constant 0 : index
    %c0_7 = arith.constant 0 : index
    %c0_8 = arith.constant 0 : index
    %5 = vector.load %arg4[%c0_6, %c0_7, %c0_8] : memref<2x1x96xf32, #tpu.memory_space<vmem>>, vector<1x1x96xf32>
    %6 = vector.shape_cast %5 : vector<1x1x96xf32> to vector<1x96xf32>
    %7 = vector.broadcast %6 : vector<1x96xf32> to vector<16x96xf32>
    %8 = arith.addf %4, %7 : vector<16x96xf32>
    %9 = vector.extract_strided_slice %8 {offsets = [0, 0], sizes = [8, 32], strides = [1, 1]} : vector<16x96xf32> to vector<8x32xf32>
    %10 = vector.extract_strided_slice %8 {offsets = [0, 32], sizes = [8, 32], strides = [1, 1]} : vector<16x96xf32> to vector<8x32xf32>
    %11 = vector.extract_strided_slice %8 {offsets = [0, 64], sizes = [8, 32], strides = [1, 1]} : vector<16x96xf32> to vector<8x32xf32>
    %12 = vector.extract_strided_slice %9 {offsets = [0, 0], sizes = [8, 8], strides = [1, 1]} : vector<8x32xf32> to vector<8x8xf32>
    %13 = vector.extract_strided_slice %10 {offsets = [0, 0], sizes = [8, 8], strides = [1, 1]} : vector<8x32xf32> to vector<8x8xf32>
    %14 = vector.extract_strided_slice %11 {offsets = [0, 0], sizes = [8, 8], strides = [1, 1]} : vector<8x32xf32> to vector<8x8xf32>
    %15 = tpu.transpose %13, [1, 0] : vector<8x8xf32> -> vector<8x8xf32>
    %cst_9 = arith.constant dense<0.000000e+00> : vector<8x8xf32>
    %16 = tpu.matmul %12, %15, %cst_9 {dimension_numbers = #tpu.dot_dimension_numbers<[1], [0], [0], [1], [0, 0, 1, 1], [], []>} : vector<8x8xf32>, vector<8x8xf32>, vector<8x8xf32> -> vector<8x8xf32>
    %cst_10 = arith.constant 0.353553385 : f32
    %17 = vector.broadcast %cst_10 : f32 to vector<8x8xf32>
    %18 = arith.mulf %16, %17 : vector<8x8xf32>
    %19 = arith.addf %18, %1 : vector<8x8xf32>
    %cst_11 = arith.constant dense<0xFF800000> : vector<8xf32>
    %20 = vector.multi_reduction <maximumf>, %19, %cst_11 [1] : vector<8x8xf32> to vector<8xf32>
    %21 = vector.shape_cast %20 : vector<8xf32> to vector<8x1xf32>
    %22 = vector.broadcast %21 : vector<8x1xf32> to vector<8x8xf32>
    %23 = arith.subf %19, %22 : vector<8x8xf32>
    %24 = math.exp %23 : vector<8x8xf32>
    %cst_12 = arith.constant dense<0.000000e+00> : vector<8xf32>
    %25 = vector.multi_reduction <add>, %24, %cst_12 [1] : vector<8x8xf32> to vector<8xf32>
    %26 = vector.shape_cast %25 : vector<8xf32> to vector<8x1xf32>
    %27 = tpu.reciprocal %26 {approx = true} : vector<8x1xf32> -> vector<8x1xf32>
    %28 = vector.broadcast %27 : vector<8x1xf32> to vector<8x8xf32>
    %29 = arith.mulf %24, %28 : vector<8x8xf32>
    %cst_13 = arith.constant dense<0.000000e+00> : vector<8x8xf32>
    %30 = tpu.matmul %29, %14, %cst_13 {dimension_numbers = #tpu.dot_dimension_numbers<[1], [0], [0], [1], [0, 0, 1, 1], [], []>} : vector<8x8xf32>, vector<8x8xf32>, vector<8x8xf32> -> vector<8x8xf32>
    %c0_14 = arith.constant 0 : index
    %c0_15 = arith.constant 0 : index
    %31 = vector.load %arg26[%c0_14, %c0_15] : memref<16x32xf32, #tpu.memory_space<vmem>>, vector<8x8xf32>
    tpu.vector_store %arg26[%c0_14, %c0_15], %30 {strides = array<i32>} : memref<16x32xf32, #tpu.memory_space<vmem>>, vector<8x8xf32>,
    %32 = vector.extract_strided_slice %9 {offsets = [0, 8], sizes = [8, 8], strides = [1, 1]} : vector<8x32xf32> to vector<8x8xf32>
    %33 = vector.extract_strided_slice %10 {offsets = [0, 8], sizes = [8, 8], strides = [1, 1]} : vector<8x32xf32> to vector<8x8xf32>
    %34 = vector.extract_strided_slice %11 {offsets = [0, 8], sizes = [8, 8], strides = [1, 1]} : vector<8x32xf32> to vector<8x8xf32>
    %35 = tpu.transpose %33, [1, 0] : vector<8x8xf32> -> vector<8x8xf32>
    %cst_16 = arith.constant dense<0.000000e+00> : vector<8x8xf32>
    %36 = tpu.matmul %32, %35, %cst_16 {dimension_numbers = #tpu.dot_dimension_numbers<[1], [0], [0], [1], [0, 0, 1, 1], [], []>} : vector<8x8xf32>, vector<8x8xf32>, vector<8x8xf32> -> vector<8x8xf32>
    %cst_17 = arith.constant 0.353553385 : f32
    %37 = vector.broadcast %cst_17 : f32 to vector<8x8xf32>
    %38 = arith.mulf %36, %37 : vector<8x8xf32>
    %39 = arith.addf %38, %1 : vector<8x8xf32>
    %cst_18 = arith.constant dense<0xFF800000> : vector<8xf32>
    %40 = vector.multi_reduction <maximumf>, %39, %cst_18 [1] : vector<8x8xf32> to vector<8xf32>
    %41 = vector.shape_cast %40 : vector<8xf32> to vector<8x1xf32>
    %42 = vector.broadcast %41 : vector<8x1xf32> to vector<8x8xf32>
    %43 = arith.subf %39, %42 : vector<8x8xf32>
    %44 = math.exp %43 : vector<8x8xf32>
    %cst_19 = arith.constant dense<0.000000e+00> : vector<8xf32>
    %45 = vector.multi_reduction <add>, %44, %cst_19 [1] : vector<8x8xf32> to vector<8xf32>
    %46 = vector.shape_cast %45 : vector<8xf32> to vector<8x1xf32>
    %47 = tpu.reciprocal %46 {approx = true} : vector<8x1xf32> -> vector<8x1xf32>
    %48 = vector.broadcast %47 : vector<8x1xf32> to vector<8x8xf32>
    %49 = arith.mulf %44, %48 : vector<8x8xf32>
    %cst_20 = arith.constant dense<0.000000e+00> : vector<8x8xf32>
    %50 = tpu.matmul %49, %34, %cst_20 {dimension_numbers = #tpu.dot_dimension_numbers<[1], [0], [0], [1], [0, 0, 1, 1], [], []>} : vector<8x8xf32>, vector<8x8xf32>, vector<8x8xf32> -> vector<8x8xf32>
    %c0_21 = arith.constant 0 : index
    %c8 = arith.constant 8 : index
    %51 = vector.load %arg26[%c0_21, %c8] : memref<16x32xf32, #tpu.memory_space<vmem>>, vector<8x8xf32>
    tpu.vector_store %arg26[%c0_21, %c8], %50 {strides = array<i32>} : memref<16x32xf32, #tpu.memory_space<vmem>>, vector<8x8xf32>,
    %52 = vector.extract_strided_slice %9 {offsets = [0, 16], sizes = [8, 8], strides = [1, 1]} : vector<8x32xf32> to vector<8x8xf32>
    %53 = vector.extract_strided_slice %10 {offsets = [0, 16], sizes = [8, 8], strides = [1, 1]} : vector<8x32xf32> to vector<8x8xf32>
    %54 = vector.extract_strided_slice %11 {offsets = [0, 16], sizes = [8, 8], strides = [1, 1]} : vector<8x32xf32> to vector<8x8xf32>
    %55 = tpu.transpose %53, [1, 0] : vector<8x8xf32> -> vector<8x8xf32>
    %cst_22 = arith.constant dense<0.000000e+00> : vector<8x8xf32>
    %56 = tpu.matmul %52, %55, %cst_22 {dimension_numbers = #tpu.dot_dimension_numbers<[1], [0], [0], [1], [0, 0, 1, 1], [], []>} : vector<8x8xf32>, vector<8x8xf32>, vector<8x8xf32> -> vector<8x8xf32>
    %cst_23 = arith.constant 0.353553385 : f32
    %57 = vector.broadcast %cst_23 : f32 to vector<8x8xf32>
    %58 = arith.mulf %56, %57 : vector<8x8xf32>
    %59 = arith.addf %58, %1 : vector<8x8xf32>
    %cst_24 = arith.constant dense<0xFF800000> : vector<8xf32>
    %60 = vector.multi_reduction <maximumf>, %59, %cst_24 [1] : vector<8x8xf32> to vector<8xf32>
    %61 = vector.shape_cast %60 : vector<8xf32> to vector<8x1xf32>
    %62 = vector.broadcast %61 : vector<8x1xf32> to vector<8x8xf32>
    %63 = arith.subf %59, %62 : vector<8x8xf32>
    %64 = math.exp %63 : vector<8x8xf32>
    %cst_25 = arith.constant dense<0.000000e+00> : vector<8xf32>
    %65 = vector.multi_reduction <add>, %64, %cst_25 [1] : vector<8x8xf32> to vector<8xf32>
    %66 = vector.shape_cast %65 : vector<8xf32> to vector<8x1xf32>
    %67 = tpu.reciprocal %66 {approx = true} : vector<8x1xf32> -> vector<8x1xf32>
    %68 = vector.broadcast %67 : vector<8x1xf32> to vector<8x8xf32>
    %69 = arith.mulf %64, %68 : vector<8x8xf32>
    %cst_26 = arith.constant dense<0.000000e+00> : vector<8x8xf32>
    %70 = tpu.matmul %69, %54, %cst_26 {dimension_numbers = #tpu.dot_dimension_numbers<[1], [0], [0], [1], [0, 0, 1, 1], [], []>} : vector<8x8xf32>, vector<8x8xf32>, vector<8x8xf32> -> vector<8x8xf32>
    %c0_27 = arith.constant 0 : index
    %c16 = arith.constant 16 : index
    %71 = vector.load %arg26[%c0_27, %c16] : memref<16x32xf32, #tpu.memory_space<vmem>>, vector<8x8xf32>
    tpu.vector_store %arg26[%c0_27, %c16], %70 {strides = array<i32>} : memref<16x32xf32, #tpu.memory_space<vmem>>, vector<8x8xf32>,
    %72 = vector.extract_strided_slice %9 {offsets = [0, 24], sizes = [8, 8], strides = [1, 1]} : vector<8x32xf32> to vector<8x8xf32>
    %73 = vector.extract_strided_slice %10 {offsets = [0, 24], sizes = [8, 8], strides = [1, 1]} : vector<8x32xf32> to vector<8x8xf32>
    %74 = vector.extract_strided_slice %11 {offsets = [0, 24], sizes = [8, 8], strides = [1, 1]} : vector<8x32xf32> to vector<8x8xf32>
    %75 = tpu.transpose %73, [1, 0] : vector<8x8xf32> -> vector<8x8xf32>
    %cst_28 = arith.constant dense<0.000000e+00> : vector<8x8xf32>
    %76 = tpu.matmul %72, %75, %cst_28 {dimension_numbers = #tpu.dot_dimension_numbers<[1], [0], [0], [1], [0, 0, 1, 1], [], []>} : vector<8x8xf32>, vector<8x8xf32>, vector<8x8xf32> -> vector<8x8xf32>
    %cst_29 = arith.constant 0.353553385 : f32
    %77 = vector.broadcast %cst_29 : f32 to vector<8x8xf32>
    %78 = arith.mulf %76, %77 : vector<8x8xf32>
    %79 = arith.addf %78, %1 : vector<8x8xf32>
    %cst_30 = arith.constant dense<0xFF800000> : vector<8xf32>
    %80 = vector.multi_reduction <maximumf>, %79, %cst_30 [1] : vector<8x8xf32> to vector<8xf32>
    %81 = vector.shape_cast %80 : vector<8xf32> to vector<8x1xf32>
    %82 = vector.broadcast %81 : vector<8x1xf32> to vector<8x8xf32>
    %83 = arith.subf %79, %82 : vector<8x8xf32>
    %84 = math.exp %83 : vector<8x8xf32>
    %cst_31 = arith.constant dense<0.000000e+00> : vector<8xf32>
    %85 = vector.multi_reduction <add>, %84, %cst_31 [1] : vector<8x8xf32> to vector<8xf32>
    %86 = vector.shape_cast %85 : vector<8xf32> to vector<8x1xf32>
    %87 = tpu.reciprocal %86 {approx = true} : vector<8x1xf32> -> vector<8x1xf32>
    %88 = vector.broadcast %87 : vector<8x1xf32> to vector<8x8xf32>
    %89 = arith.mulf %84, %88 : vector<8x8xf32>
    %cst_32 = arith.constant dense<0.000000e+00> : vector<8x8xf32>
    %90 = tpu.matmul %89, %74, %cst_32 {dimension_numbers = #tpu.dot_dimension_numbers<[1], [0], [0], [1], [0, 0, 1, 1], [], []>} : vector<8x8xf32>, vector<8x8xf32>, vector<8x8xf32> -> vector<8x8xf32>
    %c0_33 = arith.constant 0 : index
    %c24 = arith.constant 24 : index
    %91 = vector.load %arg26[%c0_33, %c24] : memref<16x32xf32, #tpu.memory_space<vmem>>, vector<8x8xf32>
    tpu.vector_store %arg26[%c0_33, %c24], %90 {strides = array<i32>} : memref<16x32xf32, #tpu.memory_space<vmem>>, vector<8x8xf32>,
    %92 = vector.extract_strided_slice %8 {offsets = [8, 0], sizes = [8, 32], strides = [1, 1]} : vector<16x96xf32> to vector<8x32xf32>
    %93 = vector.extract_strided_slice %8 {offsets = [8, 32], sizes = [8, 32], strides = [1, 1]} : vector<16x96xf32> to vector<8x32xf32>
    %94 = vector.extract_strided_slice %8 {offsets = [8, 64], sizes = [8, 32], strides = [1, 1]} : vector<16x96xf32> to vector<8x32xf32>
    %95 = vector.extract_strided_slice %92 {offsets = [0, 0], sizes = [8, 8], strides = [1, 1]} : vector<8x32xf32> to vector<8x8xf32>
    %96 = vector.extract_strided_slice %93 {offsets = [0, 0], sizes = [8, 8], strides = [1, 1]} : vector<8x32xf32> to vector<8x8xf32>
    %97 = vector.extract_strided_slice %94 {offsets = [0, 0], sizes = [8, 8], strides = [1, 1]} : vector<8x32xf32> to vector<8x8xf32>
    %98 = tpu.transpose %96, [1, 0] : vector<8x8xf32> -> vector<8x8xf32>
    %cst_34 = arith.constant dense<0.000000e+00> : vector<8x8xf32>
    %99 = tpu.matmul %95, %98, %cst_34 {dimension_numbers = #tpu.dot_dimension_numbers<[1], [0], [0], [1], [0, 0, 1, 1], [], []>} : vector<8x8xf32>, vector<8x8xf32>, vector<8x8xf32> -> vector<8x8xf32>
    %cst_35 = arith.constant 0.353553385 : f32
    %100 = vector.broadcast %cst_35 : f32 to vector<8x8xf32>
    %101 = arith.mulf %99, %100 : vector<8x8xf32>
    %102 = arith.addf %101, %1 : vector<8x8xf32>
    %cst_36 = arith.constant dense<0xFF800000> : vector<8xf32>
    %103 = vector.multi_reduction <maximumf>, %102, %cst_36 [1] : vector<8x8xf32> to vector<8xf32>
    %104 = vector.shape_cast %103 : vector<8xf32> to vector<8x1xf32>
    %105 = vector.broadcast %104 : vector<8x1xf32> to vector<8x8xf32>
    %106 = arith.subf %102, %105 : vector<8x8xf32>
    %107 = math.exp %106 : vector<8x8xf32>
    %cst_37 = arith.constant dense<0.000000e+00> : vector<8xf32>
    %108 = vector.multi_reduction <add>, %107, %cst_37 [1] : vector<8x8xf32> to vector<8xf32>
    %109 = vector.shape_cast %108 : vector<8xf32> to vector<8x1xf32>
    %110 = tpu.reciprocal %109 {approx = true} : vector<8x1xf32> -> vector<8x1xf32>
    %111 = vector.broadcast %110 : vector<8x1xf32> to vector<8x8xf32>
    %112 = arith.mulf %107, %111 : vector<8x8xf32>
    %cst_38 = arith.constant dense<0.000000e+00> : vector<8x8xf32>
    %113 = tpu.matmul %112, %97, %cst_38 {dimension_numbers = #tpu.dot_dimension_numbers<[1], [0], [0], [1], [0, 0, 1, 1], [], []>} : vector<8x8xf32>, vector<8x8xf32>, vector<8x8xf32> -> vector<8x8xf32>
    %c8_39 = arith.constant 8 : index
    %c0_40 = arith.constant 0 : index
    %114 = vector.load %arg26[%c8_39, %c0_40] : memref<16x32xf32, #tpu.memory_space<vmem>>, vector<8x8xf32>
    tpu.vector_store %arg26[%c8_39, %c0_40], %113 {strides = array<i32>} : memref<16x32xf32, #tpu.memory_space<vmem>>, vector<8x8xf32>,
    %115 = vector.extract_strided_slice %92 {offsets = [0, 8], sizes = [8, 8], strides = [1, 1]} : vector<8x32xf32> to vector<8x8xf32>
    %116 = vector.extract_strided_slice %93 {offsets = [0, 8], sizes = [8, 8], strides = [1, 1]} : vector<8x32xf32> to vector<8x8xf32>
    %117 = vector.extract_strided_slice %94 {offsets = [0, 8], sizes = [8, 8], strides = [1, 1]} : vector<8x32xf32> to vector<8x8xf32>
    %118 = tpu.transpose %116, [1, 0] : vector<8x8xf32> -> vector<8x8xf32>
    %cst_41 = arith.constant dense<0.000000e+00> : vector<8x8xf32>
    %119 = tpu.matmul %115, %118, %cst_41 {dimension_numbers = #tpu.dot_dimension_numbers<[1], [0], [0], [1], [0, 0, 1, 1], [], []>} : vector<8x8xf32>, vector<8x8xf32>, vector<8x8xf32> -> vector<8x8xf32>
    %cst_42 = arith.constant 0.353553385 : f32
    %120 = vector.broadcast %cst_42 : f32 to vector<8x8xf32>
    %121 = arith.mulf %119, %120 : vector<8x8xf32>
    %122 = arith.addf %121, %1 : vector<8x8xf32>
    %cst_43 = arith.constant dense<0xFF800000> : vector<8xf32>
    %123 = vector.multi_reduction <maximumf>, %122, %cst_43 [1] : vector<8x8xf32> to vector<8xf32>
    %124 = vector.shape_cast %123 : vector<8xf32> to vector<8x1xf32>
    %125 = vector.broadcast %124 : vector<8x1xf32> to vector<8x8xf32>
    %126 = arith.subf %122, %125 : vector<8x8xf32>
    %127 = math.exp %126 : vector<8x8xf32>
    %cst_44 = arith.constant dense<0.000000e+00> : vector<8xf32>
    %128 = vector.multi_reduction <add>, %127, %cst_44 [1] : vector<8x8xf32> to vector<8xf32>
    %129 = vector.shape_cast %128 : vector<8xf32> to vector<8x1xf32>
    %130 = tpu.reciprocal %129 {approx = true} : vector<8x1xf32> -> vector<8x1xf32>
    %131 = vector.broadcast %130 : vector<8x1xf32> to vector<8x8xf32>
    %132 = arith.mulf %127, %131 : vector<8x8xf32>
    %cst_45 = arith.constant dense<0.000000e+00> : vector<8x8xf32>
    %133 = tpu.matmul %132, %117, %cst_45 {dimension_numbers = #tpu.dot_dimension_numbers<[1], [0], [0], [1], [0, 0, 1, 1], [], []>} : vector<8x8xf32>, vector<8x8xf32>, vector<8x8xf32> -> vector<8x8xf32>
    %c8_46 = arith.constant 8 : index
    %c8_47 = arith.constant 8 : index
    %134 = vector.load %arg26[%c8_46, %c8_47] : memref<16x32xf32, #tpu.memory_space<vmem>>, vector<8x8xf32>
    tpu.vector_store %arg26[%c8_46, %c8_47], %133 {strides = array<i32>} : memref<16x32xf32, #tpu.memory_space<vmem>>, vector<8x8xf32>,
    %135 = vector.extract_strided_slice %92 {offsets = [0, 16], sizes = [8, 8], strides = [1, 1]} : vector<8x32xf32> to vector<8x8xf32>
    %136 = vector.extract_strided_slice %93 {offsets = [0, 16], sizes = [8, 8], strides = [1, 1]} : vector<8x32xf32> to vector<8x8xf32>
    %137 = vector.extract_strided_slice %94 {offsets = [0, 16], sizes = [8, 8], strides = [1, 1]} : vector<8x32xf32> to vector<8x8xf32>
    %138 = tpu.transpose %136, [1, 0] : vector<8x8xf32> -> vector<8x8xf32>
    %cst_48 = arith.constant dense<0.000000e+00> : vector<8x8xf32>
    %139 = tpu.matmul %135, %138, %cst_48 {dimension_numbers = #tpu.dot_dimension_numbers<[1], [0], [0], [1], [0, 0, 1, 1], [], []>} : vector<8x8xf32>, vector<8x8xf32>, vector<8x8xf32> -> vector<8x8xf32>
    %cst_49 = arith.constant 0.353553385 : f32
    %140 = vector.broadcast %cst_49 : f32 to vector<8x8xf32>
    %141 = arith.mulf %139, %140 : vector<8x8xf32>
    %142 = arith.addf %141, %1 : vector<8x8xf32>
    %cst_50 = arith.constant dense<0xFF800000> : vector<8xf32>
    %143 = vector.multi_reduction <maximumf>, %142, %cst_50 [1] : vector<8x8xf32> to vector<8xf32>
    %144 = vector.shape_cast %143 : vector<8xf32> to vector<8x1xf32>
    %145 = vector.broadcast %144 : vector<8x1xf32> to vector<8x8xf32>
    %146 = arith.subf %142, %145 : vector<8x8xf32>
    %147 = math.exp %146 : vector<8x8xf32>
    %cst_51 = arith.constant dense<0.000000e+00> : vector<8xf32>
    %148 = vector.multi_reduction <add>, %147, %cst_51 [1] : vector<8x8xf32> to vector<8xf32>
    %149 = vector.shape_cast %148 : vector<8xf32> to vector<8x1xf32>
    %150 = tpu.reciprocal %149 {approx = true} : vector<8x1xf32> -> vector<8x1xf32>
    %151 = vector.broadcast %150 : vector<8x1xf32> to vector<8x8xf32>
    %152 = arith.mulf %147, %151 : vector<8x8xf32>
    %cst_52 = arith.constant dense<0.000000e+00> : vector<8x8xf32>
    %153 = tpu.matmul %152, %137, %cst_52 {dimension_numbers = #tpu.dot_dimension_numbers<[1], [0], [0], [1], [0, 0, 1, 1], [], []>} : vector<8x8xf32>, vector<8x8xf32>, vector<8x8xf32> -> vector<8x8xf32>
    %c8_53 = arith.constant 8 : index
    %c16_54 = arith.constant 16 : index
    %154 = vector.load %arg26[%c8_53, %c16_54] : memref<16x32xf32, #tpu.memory_space<vmem>>, vector<8x8xf32>
    tpu.vector_store %arg26[%c8_53, %c16_54], %153 {strides = array<i32>} : memref<16x32xf32, #tpu.memory_space<vmem>>, vector<8x8xf32>,
    %155 = vector.extract_strided_slice %92 {offsets = [0, 24], sizes = [8, 8], strides = [1, 1]} : vector<8x32xf32> to vector<8x8xf32>
    %156 = vector.extract_strided_slice %93 {offsets = [0, 24], sizes = [8, 8], strides = [1, 1]} : vector<8x32xf32> to vector<8x8xf32>
    %157 = vector.extract_strided_slice %94 {offsets = [0, 24], sizes = [8, 8], strides = [1, 1]} : vector<8x32xf32> to vector<8x8xf32>
    %158 = tpu.transpose %156, [1, 0] : vector<8x8xf32> -> vector<8x8xf32>
    %cst_55 = arith.constant dense<0.000000e+00> : vector<8x8xf32>
    %159 = tpu.matmul %155, %158, %cst_55 {dimension_numbers = #tpu.dot_dimension_numbers<[1], [0], [0], [1], [0, 0, 1, 1], [], []>} : vector<8x8xf32>, vector<8x8xf32>, vector<8x8xf32> -> vector<8x8xf32>
    %cst_56 = arith.constant 0.353553385 : f32
    %160 = vector.broadcast %cst_56 : f32 to vector<8x8xf32>
    %161 = arith.mulf %159, %160 : vector<8x8xf32>
    %162 = arith.addf %161, %1 : vector<8x8xf32>
    %cst_57 = arith.constant dense<0xFF800000> : vector<8xf32>
    %163 = vector.multi_reduction <maximumf>, %162, %cst_57 [1] : vector<8x8xf32> to vector<8xf32>
    %164 = vector.shape_cast %163 : vector<8xf32> to vector<8x1xf32>
    %165 = vector.broadcast %164 : vector<8x1xf32> to vector<8x8xf32>
    %166 = arith.subf %162, %165 : vector<8x8xf32>
    %167 = math.exp %166 : vector<8x8xf32>
    %cst_58 = arith.constant dense<0.000000e+00> : vector<8xf32>
    %168 = vector.multi_reduction <add>, %167, %cst_58 [1] : vector<8x8xf32> to vector<8xf32>
    %169 = vector.shape_cast %168 : vector<8xf32> to vector<8x1xf32>
    %170 = tpu.reciprocal %169 {approx = true} : vector<8x1xf32> -> vector<8x1xf32>
    %171 = vector.broadcast %170 : vector<8x1xf32> to vector<8x8xf32>
    %172 = arith.mulf %167, %171 : vector<8x8xf32>
    %cst_59 = arith.constant dense<0.000000e+00> : vector<8x8xf32>
    %173 = tpu.matmul %172, %157, %cst_59 {dimension_numbers = #tpu.dot_dimension_numbers<[1], [0], [0], [1], [0, 0, 1, 1], [], []>} : vector<8x8xf32>, vector<8x8xf32>, vector<8x8xf32> -> vector<8x8xf32>
    %c8_60 = arith.constant 8 : index
    %c24_61 = arith.constant 24 : index
    %174 = vector.load %arg26[%c8_60, %c24_61] : memref<16x32xf32, #tpu.memory_space<vmem>>, vector<8x8xf32>
    tpu.vector_store %arg26[%c8_60, %c24_61], %173 {strides = array<i32>} : memref<16x32xf32, #tpu.memory_space<vmem>>, vector<8x8xf32>,
    %c0_62 = arith.constant 0 : index
    %c0_63 = arith.constant 0 : index
    %175 = vector.load %arg26[%c0_62, %c0_63] : memref<16x32xf32, #tpu.memory_space<vmem>>, vector<16x32xf32>
    %c0_64 = arith.constant 0 : index
    %c0_65 = arith.constant 0 : index
    %c0_66 = arith.constant 0 : index
    %176 = vector.load %arg5[%c0_64, %c0_65, %c0_66] : memref<2x32x32xf32, #tpu.memory_space<vmem>>, vector<1x32x32xf32>
    %177 = vector.shape_cast %176 : vector<1x32x32xf32> to vector<32x32xf32>
    %cst_67 = arith.constant dense<0.000000e+00> : vector<16x32xf32>
    %178 = tpu.matmul %175, %177, %cst_67 {dimension_numbers = #tpu.dot_dimension_numbers<[1], [0], [0], [1], [0, 0, 1, 1], [], []>} : vector<16x32xf32>, vector<32x32xf32>, vector<16x32xf32> -> vector<16x32xf32>
    %c0_68 = arith.constant 0 : index
    %c0_69 = arith.constant 0 : index
    %c0_70 = arith.constant 0 : index
    %179 = vector.load %arg6[%c0_68, %c0_69, %c0_70] : memref<2x1x32xf32, #tpu.memory_space<vmem>>, vector<1x1x32xf32>
    %180 = vector.shape_cast %179 : vector<1x1x32xf32> to vector<1x32xf32>
    %181 = vector.broadcast %180 : vector<1x32xf32> to vector<16x32xf32>
    %182 = arith.addf %178, %181 : vector<16x32xf32>
    %183 = arith.addf %0, %182 : vector<16x32xf32>
    %c0_71 = arith.constant 0 : index
    %c0_72 = arith.constant 0 : index
    %c0_73 = arith.constant 0 : index
    %184 = vector.load %arg13[%c0_71, %c0_72, %c0_73] : memref<2x1x32xf32, #tpu.memory_space<vmem>>, vector<1x1x32xf32>
    %185 = vector.shape_cast %184 : vector<1x1x32xf32> to vector<1x32xf32>
    %c0_74 = arith.constant 0 : index
    %c0_75 = arith.constant 0 : index
    %c0_76 = arith.constant 0 : index
    %186 = vector.load %arg14[%c0_74, %c0_75, %c0_76] : memref<2x1x32xf32, #tpu.memory_space<vmem>>, vector<1x1x32xf32>
    %187 = vector.shape_cast %186 : vector<1x1x32xf32> to vector<1x32xf32>
    %cst_77 = arith.constant dense<0.000000e+00> : vector<16xf32>
    %188 = vector.multi_reduction <add>, %183, %cst_77 [1] : vector<16x32xf32> to vector<16xf32>
    %189 = vector.shape_cast %188 : vector<16xf32> to vector<16x1xf32>
    %cst_78 = arith.constant 3.200000e+01 : f32
    %190 = vector.broadcast %cst_78 : f32 to vector<16x1xf32>
    %191 = arith.divf %189, %190 : vector<16x1xf32>
    %192 = vector.broadcast %191 : vector<16x1xf32> to vector<16x32xf32>
    %193 = arith.subf %183, %192 : vector<16x32xf32>
    %194 = arith.mulf %193, %193 : vector<16x32xf32>
    %cst_79 = arith.constant dense<0.000000e+00> : vector<16xf32>
    %195 = vector.multi_reduction <add>, %194, %cst_79 [1] : vector<16x32xf32> to vector<16xf32>
    %196 = vector.shape_cast %195 : vector<16xf32> to vector<16x1xf32>
    %cst_80 = arith.constant 3.200000e+01 : f32
    %197 = vector.broadcast %cst_80 : f32 to vector<16x1xf32>
    %198 = arith.divf %196, %197 : vector<16x1xf32>
    %cst_81 = arith.constant 9.99999974E-6 : f32
    %199 = vector.broadcast %cst_81 : f32 to vector<16x1xf32>
    %200 = arith.addf %198, %199 : vector<16x1xf32>
    %201 = math.rsqrt %200 : vector<16x1xf32>
    %202 = vector.broadcast %201 : vector<16x1xf32> to vector<16x32xf32>
    %203 = arith.mulf %193, %202 : vector<16x32xf32>
    %204 = vector.broadcast %185 : vector<1x32xf32> to vector<16x32xf32>
    %205 = arith.mulf %203, %204 : vector<16x32xf32>
    %206 = vector.broadcast %187 : vector<1x32xf32> to vector<16x32xf32>
    %207 = arith.addf %205, %206 : vector<16x32xf32>
    %c0_82 = arith.constant 0 : index
    %c0_83 = arith.constant 0 : index
    %c0_84 = arith.constant 0 : index
    %208 = vector.load %arg7[%c0_82, %c0_83, %c0_84] : memref<2x32x32xf32, #tpu.memory_space<vmem>>, vector<1x32x32xf32>
    %209 = vector.shape_cast %208 : vector<1x32x32xf32> to vector<32x32xf32>
    %cst_85 = arith.constant dense<0.000000e+00> : vector<16x32xf32>
    %210 = tpu.matmul %207, %209, %cst_85 {dimension_numbers = #tpu.dot_dimension_numbers<[1], [0], [0], [1], [0, 0, 1, 1], [], []>} : vector<16x32xf32>, vector<32x32xf32>, vector<16x32xf32> -> vector<16x32xf32>
    %c0_86 = arith.constant 0 : index
    %c0_87 = arith.constant 0 : index
    %c0_88 = arith.constant 0 : index
    %211 = vector.load %arg8[%c0_86, %c0_87, %c0_88] : memref<2x1x32xf32, #tpu.memory_space<vmem>>, vector<1x1x32xf32>
    %212 = vector.shape_cast %211 : vector<1x1x32xf32> to vector<1x32xf32>
    %213 = vector.broadcast %212 : vector<1x32xf32> to vector<16x32xf32>
    %214 = arith.addf %210, %213 : vector<16x32xf32>
    %c0_89 = arith.constant 0 : index
    %c0_90 = arith.constant 0 : index
    %c0_91 = arith.constant 0 : index
    %215 = vector.load %arg1[%c0_89, %c0_90, %c0_91] : memref<2x4x32xf32, #tpu.memory_space<vmem>>, vector<1x4x32xf32>
    %216 = vector.shape_cast %215 : vector<1x4x32xf32> to vector<4x32xf32>
    %c0_92 = arith.constant 0 : index
    %c0_93 = arith.constant 0 : index
    %c0_94 = arith.constant 0 : index
    %217 = vector.load %arg9[%c0_92, %c0_93, %c0_94] : memref<2x32x64xf32, #tpu.memory_space<vmem>>, vector<1x32x64xf32>
    %218 = vector.shape_cast %217 : vector<1x32x64xf32> to vector<32x64xf32>
    %cst_95 = arith.constant dense<0.000000e+00> : vector<4x64xf32>
    %219 = tpu.matmul %216, %218, %cst_95 {dimension_numbers = #tpu.dot_dimension_numbers<[1], [0], [0], [1], [0, 0, 1, 1], [], []>} : vector<4x32xf32>, vector<32x64xf32>, vector<4x64xf32> -> vector<4x64xf32>
    %c0_96 = arith.constant 0 : index
    %c0_97 = arith.constant 0 : index
    %c0_98 = arith.constant 0 : index
    %220 = vector.load %arg10[%c0_96, %c0_97, %c0_98] : memref<2x1x64xf32, #tpu.memory_space<vmem>>, vector<1x1x64xf32>
    %221 = vector.shape_cast %220 : vector<1x1x64xf32> to vector<1x64xf32>
    %222 = vector.broadcast %221 : vector<1x64xf32> to vector<4x64xf32>
    %223 = arith.addf %219, %222 : vector<4x64xf32>
    %224 = vector.extract_strided_slice %214 {offsets = [0, 0], sizes = [8, 32], strides = [1, 1]} : vector<16x32xf32> to vector<8x32xf32>
    %225 = vector.extract_strided_slice %224 {offsets = [0, 0], sizes = [8, 8], strides = [1, 1]} : vector<8x32xf32> to vector<8x8xf32>
    %226 = vector.extract_strided_slice %223 {offsets = [0, 0], sizes = [4, 8], strides = [1, 1]} : vector<4x64xf32> to vector<4x8xf32>
    %227 = vector.extract_strided_slice %223 {offsets = [0, 32], sizes = [4, 8], strides = [1, 1]} : vector<4x64xf32> to vector<4x8xf32>
    %228 = tpu.transpose %226, [1, 0] : vector<4x8xf32> -> vector<8x4xf32>
    %cst_99 = arith.constant dense<0.000000e+00> : vector<8x4xf32>
    %229 = tpu.matmul %225, %228, %cst_99 {dimension_numbers = #tpu.dot_dimension_numbers<[1], [0], [0], [1], [0, 0, 1, 1], [], []>} : vector<8x8xf32>, vector<8x4xf32>, vector<8x4xf32> -> vector<8x4xf32>
    %cst_100 = arith.constant 0.353553385 : f32
    %230 = vector.broadcast %cst_100 : f32 to vector<8x4xf32>
    %231 = arith.mulf %229, %230 : vector<8x4xf32>
    %cst_101 = arith.constant dense<0xFF800000> : vector<8xf32>
    %232 = vector.multi_reduction <maximumf>, %231, %cst_101 [1] : vector<8x4xf32> to vector<8xf32>
    %233 = vector.shape_cast %232 : vector<8xf32> to vector<8x1xf32>
    %234 = vector.broadcast %233 : vector<8x1xf32> to vector<8x4xf32>
    %235 = arith.subf %231, %234 : vector<8x4xf32>
    %236 = math.exp %235 : vector<8x4xf32>
    %cst_102 = arith.constant dense<0.000000e+00> : vector<8xf32>
    %237 = vector.multi_reduction <add>, %236, %cst_102 [1] : vector<8x4xf32> to vector<8xf32>
    %238 = vector.shape_cast %237 : vector<8xf32> to vector<8x1xf32>
    %239 = tpu.reciprocal %238 {approx = true} : vector<8x1xf32> -> vector<8x1xf32>
    %240 = vector.broadcast %239 : vector<8x1xf32> to vector<8x4xf32>
    %241 = arith.mulf %236, %240 : vector<8x4xf32>
    %cst_103 = arith.constant dense<0.000000e+00> : vector<8x8xf32>
    %242 = tpu.matmul %241, %227, %cst_103 {dimension_numbers = #tpu.dot_dimension_numbers<[1], [0], [0], [1], [0, 0, 1, 1], [], []>} : vector<8x4xf32>, vector<4x8xf32>, vector<8x8xf32> -> vector<8x8xf32>
    %c0_104 = arith.constant 0 : index
    %c0_105 = arith.constant 0 : index
    %243 = vector.load %arg26[%c0_104, %c0_105] : memref<16x32xf32, #tpu.memory_space<vmem>>, vector<8x8xf32>
    tpu.vector_store %arg26[%c0_104, %c0_105], %242 {strides = array<i32>} : memref<16x32xf32, #tpu.memory_space<vmem>>, vector<8x8xf32>,
    %244 = vector.extract_strided_slice %224 {offsets = [0, 8], sizes = [8, 8], strides = [1, 1]} : vector<8x32xf32> to vector<8x8xf32>
    %245 = vector.extract_strided_slice %223 {offsets = [0, 8], sizes = [4, 8], strides = [1, 1]} : vector<4x64xf32> to vector<4x8xf32>
    %246 = vector.extract_strided_slice %223 {offsets = [0, 40], sizes = [4, 8], strides = [1, 1]} : vector<4x64xf32> to vector<4x8xf32>
    %247 = tpu.transpose %245, [1, 0] : vector<4x8xf32> -> vector<8x4xf32>
    %cst_106 = arith.constant dense<0.000000e+00> : vector<8x4xf32>
    %248 = tpu.matmul %244, %247, %cst_106 {dimension_numbers = #tpu.dot_dimension_numbers<[1], [0], [0], [1], [0, 0, 1, 1], [], []>} : vector<8x8xf32>, vector<8x4xf32>, vector<8x4xf32> -> vector<8x4xf32>
    %cst_107 = arith.constant 0.353553385 : f32
    %249 = vector.broadcast %cst_107 : f32 to vector<8x4xf32>
    %250 = arith.mulf %248, %249 : vector<8x4xf32>
    %cst_108 = arith.constant dense<0xFF800000> : vector<8xf32>
    %251 = vector.multi_reduction <maximumf>, %250, %cst_108 [1] : vector<8x4xf32> to vector<8xf32>
    %252 = vector.shape_cast %251 : vector<8xf32> to vector<8x1xf32>
    %253 = vector.broadcast %252 : vector<8x1xf32> to vector<8x4xf32>
    %254 = arith.subf %250, %253 : vector<8x4xf32>
    %255 = math.exp %254 : vector<8x4xf32>
    %cst_109 = arith.constant dense<0.000000e+00> : vector<8xf32>
    %256 = vector.multi_reduction <add>, %255, %cst_109 [1] : vector<8x4xf32> to vector<8xf32>
    %257 = vector.shape_cast %256 : vector<8xf32> to vector<8x1xf32>
    %258 = tpu.reciprocal %257 {approx = true} : vector<8x1xf32> -> vector<8x1xf32>
    %259 = vector.broadcast %258 : vector<8x1xf32> to vector<8x4xf32>
    %260 = arith.mulf %255, %259 : vector<8x4xf32>
    %cst_110 = arith.constant dense<0.000000e+00> : vector<8x8xf32>
    %261 = tpu.matmul %260, %246, %cst_110 {dimension_numbers = #tpu.dot_dimension_numbers<[1], [0], [0], [1], [0, 0, 1, 1], [], []>} : vector<8x4xf32>, vector<4x8xf32>, vector<8x8xf32> -> vector<8x8xf32>
    %c0_111 = arith.constant 0 : index
    %c8_112 = arith.constant 8 : index
    %262 = vector.load %arg26[%c0_111, %c8_112] : memref<16x32xf32, #tpu.memory_space<vmem>>, vector<8x8xf32>
    tpu.vector_store %arg26[%c0_111, %c8_112], %261 {strides = array<i32>} : memref<16x32xf32, #tpu.memory_space<vmem>>, vector<8x8xf32>,
    %263 = vector.extract_strided_slice %224 {offsets = [0, 16], sizes = [8, 8], strides = [1, 1]} : vector<8x32xf32> to vector<8x8xf32>
    %264 = vector.extract_strided_slice %223 {offsets = [0, 16], sizes = [4, 8], strides = [1, 1]} : vector<4x64xf32> to vector<4x8xf32>
    %265 = vector.extract_strided_slice %223 {offsets = [0, 48], sizes = [4, 8], strides = [1, 1]} : vector<4x64xf32> to vector<4x8xf32>
    %266 = tpu.transpose %264, [1, 0] : vector<4x8xf32> -> vector<8x4xf32>
    %cst_113 = arith.constant dense<0.000000e+00> : vector<8x4xf32>
    %267 = tpu.matmul %263, %266, %cst_113 {dimension_numbers = #tpu.dot_dimension_numbers<[1], [0], [0], [1], [0, 0, 1, 1], [], []>} : vector<8x8xf32>, vector<8x4xf32>, vector<8x4xf32> -> vector<8x4xf32>
    %cst_114 = arith.constant 0.353553385 : f32
    %268 = vector.broadcast %cst_114 : f32 to vector<8x4xf32>
    %269 = arith.mulf %267, %268 : vector<8x4xf32>
    %cst_115 = arith.constant dense<0xFF800000> : vector<8xf32>
    %270 = vector.multi_reduction <maximumf>, %269, %cst_115 [1] : vector<8x4xf32> to vector<8xf32>
    %271 = vector.shape_cast %270 : vector<8xf32> to vector<8x1xf32>
    %272 = vector.broadcast %271 : vector<8x1xf32> to vector<8x4xf32>
    %273 = arith.subf %269, %272 : vector<8x4xf32>
    %274 = math.exp %273 : vector<8x4xf32>
    %cst_116 = arith.constant dense<0.000000e+00> : vector<8xf32>
    %275 = vector.multi_reduction <add>, %274, %cst_116 [1] : vector<8x4xf32> to vector<8xf32>
    %276 = vector.shape_cast %275 : vector<8xf32> to vector<8x1xf32>
    %277 = tpu.reciprocal %276 {approx = true} : vector<8x1xf32> -> vector<8x1xf32>
    %278 = vector.broadcast %277 : vector<8x1xf32> to vector<8x4xf32>
    %279 = arith.mulf %274, %278 : vector<8x4xf32>
    %cst_117 = arith.constant dense<0.000000e+00> : vector<8x8xf32>
    %280 = tpu.matmul %279, %265, %cst_117 {dimension_numbers = #tpu.dot_dimension_numbers<[1], [0], [0], [1], [0, 0, 1, 1], [], []>} : vector<8x4xf32>, vector<4x8xf32>, vector<8x8xf32> -> vector<8x8xf32>
    %c0_118 = arith.constant 0 : index
    %c16_119 = arith.constant 16 : index
    %281 = vector.load %arg26[%c0_118, %c16_119] : memref<16x32xf32, #tpu.memory_space<vmem>>, vector<8x8xf32>
    tpu.vector_store %arg26[%c0_118, %c16_119], %280 {strides = array<i32>} : memref<16x32xf32, #tpu.memory_space<vmem>>, vector<8x8xf32>,
    %282 = vector.extract_strided_slice %224 {offsets = [0, 24], sizes = [8, 8], strides = [1, 1]} : vector<8x32xf32> to vector<8x8xf32>
    %283 = vector.extract_strided_slice %223 {offsets = [0, 24], sizes = [4, 8], strides = [1, 1]} : vector<4x64xf32> to vector<4x8xf32>
    %284 = vector.extract_strided_slice %223 {offsets = [0, 56], sizes = [4, 8], strides = [1, 1]} : vector<4x64xf32> to vector<4x8xf32>
    %285 = tpu.transpose %283, [1, 0] : vector<4x8xf32> -> vector<8x4xf32>
    %cst_120 = arith.constant dense<0.000000e+00> : vector<8x4xf32>
    %286 = tpu.matmul %282, %285, %cst_120 {dimension_numbers = #tpu.dot_dimension_numbers<[1], [0], [0], [1], [0, 0, 1, 1], [], []>} : vector<8x8xf32>, vector<8x4xf32>, vector<8x4xf32> -> vector<8x4xf32>
    %cst_121 = arith.constant 0.353553385 : f32
    %287 = vector.broadcast %cst_121 : f32 to vector<8x4xf32>
    %288 = arith.mulf %286, %287 : vector<8x4xf32>
    %cst_122 = arith.constant dense<0xFF800000> : vector<8xf32>
    %289 = vector.multi_reduction <maximumf>, %288, %cst_122 [1] : vector<8x4xf32> to vector<8xf32>
    %290 = vector.shape_cast %289 : vector<8xf32> to vector<8x1xf32>
    %291 = vector.broadcast %290 : vector<8x1xf32> to vector<8x4xf32>
    %292 = arith.subf %288, %291 : vector<8x4xf32>
    %293 = math.exp %292 : vector<8x4xf32>
    %cst_123 = arith.constant dense<0.000000e+00> : vector<8xf32>
    %294 = vector.multi_reduction <add>, %293, %cst_123 [1] : vector<8x4xf32> to vector<8xf32>
    %295 = vector.shape_cast %294 : vector<8xf32> to vector<8x1xf32>
    %296 = tpu.reciprocal %295 {approx = true} : vector<8x1xf32> -> vector<8x1xf32>
    %297 = vector.broadcast %296 : vector<8x1xf32> to vector<8x4xf32>
    %298 = arith.mulf %293, %297 : vector<8x4xf32>
    %cst_124 = arith.constant dense<0.000000e+00> : vector<8x8xf32>
    %299 = tpu.matmul %298, %284, %cst_124 {dimension_numbers = #tpu.dot_dimension_numbers<[1], [0], [0], [1], [0, 0, 1, 1], [], []>} : vector<8x4xf32>, vector<4x8xf32>, vector<8x8xf32> -> vector<8x8xf32>
    %c0_125 = arith.constant 0 : index
    %c24_126 = arith.constant 24 : index
    %300 = vector.load %arg26[%c0_125, %c24_126] : memref<16x32xf32, #tpu.memory_space<vmem>>, vector<8x8xf32>
    tpu.vector_store %arg26[%c0_125, %c24_126], %299 {strides = array<i32>} : memref<16x32xf32, #tpu.memory_space<vmem>>, vector<8x8xf32>,
    %c1 = arith.constant 1 : index
    %c0_127 = arith.constant 0 : index
    %c0_128 = arith.constant 0 : index
    %301 = vector.load %arg1[%c1, %c0_127, %c0_128] : memref<2x4x32xf32, #tpu.memory_space<vmem>>, vector<1x4x32xf32>
    %302 = vector.shape_cast %301 : vector<1x4x32xf32> to vector<4x32xf32>
    %c0_129 = arith.constant 0 : index
    %c0_130 = arith.constant 0 : index
    %c0_131 = arith.constant 0 : index
    %303 = vector.load %arg9[%c0_129, %c0_130, %c0_131] : memref<2x32x64xf32, #tpu.memory_space<vmem>>, vector<1x32x64xf32>
    %304 = vector.shape_cast %303 : vector<1x32x64xf32> to vector<32x64xf32>
    %cst_132 = arith.constant dense<0.000000e+00> : vector<4x64xf32>
    %305 = tpu.matmul %302, %304, %cst_132 {dimension_numbers = #tpu.dot_dimension_numbers<[1], [0], [0], [1], [0, 0, 1, 1], [], []>} : vector<4x32xf32>, vector<32x64xf32>, vector<4x64xf32> -> vector<4x64xf32>
    %c0_133 = arith.constant 0 : index
    %c0_134 = arith.constant 0 : index
    %c0_135 = arith.constant 0 : index
    %306 = vector.load %arg10[%c0_133, %c0_134, %c0_135] : memref<2x1x64xf32, #tpu.memory_space<vmem>>, vector<1x1x64xf32>
    %307 = vector.shape_cast %306 : vector<1x1x64xf32> to vector<1x64xf32>
    %308 = vector.broadcast %307 : vector<1x64xf32> to vector<4x64xf32>
    %309 = arith.addf %305, %308 : vector<4x64xf32>
    %310 = vector.extract_strided_slice %214 {offsets = [8, 0], sizes = [8, 32], strides = [1, 1]} : vector<16x32xf32> to vector<8x32xf32>
    %311 = vector.extract_strided_slice %310 {offsets = [0, 0], sizes = [8, 8], strides = [1, 1]} : vector<8x32xf32> to vector<8x8xf32>
    %312 = vector.extract_strided_slice %309 {offsets = [0, 0], sizes = [4, 8], strides = [1, 1]} : vector<4x64xf32> to vector<4x8xf32>
    %313 = vector.extract_strided_slice %309 {offsets = [0, 32], sizes = [4, 8], strides = [1, 1]} : vector<4x64xf32> to vector<4x8xf32>
    %314 = tpu.transpose %312, [1, 0] : vector<4x8xf32> -> vector<8x4xf32>
    %cst_136 = arith.constant dense<0.000000e+00> : vector<8x4xf32>
    %315 = tpu.matmul %311, %314, %cst_136 {dimension_numbers = #tpu.dot_dimension_numbers<[1], [0], [0], [1], [0, 0, 1, 1], [], []>} : vector<8x8xf32>, vector<8x4xf32>, vector<8x4xf32> -> vector<8x4xf32>
    %cst_137 = arith.constant 0.353553385 : f32
    %316 = vector.broadcast %cst_137 : f32 to vector<8x4xf32>
    %317 = arith.mulf %315, %316 : vector<8x4xf32>
    %cst_138 = arith.constant dense<0xFF800000> : vector<8xf32>
    %318 = vector.multi_reduction <maximumf>, %317, %cst_138 [1] : vector<8x4xf32> to vector<8xf32>
    %319 = vector.shape_cast %318 : vector<8xf32> to vector<8x1xf32>
    %320 = vector.broadcast %319 : vector<8x1xf32> to vector<8x4xf32>
    %321 = arith.subf %317, %320 : vector<8x4xf32>
    %322 = math.exp %321 : vector<8x4xf32>
    %cst_139 = arith.constant dense<0.000000e+00> : vector<8xf32>
    %323 = vector.multi_reduction <add>, %322, %cst_139 [1] : vector<8x4xf32> to vector<8xf32>
    %324 = vector.shape_cast %323 : vector<8xf32> to vector<8x1xf32>
    %325 = tpu.reciprocal %324 {approx = true} : vector<8x1xf32> -> vector<8x1xf32>
    %326 = vector.broadcast %325 : vector<8x1xf32> to vector<8x4xf32>
    %327 = arith.mulf %322, %326 : vector<8x4xf32>
    %cst_140 = arith.constant dense<0.000000e+00> : vector<8x8xf32>
    %328 = tpu.matmul %327, %313, %cst_140 {dimension_numbers = #tpu.dot_dimension_numbers<[1], [0], [0], [1], [0, 0, 1, 1], [], []>} : vector<8x4xf32>, vector<4x8xf32>, vector<8x8xf32> -> vector<8x8xf32>
    %c8_141 = arith.constant 8 : index
    %c0_142 = arith.constant 0 : index
    %329 = vector.load %arg26[%c8_141, %c0_142] : memref<16x32xf32, #tpu.memory_space<vmem>>, vector<8x8xf32>
    tpu.vector_store %arg26[%c8_141, %c0_142], %328 {strides = array<i32>} : memref<16x32xf32, #tpu.memory_space<vmem>>, vector<8x8xf32>,
    %330 = vector.extract_strided_slice %310 {offsets = [0, 8], sizes = [8, 8], strides = [1, 1]} : vector<8x32xf32> to vector<8x8xf32>
    %331 = vector.extract_strided_slice %309 {offsets = [0, 8], sizes = [4, 8], strides = [1, 1]} : vector<4x64xf32> to vector<4x8xf32>
    %332 = vector.extract_strided_slice %309 {offsets = [0, 40], sizes = [4, 8], strides = [1, 1]} : vector<4x64xf32> to vector<4x8xf32>
    %333 = tpu.transpose %331, [1, 0] : vector<4x8xf32> -> vector<8x4xf32>
    %cst_143 = arith.constant dense<0.000000e+00> : vector<8x4xf32>
    %334 = tpu.matmul %330, %333, %cst_143 {dimension_numbers = #tpu.dot_dimension_numbers<[1], [0], [0], [1], [0, 0, 1, 1], [], []>} : vector<8x8xf32>, vector<8x4xf32>, vector<8x4xf32> -> vector<8x4xf32>
    %cst_144 = arith.constant 0.353553385 : f32
    %335 = vector.broadcast %cst_144 : f32 to vector<8x4xf32>
    %336 = arith.mulf %334, %335 : vector<8x4xf32>
    %cst_145 = arith.constant dense<0xFF800000> : vector<8xf32>
    %337 = vector.multi_reduction <maximumf>, %336, %cst_145 [1] : vector<8x4xf32> to vector<8xf32>
    %338 = vector.shape_cast %337 : vector<8xf32> to vector<8x1xf32>
    %339 = vector.broadcast %338 : vector<8x1xf32> to vector<8x4xf32>
    %340 = arith.subf %336, %339 : vector<8x4xf32>
    %341 = math.exp %340 : vector<8x4xf32>
    %cst_146 = arith.constant dense<0.000000e+00> : vector<8xf32>
    %342 = vector.multi_reduction <add>, %341, %cst_146 [1] : vector<8x4xf32> to vector<8xf32>
    %343 = vector.shape_cast %342 : vector<8xf32> to vector<8x1xf32>
    %344 = tpu.reciprocal %343 {approx = true} : vector<8x1xf32> -> vector<8x1xf32>
    %345 = vector.broadcast %344 : vector<8x1xf32> to vector<8x4xf32>
    %346 = arith.mulf %341, %345 : vector<8x4xf32>
    %cst_147 = arith.constant dense<0.000000e+00> : vector<8x8xf32>
    %347 = tpu.matmul %346, %332, %cst_147 {dimension_numbers = #tpu.dot_dimension_numbers<[1], [0], [0], [1], [0, 0, 1, 1], [], []>} : vector<8x4xf32>, vector<4x8xf32>, vector<8x8xf32> -> vector<8x8xf32>
    %c8_148 = arith.constant 8 : index
    %c8_149 = arith.constant 8 : index
    %348 = vector.load %arg26[%c8_148, %c8_149] : memref<16x32xf32, #tpu.memory_space<vmem>>, vector<8x8xf32>
    tpu.vector_store %arg26[%c8_148, %c8_149], %347 {strides = array<i32>} : memref<16x32xf32, #tpu.memory_space<vmem>>, vector<8x8xf32>,
    %349 = vector.extract_strided_slice %310 {offsets = [0, 16], sizes = [8, 8], strides = [1, 1]} : vector<8x32xf32> to vector<8x8xf32>
    %350 = vector.extract_strided_slice %309 {offsets = [0, 16], sizes = [4, 8], strides = [1, 1]} : vector<4x64xf32> to vector<4x8xf32>
    %351 = vector.extract_strided_slice %309 {offsets = [0, 48], sizes = [4, 8], strides = [1, 1]} : vector<4x64xf32> to vector<4x8xf32>
    %352 = tpu.transpose %350, [1, 0] : vector<4x8xf32> -> vector<8x4xf32>
    %cst_150 = arith.constant dense<0.000000e+00> : vector<8x4xf32>
    %353 = tpu.matmul %349, %352, %cst_150 {dimension_numbers = #tpu.dot_dimension_numbers<[1], [0], [0], [1], [0, 0, 1, 1], [], []>} : vector<8x8xf32>, vector<8x4xf32>, vector<8x4xf32> -> vector<8x4xf32>
    %cst_151 = arith.constant 0.353553385 : f32
    %354 = vector.broadcast %cst_151 : f32 to vector<8x4xf32>
    %355 = arith.mulf %353, %354 : vector<8x4xf32>
    %cst_152 = arith.constant dense<0xFF800000> : vector<8xf32>
    %356 = vector.multi_reduction <maximumf>, %355, %cst_152 [1] : vector<8x4xf32> to vector<8xf32>
    %357 = vector.shape_cast %356 : vector<8xf32> to vector<8x1xf32>
    %358 = vector.broadcast %357 : vector<8x1xf32> to vector<8x4xf32>
    %359 = arith.subf %355, %358 : vector<8x4xf32>
    %360 = math.exp %359 : vector<8x4xf32>
    %cst_153 = arith.constant dense<0.000000e+00> : vector<8xf32>
    %361 = vector.multi_reduction <add>, %360, %cst_153 [1] : vector<8x4xf32> to vector<8xf32>
    %362 = vector.shape_cast %361 : vector<8xf32> to vector<8x1xf32>
    %363 = tpu.reciprocal %362 {approx = true} : vector<8x1xf32> -> vector<8x1xf32>
    %364 = vector.broadcast %363 : vector<8x1xf32> to vector<8x4xf32>
    %365 = arith.mulf %360, %364 : vector<8x4xf32>
    %cst_154 = arith.constant dense<0.000000e+00> : vector<8x8xf32>
    %366 = tpu.matmul %365, %351, %cst_154 {dimension_numbers = #tpu.dot_dimension_numbers<[1], [0], [0], [1], [0, 0, 1, 1], [], []>} : vector<8x4xf32>, vector<4x8xf32>, vector<8x8xf32> -> vector<8x8xf32>
    %c8_155 = arith.constant 8 : index
    %c16_156 = arith.constant 16 : index
    %367 = vector.load %arg26[%c8_155, %c16_156] : memref<16x32xf32, #tpu.memory_space<vmem>>, vector<8x8xf32>
    tpu.vector_store %arg26[%c8_155, %c16_156], %366 {strides = array<i32>} : memref<16x32xf32, #tpu.memory_space<vmem>>, vector<8x8xf32>,
    %368 = vector.extract_strided_slice %310 {offsets = [0, 24], sizes = [8, 8], strides = [1, 1]} : vector<8x32xf32> to vector<8x8xf32>
    %369 = vector.extract_strided_slice %309 {offsets = [0, 24], sizes = [4, 8], strides = [1, 1]} : vector<4x64xf32> to vector<4x8xf32>
    %370 = vector.extract_strided_slice %309 {offsets = [0, 56], sizes = [4, 8], strides = [1, 1]} : vector<4x64xf32> to vector<4x8xf32>
    %371 = tpu.transpose %369, [1, 0] : vector<4x8xf32> -> vector<8x4xf32>
    %cst_157 = arith.constant dense<0.000000e+00> : vector<8x4xf32>
    %372 = tpu.matmul %368, %371, %cst_157 {dimension_numbers = #tpu.dot_dimension_numbers<[1], [0], [0], [1], [0, 0, 1, 1], [], []>} : vector<8x8xf32>, vector<8x4xf32>, vector<8x4xf32> -> vector<8x4xf32>
    %cst_158 = arith.constant 0.353553385 : f32
    %373 = vector.broadcast %cst_158 : f32 to vector<8x4xf32>
    %374 = arith.mulf %372, %373 : vector<8x4xf32>
    %cst_159 = arith.constant dense<0xFF800000> : vector<8xf32>
    %375 = vector.multi_reduction <maximumf>, %374, %cst_159 [1] : vector<8x4xf32> to vector<8xf32>
    %376 = vector.shape_cast %375 : vector<8xf32> to vector<8x1xf32>
    %377 = vector.broadcast %376 : vector<8x1xf32> to vector<8x4xf32>
    %378 = arith.subf %374, %377 : vector<8x4xf32>
    %379 = math.exp %378 : vector<8x4xf32>
    %cst_160 = arith.constant dense<0.000000e+00> : vector<8xf32>
    %380 = vector.multi_reduction <add>, %379, %cst_160 [1] : vector<8x4xf32> to vector<8xf32>
    %381 = vector.shape_cast %380 : vector<8xf32> to vector<8x1xf32>
    %382 = tpu.reciprocal %381 {approx = true} : vector<8x1xf32> -> vector<8x1xf32>
    %383 = vector.broadcast %382 : vector<8x1xf32> to vector<8x4xf32>
    %384 = arith.mulf %379, %383 : vector<8x4xf32>
    %cst_161 = arith.constant dense<0.000000e+00> : vector<8x8xf32>
    %385 = tpu.matmul %384, %370, %cst_161 {dimension_numbers = #tpu.dot_dimension_numbers<[1], [0], [0], [1], [0, 0, 1, 1], [], []>} : vector<8x4xf32>, vector<4x8xf32>, vector<8x8xf32> -> vector<8x8xf32>
    %c8_162 = arith.constant 8 : index
    %c24_163 = arith.constant 24 : index
    %386 = vector.load %arg26[%c8_162, %c24_163] : memref<16x32xf32, #tpu.memory_space<vmem>>, vector<8x8xf32>
    tpu.vector_store %arg26[%c8_162, %c24_163], %385 {strides = array<i32>} : memref<16x32xf32, #tpu.memory_space<vmem>>, vector<8x8xf32>,
    %c0_164 = arith.constant 0 : index
    %c0_165 = arith.constant 0 : index
    %387 = vector.load %arg26[%c0_164, %c0_165] : memref<16x32xf32, #tpu.memory_space<vmem>>, vector<16x32xf32>
    %c0_166 = arith.constant 0 : index
    %c0_167 = arith.constant 0 : index
    %c0_168 = arith.constant 0 : index
    %388 = vector.load %arg11[%c0_166, %c0_167, %c0_168] : memref<2x32x32xf32, #tpu.memory_space<vmem>>, vector<1x32x32xf32>
    %389 = vector.shape_cast %388 : vector<1x32x32xf32> to vector<32x32xf32>
    %cst_169 = arith.constant dense<0.000000e+00> : vector<16x32xf32>
    %390 = tpu.matmul %387, %389, %cst_169 {dimension_numbers = #tpu.dot_dimension_numbers<[1], [0], [0], [1], [0, 0, 1, 1], [], []>} : vector<16x32xf32>, vector<32x32xf32>, vector<16x32xf32> -> vector<16x32xf32>
    %c0_170 = arith.constant 0 : index
    %c0_171 = arith.constant 0 : index
    %c0_172 = arith.constant 0 : index
    %391 = vector.load %arg12[%c0_170, %c0_171, %c0_172] : memref<2x1x32xf32, #tpu.memory_space<vmem>>, vector<1x1x32xf32>
    %392 = vector.shape_cast %391 : vector<1x1x32xf32> to vector<1x32xf32>
    %393 = vector.broadcast %392 : vector<1x32xf32> to vector<16x32xf32>
    %394 = arith.addf %390, %393 : vector<16x32xf32>
    %395 = arith.addf %207, %394 : vector<16x32xf32>
    %c0_173 = arith.constant 0 : index
    %c0_174 = arith.constant 0 : index
    %c0_175 = arith.constant 0 : index
    %396 = vector.load %arg15[%c0_173, %c0_174, %c0_175] : memref<2x1x32xf32, #tpu.memory_space<vmem>>, vector<1x1x32xf32>
    %397 = vector.shape_cast %396 : vector<1x1x32xf32> to vector<1x32xf32>
    %c0_176 = arith.constant 0 : index
    %c0_177 = arith.constant 0 : index
    %c0_178 = arith.constant 0 : index
    %398 = vector.load %arg16[%c0_176, %c0_177, %c0_178] : memref<2x1x32xf32, #tpu.memory_space<vmem>>, vector<1x1x32xf32>
    %399 = vector.shape_cast %398 : vector<1x1x32xf32> to vector<1x32xf32>
    %cst_179 = arith.constant dense<0.000000e+00> : vector<16xf32>
    %400 = vector.multi_reduction <add>, %395, %cst_179 [1] : vector<16x32xf32> to vector<16xf32>
    %401 = vector.shape_cast %400 : vector<16xf32> to vector<16x1xf32>
    %cst_180 = arith.constant 3.200000e+01 : f32
    %402 = vector.broadcast %cst_180 : f32 to vector<16x1xf32>
    %403 = arith.divf %401, %402 : vector<16x1xf32>
    %404 = vector.broadcast %403 : vector<16x1xf32> to vector<16x32xf32>
    %405 = arith.subf %395, %404 : vector<16x32xf32>
    %406 = arith.mulf %405, %405 : vector<16x32xf32>
    %cst_181 = arith.constant dense<0.000000e+00> : vector<16xf32>
    %407 = vector.multi_reduction <add>, %406, %cst_181 [1] : vector<16x32xf32> to vector<16xf32>
    %408 = vector.shape_cast %407 : vector<16xf32> to vector<16x1xf32>
    %cst_182 = arith.constant 3.200000e+01 : f32
    %409 = vector.broadcast %cst_182 : f32 to vector<16x1xf32>
    %410 = arith.divf %408, %409 : vector<16x1xf32>
    %cst_183 = arith.constant 9.99999974E-6 : f32
    %411 = vector.broadcast %cst_183 : f32 to vector<16x1xf32>
    %412 = arith.addf %410, %411 : vector<16x1xf32>
    %413 = math.rsqrt %412 : vector<16x1xf32>
    %414 = vector.broadcast %413 : vector<16x1xf32> to vector<16x32xf32>
    %415 = arith.mulf %405, %414 : vector<16x32xf32>
    %416 = vector.broadcast %397 : vector<1x32xf32> to vector<16x32xf32>
    %417 = arith.mulf %415, %416 : vector<16x32xf32>
    %418 = vector.broadcast %399 : vector<1x32xf32> to vector<16x32xf32>
    %419 = arith.addf %417, %418 : vector<16x32xf32>
    %c0_184 = arith.constant 0 : index
    %c0_185 = arith.constant 0 : index
    %c0_186 = arith.constant 0 : index
    %420 = vector.load %arg19[%c0_184, %c0_185, %c0_186] : memref<2x32x64xf32, #tpu.memory_space<vmem>>, vector<1x32x64xf32>
    %421 = vector.shape_cast %420 : vector<1x32x64xf32> to vector<32x64xf32>
    %cst_187 = arith.constant dense<0.000000e+00> : vector<16x64xf32>
    %422 = tpu.matmul %419, %421, %cst_187 {dimension_numbers = #tpu.dot_dimension_numbers<[1], [0], [0], [1], [0, 0, 1, 1], [], []>} : vector<16x32xf32>, vector<32x64xf32>, vector<16x64xf32> -> vector<16x64xf32>
    %c0_188 = arith.constant 0 : index
    %c0_189 = arith.constant 0 : index
    %c0_190 = arith.constant 0 : index
    %423 = vector.load %arg20[%c0_188, %c0_189, %c0_190] : memref<2x1x64xf32, #tpu.memory_space<vmem>>, vector<1x1x64xf32>
    %424 = vector.shape_cast %423 : vector<1x1x64xf32> to vector<1x64xf32>
    %425 = vector.broadcast %424 : vector<1x64xf32> to vector<16x64xf32>
    %426 = arith.addf %422, %425 : vector<16x64xf32>
    %cst_191 = arith.constant 0.000000e+00 : f32
    %427 = vector.broadcast %cst_191 : f32 to vector<16x64xf32>
    %428 = arith.maximumf %426, %427 : vector<16x64xf32>
    %c0_192 = arith.constant 0 : index
    %c0_193 = arith.constant 0 : index
    %c0_194 = arith.constant 0 : index
    %429 = vector.load %arg21[%c0_192, %c0_193, %c0_194] : memref<2x64x32xf32, #tpu.memory_space<vmem>>, vector<1x64x32xf32>
    %430 = vector.shape_cast %429 : vector<1x64x32xf32> to vector<64x32xf32>
    %cst_195 = arith.constant dense<0.000000e+00> : vector<16x32xf32>
    %431 = tpu.matmul %428, %430, %cst_195 {dimension_numbers = #tpu.dot_dimension_numbers<[1], [0], [0], [1], [0, 0, 1, 1], [], []>} : vector<16x64xf32>, vector<64x32xf32>, vector<16x32xf32> -> vector<16x32xf32>
    %c0_196 = arith.constant 0 : index
    %c0_197 = arith.constant 0 : index
    %c0_198 = arith.constant 0 : index
    %432 = vector.load %arg22[%c0_196, %c0_197, %c0_198] : memref<2x1x32xf32, #tpu.memory_space<vmem>>, vector<1x1x32xf32>
    %433 = vector.shape_cast %432 : vector<1x1x32xf32> to vector<1x32xf32>
    %434 = vector.broadcast %433 : vector<1x32xf32> to vector<16x32xf32>
    %435 = arith.addf %431, %434 : vector<16x32xf32>
    %436 = arith.addf %419, %435 : vector<16x32xf32>
    %c0_199 = arith.constant 0 : index
    %c0_200 = arith.constant 0 : index
    %c0_201 = arith.constant 0 : index
    %437 = vector.load %arg17[%c0_199, %c0_200, %c0_201] : memref<2x1x32xf32, #tpu.memory_space<vmem>>, vector<1x1x32xf32>
    %438 = vector.shape_cast %437 : vector<1x1x32xf32> to vector<1x32xf32>
    %c0_202 = arith.constant 0 : index
    %c0_203 = arith.constant 0 : index
    %c0_204 = arith.constant 0 : index
    %439 = vector.load %arg18[%c0_202, %c0_203, %c0_204] : memref<2x1x32xf32, #tpu.memory_space<vmem>>, vector<1x1x32xf32>
    %440 = vector.shape_cast %439 : vector<1x1x32xf32> to vector<1x32xf32>
    %cst_205 = arith.constant dense<0.000000e+00> : vector<16xf32>
    %441 = vector.multi_reduction <add>, %436, %cst_205 [1] : vector<16x32xf32> to vector<16xf32>
    %442 = vector.shape_cast %441 : vector<16xf32> to vector<16x1xf32>
    %cst_206 = arith.constant 3.200000e+01 : f32
    %443 = vector.broadcast %cst_206 : f32 to vector<16x1xf32>
    %444 = arith.divf %442, %443 : vector<16x1xf32>
    %445 = vector.broadcast %444 : vector<16x1xf32> to vector<16x32xf32>
    %446 = arith.subf %436, %445 : vector<16x32xf32>
    %447 = arith.mulf %446, %446 : vector<16x32xf32>
    %cst_207 = arith.constant dense<0.000000e+00> : vector<16xf32>
    %448 = vector.multi_reduction <add>, %447, %cst_207 [1] : vector<16x32xf32> to vector<16xf32>
    %449 = vector.shape_cast %448 : vector<16xf32> to vector<16x1xf32>
    %cst_208 = arith.constant 3.200000e+01 : f32
    %450 = vector.broadcast %cst_208 : f32 to vector<16x1xf32>
    %451 = arith.divf %449, %450 : vector<16x1xf32>
    %cst_209 = arith.constant 9.99999974E-6 : f32
    %452 = vector.broadcast %cst_209 : f32 to vector<16x1xf32>
    %453 = arith.addf %451, %452 : vector<16x1xf32>
    %454 = math.rsqrt %453 : vector<16x1xf32>
    %455 = vector.broadcast %454 : vector<16x1xf32> to vector<16x32xf32>
    %456 = arith.mulf %446, %455 : vector<16x32xf32>
    %457 = vector.broadcast %438 : vector<1x32xf32> to vector<16x32xf32>
    %458 = arith.mulf %456, %457 : vector<16x32xf32>
    %459 = vector.broadcast %440 : vector<1x32xf32> to vector<16x32xf32>
    %460 = arith.addf %458, %459 : vector<16x32xf32>
    %c1_210 = arith.constant 1 : index
    %c0_211 = arith.constant 0 : index
    %c0_212 = arith.constant 0 : index
    %461 = vector.load %arg3[%c1_210, %c0_211, %c0_212] : memref<2x32x96xf32, #tpu.memory_space<vmem>>, vector<1x32x96xf32>
    %462 = vector.shape_cast %461 : vector<1x32x96xf32> to vector<32x96xf32>
    %cst_213 = arith.constant dense<0.000000e+00> : vector<16x96xf32>
    %463 = tpu.matmul %460, %462, %cst_213 {dimension_numbers = #tpu.dot_dimension_numbers<[1], [0], [0], [1], [0, 0, 1, 1], [], []>} : vector<16x32xf32>, vector<32x96xf32>, vector<16x96xf32> -> vector<16x96xf32>
    %c1_214 = arith.constant 1 : index
    %c0_215 = arith.constant 0 : index
    %c0_216 = arith.constant 0 : index
    %464 = vector.load %arg4[%c1_214, %c0_215, %c0_216] : memref<2x1x96xf32, #tpu.memory_space<vmem>>, vector<1x1x96xf32>
    %465 = vector.shape_cast %464 : vector<1x1x96xf32> to vector<1x96xf32>
    %466 = vector.broadcast %465 : vector<1x96xf32> to vector<16x96xf32>
    %467 = arith.addf %463, %466 : vector<16x96xf32>
    %468 = vector.extract_strided_slice %467 {offsets = [0, 0], sizes = [8, 32], strides = [1, 1]} : vector<16x96xf32> to vector<8x32xf32>
    %469 = vector.extract_strided_slice %467 {offsets = [0, 32], sizes = [8, 32], strides = [1, 1]} : vector<16x96xf32> to vector<8x32xf32>
    %470 = vector.extract_strided_slice %467 {offsets = [0, 64], sizes = [8, 32], strides = [1, 1]} : vector<16x96xf32> to vector<8x32xf32>
    %471 = vector.extract_strided_slice %468 {offsets = [0, 0], sizes = [8, 8], strides = [1, 1]} : vector<8x32xf32> to vector<8x8xf32>
    %472 = vector.extract_strided_slice %469 {offsets = [0, 0], sizes = [8, 8], strides = [1, 1]} : vector<8x32xf32> to vector<8x8xf32>
    %473 = vector.extract_strided_slice %470 {offsets = [0, 0], sizes = [8, 8], strides = [1, 1]} : vector<8x32xf32> to vector<8x8xf32>
    %474 = tpu.transpose %472, [1, 0] : vector<8x8xf32> -> vector<8x8xf32>
    %cst_217 = arith.constant dense<0.000000e+00> : vector<8x8xf32>
    %475 = tpu.matmul %471, %474, %cst_217 {dimension_numbers = #tpu.dot_dimension_numbers<[1], [0], [0], [1], [0, 0, 1, 1], [], []>} : vector<8x8xf32>, vector<8x8xf32>, vector<8x8xf32> -> vector<8x8xf32>
    %cst_218 = arith.constant 0.353553385 : f32
    %476 = vector.broadcast %cst_218 : f32 to vector<8x8xf32>
    %477 = arith.mulf %475, %476 : vector<8x8xf32>
    %478 = arith.addf %477, %1 : vector<8x8xf32>
    %cst_219 = arith.constant dense<0xFF800000> : vector<8xf32>
    %479 = vector.multi_reduction <maximumf>, %478, %cst_219 [1] : vector<8x8xf32> to vector<8xf32>
    %480 = vector.shape_cast %479 : vector<8xf32> to vector<8x1xf32>
    %481 = vector.broadcast %480 : vector<8x1xf32> to vector<8x8xf32>
    %482 = arith.subf %478, %481 : vector<8x8xf32>
    %483 = math.exp %482 : vector<8x8xf32>
    %cst_220 = arith.constant dense<0.000000e+00> : vector<8xf32>
    %484 = vector.multi_reduction <add>, %483, %cst_220 [1] : vector<8x8xf32> to vector<8xf32>
    %485 = vector.shape_cast %484 : vector<8xf32> to vector<8x1xf32>
    %486 = tpu.reciprocal %485 {approx = true} : vector<8x1xf32> -> vector<8x1xf32>
    %487 = vector.broadcast %486 : vector<8x1xf32> to vector<8x8xf32>
    %488 = arith.mulf %483, %487 : vector<8x8xf32>
    %cst_221 = arith.constant dense<0.000000e+00> : vector<8x8xf32>
    %489 = tpu.matmul %488, %473, %cst_221 {dimension_numbers = #tpu.dot_dimension_numbers<[1], [0], [0], [1], [0, 0, 1, 1], [], []>} : vector<8x8xf32>, vector<8x8xf32>, vector<8x8xf32> -> vector<8x8xf32>
    %c0_222 = arith.constant 0 : index
    %c0_223 = arith.constant 0 : index
    %490 = vector.load %arg26[%c0_222, %c0_223] : memref<16x32xf32, #tpu.memory_space<vmem>>, vector<8x8xf32>
    tpu.vector_store %arg26[%c0_222, %c0_223], %489 {strides = array<i32>} : memref<16x32xf32, #tpu.memory_space<vmem>>, vector<8x8xf32>,
    %491 = vector.extract_strided_slice %468 {offsets = [0, 8], sizes = [8, 8], strides = [1, 1]} : vector<8x32xf32> to vector<8x8xf32>
    %492 = vector.extract_strided_slice %469 {offsets = [0, 8], sizes = [8, 8], strides = [1, 1]} : vector<8x32xf32> to vector<8x8xf32>
    %493 = vector.extract_strided_slice %470 {offsets = [0, 8], sizes = [8, 8], strides = [1, 1]} : vector<8x32xf32> to vector<8x8xf32>
    %494 = tpu.transpose %492, [1, 0] : vector<8x8xf32> -> vector<8x8xf32>
    %cst_224 = arith.constant dense<0.000000e+00> : vector<8x8xf32>
    %495 = tpu.matmul %491, %494, %cst_224 {dimension_numbers = #tpu.dot_dimension_numbers<[1], [0], [0], [1], [0, 0, 1, 1], [], []>} : vector<8x8xf32>, vector<8x8xf32>, vector<8x8xf32> -> vector<8x8xf32>
    %cst_225 = arith.constant 0.353553385 : f32
    %496 = vector.broadcast %cst_225 : f32 to vector<8x8xf32>
    %497 = arith.mulf %495, %496 : vector<8x8xf32>
    %498 = arith.addf %497, %1 : vector<8x8xf32>
    %cst_226 = arith.constant dense<0xFF800000> : vector<8xf32>
    %499 = vector.multi_reduction <maximumf>, %498, %cst_226 [1] : vector<8x8xf32> to vector<8xf32>
    %500 = vector.shape_cast %499 : vector<8xf32> to vector<8x1xf32>
    %501 = vector.broadcast %500 : vector<8x1xf32> to vector<8x8xf32>
    %502 = arith.subf %498, %501 : vector<8x8xf32>
    %503 = math.exp %502 : vector<8x8xf32>
    %cst_227 = arith.constant dense<0.000000e+00> : vector<8xf32>
    %504 = vector.multi_reduction <add>, %503, %cst_227 [1] : vector<8x8xf32> to vector<8xf32>
    %505 = vector.shape_cast %504 : vector<8xf32> to vector<8x1xf32>
    %506 = tpu.reciprocal %505 {approx = true} : vector<8x1xf32> -> vector<8x1xf32>
    %507 = vector.broadcast %506 : vector<8x1xf32> to vector<8x8xf32>
    %508 = arith.mulf %503, %507 : vector<8x8xf32>
    %cst_228 = arith.constant dense<0.000000e+00> : vector<8x8xf32>
    %509 = tpu.matmul %508, %493, %cst_228 {dimension_numbers = #tpu.dot_dimension_numbers<[1], [0], [0], [1], [0, 0, 1, 1], [], []>} : vector<8x8xf32>, vector<8x8xf32>, vector<8x8xf32> -> vector<8x8xf32>
    %c0_229 = arith.constant 0 : index
    %c8_230 = arith.constant 8 : index
    %510 = vector.load %arg26[%c0_229, %c8_230] : memref<16x32xf32, #tpu.memory_space<vmem>>, vector<8x8xf32>
    tpu.vector_store %arg26[%c0_229, %c8_230], %509 {strides = array<i32>} : memref<16x32xf32, #tpu.memory_space<vmem>>, vector<8x8xf32>,
    %511 = vector.extract_strided_slice %468 {offsets = [0, 16], sizes = [8, 8], strides = [1, 1]} : vector<8x32xf32> to vector<8x8xf32>
    %512 = vector.extract_strided_slice %469 {offsets = [0, 16], sizes = [8, 8], strides = [1, 1]} : vector<8x32xf32> to vector<8x8xf32>
    %513 = vector.extract_strided_slice %470 {offsets = [0, 16], sizes = [8, 8], strides = [1, 1]} : vector<8x32xf32> to vector<8x8xf32>
    %514 = tpu.transpose %512, [1, 0] : vector<8x8xf32> -> vector<8x8xf32>
    %cst_231 = arith.constant dense<0.000000e+00> : vector<8x8xf32>
    %515 = tpu.matmul %511, %514, %cst_231 {dimension_numbers = #tpu.dot_dimension_numbers<[1], [0], [0], [1], [0, 0, 1, 1], [], []>} : vector<8x8xf32>, vector<8x8xf32>, vector<8x8xf32> -> vector<8x8xf32>
    %cst_232 = arith.constant 0.353553385 : f32
    %516 = vector.broadcast %cst_232 : f32 to vector<8x8xf32>
    %517 = arith.mulf %515, %516 : vector<8x8xf32>
    %518 = arith.addf %517, %1 : vector<8x8xf32>
    %cst_233 = arith.constant dense<0xFF800000> : vector<8xf32>
    %519 = vector.multi_reduction <maximumf>, %518, %cst_233 [1] : vector<8x8xf32> to vector<8xf32>
    %520 = vector.shape_cast %519 : vector<8xf32> to vector<8x1xf32>
    %521 = vector.broadcast %520 : vector<8x1xf32> to vector<8x8xf32>
    %522 = arith.subf %518, %521 : vector<8x8xf32>
    %523 = math.exp %522 : vector<8x8xf32>
    %cst_234 = arith.constant dense<0.000000e+00> : vector<8xf32>
    %524 = vector.multi_reduction <add>, %523, %cst_234 [1] : vector<8x8xf32> to vector<8xf32>
    %525 = vector.shape_cast %524 : vector<8xf32> to vector<8x1xf32>
    %526 = tpu.reciprocal %525 {approx = true} : vector<8x1xf32> -> vector<8x1xf32>
    %527 = vector.broadcast %526 : vector<8x1xf32> to vector<8x8xf32>
    %528 = arith.mulf %523, %527 : vector<8x8xf32>
    %cst_235 = arith.constant dense<0.000000e+00> : vector<8x8xf32>
    %529 = tpu.matmul %528, %513, %cst_235 {dimension_numbers = #tpu.dot_dimension_numbers<[1], [0], [0], [1], [0, 0, 1, 1], [], []>} : vector<8x8xf32>, vector<8x8xf32>, vector<8x8xf32> -> vector<8x8xf32>
    %c0_236 = arith.constant 0 : index
    %c16_237 = arith.constant 16 : index
    %530 = vector.load %arg26[%c0_236, %c16_237] : memref<16x32xf32, #tpu.memory_space<vmem>>, vector<8x8xf32>
    tpu.vector_store %arg26[%c0_236, %c16_237], %529 {strides = array<i32>} : memref<16x32xf32, #tpu.memory_space<vmem>>, vector<8x8xf32>,
    %531 = vector.extract_strided_slice %468 {offsets = [0, 24], sizes = [8, 8], strides = [1, 1]} : vector<8x32xf32> to vector<8x8xf32>
    %532 = vector.extract_strided_slice %469 {offsets = [0, 24], sizes = [8, 8], strides = [1, 1]} : vector<8x32xf32> to vector<8x8xf32>
    %533 = vector.extract_strided_slice %470 {offsets = [0, 24], sizes = [8, 8], strides = [1, 1]} : vector<8x32xf32> to vector<8x8xf32>
    %534 = tpu.transpose %532, [1, 0] : vector<8x8xf32> -> vector<8x8xf32>
    %cst_238 = arith.constant dense<0.000000e+00> : vector<8x8xf32>
    %535 = tpu.matmul %531, %534, %cst_238 {dimension_numbers = #tpu.dot_dimension_numbers<[1], [0], [0], [1], [0, 0, 1, 1], [], []>} : vector<8x8xf32>, vector<8x8xf32>, vector<8x8xf32> -> vector<8x8xf32>
    %cst_239 = arith.constant 0.353553385 : f32
    %536 = vector.broadcast %cst_239 : f32 to vector<8x8xf32>
    %537 = arith.mulf %535, %536 : vector<8x8xf32>
    %538 = arith.addf %537, %1 : vector<8x8xf32>
    %cst_240 = arith.constant dense<0xFF800000> : vector<8xf32>
    %539 = vector.multi_reduction <maximumf>, %538, %cst_240 [1] : vector<8x8xf32> to vector<8xf32>
    %540 = vector.shape_cast %539 : vector<8xf32> to vector<8x1xf32>
    %541 = vector.broadcast %540 : vector<8x1xf32> to vector<8x8xf32>
    %542 = arith.subf %538, %541 : vector<8x8xf32>
    %543 = math.exp %542 : vector<8x8xf32>
    %cst_241 = arith.constant dense<0.000000e+00> : vector<8xf32>
    %544 = vector.multi_reduction <add>, %543, %cst_241 [1] : vector<8x8xf32> to vector<8xf32>
    %545 = vector.shape_cast %544 : vector<8xf32> to vector<8x1xf32>
    %546 = tpu.reciprocal %545 {approx = true} : vector<8x1xf32> -> vector<8x1xf32>
    %547 = vector.broadcast %546 : vector<8x1xf32> to vector<8x8xf32>
    %548 = arith.mulf %543, %547 : vector<8x8xf32>
    %cst_242 = arith.constant dense<0.000000e+00> : vector<8x8xf32>
    %549 = tpu.matmul %548, %533, %cst_242 {dimension_numbers = #tpu.dot_dimension_numbers<[1], [0], [0], [1], [0, 0, 1, 1], [], []>} : vector<8x8xf32>, vector<8x8xf32>, vector<8x8xf32> -> vector<8x8xf32>
    %c0_243 = arith.constant 0 : index
    %c24_244 = arith.constant 24 : index
    %550 = vector.load %arg26[%c0_243, %c24_244] : memref<16x32xf32, #tpu.memory_space<vmem>>, vector<8x8xf32>
    tpu.vector_store %arg26[%c0_243, %c24_244], %549 {strides = array<i32>} : memref<16x32xf32, #tpu.memory_space<vmem>>, vector<8x8xf32>,
    %551 = vector.extract_strided_slice %467 {offsets = [8, 0], sizes = [8, 32], strides = [1, 1]} : vector<16x96xf32> to vector<8x32xf32>
    %552 = vector.extract_strided_slice %467 {offsets = [8, 32], sizes = [8, 32], strides = [1, 1]} : vector<16x96xf32> to vector<8x32xf32>
    %553 = vector.extract_strided_slice %467 {offsets = [8, 64], sizes = [8, 32], strides = [1, 1]} : vector<16x96xf32> to vector<8x32xf32>
    %554 = vector.extract_strided_slice %551 {offsets = [0, 0], sizes = [8, 8], strides = [1, 1]} : vector<8x32xf32> to vector<8x8xf32>
    %555 = vector.extract_strided_slice %552 {offsets = [0, 0], sizes = [8, 8], strides = [1, 1]} : vector<8x32xf32> to vector<8x8xf32>
    %556 = vector.extract_strided_slice %553 {offsets = [0, 0], sizes = [8, 8], strides = [1, 1]} : vector<8x32xf32> to vector<8x8xf32>
    %557 = tpu.transpose %555, [1, 0] : vector<8x8xf32> -> vector<8x8xf32>
    %cst_245 = arith.constant dense<0.000000e+00> : vector<8x8xf32>
    %558 = tpu.matmul %554, %557, %cst_245 {dimension_numbers = #tpu.dot_dimension_numbers<[1], [0], [0], [1], [0, 0, 1, 1], [], []>} : vector<8x8xf32>, vector<8x8xf32>, vector<8x8xf32> -> vector<8x8xf32>
    %cst_246 = arith.constant 0.353553385 : f32
    %559 = vector.broadcast %cst_246 : f32 to vector<8x8xf32>
    %560 = arith.mulf %558, %559 : vector<8x8xf32>
    %561 = arith.addf %560, %1 : vector<8x8xf32>
    %cst_247 = arith.constant dense<0xFF800000> : vector<8xf32>
    %562 = vector.multi_reduction <maximumf>, %561, %cst_247 [1] : vector<8x8xf32> to vector<8xf32>
    %563 = vector.shape_cast %562 : vector<8xf32> to vector<8x1xf32>
    %564 = vector.broadcast %563 : vector<8x1xf32> to vector<8x8xf32>
    %565 = arith.subf %561, %564 : vector<8x8xf32>
    %566 = math.exp %565 : vector<8x8xf32>
    %cst_248 = arith.constant dense<0.000000e+00> : vector<8xf32>
    %567 = vector.multi_reduction <add>, %566, %cst_248 [1] : vector<8x8xf32> to vector<8xf32>
    %568 = vector.shape_cast %567 : vector<8xf32> to vector<8x1xf32>
    %569 = tpu.reciprocal %568 {approx = true} : vector<8x1xf32> -> vector<8x1xf32>
    %570 = vector.broadcast %569 : vector<8x1xf32> to vector<8x8xf32>
    %571 = arith.mulf %566, %570 : vector<8x8xf32>
    %cst_249 = arith.constant dense<0.000000e+00> : vector<8x8xf32>
    %572 = tpu.matmul %571, %556, %cst_249 {dimension_numbers = #tpu.dot_dimension_numbers<[1], [0], [0], [1], [0, 0, 1, 1], [], []>} : vector<8x8xf32>, vector<8x8xf32>, vector<8x8xf32> -> vector<8x8xf32>
    %c8_250 = arith.constant 8 : index
    %c0_251 = arith.constant 0 : index
    %573 = vector.load %arg26[%c8_250, %c0_251] : memref<16x32xf32, #tpu.memory_space<vmem>>, vector<8x8xf32>
    tpu.vector_store %arg26[%c8_250, %c0_251], %572 {strides = array<i32>} : memref<16x32xf32, #tpu.memory_space<vmem>>, vector<8x8xf32>,
    %574 = vector.extract_strided_slice %551 {offsets = [0, 8], sizes = [8, 8], strides = [1, 1]} : vector<8x32xf32> to vector<8x8xf32>
    %575 = vector.extract_strided_slice %552 {offsets = [0, 8], sizes = [8, 8], strides = [1, 1]} : vector<8x32xf32> to vector<8x8xf32>
    %576 = vector.extract_strided_slice %553 {offsets = [0, 8], sizes = [8, 8], strides = [1, 1]} : vector<8x32xf32> to vector<8x8xf32>
    %577 = tpu.transpose %575, [1, 0] : vector<8x8xf32> -> vector<8x8xf32>
    %cst_252 = arith.constant dense<0.000000e+00> : vector<8x8xf32>
    %578 = tpu.matmul %574, %577, %cst_252 {dimension_numbers = #tpu.dot_dimension_numbers<[1], [0], [0], [1], [0, 0, 1, 1], [], []>} : vector<8x8xf32>, vector<8x8xf32>, vector<8x8xf32> -> vector<8x8xf32>
    %cst_253 = arith.constant 0.353553385 : f32
    %579 = vector.broadcast %cst_253 : f32 to vector<8x8xf32>
    %580 = arith.mulf %578, %579 : vector<8x8xf32>
    %581 = arith.addf %580, %1 : vector<8x8xf32>
    %cst_254 = arith.constant dense<0xFF800000> : vector<8xf32>
    %582 = vector.multi_reduction <maximumf>, %581, %cst_254 [1] : vector<8x8xf32> to vector<8xf32>
    %583 = vector.shape_cast %582 : vector<8xf32> to vector<8x1xf32>
    %584 = vector.broadcast %583 : vector<8x1xf32> to vector<8x8xf32>
    %585 = arith.subf %581, %584 : vector<8x8xf32>
    %586 = math.exp %585 : vector<8x8xf32>
    %cst_255 = arith.constant dense<0.000000e+00> : vector<8xf32>
    %587 = vector.multi_reduction <add>, %586, %cst_255 [1] : vector<8x8xf32> to vector<8xf32>
    %588 = vector.shape_cast %587 : vector<8xf32> to vector<8x1xf32>
    %589 = tpu.reciprocal %588 {approx = true} : vector<8x1xf32> -> vector<8x1xf32>
    %590 = vector.broadcast %589 : vector<8x1xf32> to vector<8x8xf32>
    %591 = arith.mulf %586, %590 : vector<8x8xf32>
    %cst_256 = arith.constant dense<0.000000e+00> : vector<8x8xf32>
    %592 = tpu.matmul %591, %576, %cst_256 {dimension_numbers = #tpu.dot_dimension_numbers<[1], [0], [0], [1], [0, 0, 1, 1], [], []>} : vector<8x8xf32>, vector<8x8xf32>, vector<8x8xf32> -> vector<8x8xf32>
    %c8_257 = arith.constant 8 : index
    %c8_258 = arith.constant 8 : index
    %593 = vector.load %arg26[%c8_257, %c8_258] : memref<16x32xf32, #tpu.memory_space<vmem>>, vector<8x8xf32>
    tpu.vector_store %arg26[%c8_257, %c8_258], %592 {strides = array<i32>} : memref<16x32xf32, #tpu.memory_space<vmem>>, vector<8x8xf32>,
    %594 = vector.extract_strided_slice %551 {offsets = [0, 16], sizes = [8, 8], strides = [1, 1]} : vector<8x32xf32> to vector<8x8xf32>
    %595 = vector.extract_strided_slice %552 {offsets = [0, 16], sizes = [8, 8], strides = [1, 1]} : vector<8x32xf32> to vector<8x8xf32>
    %596 = vector.extract_strided_slice %553 {offsets = [0, 16], sizes = [8, 8], strides = [1, 1]} : vector<8x32xf32> to vector<8x8xf32>
    %597 = tpu.transpose %595, [1, 0] : vector<8x8xf32> -> vector<8x8xf32>
    %cst_259 = arith.constant dense<0.000000e+00> : vector<8x8xf32>
    %598 = tpu.matmul %594, %597, %cst_259 {dimension_numbers = #tpu.dot_dimension_numbers<[1], [0], [0], [1], [0, 0, 1, 1], [], []>} : vector<8x8xf32>, vector<8x8xf32>, vector<8x8xf32> -> vector<8x8xf32>
    %cst_260 = arith.constant 0.353553385 : f32
    %599 = vector.broadcast %cst_260 : f32 to vector<8x8xf32>
    %600 = arith.mulf %598, %599 : vector<8x8xf32>
    %601 = arith.addf %600, %1 : vector<8x8xf32>
    %cst_261 = arith.constant dense<0xFF800000> : vector<8xf32>
    %602 = vector.multi_reduction <maximumf>, %601, %cst_261 [1] : vector<8x8xf32> to vector<8xf32>
    %603 = vector.shape_cast %602 : vector<8xf32> to vector<8x1xf32>
    %604 = vector.broadcast %603 : vector<8x1xf32> to vector<8x8xf32>
    %605 = arith.subf %601, %604 : vector<8x8xf32>
    %606 = math.exp %605 : vector<8x8xf32>
    %cst_262 = arith.constant dense<0.000000e+00> : vector<8xf32>
    %607 = vector.multi_reduction <add>, %606, %cst_262 [1] : vector<8x8xf32> to vector<8xf32>
    %608 = vector.shape_cast %607 : vector<8xf32> to vector<8x1xf32>
    %609 = tpu.reciprocal %608 {approx = true} : vector<8x1xf32> -> vector<8x1xf32>
    %610 = vector.broadcast %609 : vector<8x1xf32> to vector<8x8xf32>
    %611 = arith.mulf %606, %610 : vector<8x8xf32>
    %cst_263 = arith.constant dense<0.000000e+00> : vector<8x8xf32>
    %612 = tpu.matmul %611, %596, %cst_263 {dimension_numbers = #tpu.dot_dimension_numbers<[1], [0], [0], [1], [0, 0, 1, 1], [], []>} : vector<8x8xf32>, vector<8x8xf32>, vector<8x8xf32> -> vector<8x8xf32>
    %c8_264 = arith.constant 8 : index
    %c16_265 = arith.constant 16 : index
    %613 = vector.load %arg26[%c8_264, %c16_265] : memref<16x32xf32, #tpu.memory_space<vmem>>, vector<8x8xf32>
    tpu.vector_store %arg26[%c8_264, %c16_265], %612 {strides = array<i32>} : memref<16x32xf32, #tpu.memory_space<vmem>>, vector<8x8xf32>,
    %614 = vector.extract_strided_slice %551 {offsets = [0, 24], sizes = [8, 8], strides = [1, 1]} : vector<8x32xf32> to vector<8x8xf32>
    %615 = vector.extract_strided_slice %552 {offsets = [0, 24], sizes = [8, 8], strides = [1, 1]} : vector<8x32xf32> to vector<8x8xf32>
    %616 = vector.extract_strided_slice %553 {offsets = [0, 24], sizes = [8, 8], strides = [1, 1]} : vector<8x32xf32> to vector<8x8xf32>
    %617 = tpu.transpose %615, [1, 0] : vector<8x8xf32> -> vector<8x8xf32>
    %cst_266 = arith.constant dense<0.000000e+00> : vector<8x8xf32>
    %618 = tpu.matmul %614, %617, %cst_266 {dimension_numbers = #tpu.dot_dimension_numbers<[1], [0], [0], [1], [0, 0, 1, 1], [], []>} : vector<8x8xf32>, vector<8x8xf32>, vector<8x8xf32> -> vector<8x8xf32>
    %cst_267 = arith.constant 0.353553385 : f32
    %619 = vector.broadcast %cst_267 : f32 to vector<8x8xf32>
    %620 = arith.mulf %618, %619 : vector<8x8xf32>
    %621 = arith.addf %620, %1 : vector<8x8xf32>
    %cst_268 = arith.constant dense<0xFF800000> : vector<8xf32>
    %622 = vector.multi_reduction <maximumf>, %621, %cst_268 [1] : vector<8x8xf32> to vector<8xf32>
    %623 = vector.shape_cast %622 : vector<8xf32> to vector<8x1xf32>
    %624 = vector.broadcast %623 : vector<8x1xf32> to vector<8x8xf32>
    %625 = arith.subf %621, %624 : vector<8x8xf32>
    %626 = math.exp %625 : vector<8x8xf32>
    %cst_269 = arith.constant dense<0.000000e+00> : vector<8xf32>
    %627 = vector.multi_reduction <add>, %626, %cst_269 [1] : vector<8x8xf32> to vector<8xf32>
    %628 = vector.shape_cast %627 : vector<8xf32> to vector<8x1xf32>
    %629 = tpu.reciprocal %628 {approx = true} : vector<8x1xf32> -> vector<8x1xf32>
    %630 = vector.broadcast %629 : vector<8x1xf32> to vector<8x8xf32>
    %631 = arith.mulf %626, %630 : vector<8x8xf32>
    %cst_270 = arith.constant dense<0.000000e+00> : vector<8x8xf32>
    %632 = tpu.matmul %631, %616, %cst_270 {dimension_numbers = #tpu.dot_dimension_numbers<[1], [0], [0], [1], [0, 0, 1, 1], [], []>} : vector<8x8xf32>, vector<8x8xf32>, vector<8x8xf32> -> vector<8x8xf32>
    %c8_271 = arith.constant 8 : index
    %c24_272 = arith.constant 24 : index
    %633 = vector.load %arg26[%c8_271, %c24_272] : memref<16x32xf32, #tpu.memory_space<vmem>>, vector<8x8xf32>
    tpu.vector_store %arg26[%c8_271, %c24_272], %632 {strides = array<i32>} : memref<16x32xf32, #tpu.memory_space<vmem>>, vector<8x8xf32>,
    %c0_273 = arith.constant 0 : index
    %c0_274 = arith.constant 0 : index
    %634 = vector.load %arg26[%c0_273, %c0_274] : memref<16x32xf32, #tpu.memory_space<vmem>>, vector<16x32xf32>
    %c1_275 = arith.constant 1 : index
    %c0_276 = arith.constant 0 : index
    %c0_277 = arith.constant 0 : index
    %635 = vector.load %arg5[%c1_275, %c0_276, %c0_277] : memref<2x32x32xf32, #tpu.memory_space<vmem>>, vector<1x32x32xf32>
    %636 = vector.shape_cast %635 : vector<1x32x32xf32> to vector<32x32xf32>
    %cst_278 = arith.constant dense<0.000000e+00> : vector<16x32xf32>
    %637 = tpu.matmul %634, %636, %cst_278 {dimension_numbers = #tpu.dot_dimension_numbers<[1], [0], [0], [1], [0, 0, 1, 1], [], []>} : vector<16x32xf32>, vector<32x32xf32>, vector<16x32xf32> -> vector<16x32xf32>
    %c1_279 = arith.constant 1 : index
    %c0_280 = arith.constant 0 : index
    %c0_281 = arith.constant 0 : index
    %638 = vector.load %arg6[%c1_279, %c0_280, %c0_281] : memref<2x1x32xf32, #tpu.memory_space<vmem>>, vector<1x1x32xf32>
    %639 = vector.shape_cast %638 : vector<1x1x32xf32> to vector<1x32xf32>
    %640 = vector.broadcast %639 : vector<1x32xf32> to vector<16x32xf32>
    %641 = arith.addf %637, %640 : vector<16x32xf32>
    %642 = arith.addf %460, %641 : vector<16x32xf32>
    %c1_282 = arith.constant 1 : index
    %c0_283 = arith.constant 0 : index
    %c0_284 = arith.constant 0 : index
    %643 = vector.load %arg13[%c1_282, %c0_283, %c0_284] : memref<2x1x32xf32, #tpu.memory_space<vmem>>, vector<1x1x32xf32>
    %644 = vector.shape_cast %643 : vector<1x1x32xf32> to vector<1x32xf32>
    %c1_285 = arith.constant 1 : index
    %c0_286 = arith.constant 0 : index
    %c0_287 = arith.constant 0 : index
    %645 = vector.load %arg14[%c1_285, %c0_286, %c0_287] : memref<2x1x32xf32, #tpu.memory_space<vmem>>, vector<1x1x32xf32>
    %646 = vector.shape_cast %645 : vector<1x1x32xf32> to vector<1x32xf32>
    %cst_288 = arith.constant dense<0.000000e+00> : vector<16xf32>
    %647 = vector.multi_reduction <add>, %642, %cst_288 [1] : vector<16x32xf32> to vector<16xf32>
    %648 = vector.shape_cast %647 : vector<16xf32> to vector<16x1xf32>
    %cst_289 = arith.constant 3.200000e+01 : f32
    %649 = vector.broadcast %cst_289 : f32 to vector<16x1xf32>
    %650 = arith.divf %648, %649 : vector<16x1xf32>
    %651 = vector.broadcast %650 : vector<16x1xf32> to vector<16x32xf32>
    %652 = arith.subf %642, %651 : vector<16x32xf32>
    %653 = arith.mulf %652, %652 : vector<16x32xf32>
    %cst_290 = arith.constant dense<0.000000e+00> : vector<16xf32>
    %654 = vector.multi_reduction <add>, %653, %cst_290 [1] : vector<16x32xf32> to vector<16xf32>
    %655 = vector.shape_cast %654 : vector<16xf32> to vector<16x1xf32>
    %cst_291 = arith.constant 3.200000e+01 : f32
    %656 = vector.broadcast %cst_291 : f32 to vector<16x1xf32>
    %657 = arith.divf %655, %656 : vector<16x1xf32>
    %cst_292 = arith.constant 9.99999974E-6 : f32
    %658 = vector.broadcast %cst_292 : f32 to vector<16x1xf32>
    %659 = arith.addf %657, %658 : vector<16x1xf32>
    %660 = math.rsqrt %659 : vector<16x1xf32>
    %661 = vector.broadcast %660 : vector<16x1xf32> to vector<16x32xf32>
    %662 = arith.mulf %652, %661 : vector<16x32xf32>
    %663 = vector.broadcast %644 : vector<1x32xf32> to vector<16x32xf32>
    %664 = arith.mulf %662, %663 : vector<16x32xf32>
    %665 = vector.broadcast %646 : vector<1x32xf32> to vector<16x32xf32>
    %666 = arith.addf %664, %665 : vector<16x32xf32>
    %c1_293 = arith.constant 1 : index
    %c0_294 = arith.constant 0 : index
    %c0_295 = arith.constant 0 : index
    %667 = vector.load %arg7[%c1_293, %c0_294, %c0_295] : memref<2x32x32xf32, #tpu.memory_space<vmem>>, vector<1x32x32xf32>
    %668 = vector.shape_cast %667 : vector<1x32x32xf32> to vector<32x32xf32>
    %cst_296 = arith.constant dense<0.000000e+00> : vector<16x32xf32>
    %669 = tpu.matmul %666, %668, %cst_296 {dimension_numbers = #tpu.dot_dimension_numbers<[1], [0], [0], [1], [0, 0, 1, 1], [], []>} : vector<16x32xf32>, vector<32x32xf32>, vector<16x32xf32> -> vector<16x32xf32>
    %c1_297 = arith.constant 1 : index
    %c0_298 = arith.constant 0 : index
    %c0_299 = arith.constant 0 : index
    %670 = vector.load %arg8[%c1_297, %c0_298, %c0_299] : memref<2x1x32xf32, #tpu.memory_space<vmem>>, vector<1x1x32xf32>
    %671 = vector.shape_cast %670 : vector<1x1x32xf32> to vector<1x32xf32>
    %672 = vector.broadcast %671 : vector<1x32xf32> to vector<16x32xf32>
    %673 = arith.addf %669, %672 : vector<16x32xf32>
    %c0_300 = arith.constant 0 : index
    %c0_301 = arith.constant 0 : index
    %c0_302 = arith.constant 0 : index
    %674 = vector.load %arg1[%c0_300, %c0_301, %c0_302] : memref<2x4x32xf32, #tpu.memory_space<vmem>>, vector<1x4x32xf32>
    %675 = vector.shape_cast %674 : vector<1x4x32xf32> to vector<4x32xf32>
    %c1_303 = arith.constant 1 : index
    %c0_304 = arith.constant 0 : index
    %c0_305 = arith.constant 0 : index
    %676 = vector.load %arg9[%c1_303, %c0_304, %c0_305] : memref<2x32x64xf32, #tpu.memory_space<vmem>>, vector<1x32x64xf32>
    %677 = vector.shape_cast %676 : vector<1x32x64xf32> to vector<32x64xf32>
    %cst_306 = arith.constant dense<0.000000e+00> : vector<4x64xf32>
    %678 = tpu.matmul %675, %677, %cst_306 {dimension_numbers = #tpu.dot_dimension_numbers<[1], [0], [0], [1], [0, 0, 1, 1], [], []>} : vector<4x32xf32>, vector<32x64xf32>, vector<4x64xf32> -> vector<4x64xf32>
    %c1_307 = arith.constant 1 : index
    %c0_308 = arith.constant 0 : index
    %c0_309 = arith.constant 0 : index
    %679 = vector.load %arg10[%c1_307, %c0_308, %c0_309] : memref<2x1x64xf32, #tpu.memory_space<vmem>>, vector<1x1x64xf32>
    %680 = vector.shape_cast %679 : vector<1x1x64xf32> to vector<1x64xf32>
    %681 = vector.broadcast %680 : vector<1x64xf32> to vector<4x64xf32>
    %682 = arith.addf %678, %681 : vector<4x64xf32>
    %683 = vector.extract_strided_slice %673 {offsets = [0, 0], sizes = [8, 32], strides = [1, 1]} : vector<16x32xf32> to vector<8x32xf32>
    %684 = vector.extract_strided_slice %683 {offsets = [0, 0], sizes = [8, 8], strides = [1, 1]} : vector<8x32xf32> to vector<8x8xf32>
    %685 = vector.extract_strided_slice %682 {offsets = [0, 0], sizes = [4, 8], strides = [1, 1]} : vector<4x64xf32> to vector<4x8xf32>
    %686 = vector.extract_strided_slice %682 {offsets = [0, 32], sizes = [4, 8], strides = [1, 1]} : vector<4x64xf32> to vector<4x8xf32>
    %687 = tpu.transpose %685, [1, 0] : vector<4x8xf32> -> vector<8x4xf32>
    %cst_310 = arith.constant dense<0.000000e+00> : vector<8x4xf32>
    %688 = tpu.matmul %684, %687, %cst_310 {dimension_numbers = #tpu.dot_dimension_numbers<[1], [0], [0], [1], [0, 0, 1, 1], [], []>} : vector<8x8xf32>, vector<8x4xf32>, vector<8x4xf32> -> vector<8x4xf32>
    %cst_311 = arith.constant 0.353553385 : f32
    %689 = vector.broadcast %cst_311 : f32 to vector<8x4xf32>
    %690 = arith.mulf %688, %689 : vector<8x4xf32>
    %cst_312 = arith.constant dense<0xFF800000> : vector<8xf32>
    %691 = vector.multi_reduction <maximumf>, %690, %cst_312 [1] : vector<8x4xf32> to vector<8xf32>
    %692 = vector.shape_cast %691 : vector<8xf32> to vector<8x1xf32>
    %693 = vector.broadcast %692 : vector<8x1xf32> to vector<8x4xf32>
    %694 = arith.subf %690, %693 : vector<8x4xf32>
    %695 = math.exp %694 : vector<8x4xf32>
    %cst_313 = arith.constant dense<0.000000e+00> : vector<8xf32>
    %696 = vector.multi_reduction <add>, %695, %cst_313 [1] : vector<8x4xf32> to vector<8xf32>
    %697 = vector.shape_cast %696 : vector<8xf32> to vector<8x1xf32>
    %698 = tpu.reciprocal %697 {approx = true} : vector<8x1xf32> -> vector<8x1xf32>
    %699 = vector.broadcast %698 : vector<8x1xf32> to vector<8x4xf32>
    %700 = arith.mulf %695, %699 : vector<8x4xf32>
    %cst_314 = arith.constant dense<0.000000e+00> : vector<8x8xf32>
    %701 = tpu.matmul %700, %686, %cst_314 {dimension_numbers = #tpu.dot_dimension_numbers<[1], [0], [0], [1], [0, 0, 1, 1], [], []>} : vector<8x4xf32>, vector<4x8xf32>, vector<8x8xf32> -> vector<8x8xf32>
    %c0_315 = arith.constant 0 : index
    %c0_316 = arith.constant 0 : index
    %702 = vector.load %arg26[%c0_315, %c0_316] : memref<16x32xf32, #tpu.memory_space<vmem>>, vector<8x8xf32>
    tpu.vector_store %arg26[%c0_315, %c0_316], %701 {strides = array<i32>} : memref<16x32xf32, #tpu.memory_space<vmem>>, vector<8x8xf32>,
    %703 = vector.extract_strided_slice %683 {offsets = [0, 8], sizes = [8, 8], strides = [1, 1]} : vector<8x32xf32> to vector<8x8xf32>
    %704 = vector.extract_strided_slice %682 {offsets = [0, 8], sizes = [4, 8], strides = [1, 1]} : vector<4x64xf32> to vector<4x8xf32>
    %705 = vector.extract_strided_slice %682 {offsets = [0, 40], sizes = [4, 8], strides = [1, 1]} : vector<4x64xf32> to vector<4x8xf32>
    %706 = tpu.transpose %704, [1, 0] : vector<4x8xf32> -> vector<8x4xf32>
    %cst_317 = arith.constant dense<0.000000e+00> : vector<8x4xf32>
    %707 = tpu.matmul %703, %706, %cst_317 {dimension_numbers = #tpu.dot_dimension_numbers<[1], [0], [0], [1], [0, 0, 1, 1], [], []>} : vector<8x8xf32>, vector<8x4xf32>, vector<8x4xf32> -> vector<8x4xf32>
    %cst_318 = arith.constant 0.353553385 : f32
    %708 = vector.broadcast %cst_318 : f32 to vector<8x4xf32>
    %709 = arith.mulf %707, %708 : vector<8x4xf32>
    %cst_319 = arith.constant dense<0xFF800000> : vector<8xf32>
    %710 = vector.multi_reduction <maximumf>, %709, %cst_319 [1] : vector<8x4xf32> to vector<8xf32>
    %711 = vector.shape_cast %710 : vector<8xf32> to vector<8x1xf32>
    %712 = vector.broadcast %711 : vector<8x1xf32> to vector<8x4xf32>
    %713 = arith.subf %709, %712 : vector<8x4xf32>
    %714 = math.exp %713 : vector<8x4xf32>
    %cst_320 = arith.constant dense<0.000000e+00> : vector<8xf32>
    %715 = vector.multi_reduction <add>, %714, %cst_320 [1] : vector<8x4xf32> to vector<8xf32>
    %716 = vector.shape_cast %715 : vector<8xf32> to vector<8x1xf32>
    %717 = tpu.reciprocal %716 {approx = true} : vector<8x1xf32> -> vector<8x1xf32>
    %718 = vector.broadcast %717 : vector<8x1xf32> to vector<8x4xf32>
    %719 = arith.mulf %714, %718 : vector<8x4xf32>
    %cst_321 = arith.constant dense<0.000000e+00> : vector<8x8xf32>
    %720 = tpu.matmul %719, %705, %cst_321 {dimension_numbers = #tpu.dot_dimension_numbers<[1], [0], [0], [1], [0, 0, 1, 1], [], []>} : vector<8x4xf32>, vector<4x8xf32>, vector<8x8xf32> -> vector<8x8xf32>
    %c0_322 = arith.constant 0 : index
    %c8_323 = arith.constant 8 : index
    %721 = vector.load %arg26[%c0_322, %c8_323] : memref<16x32xf32, #tpu.memory_space<vmem>>, vector<8x8xf32>
    tpu.vector_store %arg26[%c0_322, %c8_323], %720 {strides = array<i32>} : memref<16x32xf32, #tpu.memory_space<vmem>>, vector<8x8xf32>,
    %722 = vector.extract_strided_slice %683 {offsets = [0, 16], sizes = [8, 8], strides = [1, 1]} : vector<8x32xf32> to vector<8x8xf32>
    %723 = vector.extract_strided_slice %682 {offsets = [0, 16], sizes = [4, 8], strides = [1, 1]} : vector<4x64xf32> to vector<4x8xf32>
    %724 = vector.extract_strided_slice %682 {offsets = [0, 48], sizes = [4, 8], strides = [1, 1]} : vector<4x64xf32> to vector<4x8xf32>
    %725 = tpu.transpose %723, [1, 0] : vector<4x8xf32> -> vector<8x4xf32>
    %cst_324 = arith.constant dense<0.000000e+00> : vector<8x4xf32>
    %726 = tpu.matmul %722, %725, %cst_324 {dimension_numbers = #tpu.dot_dimension_numbers<[1], [0], [0], [1], [0, 0, 1, 1], [], []>} : vector<8x8xf32>, vector<8x4xf32>, vector<8x4xf32> -> vector<8x4xf32>
    %cst_325 = arith.constant 0.353553385 : f32
    %727 = vector.broadcast %cst_325 : f32 to vector<8x4xf32>
    %728 = arith.mulf %726, %727 : vector<8x4xf32>
    %cst_326 = arith.constant dense<0xFF800000> : vector<8xf32>
    %729 = vector.multi_reduction <maximumf>, %728, %cst_326 [1] : vector<8x4xf32> to vector<8xf32>
    %730 = vector.shape_cast %729 : vector<8xf32> to vector<8x1xf32>
    %731 = vector.broadcast %730 : vector<8x1xf32> to vector<8x4xf32>
    %732 = arith.subf %728, %731 : vector<8x4xf32>
    %733 = math.exp %732 : vector<8x4xf32>
    %cst_327 = arith.constant dense<0.000000e+00> : vector<8xf32>
    %734 = vector.multi_reduction <add>, %733, %cst_327 [1] : vector<8x4xf32> to vector<8xf32>
    %735 = vector.shape_cast %734 : vector<8xf32> to vector<8x1xf32>
    %736 = tpu.reciprocal %735 {approx = true} : vector<8x1xf32> -> vector<8x1xf32>
    %737 = vector.broadcast %736 : vector<8x1xf32> to vector<8x4xf32>
    %738 = arith.mulf %733, %737 : vector<8x4xf32>
    %cst_328 = arith.constant dense<0.000000e+00> : vector<8x8xf32>
    %739 = tpu.matmul %738, %724, %cst_328 {dimension_numbers = #tpu.dot_dimension_numbers<[1], [0], [0], [1], [0, 0, 1, 1], [], []>} : vector<8x4xf32>, vector<4x8xf32>, vector<8x8xf32> -> vector<8x8xf32>
    %c0_329 = arith.constant 0 : index
    %c16_330 = arith.constant 16 : index
    %740 = vector.load %arg26[%c0_329, %c16_330] : memref<16x32xf32, #tpu.memory_space<vmem>>, vector<8x8xf32>
    tpu.vector_store %arg26[%c0_329, %c16_330], %739 {strides = array<i32>} : memref<16x32xf32, #tpu.memory_space<vmem>>, vector<8x8xf32>,
    %741 = vector.extract_strided_slice %683 {offsets = [0, 24], sizes = [8, 8], strides = [1, 1]} : vector<8x32xf32> to vector<8x8xf32>
    %742 = vector.extract_strided_slice %682 {offsets = [0, 24], sizes = [4, 8], strides = [1, 1]} : vector<4x64xf32> to vector<4x8xf32>
    %743 = vector.extract_strided_slice %682 {offsets = [0, 56], sizes = [4, 8], strides = [1, 1]} : vector<4x64xf32> to vector<4x8xf32>
    %744 = tpu.transpose %742, [1, 0] : vector<4x8xf32> -> vector<8x4xf32>
    %cst_331 = arith.constant dense<0.000000e+00> : vector<8x4xf32>
    %745 = tpu.matmul %741, %744, %cst_331 {dimension_numbers = #tpu.dot_dimension_numbers<[1], [0], [0], [1], [0, 0, 1, 1], [], []>} : vector<8x8xf32>, vector<8x4xf32>, vector<8x4xf32> -> vector<8x4xf32>
    %cst_332 = arith.constant 0.353553385 : f32
    %746 = vector.broadcast %cst_332 : f32 to vector<8x4xf32>
    %747 = arith.mulf %745, %746 : vector<8x4xf32>
    %cst_333 = arith.constant dense<0xFF800000> : vector<8xf32>
    %748 = vector.multi_reduction <maximumf>, %747, %cst_333 [1] : vector<8x4xf32> to vector<8xf32>
    %749 = vector.shape_cast %748 : vector<8xf32> to vector<8x1xf32>
    %750 = vector.broadcast %749 : vector<8x1xf32> to vector<8x4xf32>
    %751 = arith.subf %747, %750 : vector<8x4xf32>
    %752 = math.exp %751 : vector<8x4xf32>
    %cst_334 = arith.constant dense<0.000000e+00> : vector<8xf32>
    %753 = vector.multi_reduction <add>, %752, %cst_334 [1] : vector<8x4xf32> to vector<8xf32>
    %754 = vector.shape_cast %753 : vector<8xf32> to vector<8x1xf32>
    %755 = tpu.reciprocal %754 {approx = true} : vector<8x1xf32> -> vector<8x1xf32>
    %756 = vector.broadcast %755 : vector<8x1xf32> to vector<8x4xf32>
    %757 = arith.mulf %752, %756 : vector<8x4xf32>
    %cst_335 = arith.constant dense<0.000000e+00> : vector<8x8xf32>
    %758 = tpu.matmul %757, %743, %cst_335 {dimension_numbers = #tpu.dot_dimension_numbers<[1], [0], [0], [1], [0, 0, 1, 1], [], []>} : vector<8x4xf32>, vector<4x8xf32>, vector<8x8xf32> -> vector<8x8xf32>
    %c0_336 = arith.constant 0 : index
    %c24_337 = arith.constant 24 : index
    %759 = vector.load %arg26[%c0_336, %c24_337] : memref<16x32xf32, #tpu.memory_space<vmem>>, vector<8x8xf32>
    tpu.vector_store %arg26[%c0_336, %c24_337], %758 {strides = array<i32>} : memref<16x32xf32, #tpu.memory_space<vmem>>, vector<8x8xf32>,
    %c1_338 = arith.constant 1 : index
    %c0_339 = arith.constant 0 : index
    %c0_340 = arith.constant 0 : index
    %760 = vector.load %arg1[%c1_338, %c0_339, %c0_340] : memref<2x4x32xf32, #tpu.memory_space<vmem>>, vector<1x4x32xf32>
    %761 = vector.shape_cast %760 : vector<1x4x32xf32> to vector<4x32xf32>
    %c1_341 = arith.constant 1 : index
    %c0_342 = arith.constant 0 : index
    %c0_343 = arith.constant 0 : index
    %762 = vector.load %arg9[%c1_341, %c0_342, %c0_343] : memref<2x32x64xf32, #tpu.memory_space<vmem>>, vector<1x32x64xf32>
    %763 = vector.shape_cast %762 : vector<1x32x64xf32> to vector<32x64xf32>
    %cst_344 = arith.constant dense<0.000000e+00> : vector<4x64xf32>
    %764 = tpu.matmul %761, %763, %cst_344 {dimension_numbers = #tpu.dot_dimension_numbers<[1], [0], [0], [1], [0, 0, 1, 1], [], []>} : vector<4x32xf32>, vector<32x64xf32>, vector<4x64xf32> -> vector<4x64xf32>
    %c1_345 = arith.constant 1 : index
    %c0_346 = arith.constant 0 : index
    %c0_347 = arith.constant 0 : index
    %765 = vector.load %arg10[%c1_345, %c0_346, %c0_347] : memref<2x1x64xf32, #tpu.memory_space<vmem>>, vector<1x1x64xf32>
    %766 = vector.shape_cast %765 : vector<1x1x64xf32> to vector<1x64xf32>
    %767 = vector.broadcast %766 : vector<1x64xf32> to vector<4x64xf32>
    %768 = arith.addf %764, %767 : vector<4x64xf32>
    %769 = vector.extract_strided_slice %673 {offsets = [8, 0], sizes = [8, 32], strides = [1, 1]} : vector<16x32xf32> to vector<8x32xf32>
    %770 = vector.extract_strided_slice %769 {offsets = [0, 0], sizes = [8, 8], strides = [1, 1]} : vector<8x32xf32> to vector<8x8xf32>
    %771 = vector.extract_strided_slice %768 {offsets = [0, 0], sizes = [4, 8], strides = [1, 1]} : vector<4x64xf32> to vector<4x8xf32>
    %772 = vector.extract_strided_slice %768 {offsets = [0, 32], sizes = [4, 8], strides = [1, 1]} : vector<4x64xf32> to vector<4x8xf32>
    %773 = tpu.transpose %771, [1, 0] : vector<4x8xf32> -> vector<8x4xf32>
    %cst_348 = arith.constant dense<0.000000e+00> : vector<8x4xf32>
    %774 = tpu.matmul %770, %773, %cst_348 {dimension_numbers = #tpu.dot_dimension_numbers<[1], [0], [0], [1], [0, 0, 1, 1], [], []>} : vector<8x8xf32>, vector<8x4xf32>, vector<8x4xf32> -> vector<8x4xf32>
    %cst_349 = arith.constant 0.353553385 : f32
    %775 = vector.broadcast %cst_349 : f32 to vector<8x4xf32>
    %776 = arith.mulf %774, %775 : vector<8x4xf32>
    %cst_350 = arith.constant dense<0xFF800000> : vector<8xf32>
    %777 = vector.multi_reduction <maximumf>, %776, %cst_350 [1] : vector<8x4xf32> to vector<8xf32>
    %778 = vector.shape_cast %777 : vector<8xf32> to vector<8x1xf32>
    %779 = vector.broadcast %778 : vector<8x1xf32> to vector<8x4xf32>
    %780 = arith.subf %776, %779 : vector<8x4xf32>
    %781 = math.exp %780 : vector<8x4xf32>
    %cst_351 = arith.constant dense<0.000000e+00> : vector<8xf32>
    %782 = vector.multi_reduction <add>, %781, %cst_351 [1] : vector<8x4xf32> to vector<8xf32>
    %783 = vector.shape_cast %782 : vector<8xf32> to vector<8x1xf32>
    %784 = tpu.reciprocal %783 {approx = true} : vector<8x1xf32> -> vector<8x1xf32>
    %785 = vector.broadcast %784 : vector<8x1xf32> to vector<8x4xf32>
    %786 = arith.mulf %781, %785 : vector<8x4xf32>
    %cst_352 = arith.constant dense<0.000000e+00> : vector<8x8xf32>
    %787 = tpu.matmul %786, %772, %cst_352 {dimension_numbers = #tpu.dot_dimension_numbers<[1], [0], [0], [1], [0, 0, 1, 1], [], []>} : vector<8x4xf32>, vector<4x8xf32>, vector<8x8xf32> -> vector<8x8xf32>
    %c8_353 = arith.constant 8 : index
    %c0_354 = arith.constant 0 : index
    %788 = vector.load %arg26[%c8_353, %c0_354] : memref<16x32xf32, #tpu.memory_space<vmem>>, vector<8x8xf32>
    tpu.vector_store %arg26[%c8_353, %c0_354], %787 {strides = array<i32>} : memref<16x32xf32, #tpu.memory_space<vmem>>, vector<8x8xf32>,
    %789 = vector.extract_strided_slice %769 {offsets = [0, 8], sizes = [8, 8], strides = [1, 1]} : vector<8x32xf32> to vector<8x8xf32>
    %790 = vector.extract_strided_slice %768 {offsets = [0, 8], sizes = [4, 8], strides = [1, 1]} : vector<4x64xf32> to vector<4x8xf32>
    %791 = vector.extract_strided_slice %768 {offsets = [0, 40], sizes = [4, 8], strides = [1, 1]} : vector<4x64xf32> to vector<4x8xf32>
    %792 = tpu.transpose %790, [1, 0] : vector<4x8xf32> -> vector<8x4xf32>
    %cst_355 = arith.constant dense<0.000000e+00> : vector<8x4xf32>
    %793 = tpu.matmul %789, %792, %cst_355 {dimension_numbers = #tpu.dot_dimension_numbers<[1], [0], [0], [1], [0, 0, 1, 1], [], []>} : vector<8x8xf32>, vector<8x4xf32>, vector<8x4xf32> -> vector<8x4xf32>
    %cst_356 = arith.constant 0.353553385 : f32
    %794 = vector.broadcast %cst_356 : f32 to vector<8x4xf32>
    %795 = arith.mulf %793, %794 : vector<8x4xf32>
    %cst_357 = arith.constant dense<0xFF800000> : vector<8xf32>
    %796 = vector.multi_reduction <maximumf>, %795, %cst_357 [1] : vector<8x4xf32> to vector<8xf32>
    %797 = vector.shape_cast %796 : vector<8xf32> to vector<8x1xf32>
    %798 = vector.broadcast %797 : vector<8x1xf32> to vector<8x4xf32>
    %799 = arith.subf %795, %798 : vector<8x4xf32>
    %800 = math.exp %799 : vector<8x4xf32>
    %cst_358 = arith.constant dense<0.000000e+00> : vector<8xf32>
    %801 = vector.multi_reduction <add>, %800, %cst_358 [1] : vector<8x4xf32> to vector<8xf32>
    %802 = vector.shape_cast %801 : vector<8xf32> to vector<8x1xf32>
    %803 = tpu.reciprocal %802 {approx = true} : vector<8x1xf32> -> vector<8x1xf32>
    %804 = vector.broadcast %803 : vector<8x1xf32> to vector<8x4xf32>
    %805 = arith.mulf %800, %804 : vector<8x4xf32>
    %cst_359 = arith.constant dense<0.000000e+00> : vector<8x8xf32>
    %806 = tpu.matmul %805, %791, %cst_359 {dimension_numbers = #tpu.dot_dimension_numbers<[1], [0], [0], [1], [0, 0, 1, 1], [], []>} : vector<8x4xf32>, vector<4x8xf32>, vector<8x8xf32> -> vector<8x8xf32>
    %c8_360 = arith.constant 8 : index
    %c8_361 = arith.constant 8 : index
    %807 = vector.load %arg26[%c8_360, %c8_361] : memref<16x32xf32, #tpu.memory_space<vmem>>, vector<8x8xf32>
    tpu.vector_store %arg26[%c8_360, %c8_361], %806 {strides = array<i32>} : memref<16x32xf32, #tpu.memory_space<vmem>>, vector<8x8xf32>,
    %808 = vector.extract_strided_slice %769 {offsets = [0, 16], sizes = [8, 8], strides = [1, 1]} : vector<8x32xf32> to vector<8x8xf32>
    %809 = vector.extract_strided_slice %768 {offsets = [0, 16], sizes = [4, 8], strides = [1, 1]} : vector<4x64xf32> to vector<4x8xf32>
    %810 = vector.extract_strided_slice %768 {offsets = [0, 48], sizes = [4, 8], strides = [1, 1]} : vector<4x64xf32> to vector<4x8xf32>
    %811 = tpu.transpose %809, [1, 0] : vector<4x8xf32> -> vector<8x4xf32>
    %cst_362 = arith.constant dense<0.000000e+00> : vector<8x4xf32>
    %812 = tpu.matmul %808, %811, %cst_362 {dimension_numbers = #tpu.dot_dimension_numbers<[1], [0], [0], [1], [0, 0, 1, 1], [], []>} : vector<8x8xf32>, vector<8x4xf32>, vector<8x4xf32> -> vector<8x4xf32>
    %cst_363 = arith.constant 0.353553385 : f32
    %813 = vector.broadcast %cst_363 : f32 to vector<8x4xf32>
    %814 = arith.mulf %812, %813 : vector<8x4xf32>
    %cst_364 = arith.constant dense<0xFF800000> : vector<8xf32>
    %815 = vector.multi_reduction <maximumf>, %814, %cst_364 [1] : vector<8x4xf32> to vector<8xf32>
    %816 = vector.shape_cast %815 : vector<8xf32> to vector<8x1xf32>
    %817 = vector.broadcast %816 : vector<8x1xf32> to vector<8x4xf32>
    %818 = arith.subf %814, %817 : vector<8x4xf32>
    %819 = math.exp %818 : vector<8x4xf32>
    %cst_365 = arith.constant dense<0.000000e+00> : vector<8xf32>
    %820 = vector.multi_reduction <add>, %819, %cst_365 [1] : vector<8x4xf32> to vector<8xf32>
    %821 = vector.shape_cast %820 : vector<8xf32> to vector<8x1xf32>
    %822 = tpu.reciprocal %821 {approx = true} : vector<8x1xf32> -> vector<8x1xf32>
    %823 = vector.broadcast %822 : vector<8x1xf32> to vector<8x4xf32>
    %824 = arith.mulf %819, %823 : vector<8x4xf32>
    %cst_366 = arith.constant dense<0.000000e+00> : vector<8x8xf32>
    %825 = tpu.matmul %824, %810, %cst_366 {dimension_numbers = #tpu.dot_dimension_numbers<[1], [0], [0], [1], [0, 0, 1, 1], [], []>} : vector<8x4xf32>, vector<4x8xf32>, vector<8x8xf32> -> vector<8x8xf32>
    %c8_367 = arith.constant 8 : index
    %c16_368 = arith.constant 16 : index
    %826 = vector.load %arg26[%c8_367, %c16_368] : memref<16x32xf32, #tpu.memory_space<vmem>>, vector<8x8xf32>
    tpu.vector_store %arg26[%c8_367, %c16_368], %825 {strides = array<i32>} : memref<16x32xf32, #tpu.memory_space<vmem>>, vector<8x8xf32>,
    %827 = vector.extract_strided_slice %769 {offsets = [0, 24], sizes = [8, 8], strides = [1, 1]} : vector<8x32xf32> to vector<8x8xf32>
    %828 = vector.extract_strided_slice %768 {offsets = [0, 24], sizes = [4, 8], strides = [1, 1]} : vector<4x64xf32> to vector<4x8xf32>
    %829 = vector.extract_strided_slice %768 {offsets = [0, 56], sizes = [4, 8], strides = [1, 1]} : vector<4x64xf32> to vector<4x8xf32>
    %830 = tpu.transpose %828, [1, 0] : vector<4x8xf32> -> vector<8x4xf32>
    %cst_369 = arith.constant dense<0.000000e+00> : vector<8x4xf32>
    %831 = tpu.matmul %827, %830, %cst_369 {dimension_numbers = #tpu.dot_dimension_numbers<[1], [0], [0], [1], [0, 0, 1, 1], [], []>} : vector<8x8xf32>, vector<8x4xf32>, vector<8x4xf32> -> vector<8x4xf32>
    %cst_370 = arith.constant 0.353553385 : f32
    %832 = vector.broadcast %cst_370 : f32 to vector<8x4xf32>
    %833 = arith.mulf %831, %832 : vector<8x4xf32>
    %cst_371 = arith.constant dense<0xFF800000> : vector<8xf32>
    %834 = vector.multi_reduction <maximumf>, %833, %cst_371 [1] : vector<8x4xf32> to vector<8xf32>
    %835 = vector.shape_cast %834 : vector<8xf32> to vector<8x1xf32>
    %836 = vector.broadcast %835 : vector<8x1xf32> to vector<8x4xf32>
    %837 = arith.subf %833, %836 : vector<8x4xf32>
    %838 = math.exp %837 : vector<8x4xf32>
    %cst_372 = arith.constant dense<0.000000e+00> : vector<8xf32>
    %839 = vector.multi_reduction <add>, %838, %cst_372 [1] : vector<8x4xf32> to vector<8xf32>
    %840 = vector.shape_cast %839 : vector<8xf32> to vector<8x1xf32>
    %841 = tpu.reciprocal %840 {approx = true} : vector<8x1xf32> -> vector<8x1xf32>
    %842 = vector.broadcast %841 : vector<8x1xf32> to vector<8x4xf32>
    %843 = arith.mulf %838, %842 : vector<8x4xf32>
    %cst_373 = arith.constant dense<0.000000e+00> : vector<8x8xf32>
    %844 = tpu.matmul %843, %829, %cst_373 {dimension_numbers = #tpu.dot_dimension_numbers<[1], [0], [0], [1], [0, 0, 1, 1], [], []>} : vector<8x4xf32>, vector<4x8xf32>, vector<8x8xf32> -> vector<8x8xf32>
    %c8_374 = arith.constant 8 : index
    %c24_375 = arith.constant 24 : index
    %845 = vector.load %arg26[%c8_374, %c24_375] : memref<16x32xf32, #tpu.memory_space<vmem>>, vector<8x8xf32>
    tpu.vector_store %arg26[%c8_374, %c24_375], %844 {strides = array<i32>} : memref<16x32xf32, #tpu.memory_space<vmem>>, vector<8x8xf32>,
    %c0_376 = arith.constant 0 : index
    %c0_377 = arith.constant 0 : index
    %846 = vector.load %arg26[%c0_376, %c0_377] : memref<16x32xf32, #tpu.memory_space<vmem>>, vector<16x32xf32>
    %c1_378 = arith.constant 1 : index
    %c0_379 = arith.constant 0 : index
    %c0_380 = arith.constant 0 : index
    %847 = vector.load %arg11[%c1_378, %c0_379, %c0_380] : memref<2x32x32xf32, #tpu.memory_space<vmem>>, vector<1x32x32xf32>
    %848 = vector.shape_cast %847 : vector<1x32x32xf32> to vector<32x32xf32>
    %cst_381 = arith.constant dense<0.000000e+00> : vector<16x32xf32>
    %849 = tpu.matmul %846, %848, %cst_381 {dimension_numbers = #tpu.dot_dimension_numbers<[1], [0], [0], [1], [0, 0, 1, 1], [], []>} : vector<16x32xf32>, vector<32x32xf32>, vector<16x32xf32> -> vector<16x32xf32>
    %c1_382 = arith.constant 1 : index
    %c0_383 = arith.constant 0 : index
    %c0_384 = arith.constant 0 : index
    %850 = vector.load %arg12[%c1_382, %c0_383, %c0_384] : memref<2x1x32xf32, #tpu.memory_space<vmem>>, vector<1x1x32xf32>
    %851 = vector.shape_cast %850 : vector<1x1x32xf32> to vector<1x32xf32>
    %852 = vector.broadcast %851 : vector<1x32xf32> to vector<16x32xf32>
    %853 = arith.addf %849, %852 : vector<16x32xf32>
    %854 = arith.addf %666, %853 : vector<16x32xf32>
    %c1_385 = arith.constant 1 : index
    %c0_386 = arith.constant 0 : index
    %c0_387 = arith.constant 0 : index
    %855 = vector.load %arg15[%c1_385, %c0_386, %c0_387] : memref<2x1x32xf32, #tpu.memory_space<vmem>>, vector<1x1x32xf32>
    %856 = vector.shape_cast %855 : vector<1x1x32xf32> to vector<1x32xf32>
    %c1_388 = arith.constant 1 : index
    %c0_389 = arith.constant 0 : index
    %c0_390 = arith.constant 0 : index
    %857 = vector.load %arg16[%c1_388, %c0_389, %c0_390] : memref<2x1x32xf32, #tpu.memory_space<vmem>>, vector<1x1x32xf32>
    %858 = vector.shape_cast %857 : vector<1x1x32xf32> to vector<1x32xf32>
    %cst_391 = arith.constant dense<0.000000e+00> : vector<16xf32>
    %859 = vector.multi_reduction <add>, %854, %cst_391 [1] : vector<16x32xf32> to vector<16xf32>
    %860 = vector.shape_cast %859 : vector<16xf32> to vector<16x1xf32>
    %cst_392 = arith.constant 3.200000e+01 : f32
    %861 = vector.broadcast %cst_392 : f32 to vector<16x1xf32>
    %862 = arith.divf %860, %861 : vector<16x1xf32>
    %863 = vector.broadcast %862 : vector<16x1xf32> to vector<16x32xf32>
    %864 = arith.subf %854, %863 : vector<16x32xf32>
    %865 = arith.mulf %864, %864 : vector<16x32xf32>
    %cst_393 = arith.constant dense<0.000000e+00> : vector<16xf32>
    %866 = vector.multi_reduction <add>, %865, %cst_393 [1] : vector<16x32xf32> to vector<16xf32>
    %867 = vector.shape_cast %866 : vector<16xf32> to vector<16x1xf32>
    %cst_394 = arith.constant 3.200000e+01 : f32
    %868 = vector.broadcast %cst_394 : f32 to vector<16x1xf32>
    %869 = arith.divf %867, %868 : vector<16x1xf32>
    %cst_395 = arith.constant 9.99999974E-6 : f32
    %870 = vector.broadcast %cst_395 : f32 to vector<16x1xf32>
    %871 = arith.addf %869, %870 : vector<16x1xf32>
    %872 = math.rsqrt %871 : vector<16x1xf32>
    %873 = vector.broadcast %872 : vector<16x1xf32> to vector<16x32xf32>
    %874 = arith.mulf %864, %873 : vector<16x32xf32>
    %875 = vector.broadcast %856 : vector<1x32xf32> to vector<16x32xf32>
    %876 = arith.mulf %874, %875 : vector<16x32xf32>
    %877 = vector.broadcast %858 : vector<1x32xf32> to vector<16x32xf32>
    %878 = arith.addf %876, %877 : vector<16x32xf32>
    %c1_396 = arith.constant 1 : index
    %c0_397 = arith.constant 0 : index
    %c0_398 = arith.constant 0 : index
    %879 = vector.load %arg19[%c1_396, %c0_397, %c0_398] : memref<2x32x64xf32, #tpu.memory_space<vmem>>, vector<1x32x64xf32>
    %880 = vector.shape_cast %879 : vector<1x32x64xf32> to vector<32x64xf32>
    %cst_399 = arith.constant dense<0.000000e+00> : vector<16x64xf32>
    %881 = tpu.matmul %878, %880, %cst_399 {dimension_numbers = #tpu.dot_dimension_numbers<[1], [0], [0], [1], [0, 0, 1, 1], [], []>} : vector<16x32xf32>, vector<32x64xf32>, vector<16x64xf32> -> vector<16x64xf32>
    %c1_400 = arith.constant 1 : index
    %c0_401 = arith.constant 0 : index
    %c0_402 = arith.constant 0 : index
    %882 = vector.load %arg20[%c1_400, %c0_401, %c0_402] : memref<2x1x64xf32, #tpu.memory_space<vmem>>, vector<1x1x64xf32>
    %883 = vector.shape_cast %882 : vector<1x1x64xf32> to vector<1x64xf32>
    %884 = vector.broadcast %883 : vector<1x64xf32> to vector<16x64xf32>
    %885 = arith.addf %881, %884 : vector<16x64xf32>
    %cst_403 = arith.constant 0.000000e+00 : f32
    %886 = vector.broadcast %cst_403 : f32 to vector<16x64xf32>
    %887 = arith.maximumf %885, %886 : vector<16x64xf32>
    %c1_404 = arith.constant 1 : index
    %c0_405 = arith.constant 0 : index
    %c0_406 = arith.constant 0 : index
    %888 = vector.load %arg21[%c1_404, %c0_405, %c0_406] : memref<2x64x32xf32, #tpu.memory_space<vmem>>, vector<1x64x32xf32>
    %889 = vector.shape_cast %888 : vector<1x64x32xf32> to vector<64x32xf32>
    %cst_407 = arith.constant dense<0.000000e+00> : vector<16x32xf32>
    %890 = tpu.matmul %887, %889, %cst_407 {dimension_numbers = #tpu.dot_dimension_numbers<[1], [0], [0], [1], [0, 0, 1, 1], [], []>} : vector<16x64xf32>, vector<64x32xf32>, vector<16x32xf32> -> vector<16x32xf32>
    %c1_408 = arith.constant 1 : index
    %c0_409 = arith.constant 0 : index
    %c0_410 = arith.constant 0 : index
    %891 = vector.load %arg22[%c1_408, %c0_409, %c0_410] : memref<2x1x32xf32, #tpu.memory_space<vmem>>, vector<1x1x32xf32>
    %892 = vector.shape_cast %891 : vector<1x1x32xf32> to vector<1x32xf32>
    %893 = vector.broadcast %892 : vector<1x32xf32> to vector<16x32xf32>
    %894 = arith.addf %890, %893 : vector<16x32xf32>
    %895 = arith.addf %878, %894 : vector<16x32xf32>
    %c1_411 = arith.constant 1 : index
    %c0_412 = arith.constant 0 : index
    %c0_413 = arith.constant 0 : index
    %896 = vector.load %arg17[%c1_411, %c0_412, %c0_413] : memref<2x1x32xf32, #tpu.memory_space<vmem>>, vector<1x1x32xf32>
    %897 = vector.shape_cast %896 : vector<1x1x32xf32> to vector<1x32xf32>
    %c1_414 = arith.constant 1 : index
    %c0_415 = arith.constant 0 : index
    %c0_416 = arith.constant 0 : index
    %898 = vector.load %arg18[%c1_414, %c0_415, %c0_416] : memref<2x1x32xf32, #tpu.memory_space<vmem>>, vector<1x1x32xf32>
    %899 = vector.shape_cast %898 : vector<1x1x32xf32> to vector<1x32xf32>
    %cst_417 = arith.constant dense<0.000000e+00> : vector<16xf32>
    %900 = vector.multi_reduction <add>, %895, %cst_417 [1] : vector<16x32xf32> to vector<16xf32>
    %901 = vector.shape_cast %900 : vector<16xf32> to vector<16x1xf32>
    %cst_418 = arith.constant 3.200000e+01 : f32
    %902 = vector.broadcast %cst_418 : f32 to vector<16x1xf32>
    %903 = arith.divf %901, %902 : vector<16x1xf32>
    %904 = vector.broadcast %903 : vector<16x1xf32> to vector<16x32xf32>
    %905 = arith.subf %895, %904 : vector<16x32xf32>
    %906 = arith.mulf %905, %905 : vector<16x32xf32>
    %cst_419 = arith.constant dense<0.000000e+00> : vector<16xf32>
    %907 = vector.multi_reduction <add>, %906, %cst_419 [1] : vector<16x32xf32> to vector<16xf32>
    %908 = vector.shape_cast %907 : vector<16xf32> to vector<16x1xf32>
    %cst_420 = arith.constant 3.200000e+01 : f32
    %909 = vector.broadcast %cst_420 : f32 to vector<16x1xf32>
    %910 = arith.divf %908, %909 : vector<16x1xf32>
    %cst_421 = arith.constant 9.99999974E-6 : f32
    %911 = vector.broadcast %cst_421 : f32 to vector<16x1xf32>
    %912 = arith.addf %910, %911 : vector<16x1xf32>
    %913 = math.rsqrt %912 : vector<16x1xf32>
    %914 = vector.broadcast %913 : vector<16x1xf32> to vector<16x32xf32>
    %915 = arith.mulf %905, %914 : vector<16x32xf32>
    %916 = vector.broadcast %897 : vector<1x32xf32> to vector<16x32xf32>
    %917 = arith.mulf %915, %916 : vector<16x32xf32>
    %918 = vector.broadcast %899 : vector<1x32xf32> to vector<16x32xf32>
    %919 = arith.addf %917, %918 : vector<16x32xf32>
    %c0_422 = arith.constant 0 : index
    %c0_423 = arith.constant 0 : index
    %920 = vector.load %arg23[%c0_422, %c0_423] : memref<32x64xf32, #tpu.memory_space<vmem>>, vector<32x64xf32>
    %cst_424 = arith.constant dense<0.000000e+00> : vector<16x64xf32>
    %921 = tpu.matmul %919, %920, %cst_424 {dimension_numbers = #tpu.dot_dimension_numbers<[1], [0], [0], [1], [0, 0, 1, 1], [], []>} : vector<16x32xf32>, vector<32x64xf32>, vector<16x64xf32> -> vector<16x64xf32>
    %c0_425 = arith.constant 0 : index
    %c0_426 = arith.constant 0 : index
    %922 = vector.load %arg24[%c0_425, %c0_426] : memref<1x64xf32, #tpu.memory_space<vmem>>, vector<1x64xf32>
    %923 = vector.broadcast %922 : vector<1x64xf32> to vector<16x64xf32>
    %924 = arith.addf %921, %923 : vector<16x64xf32>
    %c0_427 = arith.constant 0 : index
    %c0_428 = arith.constant 0 : index
    %925 = vector.load %arg25[%c0_427, %c0_428] : memref<16x64xf32, #tpu.memory_space<vmem>>, vector<16x64xf32>
    tpu.vector_store %arg25[%c0_427, %c0_428], %924 {strides = array<i32>} : memref<16x64xf32, #tpu.memory_space<vmem>>, vector<16x64xf32>,
    return
  }
}

</mosaic_0001>

<llo_original>
// kernel: image_to_html_forward.2
$region0: #{image_to_html_forward.2}
  #allocation0 [shape = 'u32[]', space=smem, size = 0x4, offset = 0x4, fixed_abs, tag = 'smem constant byte address 0x4 - core index']
  #allocation1 [shape = 'u32[144,128]{1,0:T(1,128)}', space=vmem, size = 0x12000, scoped, tag = 'internal scratch']
  %s0 = inlined_call_operand.vmem [shape: f32[128,27], index: 0, kind: input, shape index: {}]
  %s1 = inlined_call_operand.vmem [shape: f32[27,16], index: 1, kind: input, shape index: {}]
  %s2 = inlined_call_operand.vmem [shape: f32[1,16], index: 2, kind: input, shape index: {}]
  %s3 = inlined_call_operand.vmem [shape: f32[9,32,128], index: 3, kind: input, shape index: {}]
  %s4 = inlined_call_operand.vmem [shape: f32[144,32], index: 4, kind: input, shape index: {}]
  %s5 = inlined_call_operand.vmem [shape: f32[1,32], index: 5, kind: input, shape index: {}]
  %s6 = inlined_call_operand.vmem [shape: f32[8,32], index: 6, kind: input, shape index: {}]
  %s7 = inlined_call_operand.vmem [shape: f32[8,32], index: 7, kind: output, shape index: {}]
  %s8 = sld [smem:[#allocation0]]
  $region38: #{image_to_html_forward.2} parent=0
    _
  %s10 = ssub.s32 1, %s8
  %s11 = scalar_select 0, %s10, %s8
  // Predicated region
  $region2: #{image_to_html_forward.2} parent=0 // pred_check
    _
  $region3: #{image_to_html_forward.2} parent=0 // pred_check_branch
    %13 = sbr.rel (0) target = $region5
  $region4: #{image_to_html_forward.2} parent=0 // pred_region
    _
  $region5: #{image_to_html_forward.2} parent=0 // pred_fallthru
    _
  // Predicated region
  $region6: #{image_to_html_forward.2} parent=0 // pred_check
    _
  $region7: #{image_to_html_forward.2} parent=0 // pred_check_branch
    %15 = sbr.rel (0) target = $region9
  $region8: #{image_to_html_forward.2} parent=0 // pred_region
    _
  $region9: #{image_to_html_forward.2} parent=0 // pred_fallthru
    _
  // Predicated region
  $region10: #{image_to_html_forward.2} parent=0 // pred_check
    _
  $region11: #{image_to_html_forward.2} parent=0 // pred_check_branch
    %17 = sbr.rel (0) target = $region13
  $region12: #{image_to_html_forward.2} parent=0 // pred_region
    _
  $region13: #{image_to_html_forward.2} parent=0 // pred_fallthru
    _
  // Predicated region
  $region14: #{image_to_html_forward.2} parent=0 // pred_check
    _
  $region15: #{image_to_html_forward.2} parent=0 // pred_check_branch
    %19 = sbr.rel (0) target = $region17
  $region16: #{image_to_html_forward.2} parent=0 // pred_region
    _
  $region17: #{image_to_html_forward.2} parent=0 // pred_fallthru
    _
  // Predicated region
  $region18: #{image_to_html_forward.2} parent=0 // pred_check
    _
  $region19: #{image_to_html_forward.2} parent=0 // pred_check_branch
    %21 = sbr.rel (0) target = $region21
  $region20: #{image_to_html_forward.2} parent=0 // pred_region
    _
  $region21: #{image_to_html_forward.2} parent=0 // pred_fallthru
    _
  // Predicated region
  $region22: #{image_to_html_forward.2} parent=0 // pred_check
    _
  $region23: #{image_to_html_forward.2} parent=0 // pred_check_branch
    %23 = sbr.rel (0) target = $region25
  $region24: #{image_to_html_forward.2} parent=0 // pred_region
    _
  $region25: #{image_to_html_forward.2} parent=0 // pred_fallthru
    _
  // Predicated region
  $region26: #{image_to_html_forward.2} parent=0 // pred_check
    _
  $region27: #{image_to_html_forward.2} parent=0 // pred_check_branch
    %25 = sbr.rel (0) target = $region29
  $region28: #{image_to_html_forward.2} parent=0 // pred_region
    _
  $region29: #{image_to_html_forward.2} parent=0 // pred_fallthru
    _
  %v26 = vld [vmem:[%s0] sm:$0xff]
  %v27 = vld [vmem:[%s0 + $0x8] sm:$0xff]
  %v28 = vld [vmem:[%s0 + $0x10] sm:$0xff]
  %v29 = vld [vmem:[%s0 + $0x18] sm:$0xff]
  %v30 = vld [vmem:[%s0 + $0x20] sm:$0xff]
  %v31 = vld [vmem:[%s0 + $0x28] sm:$0xff]
  %v32 = vld [vmem:[%s0 + $0x30] sm:$0xff]
  %v33 = vld [vmem:[%s0 + $0x38] sm:$0xff]
  %v34 = vld [vmem:[%s0 + $0x40] sm:$0xff]
  %v35 = vld [vmem:[%s0 + $0x48] sm:$0xff]
  %v36 = vld [vmem:[%s0 + $0x50] sm:$0xff]
  %v37 = vld [vmem:[%s0 + $0x58] sm:$0xff]
  %v38 = vld [vmem:[%s0 + $0x60] sm:$0xff]
  %v39 = vld [vmem:[%s0 + $0x68] sm:$0xff]
  %v40 = vld [vmem:[%s0 + $0x70] sm:$0xff]
  %v41 = vld [vmem:[%s0 + $0x78] sm:$0xff]
  %v42 = vld [vmem:[%s1] sm:$0xff]
  %v43 = vld [vmem:[%s1 + $0x8] sm:$0xff]
  %v44 = vld [vmem:[%s1 + $0x10] sm:$0xff]
  %v45 = vld [vmem:[%s1 + $0x18] sm:$0x7]
  %v46 = vld [vmem:[%s2] sm:$0x1]
  %v48 = vlaneseq
  %v49 = vshrl.u32 %v48, 7
  %v50 = vsub.s32 0, %v49
  %v51 = vrot.slane %v46, %v50
  %vm53 = vcmask 220160
  %v55 = vsel %vm53, %v26, 0
  %v58 = vsel %vm53, %v27, 0
  %v61 = vsel %vm53, %v28, 0
  %v64 = vsel %vm53, %v29, 0
  %v67 = vsel %vm53, %v30, 0
  %v70 = vsel %vm53, %v31, 0
  %v73 = vsel %vm53, %v32, 0
  %v76 = vsel %vm53, %v33, 0
  %v79 = vsel %vm53, %v34, 0
  %v82 = vsel %vm53, %v35, 0
  %v85 = vsel %vm53, %v36, 0
  %v88 = vsel %vm53, %v37, 0
  %v91 = vsel %vm53, %v38, 0
  %v94 = vsel %vm53, %v39, 0
  %v97 = vsel %vm53, %v40, 0
  %v100 = vsel %vm53, %v41, 0
  %vm102 = vcmask 1042432
  %v104 = vsel %vm102, %v45, 0
  %106 = vmatprep.subr.mxu0 0.0
  %107 = vmatpush1.msra.mxu0 %v42
  %108 = vmatprep.subr.mxu0 0.0
  %109 = vmatpush1.msra.mxu0 %v43
  %110 = vmatprep.subr.mxu0 0.0
  %111 = vmatpush1.msra.mxu0 %v44
  %112 = vmatprep.subr.mxu0 0.0
  %113 = vmatpush1.msra.mxu0 %v104
  %114 = vmatprep.subr.mxu0 0.0
  %115 = vmatpush1.msra.mxu0 0.0
  %116 = vmatprep.subr.mxu0 0.0
  %117 = vmatpush1.msra.mxu0 0.0
  %118 = vmatprep.subr.mxu0 0.0
  %119 = vmatpush1.msra.mxu0 0.0
  %120 = vmatprep.subr.mxu0 0.0
  %121 = vmatpush1.msra.mxu0 0.0
  %122 = vmatprep.subr.mxu0 0.0
  %123 = vmatpush1.msra.mxu0 0.0
  %124 = vmatprep.subr.mxu0 0.0
  %125 = vmatpush1.msra.mxu0 0.0
  %126 = vmatprep.subr.mxu0 0.0
  %127 = vmatpush1.msra.mxu0 0.0
  %128 = vmatprep.subr.mxu0 0.0
  %129 = vmatpush1.msra.mxu0 0.0
  %130 = vmatprep.subr.mxu0 0.0
  %131 = vmatpush1.msra.mxu0 0.0
  %132 = vmatprep.subr.mxu0 0.0
  %133 = vmatpush1.msra.mxu0 0.0
  %134 = vmatprep.subr.mxu0 0.0
  %135 = vmatpush1.msra.mxu0 0.0
  %136 = vmatprep.subr.mxu0 0.0
  %137 = vmatpush1.msra.mxu0 0.0
  %138 = vmatprep.subr.mxu0 0.0
  %139 = vmatpush1.msra.mxu0 0.0
  %140 = vmatprep.subr.mxu0 0.0
  %141 = vmatpush1.msra.mxu0 0.0
  %142 = vmatprep.subr.mxu0 0.0
  %143 = vmatpush1.msra.mxu0 0.0
  %144 = vmatprep.subr.mxu0 0.0
  %145 = vmatpush1.msra.mxu0 0.0
  %146 = vmatprep.subr.mxu0 0.0
  %147 = vmatpush1.msra.mxu0 0.0
  %148 = vmatprep.subr.mxu0 0.0
  %149 = vmatpush1.msra.mxu0 0.0
  %150 = vmatprep.subr.mxu0 0.0
  %151 = vmatpush1.msra.mxu0 0.0
  %152 = vmatprep.subr.mxu0 0.0
  %153 = vmatpush1.msra.mxu0 0.0
  %154 = vmatprep.subr.mxu0 0.0
  %155 = vmatpush1.msra.mxu0 0.0
  %156 = vmatprep.subr.mxu0 0.0
  %157 = vmatpush1.msra.mxu0 0.0
  %158 = vmatprep.subr.mxu0 0.0
  %159 = vmatpush1.msra.mxu0 0.0
  %160 = vmatprep.subr.mxu0 0.0
  %161 = vmatpush1.msra.mxu0 0.0
  %162 = vmatprep.subr.mxu0 0.0
  %163 = vmatpush1.msra.mxu0 0.0
  %164 = vmatprep.subr.mxu0 0.0
  %165 = vmatpush1.msra.mxu0 0.0
  %166 = vmatprep.subr.mxu0 0.0
  %167 = vmatpush1.msra.mxu0 0.0
  %168 = vmatprep.subr.mxu0 0.0
  %169 = vmatpush1.msra.mxu0 0.0
  %170 = vmatprep.mubr.f32.mxu0 0.0
  %171 = vmatmul.mubr.f32.gmra.mrb[0].mxu0 %v55
  %v172 = vpop.f32.mrb[0].mxu0
  %v173 = vadd.f32 %v51, %v172
  %v174 = vpop.f32.mrb[0].mxu0
  %175 = vmatprep.mubr.f32.mxu0 0.0
  %176 = vmatmul.mubr.f32.gmra.mrb[0].mxu0 %v58
  %v177 = vpop.f32.mrb[0].mxu0
  %v178 = vadd.f32 %v51, %v177
  %v179 = vpop.f32.mrb[0].mxu0
  %180 = vmatprep.mubr.f32.mxu0 0.0
  %181 = vmatmul.mubr.f32.gmra.mrb[0].mxu0 %v61
  %v182 = vpop.f32.mrb[0].mxu0
  %v183 = vadd.f32 %v51, %v182
  %v184 = vpop.f32.mrb[0].mxu0
  %185 = vmatprep.mubr.f32.mxu0 0.0
  %186 = vmatmul.mubr.f32.gmra.mrb[0].mxu0 %v64
  %v187 = vpop.f32.mrb[0].mxu0
  %v188 = vadd.f32 %v51, %v187
  %v189 = vpop.f32.mrb[0].mxu0
  %190 = vmatprep.mubr.f32.mxu0 0.0
  %191 = vmatmul.mubr.f32.gmra.mrb[0].mxu0 %v67
  %v192 = vpop.f32.mrb[0].mxu0
  %v193 = vadd.f32 %v51, %v192
  %v194 = vpop.f32.mrb[0].mxu0
  %195 = vmatprep.mubr.f32.mxu0 0.0
  %196 = vmatmul.mubr.f32.gmra.mrb[0].mxu0 %v70
  %v197 = vpop.f32.mrb[0].mxu0
  %v198 = vadd.f32 %v51, %v197
  %v199 = vpop.f32.mrb[0].mxu0
  %200 = vmatprep.mubr.f32.mxu0 0.0
  %201 = vmatmul.mubr.f32.gmra.mrb[0].mxu0 %v73
  %v202 = vpop.f32.mrb[0].mxu0
  %v203 = vadd.f32 %v51, %v202
  %v204 = vpop.f32.mrb[0].mxu0
  %205 = vmatprep.mubr.f32.mxu0 0.0
  %206 = vmatmul.mubr.f32.gmra.mrb[0].mxu0 %v76
  %v207 = vpop.f32.mrb[0].mxu0
  %v208 = vadd.f32 %v51, %v207
  %v209 = vpop.f32.mrb[0].mxu0
  %210 = vmatprep.mubr.f32.mxu0 0.0
  %211 = vmatmul.mubr.f32.gmra.mrb[0].mxu0 %v79
  %v212 = vpop.f32.mrb[0].mxu0
  %v213 = vadd.f32 %v51, %v212
  %v214 = vpop.f32.mrb[0].mxu0
  %215 = vmatprep.mubr.f32.mxu0 0.0
  %216 = vmatmul.mubr.f32.gmra.mrb[0].mxu0 %v82
  %v217 = vpop.f32.mrb[0].mxu0
  %v218 = vadd.f32 %v51, %v217
  %v219 = vpop.f32.mrb[0].mxu0
  %220 = vmatprep.mubr.f32.mxu0 0.0
  %221 = vmatmul.mubr.f32.gmra.mrb[0].mxu0 %v85
  %v222 = vpop.f32.mrb[0].mxu0
  %v223 = vadd.f32 %v51, %v222
  %v224 = vpop.f32.mrb[0].mxu0
  %225 = vmatprep.mubr.f32.mxu0 0.0
  %226 = vmatmul.mubr.f32.gmra.mrb[0].mxu0 %v88
  %v227 = vpop.f32.mrb[0].mxu0
  %v228 = vadd.f32 %v51, %v227
  %v229 = vpop.f32.mrb[0].mxu0
  %230 = vmatprep.mubr.f32.mxu0 0.0
  %231 = vmatmul.mubr.f32.gmra.mrb[0].mxu0 %v91
  %v232 = vpop.f32.mrb[0].mxu0
  %v233 = vadd.f32 %v51, %v232
  %v234 = vpop.f32.mrb[0].mxu0
  %235 = vmatprep.mubr.f32.mxu0 0.0
  %236 = vmatmul.mubr.f32.gmra.mrb[0].mxu0 %v94
  %v237 = vpop.f32.mrb[0].mxu0
  %v238 = vadd.f32 %v51, %v237
  %v239 = vpop.f32.mrb[0].mxu0
  %240 = vmatprep.mubr.f32.mxu0 0.0
  %241 = vmatmul.mubr.f32.gmra.mrb[0].mxu0 %v97
  %v242 = vpop.f32.mrb[0].mxu0
  %v243 = vadd.f32 %v51, %v242
  %v244 = vpop.f32.mrb[0].mxu0
  %245 = vmatprep.mubr.f32.mxu0 0.0
  %246 = vmatmul.mubr.f32.gmra.mrb[0].mxu0 %v100
  %v247 = vpop.f32.mrb[0].mxu0
  %v248 = vadd.f32 %v51, %v247
  %v249 = vpop.f32.mrb[0].mxu0
  %250 = vdwg.mxu0
  %v251 = vmax.f32 %v173, 0.0
  %v252 = vmax.f32 %v178, 0.0
  %v253 = vmax.f32 %v183, 0.0
  %v254 = vmax.f32 %v188, 0.0
  %v255 = vmax.f32 %v193, 0.0
  %v256 = vmax.f32 %v198, 0.0
  %v257 = vmax.f32 %v203, 0.0
  %v258 = vmax.f32 %v208, 0.0
  %v259 = vmax.f32 %v213, 0.0
  %v260 = vmax.f32 %v218, 0.0
  %v261 = vmax.f32 %v223, 0.0
  %v262 = vmax.f32 %v228, 0.0
  %v263 = vmax.f32 %v233, 0.0
  %v264 = vmax.f32 %v238, 0.0
  %v265 = vmax.f32 %v243, 0.0
  %v266 = vmax.f32 %v248, 0.0
  %v267 = vld [vmem:[%s3] sm:$0xff]
  %v268 = vld [vmem:[%s3 + $0x8] sm:$0xff]
  %v269 = vld [vmem:[%s3 + $0x10] sm:$0xff]
  %v270 = vld [vmem:[%s3 + $0x18] sm:$0xff]
  %271 = vmatprep.subr.mxu0 0.0
  %272 = vmatpush1.msra.mxu0 %v251
  %273 = vmatprep.subr.mxu0 0.0
  %274 = vmatpush1.msra.mxu0 %v252
  %275 = vmatprep.subr.mxu0 0.0
  %276 = vmatpush1.msra.mxu0 %v253
  %277 = vmatprep.subr.mxu0 0.0
  %278 = vmatpush1.msra.mxu0 %v254
  %279 = vmatprep.subr.mxu0 0.0
  %280 = vmatpush1.msra.mxu0 %v255
  %281 = vmatprep.subr.mxu0 0.0
  %282 = vmatpush1.msra.mxu0 %v256
  %283 = vmatprep.subr.mxu0 0.0
  %284 = vmatpush1.msra.mxu0 %v257
  %285 = vmatprep.subr.mxu0 0.0
  %286 = vmatpush1.msra.mxu0 %v258
  %287 = vmatprep.subr.mxu0 0.0
  %288 = vmatpush1.msra.mxu0 %v259
  %289 = vmatprep.subr.mxu0 0.0
  %290 = vmatpush1.msra.mxu0 %v260
  %291 = vmatprep.subr.mxu0 0.0
  %292 = vmatpush1.msra.mxu0 %v261
  %293 = vmatprep.subr.mxu0 0.0
  %294 = vmatpush1.msra.mxu0 %v262
  %295 = vmatprep.subr.mxu0 0.0
  %296 = vmatpush1.msra.mxu0 %v263
  %297 = vmatprep.subr.mxu0 0.0
  %298 = vmatpush1.msra.mxu0 %v264
  %299 = vmatprep.subr.mxu0 0.0
  %300 = vmatpush1.msra.mxu0 %v265
  %301 = vmatprep.subr.mxu0 0.0
  %302 = vmatpush1.msra.mxu0 %v266
  %303 = vmatprep.subr.mxu0 0.0
  %304 = vmatpush1.msra.mxu0 0.0
  %305 = vmatprep.subr.mxu0 0.0
  %306 = vmatpush1.msra.mxu0 0.0
  %307 = vmatprep.subr.mxu0 0.0
  %308 = vmatpush1.msra.mxu0 0.0
  %309 = vmatprep.subr.mxu0 0.0
  %310 = vmatpush1.msra.mxu0 0.0
  %311 = vmatprep.subr.mxu0 0.0
  %312 = vmatpush1.msra.mxu0 0.0
  %313 = vmatprep.subr.mxu0 0.0
  %314 = vmatpush1.msra.mxu0 0.0
  %315 = vmatprep.subr.mxu0 0.0
  %316 = vmatpush1.msra.mxu0 0.0
  %317 = vmatprep.subr.mxu0 0.0
  %318 = vmatpush1.msra.mxu0 0.0
  %319 = vmatprep.subr.mxu0 0.0
  %320 = vmatpush1.msra.mxu0 0.0
  %321 = vmatprep.subr.mxu0 0.0
  %322 = vmatpush1.msra.mxu0 0.0
  %323 = vmatprep.subr.mxu0 0.0
  %324 = vmatpush1.msra.mxu0 0.0
  %325 = vmatprep.subr.mxu0 0.0
  %326 = vmatpush1.msra.mxu0 0.0
  %327 = vmatprep.subr.mxu0 0.0
  %328 = vmatpush1.msra.mxu0 0.0
  %329 = vmatprep.subr.mxu0 0.0
  %330 = vmatpush1.msra.mxu0 0.0
  %331 = vmatprep.subr.mxu0 0.0
  %332 = vmatpush1.msra.mxu0 0.0
  %333 = vmatprep.subr.mxu0 0.0
  %334 = vmatpush1.msra.mxu0 0.0
  %335 = vmatprep.mubr.f32.mxu0 0.0
  %336 = vmatmul.mubr.f32.gmra.mrb[0].mxu0 %v267
  %v337 = vpop.f32.mrb[0].mxu0
  %v338 = vadd.f32 0.0, %v337
  %v339 = vpop.f32.mrb[0].mxu0
  %340 = vmatprep.mubr.f32.mxu0 0.0
  %341 = vmatmul.mubr.f32.gmra.mrb[0].mxu0 %v268
  %v342 = vpop.f32.mrb[0].mxu0
  %v343 = vadd.f32 0.0, %v342
  %v344 = vpop.f32.mrb[0].mxu0
  %345 = vmatprep.mubr.f32.mxu0 0.0
  %346 = vmatmul.mubr.f32.gmra.mrb[0].mxu0 %v269
  %v347 = vpop.f32.mrb[0].mxu0
  %v348 = vadd.f32 0.0, %v347
  %v349 = vpop.f32.mrb[0].mxu0
  %350 = vmatprep.mubr.f32.mxu0 0.0
  %351 = vmatmul.mubr.f32.gmra.mrb[0].mxu0 %v270
  %v352 = vpop.f32.mrb[0].mxu0
  %v353 = vadd.f32 0.0, %v352
  %v354 = vpop.f32.mrb[0].mxu0
  %355 = vdwg.mxu0
  %v356 = vld [vmem:[%s4] sm:$0xff]
  %v357 = vld [vmem:[%s4 + $0x8] sm:$0xff]
  %s358 = scalar_lea.vmem %s3, 32
  %v359 = vld [vmem:[%s358] sm:$0xff]
  %v360 = vld [vmem:[%s358 + $0x8] sm:$0xff]
  %v361 = vld [vmem:[%s358 + $0x10] sm:$0xff]
  %v362 = vld [vmem:[%s358 + $0x18] sm:$0xff]
  %363 = vmatprep.subr.mxu0 0.0
  %364 = vmatpush1.msra.mxu0 %v251
  %365 = vmatprep.subr.mxu0 0.0
  %366 = vmatpush1.msra.mxu0 %v252
  %367 = vmatprep.subr.mxu0 0.0
  %368 = vmatpush1.msra.mxu0 %v253
  %369 = vmatprep.subr.mxu0 0.0
  %370 = vmatpush1.msra.mxu0 %v254
  %371 = vmatprep.subr.mxu0 0.0
  %372 = vmatpush1.msra.mxu0 %v255
  %373 = vmatprep.subr.mxu0 0.0
  %374 = vmatpush1.msra.mxu0 %v256
  %375 = vmatprep.subr.mxu0 0.0
  %376 = vmatpush1.msra.mxu0 %v257
  %377 = vmatprep.subr.mxu0 0.0
  %378 = vmatpush1.msra.mxu0 %v258
  %379 = vmatprep.subr.mxu0 0.0
  %380 = vmatpush1.msra.mxu0 %v259
  %381 = vmatprep.subr.mxu0 0.0
  %382 = vmatpush1.msra.mxu0 %v260
  %383 = vmatprep.subr.mxu0 0.0
  %384 = vmatpush1.msra.mxu0 %v261
  %385 = vmatprep.subr.mxu0 0.0
  %386 = vmatpush1.msra.mxu0 %v262
  %387 = vmatprep.subr.mxu0 0.0
  %388 = vmatpush1.msra.mxu0 %v263
  %389 = vmatprep.subr.mxu0 0.0
  %390 = vmatpush1.msra.mxu0 %v264
  %391 = vmatprep.subr.mxu0 0.0
  %392 = vmatpush1.msra.mxu0 %v265
  %393 = vmatprep.subr.mxu0 0.0
  %394 = vmatpush1.msra.mxu0 %v266
  %395 = vmatprep.subr.mxu0 0.0
  %396 = vmatpush1.msra.mxu0 0.0
  %397 = vmatprep.subr.mxu0 0.0
  %398 = vmatpush1.msra.mxu0 0.0
  %399 = vmatprep.subr.mxu0 0.0
  %400 = vmatpush1.msra.mxu0 0.0
  %401 = vmatprep.subr.mxu0 0.0
  %402 = vmatpush1.msra.mxu0 0.0
  %403 = vmatprep.subr.mxu0 0.0
  %404 = vmatpush1.msra.mxu0 0.0
  %405 = vmatprep.subr.mxu0 0.0
  %406 = vmatpush1.msra.mxu0 0.0
  %407 = vmatprep.subr.mxu0 0.0
  %408 = vmatpush1.msra.mxu0 0.0
  %409 = vmatprep.subr.mxu0 0.0
  %410 = vmatpush1.msra.mxu0 0.0
  %411 = vmatprep.subr.mxu0 0.0
  %412 = vmatpush1.msra.mxu0 0.0
  %413 = vmatprep.subr.mxu0 0.0
  %414 = vmatpush1.msra.mxu0 0.0
  %415 = vmatprep.subr.mxu0 0.0
  %416 = vmatpush1.msra.mxu0 0.0
  %417 = vmatprep.subr.mxu0 0.0
  %418 = vmatpush1.msra.mxu0 0.0
  %419 = vmatprep.subr.mxu0 0.0
  %420 = vmatpush1.msra.mxu0 0.0
  %421 = vmatprep.subr.mxu0 0.0
  %422 = vmatpush1.msra.mxu0 0.0
  %423 = vmatprep.subr.mxu0 0.0
  %424 = vmatpush1.msra.mxu0 0.0
  %425 = vmatprep.subr.mxu0 0.0
  %426 = vmatpush1.msra.mxu0 0.0
  %427 = vmatprep.mubr.f32.mxu0 0.0
  %428 = vmatmul.mubr.f32.gmra.mrb[0].mxu0 %v359
  %v429 = vpop.f32.mrb[0].mxu0
  %v430 = vadd.f32 0.0, %v429
  %v431 = vpop.f32.mrb[0].mxu0
  %432 = vmatprep.mubr.f32.mxu0 0.0
  %433 = vmatmul.mubr.f32.gmra.mrb[0].mxu0 %v360
  %v434 = vpop.f32.mrb[0].mxu0
  %v435 = vadd.f32 0.0, %v434
  %v436 = vpop.f32.mrb[0].mxu0
  %437 = vmatprep.mubr.f32.mxu0 0.0
  %438 = vmatmul.mubr.f32.gmra.mrb[0].mxu0 %v361
  %v439 = vpop.f32.mrb[0].mxu0
  %v440 = vadd.f32 0.0, %v439
  %v441 = vpop.f32.mrb[0].mxu0
  %442 = vmatprep.mubr.f32.mxu0 0.0
  %443 = vmatmul.mubr.f32.gmra.mrb[0].mxu0 %v362
  %v444 = vpop.f32.mrb[0].mxu0
  %v445 = vadd.f32 0.0, %v444
  %v446 = vpop.f32.mrb[0].mxu0
  %447 = vdwg.mxu0
  %v448 = vld [vmem:[%s4 + $0x10] sm:$0xff]
  %v449 = vld [vmem:[%s4 + $0x18] sm:$0xff]
  %vm450 = vcmask 130048
  %v452 = vsel %vm450, %v430, 0
  %v455 = vsel %vm450, %v435, 0
  %v458 = vsel %vm450, %v440, 0
  %v461 = vsel %vm450, %v445, 0
  %463 = vmatprep.subr.mxu0 0.0
  %464 = vmatpush1.msra.mxu0 %v448
  %465 = vmatprep.subr.mxu0 0.0
  %466 = vmatpush1.msra.mxu0 %v449
  %467 = vmatprep.subr.mxu0 0.0
  %468 = vmatpush1.msra.mxu0 0.0
  %469 = vmatprep.subr.mxu0 0.0
  %470 = vmatpush1.msra.mxu0 0.0
  %471 = vmatprep.subr.mxu0 0.0
  %472 = vmatpush1.msra.mxu0 0.0
  %473 = vmatprep.subr.mxu0 0.0
  %474 = vmatpush1.msra.mxu0 0.0
  %475 = vmatprep.subr.mxu0 0.0
  %476 = vmatpush1.msra.mxu0 0.0
  %477 = vmatprep.subr.mxu0 0.0
  %478 = vmatpush1.msra.mxu0 0.0
  %479 = vmatprep.subr.mxu0 0.0
  %480 = vmatpush1.msra.mxu0 0.0
  %481 = vmatprep.subr.mxu0 0.0
  %482 = vmatpush1.msra.mxu0 0.0
  %483 = vmatprep.subr.mxu0 0.0
  %484 = vmatpush1.msra.mxu0 0.0
  %485 = vmatprep.subr.mxu0 0.0
  %486 = vmatpush1.msra.mxu0 0.0
  %487 = vmatprep.subr.mxu0 0.0
  %488 = vmatpush1.msra.mxu0 0.0
  %489 = vmatprep.subr.mxu0 0.0
  %490 = vmatpush1.msra.mxu0 0.0
  %491 = vmatprep.subr.mxu0 0.0
  %492 = vmatpush1.msra.mxu0 0.0
  %493 = vmatprep.subr.mxu0 0.0
  %494 = vmatpush1.msra.mxu0 0.0
  %495 = vmatprep.subr.mxu0 0.0
  %496 = vmatpush1.msra.mxu0 0.0
  %497 = vmatprep.subr.mxu0 0.0
  %498 = vmatpush1.msra.mxu0 0.0
  %499 = vmatprep.subr.mxu0 0.0
  %500 = vmatpush1.msra.mxu0 0.0
  %501 = vmatprep.subr.mxu0 0.0
  %502 = vmatpush1.msra.mxu0 0.0
  %503 = vmatprep.subr.mxu0 0.0
  %504 = vmatpush1.msra.mxu0 0.0
  %505 = vmatprep.subr.mxu0 0.0
  %506 = vmatpush1.msra.mxu0 0.0
  %507 = vmatprep.subr.mxu0 0.0
  %508 = vmatpush1.msra.mxu0 0.0
  %509 = vmatprep.subr.mxu0 0.0
  %510 = vmatpush1.msra.mxu0 0.0
  %511 = vmatprep.subr.mxu0 0.0
  %512 = vmatpush1.msra.mxu0 0.0
  %513 = vmatprep.subr.mxu0 0.0
  %514 = vmatpush1.msra.mxu0 0.0
  %515 = vmatprep.subr.mxu0 0.0
  %516 = vmatpush1.msra.mxu0 0.0
  %517 = vmatprep.subr.mxu0 0.0
  %518 = vmatpush1.msra.mxu0 0.0
  %519 = vmatprep.subr.mxu0 0.0
  %520 = vmatpush1.msra.mxu0 0.0
  %521 = vmatprep.subr.mxu0 0.0
  %522 = vmatpush1.msra.mxu0 0.0
  %523 = vmatprep.subr.mxu0 0.0
  %524 = vmatpush1.msra.mxu0 0.0
  %525 = vmatprep.subr.mxu0 0.0
  %526 = vmatpush1.msra.mxu0 0.0
  %527 = vmatprep.mubr.f32.mxu0 0.0
  %528 = vmatmul.mubr.f32.gmra.mrb[0].mxu0 %v452
  %v529 = vpop.f32.mrb[0].mxu0
  %v530 = vadd.f32 0.0, %v529
  %v531 = vpop.f32.mrb[0].mxu0
  %532 = vmatprep.mubr.f32.mxu0 0.0
  %533 = vmatmul.mubr.f32.gmra.mrb[0].mxu0 %v455
  %v534 = vpop.f32.mrb[0].mxu0
  %v535 = vadd.f32 0.0, %v534
  %v536 = vpop.f32.mrb[0].mxu0
  %537 = vmatprep.mubr.f32.mxu0 0.0
  %538 = vmatmul.mubr.f32.gmra.mrb[0].mxu0 %v458
  %v539 = vpop.f32.mrb[0].mxu0
  %v540 = vadd.f32 0.0, %v539
  %v541 = vpop.f32.mrb[0].mxu0
  %542 = vmatprep.mubr.f32.mxu0 0.0
  %543 = vmatmul.mubr.f32.gmra.mrb[0].mxu0 %v461
  %v544 = vpop.f32.mrb[0].mxu0
  %v545 = vadd.f32 0.0, %v544
  %v546 = vpop.f32.mrb[0].mxu0
  %547 = vdwg.mxu0
  %v549 = vsel %vm450, %v338, 0
  %v552 = vsel %vm450, %v343, 0
  %v555 = vsel %vm450, %v348, 0
  %v558 = vsel %vm450, %v353, 0
  %560 = vmatprep.subr.mxu0 0.0
  %561 = vmatpush1.msra.mxu0 %v356
  %562 = vmatprep.subr.mxu0 0.0
  %563 = vmatpush1.msra.mxu0 %v357
  %564 = vmatprep.subr.mxu0 0.0
  %565 = vmatpush1.msra.mxu0 0.0
  %566 = vmatprep.subr.mxu0 0.0
  %567 = vmatpush1.msra.mxu0 0.0
  %568 = vmatprep.subr.mxu0 0.0
  %569 = vmatpush1.msra.mxu0 0.0
  %570 = vmatprep.subr.mxu0 0.0
  %571 = vmatpush1.msra.mxu0 0.0
  %572 = vmatprep.subr.mxu0 0.0
  %573 = vmatpush1.msra.mxu0 0.0
  %574 = vmatprep.subr.mxu0 0.0
  %575 = vmatpush1.msra.mxu0 0.0
  %576 = vmatprep.subr.mxu0 0.0
  %577 = vmatpush1.msra.mxu0 0.0
  %578 = vmatprep.subr.mxu0 0.0
  %579 = vmatpush1.msra.mxu0 0.0
  %580 = vmatprep.subr.mxu0 0.0
  %581 = vmatpush1.msra.mxu0 0.0
  %582 = vmatprep.subr.mxu0 0.0
  %583 = vmatpush1.msra.mxu0 0.0
  %584 = vmatprep.subr.mxu0 0.0
  %585 = vmatpush1.msra.mxu0 0.0
  %586 = vmatprep.subr.mxu0 0.0
  %587 = vmatpush1.msra.mxu0 0.0
  %588 = vmatprep.subr.mxu0 0.0
  %589 = vmatpush1.msra.mxu0 0.0
  %590 = vmatprep.subr.mxu0 0.0
  %591 = vmatpush1.msra.mxu0 0.0
  %592 = vmatprep.subr.mxu0 0.0
  %593 = vmatpush1.msra.mxu0 0.0
  %594 = vmatprep.subr.mxu0 0.0
  %595 = vmatpush1.msra.mxu0 0.0
  %596 = vmatprep.subr.mxu0 0.0
  %597 = vmatpush1.msra.mxu0 0.0
  %598 = vmatprep.subr.mxu0 0.0
  %599 = vmatpush1.msra.mxu0 0.0
  %600 = vmatprep.subr.mxu0 0.0
  %601 = vmatpush1.msra.mxu0 0.0
  %602 = vmatprep.subr.mxu0 0.0
  %603 = vmatpush1.msra.mxu0 0.0
  %604 = vmatprep.subr.mxu0 0.0
  %605 = vmatpush1.msra.mxu0 0.0
  %606 = vmatprep.subr.mxu0 0.0
  %607 = vmatpush1.msra.mxu0 0.0
  %608 = vmatprep.subr.mxu0 0.0
  %609 = vmatpush1.msra.mxu0 0.0
  %610 = vmatprep.subr.mxu0 0.0
  %611 = vmatpush1.msra.mxu0 0.0
  %612 = vmatprep.subr.mxu0 0.0
  %613 = vmatpush1.msra.mxu0 0.0
  %614 = vmatprep.subr.mxu0 0.0
  %615 = vmatpush1.msra.mxu0 0.0
  %616 = vmatprep.subr.mxu0 0.0
  %617 = vmatpush1.msra.mxu0 0.0
  %618 = vmatprep.subr.mxu0 0.0
  %619 = vmatpush1.msra.mxu0 0.0
  %620 = vmatprep.subr.mxu0 0.0
  %621 = vmatpush1.msra.mxu0 0.0
  %622 = vmatprep.subr.mxu0 0.0
  %623 = vmatpush1.msra.mxu0 0.0
  %624 = vmatprep.mubr.f32.mxu0 0.0
  %625 = vmatmul.mubr.f32.gmra.mrb[0].mxu0 %v549
  %v626 = vpop.f32.mrb[0].mxu0
  %v627 = vadd.f32 %v530, %v626
  %v628 = vpop.f32.mrb[0].mxu0
  %629 = vmatprep.mubr.f32.mxu0 0.0
  %630 = vmatmul.mubr.f32.gmra.mrb[0].mxu0 %v552
  %v631 = vpop.f32.mrb[0].mxu0
  %v632 = vadd.f32 %v535, %v631
  %v633 = vpop.f32.mrb[0].mxu0
  %634 = vmatprep.mubr.f32.mxu0 0.0
  %635 = vmatmul.mubr.f32.gmra.mrb[0].mxu0 %v555
  %v636 = vpop.f32.mrb[0].mxu0
  %v637 = vadd.f32 %v540, %v636
  %v638 = vpop.f32.mrb[0].mxu0
  %639 = vmatprep.mubr.f32.mxu0 0.0
  %640 = vmatmul.mubr.f32.gmra.mrb[0].mxu0 %v558
  %v641 = vpop.f32.mrb[0].mxu0
  %v642 = vadd.f32 %v545, %v641
  %v643 = vpop.f32.mrb[0].mxu0
  %644 = vdwg.mxu0
  %s645 = scalar_lea.vmem %s3, 64
  %v646 = vld [vmem:[%s645] sm:$0xff]
  %v647 = vld [vmem:[%s645 + $0x8] sm:$0xff]
  %v648 = vld [vmem:[%s645 + $0x10] sm:$0xff]
  %v649 = vld [vmem:[%s645 + $0x18] sm:$0xff]
  %650 = vmatprep.subr.mxu0 0.0
  %651 = vmatpush1.msra.mxu0 %v251
  %652 = vmatprep.subr.mxu0 0.0
  %653 = vmatpush1.msra.mxu0 %v252
  %654 = vmatprep.subr.mxu0 0.0
  %655 = vmatpush1.msra.mxu0 %v253
  %656 = vmatprep.subr.mxu0 0.0
  %657 = vmatpush1.msra.mxu0 %v254
  %658 = vmatprep.subr.mxu0 0.0
  %659 = vmatpush1.msra.mxu0 %v255
  %660 = vmatprep.subr.mxu0 0.0
  %661 = vmatpush1.msra.mxu0 %v256
  %662 = vmatprep.subr.mxu0 0.0
  %663 = vmatpush1.msra.mxu0 %v257
  %664 = vmatprep.subr.mxu0 0.0
  %665 = vmatpush1.msra.mxu0 %v258
  %666 = vmatprep.subr.mxu0 0.0
  %667 = vmatpush1.msra.mxu0 %v259
  %668 = vmatprep.subr.mxu0 0.0
  %669 = vmatpush1.msra.mxu0 %v260
  %670 = vmatprep.subr.mxu0 0.0
  %671 = vmatpush1.msra.mxu0 %v261
  %672 = vmatprep.subr.mxu0 0.0
  %673 = vmatpush1.msra.mxu0 %v262
  %674 = vmatprep.subr.mxu0 0.0
  %675 = vmatpush1.msra.mxu0 %v263
  %676 = vmatprep.subr.mxu0 0.0
  %677 = vmatpush1.msra.mxu0 %v264
  %678 = vmatprep.subr.mxu0 0.0
  %679 = vmatpush1.msra.mxu0 %v265
  %680 = vmatprep.subr.mxu0 0.0
  %681 = vmatpush1.msra.mxu0 %v266
  %682 = vmatprep.subr.mxu0 0.0
  %683 = vmatpush1.msra.mxu0 0.0
  %684 = vmatprep.subr.mxu0 0.0
  %685 = vmatpush1.msra.mxu0 0.0
  %686 = vmatprep.subr.mxu0 0.0
  %687 = vmatpush1.msra.mxu0 0.0
  %688 = vmatprep.subr.mxu0 0.0
  %689 = vmatpush1.msra.mxu0 0.0
  %690 = vmatprep.subr.mxu0 0.0
  %691 = vmatpush1.msra.mxu0 0.0
  %692 = vmatprep.subr.mxu0 0.0
  %693 = vmatpush1.msra.mxu0 0.0
  %694 = vmatprep.subr.mxu0 0.0
  %695 = vmatpush1.msra.mxu0 0.0
  %696 = vmatprep.subr.mxu0 0.0
  %697 = vmatpush1.msra.mxu0 0.0
  %698 = vmatprep.subr.mxu0 0.0
  %699 = vmatpush1.msra.mxu0 0.0
  %700 = vmatprep.subr.mxu0 0.0
  %701 = vmatpush1.msra.mxu0 0.0
  %702 = vmatprep.subr.mxu0 0.0
  %703 = vmatpush1.msra.mxu0 0.0
  %704 = vmatprep.subr.mxu0 0.0
  %705 = vmatpush1.msra.mxu0 0.0
  %706 = vmatprep.subr.mxu0 0.0
  %707 = vmatpush1.msra.mxu0 0.0
  %708 = vmatprep.subr.mxu0 0.0
  %709 = vmatpush1.msra.mxu0 0.0
  %710 = vmatprep.subr.mxu0 0.0
  %711 = vmatpush1.msra.mxu0 0.0
  %712 = vmatprep.subr.mxu0 0.0
  %713 = vmatpush1.msra.mxu0 0.0
  %714 = vmatprep.mubr.f32.mxu0 0.0
  %715 = vmatmul.mubr.f32.gmra.mrb[0].mxu0 %v646
  %v716 = vpop.f32.mrb[0].mxu0
  %v717 = vadd.f32 0.0, %v716
  %v718 = vpop.f32.mrb[0].mxu0
  %719 = vmatprep.mubr.f32.mxu0 0.0
  %720 = vmatmul.mubr.f32.gmra.mrb[0].mxu0 %v647
  %v721 = vpop.f32.mrb[0].mxu0
  %v722 = vadd.f32 0.0, %v721
  %v723 = vpop.f32.mrb[0].mxu0
  %724 = vmatprep.mubr.f32.mxu0 0.0
  %725 = vmatmul.mubr.f32.gmra.mrb[0].mxu0 %v648
  %v726 = vpop.f32.mrb[0].mxu0
  %v727 = vadd.f32 0.0, %v726
  %v728 = vpop.f32.mrb[0].mxu0
  %729 = vmatprep.mubr.f32.mxu0 0.0
  %730 = vmatmul.mubr.f32.gmra.mrb[0].mxu0 %v649
  %v731 = vpop.f32.mrb[0].mxu0
  %v732 = vadd.f32 0.0, %v731
  %v733 = vpop.f32.mrb[0].mxu0
  %734 = vdwg.mxu0
  %v735 = vld [vmem:[%s4 + $0x20] sm:$0xff]
  %v736 = vld [vmem:[%s4 + $0x28] sm:$0xff]
  %v738 = vsel %vm450, %v717, 0
  %v741 = vsel %vm450, %v722, 0
  %v744 = vsel %vm450, %v727, 0
  %v747 = vsel %vm450, %v732, 0
  %749 = vmatprep.subr.mxu0 0.0
  %750 = vmatpush1.msra.mxu0 %v735
  %751 = vmatprep.subr.mxu0 0.0
  %752 = vmatpush1.msra.mxu0 %v736
  %753 = vmatprep.subr.mxu0 0.0
  %754 = vmatpush1.msra.mxu0 0.0
  %755 = vmatprep.subr.mxu0 0.0
  %756 = vmatpush1.msra.mxu0 0.0
  %757 = vmatprep.subr.mxu0 0.0
  %758 = vmatpush1.msra.mxu0 0.0
  %759 = vmatprep.subr.mxu0 0.0
  %760 = vmatpush1.msra.mxu0 0.0
  %761 = vmatprep.subr.mxu0 0.0
  %762 = vmatpush1.msra.mxu0 0.0
  %763 = vmatprep.subr.mxu0 0.0
  %764 = vmatpush1.msra.mxu0 0.0
  %765 = vmatprep.subr.mxu0 0.0
  %766 = vmatpush1.msra.mxu0 0.0
  %767 = vmatprep.subr.mxu0 0.0
  %768 = vmatpush1.msra.mxu0 0.0
  %769 = vmatprep.subr.mxu0 0.0
  %770 = vmatpush1.msra.mxu0 0.0
  %771 = vmatprep.subr.mxu0 0.0
  %772 = vmatpush1.msra.mxu0 0.0
  %773 = vmatprep.subr.mxu0 0.0
  %774 = vmatpush1.msra.mxu0 0.0
  %775 = vmatprep.subr.mxu0 0.0
  %776 = vmatpush1.msra.mxu0 0.0
  %777 = vmatprep.subr.mxu0 0.0
  %778 = vmatpush1.msra.mxu0 0.0
  %779 = vmatprep.subr.mxu0 0.0
  %780 = vmatpush1.msra.mxu0 0.0
  %781 = vmatprep.subr.mxu0 0.0
  %782 = vmatpush1.msra.mxu0 0.0
  %783 = vmatprep.subr.mxu0 0.0
  %784 = vmatpush1.msra.mxu0 0.0
  %785 = vmatprep.subr.mxu0 0.0
  %786 = vmatpush1.msra.mxu0 0.0
  %787 = vmatprep.subr.mxu0 0.0
  %788 = vmatpush1.msra.mxu0 0.0
  %789 = vmatprep.subr.mxu0 0.0
  %790 = vmatpush1.msra.mxu0 0.0
  %791 = vmatprep.subr.mxu0 0.0
  %792 = vmatpush1.msra.mxu0 0.0
  %793 = vmatprep.subr.mxu0 0.0
  %794 = vmatpush1.msra.mxu0 0.0
  %795 = vmatprep.subr.mxu0 0.0
  %796 = vmatpush1.msra.mxu0 0.0
  %797 = vmatprep.subr.mxu0 0.0
  %798 = vmatpush1.msra.mxu0 0.0
  %799 = vmatprep.subr.mxu0 0.0
  %800 = vmatpush1.msra.mxu0 0.0
  %801 = vmatprep.subr.mxu0 0.0
  %802 = vmatpush1.msra.mxu0 0.0
  %803 = vmatprep.subr.mxu0 0.0
  %804 = vmatpush1.msra.mxu0 0.0
  %805 = vmatprep.subr.mxu0 0.0
  %806 = vmatpush1.msra.mxu0 0.0
  %807 = vmatprep.subr.mxu0 0.0
  %808 = vmatpush1.msra.mxu0 0.0
  %809 = vmatprep.subr.mxu0 0.0
  %810 = vmatpush1.msra.mxu0 0.0
  %811 = vmatprep.subr.mxu0 0.0
  %812 = vmatpush1.msra.mxu0 0.0
  %813 = vmatprep.mubr.f32.mxu0 0.0
  %814 = vmatmul.mubr.f32.gmra.mrb[0].mxu0 %v738
  %v815 = vpop.f32.mrb[0].mxu0
  %v816 = vadd.f32 0.0, %v815
  %v817 = vpop.f32.mrb[0].mxu0
  %818 = vmatprep.mubr.f32.mxu0 0.0
  %819 = vmatmul.mubr.f32.gmra.mrb[0].mxu0 %v741
  %v820 = vpop.f32.mrb[0].mxu0
  %v821 = vadd.f32 0.0, %v820
  %v822 = vpop.f32.mrb[0].mxu0
  %823 = vmatprep.mubr.f32.mxu0 0.0
  %824 = vmatmul.mubr.f32.gmra.mrb[0].mxu0 %v744
  %v825 = vpop.f32.mrb[0].mxu0
  %v826 = vadd.f32 0.0, %v825
  %v827 = vpop.f32.mrb[0].mxu0
  %828 = vmatprep.mubr.f32.mxu0 0.0
  %829 = vmatmul.mubr.f32.gmra.mrb[0].mxu0 %v747
  %v830 = vpop.f32.mrb[0].mxu0
  %v831 = vadd.f32 0.0, %v830
  %v832 = vpop.f32.mrb[0].mxu0
  %833 = vdwg.mxu0
  %v834 = vadd.f32 %v627, %v816
  %v835 = vadd.f32 %v632, %v821
  %v836 = vadd.f32 %v637, %v826
  %v837 = vadd.f32 %v642, %v831
  %s838 = scalar_lea.vmem %s3, 96
  %v839 = vld [vmem:[%s838] sm:$0xff]
  %v840 = vld [vmem:[%s838 + $0x8] sm:$0xff]
  %v841 = vld [vmem:[%s838 + $0x10] sm:$0xff]
  %v842 = vld [vmem:[%s838 + $0x18] sm:$0xff]
  %843 = vmatprep.subr.mxu0 0.0
  %844 = vmatpush1.msra.mxu0 %v251
  %845 = vmatprep.subr.mxu0 0.0
  %846 = vmatpush1.msra.mxu0 %v252
  %847 = vmatprep.subr.mxu0 0.0
  %848 = vmatpush1.msra.mxu0 %v253
  %849 = vmatprep.subr.mxu0 0.0
  %850 = vmatpush1.msra.mxu0 %v254
  %851 = vmatprep.subr.mxu0 0.0
  %852 = vmatpush1.msra.mxu0 %v255
  %853 = vmatprep.subr.mxu0 0.0
  %854 = vmatpush1.msra.mxu0 %v256
  %855 = vmatprep.subr.mxu0 0.0
  %856 = vmatpush1.msra.mxu0 %v257
  %857 = vmatprep.subr.mxu0 0.0
  %858 = vmatpush1.msra.mxu0 %v258
  %859 = vmatprep.subr.mxu0 0.0
  %860 = vmatpush1.msra.mxu0 %v259
  %861 = vmatprep.subr.mxu0 0.0
  %862 = vmatpush1.msra.mxu0 %v260
  %863 = vmatprep.subr.mxu0 0.0
  %864 = vmatpush1.msra.mxu0 %v261
  %865 = vmatprep.subr.mxu0 0.0
  %866 = vmatpush1.msra.mxu0 %v262
  %867 = vmatprep.subr.mxu0 0.0
  %868 = vmatpush1.msra.mxu0 %v263
  %869 = vmatprep.subr.mxu0 0.0
  %870 = vmatpush1.msra.mxu0 %v264
  %871 = vmatprep.subr.mxu0 0.0
  %872 = vmatpush1.msra.mxu0 %v265
  %873 = vmatprep.subr.mxu0 0.0
  %874 = vmatpush1.msra.mxu0 %v266
  %875 = vmatprep.subr.mxu0 0.0
  %876 = vmatpush1.msra.mxu0 0.0
  %877 = vmatprep.subr.mxu0 0.0
  %878 = vmatpush1.msra.mxu0 0.0
  %879 = vmatprep.subr.mxu0 0.0
  %880 = vmatpush1.msra.mxu0 0.0
  %881 = vmatprep.subr.mxu0 0.0
  %882 = vmatpush1.msra.mxu0 0.0
  %883 = vmatprep.subr.mxu0 0.0
  %884 = vmatpush1.msra.mxu0 0.0
  %885 = vmatprep.subr.mxu0 0.0
  %886 = vmatpush1.msra.mxu0 0.0
  %887 = vmatprep.subr.mxu0 0.0
  %888 = vmatpush1.msra.mxu0 0.0
  %889 = vmatprep.subr.mxu0 0.0
  %890 = vmatpush1.msra.mxu0 0.0
  %891 = vmatprep.subr.mxu0 0.0
  %892 = vmatpush1.msra.mxu0 0.0
  %893 = vmatprep.subr.mxu0 0.0
  %894 = vmatpush1.msra.mxu0 0.0
  %895 = vmatprep.subr.mxu0 0.0
  %896 = vmatpush1.msra.mxu0 0.0
  %897 = vmatprep.subr.mxu0 0.0
  %898 = vmatpush1.msra.mxu0 0.0
  %899 = vmatprep.subr.mxu0 0.0
  %900 = vmatpush1.msra.mxu0 0.0
  %901 = vmatprep.subr.mxu0 0.0
  %902 = vmatpush1.msra.mxu0 0.0
  %903 = vmatprep.subr.mxu0 0.0
  %904 = vmatpush1.msra.mxu0 0.0
  %905 = vmatprep.subr.mxu0 0.0
  %906 = vmatpush1.msra.mxu0 0.0
  %907 = vmatprep.mubr.f32.mxu0 0.0
  %908 = vmatmul.mubr.f32.gmra.mrb[0].mxu0 %v839
  %v909 = vpop.f32.mrb[0].mxu0
  %v910 = vadd.f32 0.0, %v909
  %v911 = vpop.f32.mrb[0].mxu0
  %912 = vmatprep.mubr.f32.mxu0 0.0
  %913 = vmatmul.mubr.f32.gmra.mrb[0].mxu0 %v840
  %v914 = vpop.f32.mrb[0].mxu0
  %v915 = vadd.f32 0.0, %v914
  %v916 = vpop.f32.mrb[0].mxu0
  %917 = vmatprep.mubr.f32.mxu0 0.0
  %918 = vmatmul.mubr.f32.gmra.mrb[0].mxu0 %v841
  %v919 = vpop.f32.mrb[0].mxu0
  %v920 = vadd.f32 0.0, %v919
  %v921 = vpop.f32.mrb[0].mxu0
  %922 = vmatprep.mubr.f32.mxu0 0.0
  %923 = vmatmul.mubr.f32.gmra.mrb[0].mxu0 %v842
  %v924 = vpop.f32.mrb[0].mxu0
  %v925 = vadd.f32 0.0, %v924
  %v926 = vpop.f32.mrb[0].mxu0
  %927 = vdwg.mxu0
  %v928 = vld [vmem:[%s4 + $0x30] sm:$0xff]
  %v929 = vld [vmem:[%s4 + $0x38] sm:$0xff]
  %v931 = vsel %vm450, %v910, 0
  %v934 = vsel %vm450, %v915, 0
  %v937 = vsel %vm450, %v920, 0
  %v940 = vsel %vm450, %v925, 0
  %942 = vmatprep.subr.mxu0 0.0
  %943 = vmatpush1.msra.mxu0 %v928
  %944 = vmatprep.subr.mxu0 0.0
  %945 = vmatpush1.msra.mxu0 %v929
  %946 = vmatprep.subr.mxu0 0.0
  %947 = vmatpush1.msra.mxu0 0.0
  %948 = vmatprep.subr.mxu0 0.0
  %949 = vmatpush1.msra.mxu0 0.0
  %950 = vmatprep.subr.mxu0 0.0
  %951 = vmatpush1.msra.mxu0 0.0
  %952 = vmatprep.subr.mxu0 0.0
  %953 = vmatpush1.msra.mxu0 0.0
  %954 = vmatprep.subr.mxu0 0.0
  %955 = vmatpush1.msra.mxu0 0.0
  %956 = vmatprep.subr.mxu0 0.0
  %957 = vmatpush1.msra.mxu0 0.0
  %958 = vmatprep.subr.mxu0 0.0
  %959 = vmatpush1.msra.mxu0 0.0
  %960 = vmatprep.subr.mxu0 0.0
  %961 = vmatpush1.msra.mxu0 0.0
  %962 = vmatprep.subr.mxu0 0.0
  %963 = vmatpush1.msra.mxu0 0.0
  %964 = vmatprep.subr.mxu0 0.0
  %965 = vmatpush1.msra.mxu0 0.0
  %966 = vmatprep.subr.mxu0 0.0
  %967 = vmatpush1.msra.mxu0 0.0
  %968 = vmatprep.subr.mxu0 0.0
  %969 = vmatpush1.msra.mxu0 0.0
  %970 = vmatprep.subr.mxu0 0.0
  %971 = vmatpush1.msra.mxu0 0.0
  %972 = vmatprep.subr.mxu0 0.0
  %973 = vmatpush1.msra.mxu0 0.0
  %974 = vmatprep.subr.mxu0 0.0
  %975 = vmatpush1.msra.mxu0 0.0
  %976 = vmatprep.subr.mxu0 0.0
  %977 = vmatpush1.msra.mxu0 0.0
  %978 = vmatprep.subr.mxu0 0.0
  %979 = vmatpush1.msra.mxu0 0.0
  %980 = vmatprep.subr.mxu0 0.0
  %981 = vmatpush1.msra.mxu0 0.0
  %982 = vmatprep.subr.mxu0 0.0
  %983 = vmatpush1.msra.mxu0 0.0
  %984 = vmatprep.subr.mxu0 0.0
  %985 = vmatpush1.msra.mxu0 0.0
  %986 = vmatprep.subr.mxu0 0.0
  %987 = vmatpush1.msra.mxu0 0.0
  %988 = vmatprep.subr.mxu0 0.0
  %989 = vmatpush1.msra.mxu0 0.0
  %990 = vmatprep.subr.mxu0 0.0
  %991 = vmatpush1.msra.mxu0 0.0
  %992 = vmatprep.subr.mxu0 0.0
  %993 = vmatpush1.msra.mxu0 0.0
  %994 = vmatprep.subr.mxu0 0.0
  %995 = vmatpush1.msra.mxu0 0.0
  %996 = vmatprep.subr.mxu0 0.0
  %997 = vmatpush1.msra.mxu0 0.0
  %998 = vmatprep.subr.mxu0 0.0
  %999 = vmatpush1.msra.mxu0 0.0
  %1000 = vmatprep.subr.mxu0 0.0
  %1001 = vmatpush1.msra.mxu0 0.0
  %1002 = vmatprep.subr.mxu0 0.0
  %1003 = vmatpush1.msra.mxu0 0.0
  %1004 = vmatprep.subr.mxu0 0.0
  %1005 = vmatpush1.msra.mxu0 0.0
  %1006 = vmatprep.mubr.f32.mxu0 0.0
  %1007 = vmatmul.mubr.f32.gmra.mrb[0].mxu0 %v931
  %v1008 = vpop.f32.mrb[0].mxu0
  %v1009 = vadd.f32 0.0, %v1008
  %v1010 = vpop.f32.mrb[0].mxu0
  %1011 = vmatprep.mubr.f32.mxu0 0.0
  %1012 = vmatmul.mubr.f32.gmra.mrb[0].mxu0 %v934
  %v1013 = vpop.f32.mrb[0].mxu0
  %v1014 = vadd.f32 0.0, %v1013
  %v1015 = vpop.f32.mrb[0].mxu0
  %1016 = vmatprep.mubr.f32.mxu0 0.0
  %1017 = vmatmul.mubr.f32.gmra.mrb[0].mxu0 %v937
  %v1018 = vpop.f32.mrb[0].mxu0
  %v1019 = vadd.f32 0.0, %v1018
  %v1020 = vpop.f32.mrb[0].mxu0
  %1021 = vmatprep.mubr.f32.mxu0 0.0
  %1022 = vmatmul.mubr.f32.gmra.mrb[0].mxu0 %v940
  %v1023 = vpop.f32.mrb[0].mxu0
  %v1024 = vadd.f32 0.0, %v1023
  %v1025 = vpop.f32.mrb[0].mxu0
  %1026 = vdwg.mxu0
  %v1027 = vadd.f32 %v834, %v1009
  %v1028 = vadd.f32 %v835, %v1014
  %v1029 = vadd.f32 %v836, %v1019
  %v1030 = vadd.f32 %v837, %v1024
  %s1031 = scalar_lea.vmem %s3, 128
  %v1032 = vld [vmem:[%s1031] sm:$0xff]
  %v1033 = vld [vmem:[%s1031 + $0x8] sm:$0xff]
  %v1034 = vld [vmem:[%s1031 + $0x10] sm:$0xff]
  %v1035 = vld [vmem:[%s1031 + $0x18] sm:$0xff]
  %1036 = vmatprep.subr.mxu0 0.0
  %1037 = vmatpush1.msra.mxu0 %v251
  %1038 = vmatprep.subr.mxu0 0.0
  %1039 = vmatpush1.msra.mxu0 %v252
  %1040 = vmatprep.subr.mxu0 0.0
  %1041 = vmatpush1.msra.mxu0 %v253
  %1042 = vmatprep.subr.mxu0 0.0
  %1043 = vmatpush1.msra.mxu0 %v254
  %1044 = vmatprep.subr.mxu0 0.0
  %1045 = vmatpush1.msra.mxu0 %v255
  %1046 = vmatprep.subr.mxu0 0.0
  %1047 = vmatpush1.msra.mxu0 %v256
  %1048 = vmatprep.subr.mxu0 0.0
  %1049 = vmatpush1.msra.mxu0 %v257
  %1050 = vmatprep.subr.mxu0 0.0
  %1051 = vmatpush1.msra.mxu0 %v258
  %1052 = vmatprep.subr.mxu0 0.0
  %1053 = vmatpush1.msra.mxu0 %v259
  %1054 = vmatprep.subr.mxu0 0.0
  %1055 = vmatpush1.msra.mxu0 %v260
  %1056 = vmatprep.subr.mxu0 0.0
  %1057 = vmatpush1.msra.mxu0 %v261
  %1058 = vmatprep.subr.mxu0 0.0
  %1059 = vmatpush1.msra.mxu0 %v262
  %1060 = vmatprep.subr.mxu0 0.0
  %1061 = vmatpush1.msra.mxu0 %v263
  %1062 = vmatprep.subr.mxu0 0.0
  %1063 = vmatpush1.msra.mxu0 %v264
  %1064 = vmatprep.subr.mxu0 0.0
  %1065 = vmatpush1.msra.mxu0 %v265
  %1066 = vmatprep.subr.mxu0 0.0
  %1067 = vmatpush1.msra.mxu0 %v266
  %1068 = vmatprep.subr.mxu0 0.0
  %1069 = vmatpush1.msra.mxu0 0.0
  %1070 = vmatprep.subr.mxu0 0.0
  %1071 = vmatpush1.msra.mxu0 0.0
  %1072 = vmatprep.subr.mxu0 0.0
  %1073 = vmatpush1.msra.mxu0 0.0
  %1074 = vmatprep.subr.mxu0 0.0
  %1075 = vmatpush1.msra.mxu0 0.0
  %1076 = vmatprep.subr.mxu0 0.0
  %1077 = vmatpush1.msra.mxu0 0.0
  %1078 = vmatprep.subr.mxu0 0.0
  %1079 = vmatpush1.msra.mxu0 0.0
  %1080 = vmatprep.subr.mxu0 0.0
  %1081 = vmatpush1.msra.mxu0 0.0
  %1082 = vmatprep.subr.mxu0 0.0
  %1083 = vmatpush1.msra.mxu0 0.0
  %1084 = vmatprep.subr.mxu0 0.0
  %1085 = vmatpush1.msra.mxu0 0.0
  %1086 = vmatprep.subr.mxu0 0.0
  %1087 = vmatpush1.msra.mxu0 0.0
  %1088 = vmatprep.subr.mxu0 0.0
  %1089 = vmatpush1.msra.mxu0 0.0
  %1090 = vmatprep.subr.mxu0 0.0
  %1091 = vmatpush1.msra.mxu0 0.0
  %1092 = vmatprep.subr.mxu0 0.0
  %1093 = vmatpush1.msra.mxu0 0.0
  %1094 = vmatprep.subr.mxu0 0.0
  %1095 = vmatpush1.msra.mxu0 0.0
  %1096 = vmatprep.subr.mxu0 0.0
  %1097 = vmatpush1.msra.mxu0 0.0
  %1098 = vmatprep.subr.mxu0 0.0
  %1099 = vmatpush1.msra.mxu0 0.0
  %1100 = vmatprep.mubr.f32.mxu0 0.0
  %1101 = vmatmul.mubr.f32.gmra.mrb[0].mxu0 %v1032
  %v1102 = vpop.f32.mrb[0].mxu0
  %v1103 = vadd.f32 0.0, %v1102
  %v1104 = vpop.f32.mrb[0].mxu0
  %1105 = vmatprep.mubr.f32.mxu0 0.0
  %1106 = vmatmul.mubr.f32.gmra.mrb[0].mxu0 %v1033
  %v1107 = vpop.f32.mrb[0].mxu0
  %v1108 = vadd.f32 0.0, %v1107
  %v1109 = vpop.f32.mrb[0].mxu0
  %1110 = vmatprep.mubr.f32.mxu0 0.0
  %1111 = vmatmul.mubr.f32.gmra.mrb[0].mxu0 %v1034
  %v1112 = vpop.f32.mrb[0].mxu0
  %v1113 = vadd.f32 0.0, %v1112
  %v1114 = vpop.f32.mrb[0].mxu0
  %1115 = vmatprep.mubr.f32.mxu0 0.0
  %1116 = vmatmul.mubr.f32.gmra.mrb[0].mxu0 %v1035
  %v1117 = vpop.f32.mrb[0].mxu0
  %v1118 = vadd.f32 0.0, %v1117
  %v1119 = vpop.f32.mrb[0].mxu0
  %1120 = vdwg.mxu0
  %v1121 = vld [vmem:[%s4 + $0x40] sm:$0xff]
  %v1122 = vld [vmem:[%s4 + $0x48] sm:$0xff]
  %v1124 = vsel %vm450, %v1103, 0
  %v1127 = vsel %vm450, %v1108, 0
  %v1130 = vsel %vm450, %v1113, 0
  %v1133 = vsel %vm450, %v1118, 0
  %1135 = vmatprep.subr.mxu0 0.0
  %1136 = vmatpush1.msra.mxu0 %v1121
  %1137 = vmatprep.subr.mxu0 0.0
  %1138 = vmatpush1.msra.mxu0 %v1122
  %1139 = vmatprep.subr.mxu0 0.0
  %1140 = vmatpush1.msra.mxu0 0.0
  %1141 = vmatprep.subr.mxu0 0.0
  %1142 = vmatpush1.msra.mxu0 0.0
  %1143 = vmatprep.subr.mxu0 0.0
  %1144 = vmatpush1.msra.mxu0 0.0
  %1145 = vmatprep.subr.mxu0 0.0
  %1146 = vmatpush1.msra.mxu0 0.0
  %1147 = vmatprep.subr.mxu0 0.0
  %1148 = vmatpush1.msra.mxu0 0.0
  %1149 = vmatprep.subr.mxu0 0.0
  %1150 = vmatpush1.msra.mxu0 0.0
  %1151 = vmatprep.subr.mxu0 0.0
  %1152 = vmatpush1.msra.mxu0 0.0
  %1153 = vmatprep.subr.mxu0 0.0
  %1154 = vmatpush1.msra.mxu0 0.0
  %1155 = vmatprep.subr.mxu0 0.0
  %1156 = vmatpush1.msra.mxu0 0.0
  %1157 = vmatprep.subr.mxu0 0.0
  %1158 = vmatpush1.msra.mxu0 0.0
  %1159 = vmatprep.subr.mxu0 0.0
  %1160 = vmatpush1.msra.mxu0 0.0
  %1161 = vmatprep.subr.mxu0 0.0
  %1162 = vmatpush1.msra.mxu0 0.0
  %1163 = vmatprep.subr.mxu0 0.0
  %1164 = vmatpush1.msra.mxu0 0.0
  %1165 = vmatprep.subr.mxu0 0.0
  %1166 = vmatpush1.msra.mxu0 0.0
  %1167 = vmatprep.subr.mxu0 0.0
  %1168 = vmatpush1.msra.mxu0 0.0
  %1169 = vmatprep.subr.mxu0 0.0
  %1170 = vmatpush1.msra.mxu0 0.0
  %1171 = vmatprep.subr.mxu0 0.0
  %1172 = vmatpush1.msra.mxu0 0.0
  %1173 = vmatprep.subr.mxu0 0.0
  %1174 = vmatpush1.msra.mxu0 0.0
  %1175 = vmatprep.subr.mxu0 0.0
  %1176 = vmatpush1.msra.mxu0 0.0
  %1177 = vmatprep.subr.mxu0 0.0
  %1178 = vmatpush1.msra.mxu0 0.0
  %1179 = vmatprep.subr.mxu0 0.0
  %1180 = vmatpush1.msra.mxu0 0.0
  %1181 = vmatprep.subr.mxu0 0.0
  %1182 = vmatpush1.msra.mxu0 0.0
  %1183 = vmatprep.subr.mxu0 0.0
  %1184 = vmatpush1.msra.mxu0 0.0
  %1185 = vmatprep.subr.mxu0 0.0
  %1186 = vmatpush1.msra.mxu0 0.0
  %1187 = vmatprep.subr.mxu0 0.0
  %1188 = vmatpush1.msra.mxu0 0.0
  %1189 = vmatprep.subr.mxu0 0.0
  %1190 = vmatpush1.msra.mxu0 0.0
  %1191 = vmatprep.subr.mxu0 0.0
  %1192 = vmatpush1.msra.mxu0 0.0
  %1193 = vmatprep.subr.mxu0 0.0
  %1194 = vmatpush1.msra.mxu0 0.0
  %1195 = vmatprep.subr.mxu0 0.0
  %1196 = vmatpush1.msra.mxu0 0.0
  %1197 = vmatprep.subr.mxu0 0.0
  %1198 = vmatpush1.msra.mxu0 0.0
  %1199 = vmatprep.mubr.f32.mxu0 0.0
  %1200 = vmatmul.mubr.f32.gmra.mrb[0].mxu0 %v1124
  %v1201 = vpop.f32.mrb[0].mxu0
  %v1202 = vadd.f32 0.0, %v1201
  %v1203 = vpop.f32.mrb[0].mxu0
  %1204 = vmatprep.mubr.f32.mxu0 0.0
  %1205 = vmatmul.mubr.f32.gmra.mrb[0].mxu0 %v1127
  %v1206 = vpop.f32.mrb[0].mxu0
  %v1207 = vadd.f32 0.0, %v1206
  %v1208 = vpop.f32.mrb[0].mxu0
  %1209 = vmatprep.mubr.f32.mxu0 0.0
  %1210 = vmatmul.mubr.f32.gmra.mrb[0].mxu0 %v1130
  %v1211 = vpop.f32.mrb[0].mxu0
  %v1212 = vadd.f32 0.0, %v1211
  %v1213 = vpop.f32.mrb[0].mxu0
  %1214 = vmatprep.mubr.f32.mxu0 0.0
  %1215 = vmatmul.mubr.f32.gmra.mrb[0].mxu0 %v1133
  %v1216 = vpop.f32.mrb[0].mxu0
  %v1217 = vadd.f32 0.0, %v1216
  %v1218 = vpop.f32.mrb[0].mxu0
  %1219 = vdwg.mxu0
  %v1220 = vadd.f32 %v1027, %v1202
  %v1221 = vadd.f32 %v1028, %v1207
  %v1222 = vadd.f32 %v1029, %v1212
  %v1223 = vadd.f32 %v1030, %v1217
  %s1224 = scalar_lea.vmem %s3, 160
  %v1225 = vld [vmem:[%s1224] sm:$0xff]
  %v1226 = vld [vmem:[%s1224 + $0x8] sm:$0xff]
  %v1227 = vld [vmem:[%s1224 + $0x10] sm:$0xff]
  %v1228 = vld [vmem:[%s1224 + $0x18] sm:$0xff]
  %1229 = vmatprep.subr.mxu0 0.0
  %1230 = vmatpush1.msra.mxu0 %v251
  %1231 = vmatprep.subr.mxu0 0.0
  %1232 = vmatpush1.msra.mxu0 %v252
  %1233 = vmatprep.subr.mxu0 0.0
  %1234 = vmatpush1.msra.mxu0 %v253
  %1235 = vmatprep.subr.mxu0 0.0
  %1236 = vmatpush1.msra.mxu0 %v254
  %1237 = vmatprep.subr.mxu0 0.0
  %1238 = vmatpush1.msra.mxu0 %v255
  %1239 = vmatprep.subr.mxu0 0.0
  %1240 = vmatpush1.msra.mxu0 %v256
  %1241 = vmatprep.subr.mxu0 0.0
  %1242 = vmatpush1.msra.mxu0 %v257
  %1243 = vmatprep.subr.mxu0 0.0
  %1244 = vmatpush1.msra.mxu0 %v258
  %1245 = vmatprep.subr.mxu0 0.0
  %1246 = vmatpush1.msra.mxu0 %v259
  %1247 = vmatprep.subr.mxu0 0.0
  %1248 = vmatpush1.msra.mxu0 %v260
  %1249 = vmatprep.subr.mxu0 0.0
  %1250 = vmatpush1.msra.mxu0 %v261
  %1251 = vmatprep.subr.mxu0 0.0
  %1252 = vmatpush1.msra.mxu0 %v262
  %1253 = vmatprep.subr.mxu0 0.0
  %1254 = vmatpush1.msra.mxu0 %v263
  %1255 = vmatprep.subr.mxu0 0.0
  %1256 = vmatpush1.msra.mxu0 %v264
  %1257 = vmatprep.subr.mxu0 0.0
  %1258 = vmatpush1.msra.mxu0 %v265
  %1259 = vmatprep.subr.mxu0 0.0
  %1260 = vmatpush1.msra.mxu0 %v266
  %1261 = vmatprep.subr.mxu0 0.0
  %1262 = vmatpush1.msra.mxu0 0.0
  %1263 = vmatprep.subr.mxu0 0.0
  %1264 = vmatpush1.msra.mxu0 0.0
  %1265 = vmatprep.subr.mxu0 0.0
  %1266 = vmatpush1.msra.mxu0 0.0
  %1267 = vmatprep.subr.mxu0 0.0
  %1268 = vmatpush1.msra.mxu0 0.0
  %1269 = vmatprep.subr.mxu0 0.0
  %1270 = vmatpush1.msra.mxu0 0.0
  %1271 = vmatprep.subr.mxu0 0.0
  %1272 = vmatpush1.msra.mxu0 0.0
  %1273 = vmatprep.subr.mxu0 0.0
  %1274 = vmatpush1.msra.mxu0 0.0
  %1275 = vmatprep.subr.mxu0 0.0
  %1276 = vmatpush1.msra.mxu0 0.0
  %1277 = vmatprep.subr.mxu0 0.0
  %1278 = vmatpush1.msra.mxu0 0.0
  %1279 = vmatprep.subr.mxu0 0.0
  %1280 = vmatpush1.msra.mxu0 0.0
  %1281 = vmatprep.subr.mxu0 0.0
  %1282 = vmatpush1.msra.mxu0 0.0
  %1283 = vmatprep.subr.mxu0 0.0
  %1284 = vmatpush1.msra.mxu0 0.0
  %1285 = vmatprep.subr.mxu0 0.0
  %1286 = vmatpush1.msra.mxu0 0.0
  %1287 = vmatprep.subr.mxu0 0.0
  %1288 = vmatpush1.msra.mxu0 0.0
  %1289 = vmatprep.subr.mxu0 0.0
  %1290 = vmatpush1.msra.mxu0 0.0
  %1291 = vmatprep.subr.mxu0 0.0
  %1292 = vmatpush1.msra.mxu0 0.0
  %1293 = vmatprep.mubr.f32.mxu0 0.0
  %1294 = vmatmul.mubr.f32.gmra.mrb[0].mxu0 %v1225
  %v1295 = vpop.f32.mrb[0].mxu0
  %v1296 = vadd.f32 0.0, %v1295
  %v1297 = vpop.f32.mrb[0].mxu0
  %1298 = vmatprep.mubr.f32.mxu0 0.0
  %1299 = vmatmul.mubr.f32.gmra.mrb[0].mxu0 %v1226
  %v1300 = vpop.f32.mrb[0].mxu0
  %v1301 = vadd.f32 0.0, %v1300
  %v1302 = vpop.f32.mrb[0].mxu0
  %1303 = vmatprep.mubr.f32.mxu0 0.0
  %1304 = vmatmul.mubr.f32.gmra.mrb[0].mxu0 %v1227
  %v1305 = vpop.f32.mrb[0].mxu0
  %v1306 = vadd.f32 0.0, %v1305
  %v1307 = vpop.f32.mrb[0].mxu0
  %1308 = vmatprep.mubr.f32.mxu0 0.0
  %1309 = vmatmul.mubr.f32.gmra.mrb[0].mxu0 %v1228
  %v1310 = vpop.f32.mrb[0].mxu0
  %v1311 = vadd.f32 0.0, %v1310
  %v1312 = vpop.f32.mrb[0].mxu0
  %1313 = vdwg.mxu0
  %v1314 = vld [vmem:[%s4 + $0x50] sm:$0xff]
  %v1315 = vld [vmem:[%s4 + $0x58] sm:$0xff]
  %v1317 = vsel %vm450, %v1296, 0
  %v1320 = vsel %vm450, %v1301, 0
  %v1323 = vsel %vm450, %v1306, 0
  %v1326 = vsel %vm450, %v1311, 0
  %1328 = vmatprep.subr.mxu0 0.0
  %1329 = vmatpush1.msra.mxu0 %v1314
  %1330 = vmatprep.subr.mxu0 0.0
  %1331 = vmatpush1.msra.mxu0 %v1315
  %1332 = vmatprep.subr.mxu0 0.0
  %1333 = vmatpush1.msra.mxu0 0.0
  %1334 = vmatprep.subr.mxu0 0.0
  %1335 = vmatpush1.msra.mxu0 0.0
  %1336 = vmatprep.subr.mxu0 0.0
  %1337 = vmatpush1.msra.mxu0 0.0
  %1338 = vmatprep.subr.mxu0 0.0
  %1339 = vmatpush1.msra.mxu0 0.0
  %1340 = vmatprep.subr.mxu0 0.0
  %1341 = vmatpush1.msra.mxu0 0.0
  %1342 = vmatprep.subr.mxu0 0.0
  %1343 = vmatpush1.msra.mxu0 0.0
  %1344 = vmatprep.subr.mxu0 0.0
  %1345 = vmatpush1.msra.mxu0 0.0
  %1346 = vmatprep.subr.mxu0 0.0
  %1347 = vmatpush1.msra.mxu0 0.0
  %1348 = vmatprep.subr.mxu0 0.0
  %1349 = vmatpush1.msra.mxu0 0.0
  %1350 = vmatprep.subr.mxu0 0.0
  %1351 = vmatpush1.msra.mxu0 0.0
  %1352 = vmatprep.subr.mxu0 0.0
  %1353 = vmatpush1.msra.mxu0 0.0
  %1354 = vmatprep.subr.mxu0 0.0
  %1355 = vmatpush1.msra.mxu0 0.0
  %1356 = vmatprep.subr.mxu0 0.0
  %1357 = vmatpush1.msra.mxu0 0.0
  %1358 = vmatprep.subr.mxu0 0.0
  %1359 = vmatpush1.msra.mxu0 0.0
  %1360 = vmatprep.subr.mxu0 0.0
  %1361 = vmatpush1.msra.mxu0 0.0
  %1362 = vmatprep.subr.mxu0 0.0
  %1363 = vmatpush1.msra.mxu0 0.0
  %1364 = vmatprep.subr.mxu0 0.0
  %1365 = vmatpush1.msra.mxu0 0.0
  %1366 = vmatprep.subr.mxu0 0.0
  %1367 = vmatpush1.msra.mxu0 0.0
  %1368 = vmatprep.subr.mxu0 0.0
  %1369 = vmatpush1.msra.mxu0 0.0
  %1370 = vmatprep.subr.mxu0 0.0
  %1371 = vmatpush1.msra.mxu0 0.0
  %1372 = vmatprep.subr.mxu0 0.0
  %1373 = vmatpush1.msra.mxu0 0.0
  %1374 = vmatprep.subr.mxu0 0.0
  %1375 = vmatpush1.msra.mxu0 0.0
  %1376 = vmatprep.subr.mxu0 0.0
  %1377 = vmatpush1.msra.mxu0 0.0
  %1378 = vmatprep.subr.mxu0 0.0
  %1379 = vmatpush1.msra.mxu0 0.0
  %1380 = vmatprep.subr.mxu0 0.0
  %1381 = vmatpush1.msra.mxu0 0.0
  %1382 = vmatprep.subr.mxu0 0.0
  %1383 = vmatpush1.msra.mxu0 0.0
  %1384 = vmatprep.subr.mxu0 0.0
  %1385 = vmatpush1.msra.mxu0 0.0
  %1386 = vmatprep.subr.mxu0 0.0
  %1387 = vmatpush1.msra.mxu0 0.0
  %1388 = vmatprep.subr.mxu0 0.0
  %1389 = vmatpush1.msra.mxu0 0.0
  %1390 = vmatprep.subr.mxu0 0.0
  %1391 = vmatpush1.msra.mxu0 0.0
  %1392 = vmatprep.mubr.f32.mxu0 0.0
  %1393 = vmatmul.mubr.f32.gmra.mrb[0].mxu0 %v1317
  %v1394 = vpop.f32.mrb[0].mxu0
  %v1395 = vadd.f32 0.0, %v1394
  %v1396 = vpop.f32.mrb[0].mxu0
  %1397 = vmatprep.mubr.f32.mxu0 0.0
  %1398 = vmatmul.mubr.f32.gmra.mrb[0].mxu0 %v1320
  %v1399 = vpop.f32.mrb[0].mxu0
  %v1400 = vadd.f32 0.0, %v1399
  %v1401 = vpop.f32.mrb[0].mxu0
  %1402 = vmatprep.mubr.f32.mxu0 0.0
  %1403 = vmatmul.mubr.f32.gmra.mrb[0].mxu0 %v1323
  %v1404 = vpop.f32.mrb[0].mxu0
  %v1405 = vadd.f32 0.0, %v1404
  %v1406 = vpop.f32.mrb[0].mxu0
  %1407 = vmatprep.mubr.f32.mxu0 0.0
  %1408 = vmatmul.mubr.f32.gmra.mrb[0].mxu0 %v1326
  %v1409 = vpop.f32.mrb[0].mxu0
  %v1410 = vadd.f32 0.0, %v1409
  %v1411 = vpop.f32.mrb[0].mxu0
  %1412 = vdwg.mxu0
  %v1413 = vadd.f32 %v1220, %v1395
  %v1414 = vadd.f32 %v1221, %v1400
  %v1415 = vadd.f32 %v1222, %v1405
  %v1416 = vadd.f32 %v1223, %v1410
  %s1417 = scalar_lea.vmem %s3, 192
  %v1418 = vld [vmem:[%s1417] sm:$0xff]
  %v1419 = vld [vmem:[%s1417 + $0x8] sm:$0xff]
  %v1420 = vld [vmem:[%s1417 + $0x10] sm:$0xff]
  %v1421 = vld [vmem:[%s1417 + $0x18] sm:$0xff]
  %1422 = vmatprep.subr.mxu0 0.0
  %1423 = vmatpush1.msra.mxu0 %v251
  %1424 = vmatprep.subr.mxu0 0.0
  %1425 = vmatpush1.msra.mxu0 %v252
  %1426 = vmatprep.subr.mxu0 0.0
  %1427 = vmatpush1.msra.mxu0 %v253
  %1428 = vmatprep.subr.mxu0 0.0
  %1429 = vmatpush1.msra.mxu0 %v254
  %1430 = vmatprep.subr.mxu0 0.0
  %1431 = vmatpush1.msra.mxu0 %v255
  %1432 = vmatprep.subr.mxu0 0.0
  %1433 = vmatpush1.msra.mxu0 %v256
  %1434 = vmatprep.subr.mxu0 0.0
  %1435 = vmatpush1.msra.mxu0 %v257
  %1436 = vmatprep.subr.mxu0 0.0
  %1437 = vmatpush1.msra.mxu0 %v258
  %1438 = vmatprep.subr.mxu0 0.0
  %1439 = vmatpush1.msra.mxu0 %v259
  %1440 = vmatprep.subr.mxu0 0.0
  %1441 = vmatpush1.msra.mxu0 %v260
  %1442 = vmatprep.subr.mxu0 0.0
  %1443 = vmatpush1.msra.mxu0 %v261
  %1444 = vmatprep.subr.mxu0 0.0
  %1445 = vmatpush1.msra.mxu0 %v262
  %1446 = vmatprep.subr.mxu0 0.0
  %1447 = vmatpush1.msra.mxu0 %v263
  %1448 = vmatprep.subr.mxu0 0.0
  %1449 = vmatpush1.msra.mxu0 %v264
  %1450 = vmatprep.subr.mxu0 0.0
  %1451 = vmatpush1.msra.mxu0 %v265
  %1452 = vmatprep.subr.mxu0 0.0
  %1453 = vmatpush1.msra.mxu0 %v266
  %1454 = vmatprep.subr.mxu0 0.0
  %1455 = vmatpush1.msra.mxu0 0.0
  %1456 = vmatprep.subr.mxu0 0.0
  %1457 = vmatpush1.msra.mxu0 0.0
  %1458 = vmatprep.subr.mxu0 0.0
  %1459 = vmatpush1.msra.mxu0 0.0
  %1460 = vmatprep.subr.mxu0 0.0
  %1461 = vmatpush1.msra.mxu0 0.0
  %1462 = vmatprep.subr.mxu0 0.0
  %1463 = vmatpush1.msra.mxu0 0.0
  %1464 = vmatprep.subr.mxu0 0.0
  %1465 = vmatpush1.msra.mxu0 0.0
  %1466 = vmatprep.subr.mxu0 0.0
  %1467 = vmatpush1.msra.mxu0 0.0
  %1468 = vmatprep.subr.mxu0 0.0
  %1469 = vmatpush1.msra.mxu0 0.0
  %1470 = vmatprep.subr.mxu0 0.0
  %1471 = vmatpush1.msra.mxu0 0.0
  %1472 = vmatprep.subr.mxu0 0.0
  %1473 = vmatpush1.msra.mxu0 0.0
  %1474 = vmatprep.subr.mxu0 0.0
  %1475 = vmatpush1.msra.mxu0 0.0
  %1476 = vmatprep.subr.mxu0 0.0
  %1477 = vmatpush1.msra.mxu0 0.0
  %1478 = vmatprep.subr.mxu0 0.0
  %1479 = vmatpush1.msra.mxu0 0.0
  %1480 = vmatprep.subr.mxu0 0.0
  %1481 = vmatpush1.msra.mxu0 0.0
  %1482 = vmatprep.subr.mxu0 0.0
  %1483 = vmatpush1.msra.mxu0 0.0
  %1484 = vmatprep.subr.mxu0 0.0
  %1485 = vmatpush1.msra.mxu0 0.0
  %1486 = vmatprep.mubr.f32.mxu0 0.0
  %1487 = vmatmul.mubr.f32.gmra.mrb[0].mxu0 %v1418
  %v1488 = vpop.f32.mrb[0].mxu0
  %v1489 = vadd.f32 0.0, %v1488
  %v1490 = vpop.f32.mrb[0].mxu0
  %1491 = vmatprep.mubr.f32.mxu0 0.0
  %1492 = vmatmul.mubr.f32.gmra.mrb[0].mxu0 %v1419
  %v1493 = vpop.f32.mrb[0].mxu0
  %v1494 = vadd.f32 0.0, %v1493
  %v1495 = vpop.f32.mrb[0].mxu0
  %1496 = vmatprep.mubr.f32.mxu0 0.0
  %1497 = vmatmul.mubr.f32.gmra.mrb[0].mxu0 %v1420
  %v1498 = vpop.f32.mrb[0].mxu0
  %v1499 = vadd.f32 0.0, %v1498
  %v1500 = vpop.f32.mrb[0].mxu0
  %1501 = vmatprep.mubr.f32.mxu0 0.0
  %1502 = vmatmul.mubr.f32.gmra.mrb[0].mxu0 %v1421
  %v1503 = vpop.f32.mrb[0].mxu0
  %v1504 = vadd.f32 0.0, %v1503
  %v1505 = vpop.f32.mrb[0].mxu0
  %1506 = vdwg.mxu0
  %v1507 = vld [vmem:[%s4 + $0x60] sm:$0xff]
  %v1508 = vld [vmem:[%s4 + $0x68] sm:$0xff]
  %v1510 = vsel %vm450, %v1489, 0
  %v1513 = vsel %vm450, %v1494, 0
  %v1516 = vsel %vm450, %v1499, 0
  %v1519 = vsel %vm450, %v1504, 0
  %1521 = vmatprep.subr.mxu0 0.0
  %1522 = vmatpush1.msra.mxu0 %v1507
  %1523 = vmatprep.subr.mxu0 0.0
  %1524 = vmatpush1.msra.mxu0 %v1508
  %1525 = vmatprep.subr.mxu0 0.0
  %1526 = vmatpush1.msra.mxu0 0.0
  %1527 = vmatprep.subr.mxu0 0.0
  %1528 = vmatpush1.msra.mxu0 0.0
  %1529 = vmatprep.subr.mxu0 0.0
  %1530 = vmatpush1.msra.mxu0 0.0
  %1531 = vmatprep.subr.mxu0 0.0
  %1532 = vmatpush1.msra.mxu0 0.0
  %1533 = vmatprep.subr.mxu0 0.0
  %1534 = vmatpush1.msra.mxu0 0.0
  %1535 = vmatprep.subr.mxu0 0.0
  %1536 = vmatpush1.msra.mxu0 0.0
  %1537 = vmatprep.subr.mxu0 0.0
  %1538 = vmatpush1.msra.mxu0 0.0
  %1539 = vmatprep.subr.mxu0 0.0
  %1540 = vmatpush1.msra.mxu0 0.0
  %1541 = vmatprep.subr.mxu0 0.0
  %1542 = vmatpush1.msra.mxu0 0.0
  %1543 = vmatprep.subr.mxu0 0.0
  %1544 = vmatpush1.msra.mxu0 0.0
  %1545 = vmatprep.subr.mxu0 0.0
  %1546 = vmatpush1.msra.mxu0 0.0
  %1547 = vmatprep.subr.mxu0 0.0
  %1548 = vmatpush1.msra.mxu0 0.0
  %1549 = vmatprep.subr.mxu0 0.0
  %1550 = vmatpush1.msra.mxu0 0.0
  %1551 = vmatprep.subr.mxu0 0.0
  %1552 = vmatpush1.msra.mxu0 0.0
  %1553 = vmatprep.subr.mxu0 0.0
  %1554 = vmatpush1.msra.mxu0 0.0
  %1555 = vmatprep.subr.mxu0 0.0
  %1556 = vmatpush1.msra.mxu0 0.0
  %1557 = vmatprep.subr.mxu0 0.0
  %1558 = vmatpush1.msra.mxu0 0.0
  %1559 = vmatprep.subr.mxu0 0.0
  %1560 = vmatpush1.msra.mxu0 0.0
  %1561 = vmatprep.subr.mxu0 0.0
  %1562 = vmatpush1.msra.mxu0 0.0
  %1563 = vmatprep.subr.mxu0 0.0
  %1564 = vmatpush1.msra.mxu0 0.0
  %1565 = vmatprep.subr.mxu0 0.0
  %1566 = vmatpush1.msra.mxu0 0.0
  %1567 = vmatprep.subr.mxu0 0.0
  %1568 = vmatpush1.msra.mxu0 0.0
  %1569 = vmatprep.subr.mxu0 0.0
  %1570 = vmatpush1.msra.mxu0 0.0
  %1571 = vmatprep.subr.mxu0 0.0
  %1572 = vmatpush1.msra.mxu0 0.0
  %1573 = vmatprep.subr.mxu0 0.0
  %1574 = vmatpush1.msra.mxu0 0.0
  %1575 = vmatprep.subr.mxu0 0.0
  %1576 = vmatpush1.msra.mxu0 0.0
  %1577 = vmatprep.subr.mxu0 0.0
  %1578 = vmatpush1.msra.mxu0 0.0
  %1579 = vmatprep.subr.mxu0 0.0
  %1580 = vmatpush1.msra.mxu0 0.0
  %1581 = vmatprep.subr.mxu0 0.0
  %1582 = vmatpush1.msra.mxu0 0.0
  %1583 = vmatprep.subr.mxu0 0.0
  %1584 = vmatpush1.msra.mxu0 0.0
  %1585 = vmatprep.mubr.f32.mxu0 0.0
  %1586 = vmatmul.mubr.f32.gmra.mrb[0].mxu0 %v1510
  %v1587 = vpop.f32.mrb[0].mxu0
  %v1588 = vadd.f32 0.0, %v1587
  %v1589 = vpop.f32.mrb[0].mxu0
  %1590 = vmatprep.mubr.f32.mxu0 0.0
  %1591 = vmatmul.mubr.f32.gmra.mrb[0].mxu0 %v1513
  %v1592 = vpop.f32.mrb[0].mxu0
  %v1593 = vadd.f32 0.0, %v1592
  %v1594 = vpop.f32.mrb[0].mxu0
  %1595 = vmatprep.mubr.f32.mxu0 0.0
  %1596 = vmatmul.mubr.f32.gmra.mrb[0].mxu0 %v1516
  %v1597 = vpop.f32.mrb[0].mxu0
  %v1598 = vadd.f32 0.0, %v1597
  %v1599 = vpop.f32.mrb[0].mxu0
  %1600 = vmatprep.mubr.f32.mxu0 0.0
  %1601 = vmatmul.mubr.f32.gmra.mrb[0].mxu0 %v1519
  %v1602 = vpop.f32.mrb[0].mxu0
  %v1603 = vadd.f32 0.0, %v1602
  %v1604 = vpop.f32.mrb[0].mxu0
  %1605 = vdwg.mxu0
  %v1606 = vadd.f32 %v1413, %v1588
  %v1607 = vadd.f32 %v1414, %v1593
  %v1608 = vadd.f32 %v1415, %v1598
  %v1609 = vadd.f32 %v1416, %v1603
  %s1610 = scalar_lea.vmem %s3, 224
  %v1611 = vld [vmem:[%s1610] sm:$0xff]
  %v1612 = vld [vmem:[%s1610 + $0x8] sm:$0xff]
  %v1613 = vld [vmem:[%s1610 + $0x10] sm:$0xff]
  %v1614 = vld [vmem:[%s1610 + $0x18] sm:$0xff]
  %1615 = vmatprep.subr.mxu0 0.0
  %1616 = vmatpush1.msra.mxu0 %v251
  %1617 = vmatprep.subr.mxu0 0.0
  %1618 = vmatpush1.msra.mxu0 %v252
  %1619 = vmatprep.subr.mxu0 0.0
  %1620 = vmatpush1.msra.mxu0 %v253
  %1621 = vmatprep.subr.mxu0 0.0
  %1622 = vmatpush1.msra.mxu0 %v254
  %1623 = vmatprep.subr.mxu0 0.0
  %1624 = vmatpush1.msra.mxu0 %v255
  %1625 = vmatprep.subr.mxu0 0.0
  %1626 = vmatpush1.msra.mxu0 %v256
  %1627 = vmatprep.subr.mxu0 0.0
  %1628 = vmatpush1.msra.mxu0 %v257
  %1629 = vmatprep.subr.mxu0 0.0
  %1630 = vmatpush1.msra.mxu0 %v258
  %1631 = vmatprep.subr.mxu0 0.0
  %1632 = vmatpush1.msra.mxu0 %v259
  %1633 = vmatprep.subr.mxu0 0.0
  %1634 = vmatpush1.msra.mxu0 %v260
  %1635 = vmatprep.subr.mxu0 0.0
  %1636 = vmatpush1.msra.mxu0 %v261
  %1637 = vmatprep.subr.mxu0 0.0
  %1638 = vmatpush1.msra.mxu0 %v262
  %1639 = vmatprep.subr.mxu0 0.0
  %1640 = vmatpush1.msra.mxu0 %v263
  %1641 = vmatprep.subr.mxu0 0.0
  %1642 = vmatpush1.msra.mxu0 %v264
  %1643 = vmatprep.subr.mxu0 0.0
  %1644 = vmatpush1.msra.mxu0 %v265
  %1645 = vmatprep.subr.mxu0 0.0
  %1646 = vmatpush1.msra.mxu0 %v266
  %1647 = vmatprep.subr.mxu0 0.0
  %1648 = vmatpush1.msra.mxu0 0.0
  %1649 = vmatprep.subr.mxu0 0.0
  %1650 = vmatpush1.msra.mxu0 0.0
  %1651 = vmatprep.subr.mxu0 0.0
  %1652 = vmatpush1.msra.mxu0 0.0
  %1653 = vmatprep.subr.mxu0 0.0
  %1654 = vmatpush1.msra.mxu0 0.0
  %1655 = vmatprep.subr.mxu0 0.0
  %1656 = vmatpush1.msra.mxu0 0.0
  %1657 = vmatprep.subr.mxu0 0.0
  %1658 = vmatpush1.msra.mxu0 0.0
  %1659 = vmatprep.subr.mxu0 0.0
  %1660 = vmatpush1.msra.mxu0 0.0
  %1661 = vmatprep.subr.mxu0 0.0
  %1662 = vmatpush1.msra.mxu0 0.0
  %1663 = vmatprep.subr.mxu0 0.0
  %1664 = vmatpush1.msra.mxu0 0.0
  %1665 = vmatprep.subr.mxu0 0.0
  %1666 = vmatpush1.msra.mxu0 0.0
  %1667 = vmatprep.subr.mxu0 0.0
  %1668 = vmatpush1.msra.mxu0 0.0
  %1669 = vmatprep.subr.mxu0 0.0
  %1670 = vmatpush1.msra.mxu0 0.0
  %1671 = vmatprep.subr.mxu0 0.0
  %1672 = vmatpush1.msra.mxu0 0.0
  %1673 = vmatprep.subr.mxu0 0.0
  %1674 = vmatpush1.msra.mxu0 0.0
  %1675 = vmatprep.subr.mxu0 0.0
  %1676 = vmatpush1.msra.mxu0 0.0
  %1677 = vmatprep.subr.mxu0 0.0
  %1678 = vmatpush1.msra.mxu0 0.0
  %1679 = vmatprep.mubr.f32.mxu0 0.0
  %1680 = vmatmul.mubr.f32.gmra.mrb[0].mxu0 %v1611
  %v1681 = vpop.f32.mrb[0].mxu0
  %v1682 = vadd.f32 0.0, %v1681
  %v1683 = vpop.f32.mrb[0].mxu0
  %1684 = vmatprep.mubr.f32.mxu0 0.0
  %1685 = vmatmul.mubr.f32.gmra.mrb[0].mxu0 %v1612
  %v1686 = vpop.f32.mrb[0].mxu0
  %v1687 = vadd.f32 0.0, %v1686
  %v1688 = vpop.f32.mrb[0].mxu0
  %1689 = vmatprep.mubr.f32.mxu0 0.0
  %1690 = vmatmul.mubr.f32.gmra.mrb[0].mxu0 %v1613
  %v1691 = vpop.f32.mrb[0].mxu0
  %v1692 = vadd.f32 0.0, %v1691
  %v1693 = vpop.f32.mrb[0].mxu0
  %1694 = vmatprep.mubr.f32.mxu0 0.0
  %1695 = vmatmul.mubr.f32.gmra.mrb[0].mxu0 %v1614
  %v1696 = vpop.f32.mrb[0].mxu0
  %v1697 = vadd.f32 0.0, %v1696
  %v1698 = vpop.f32.mrb[0].mxu0
  %1699 = vdwg.mxu0
  %v1700 = vld [vmem:[%s4 + $0x70] sm:$0xff]
  %v1701 = vld [vmem:[%s4 + $0x78] sm:$0xff]
  %v1703 = vsel %vm450, %v1682, 0
  %v1706 = vsel %vm450, %v1687, 0
  %v1709 = vsel %vm450, %v1692, 0
  %v1712 = vsel %vm450, %v1697, 0
  %1714 = vmatprep.subr.mxu0 0.0
  %1715 = vmatpush1.msra.mxu0 %v1700
  %1716 = vmatprep.subr.mxu0 0.0
  %1717 = vmatpush1.msra.mxu0 %v1701
  %1718 = vmatprep.subr.mxu0 0.0
  %1719 = vmatpush1.msra.mxu0 0.0
  %1720 = vmatprep.subr.mxu0 0.0
  %1721 = vmatpush1.msra.mxu0 0.0
  %1722 = vmatprep.subr.mxu0 0.0
  %1723 = vmatpush1.msra.mxu0 0.0
  %1724 = vmatprep.subr.mxu0 0.0
  %1725 = vmatpush1.msra.mxu0 0.0
  %1726 = vmatprep.subr.mxu0 0.0
  %1727 = vmatpush1.msra.mxu0 0.0
  %1728 = vmatprep.subr.mxu0 0.0
  %1729 = vmatpush1.msra.mxu0 0.0
  %1730 = vmatprep.subr.mxu0 0.0
  %1731 = vmatpush1.msra.mxu0 0.0
  %1732 = vmatprep.subr.mxu0 0.0
  %1733 = vmatpush1.msra.mxu0 0.0
  %1734 = vmatprep.subr.mxu0 0.0
  %1735 = vmatpush1.msra.mxu0 0.0
  %1736 = vmatprep.subr.mxu0 0.0
  %1737 = vmatpush1.msra.mxu0 0.0
  %1738 = vmatprep.subr.mxu0 0.0
  %1739 = vmatpush1.msra.mxu0 0.0
  %1740 = vmatprep.subr.mxu0 0.0
  %1741 = vmatpush1.msra.mxu0 0.0
  %1742 = vmatprep.subr.mxu0 0.0
  %1743 = vmatpush1.msra.mxu0 0.0
  %1744 = vmatprep.subr.mxu0 0.0
  %1745 = vmatpush1.msra.mxu0 0.0
  %1746 = vmatprep.subr.mxu0 0.0
  %1747 = vmatpush1.msra.mxu0 0.0
  %1748 = vmatprep.subr.mxu0 0.0
  %1749 = vmatpush1.msra.mxu0 0.0
  %1750 = vmatprep.subr.mxu0 0.0
  %1751 = vmatpush1.msra.mxu0 0.0
  %1752 = vmatprep.subr.mxu0 0.0
  %1753 = vmatpush1.msra.mxu0 0.0
  %1754 = vmatprep.subr.mxu0 0.0
  %1755 = vmatpush1.msra.mxu0 0.0
  %1756 = vmatprep.subr.mxu0 0.0
  %1757 = vmatpush1.msra.mxu0 0.0
  %1758 = vmatprep.subr.mxu0 0.0
  %1759 = vmatpush1.msra.mxu0 0.0
  %1760 = vmatprep.subr.mxu0 0.0
  %1761 = vmatpush1.msra.mxu0 0.0
  %1762 = vmatprep.subr.mxu0 0.0
  %1763 = vmatpush1.msra.mxu0 0.0
  %1764 = vmatprep.subr.mxu0 0.0
  %1765 = vmatpush1.msra.mxu0 0.0
  %1766 = vmatprep.subr.mxu0 0.0
  %1767 = vmatpush1.msra.mxu0 0.0
  %1768 = vmatprep.subr.mxu0 0.0
  %1769 = vmatpush1.msra.mxu0 0.0
  %1770 = vmatprep.subr.mxu0 0.0
  %1771 = vmatpush1.msra.mxu0 0.0
  %1772 = vmatprep.subr.mxu0 0.0
  %1773 = vmatpush1.msra.mxu0 0.0
  %1774 = vmatprep.subr.mxu0 0.0
  %1775 = vmatpush1.msra.mxu0 0.0
  %1776 = vmatprep.subr.mxu0 0.0
  %1777 = vmatpush1.msra.mxu0 0.0
  %1778 = vmatprep.mubr.f32.mxu0 0.0
  %1779 = vmatmul.mubr.f32.gmra.mrb[0].mxu0 %v1703
  %v1780 = vpop.f32.mrb[0].mxu0
  %v1781 = vadd.f32 0.0, %v1780
  %v1782 = vpop.f32.mrb[0].mxu0
  %1783 = vmatprep.mubr.f32.mxu0 0.0
  %1784 = vmatmul.mubr.f32.gmra.mrb[0].mxu0 %v1706
  %v1785 = vpop.f32.mrb[0].mxu0
  %v1786 = vadd.f32 0.0, %v1785
  %v1787 = vpop.f32.mrb[0].mxu0
  %1788 = vmatprep.mubr.f32.mxu0 0.0
  %1789 = vmatmul.mubr.f32.gmra.mrb[0].mxu0 %v1709
  %v1790 = vpop.f32.mrb[0].mxu0
  %v1791 = vadd.f32 0.0, %v1790
  %v1792 = vpop.f32.mrb[0].mxu0
  %1793 = vmatprep.mubr.f32.mxu0 0.0
  %1794 = vmatmul.mubr.f32.gmra.mrb[0].mxu0 %v1712
  %v1795 = vpop.f32.mrb[0].mxu0
  %v1796 = vadd.f32 0.0, %v1795
  %v1797 = vpop.f32.mrb[0].mxu0
  %1798 = vdwg.mxu0
  %v1799 = vadd.f32 %v1606, %v1781
  %v1800 = vadd.f32 %v1607, %v1786
  %v1801 = vadd.f32 %v1608, %v1791
  %v1802 = vadd.f32 %v1609, %v1796
  %s1803 = scalar_lea.vmem %s3, 256
  %v1804 = vld [vmem:[%s1803] sm:$0xff]
  %v1805 = vld [vmem:[%s1803 + $0x8] sm:$0xff]
  %v1806 = vld [vmem:[%s1803 + $0x10] sm:$0xff]
  %v1807 = vld [vmem:[%s1803 + $0x18] sm:$0xff]
  %1808 = vmatprep.subr.mxu0 0.0
  %1809 = vmatpush1.msra.mxu0 %v251
  %1810 = vmatprep.subr.mxu0 0.0
  %1811 = vmatpush1.msra.mxu0 %v252
  %1812 = vmatprep.subr.mxu0 0.0
  %1813 = vmatpush1.msra.mxu0 %v253
  %1814 = vmatprep.subr.mxu0 0.0
  %1815 = vmatpush1.msra.mxu0 %v254
  %1816 = vmatprep.subr.mxu0 0.0
  %1817 = vmatpush1.msra.mxu0 %v255
  %1818 = vmatprep.subr.mxu0 0.0
  %1819 = vmatpush1.msra.mxu0 %v256
  %1820 = vmatprep.subr.mxu0 0.0
  %1821 = vmatpush1.msra.mxu0 %v257
  %1822 = vmatprep.subr.mxu0 0.0
  %1823 = vmatpush1.msra.mxu0 %v258
  %1824 = vmatprep.subr.mxu0 0.0
  %1825 = vmatpush1.msra.mxu0 %v259
  %1826 = vmatprep.subr.mxu0 0.0
  %1827 = vmatpush1.msra.mxu0 %v260
  %1828 = vmatprep.subr.mxu0 0.0
  %1829 = vmatpush1.msra.mxu0 %v261
  %1830 = vmatprep.subr.mxu0 0.0
  %1831 = vmatpush1.msra.mxu0 %v262
  %1832 = vmatprep.subr.mxu0 0.0
  %1833 = vmatpush1.msra.mxu0 %v263
  %1834 = vmatprep.subr.mxu0 0.0
  %1835 = vmatpush1.msra.mxu0 %v264
  %1836 = vmatprep.subr.mxu0 0.0
  %1837 = vmatpush1.msra.mxu0 %v265
  %1838 = vmatprep.subr.mxu0 0.0
  %1839 = vmatpush1.msra.mxu0 %v266
  %1840 = vmatprep.subr.mxu0 0.0
  %1841 = vmatpush1.msra.mxu0 0.0
  %1842 = vmatprep.subr.mxu0 0.0
  %1843 = vmatpush1.msra.mxu0 0.0
  %1844 = vmatprep.subr.mxu0 0.0
  %1845 = vmatpush1.msra.mxu0 0.0
  %1846 = vmatprep.subr.mxu0 0.0
  %1847 = vmatpush1.msra.mxu0 0.0
  %1848 = vmatprep.subr.mxu0 0.0
  %1849 = vmatpush1.msra.mxu0 0.0
  %1850 = vmatprep.subr.mxu0 0.0
  %1851 = vmatpush1.msra.mxu0 0.0
  %1852 = vmatprep.subr.mxu0 0.0
  %1853 = vmatpush1.msra.mxu0 0.0
  %1854 = vmatprep.subr.mxu0 0.0
  %1855 = vmatpush1.msra.mxu0 0.0
  %1856 = vmatprep.subr.mxu0 0.0
  %1857 = vmatpush1.msra.mxu0 0.0
  %1858 = vmatprep.subr.mxu0 0.0
  %1859 = vmatpush1.msra.mxu0 0.0
  %1860 = vmatprep.subr.mxu0 0.0
  %1861 = vmatpush1.msra.mxu0 0.0
  %1862 = vmatprep.subr.mxu0 0.0
  %1863 = vmatpush1.msra.mxu0 0.0
  %1864 = vmatprep.subr.mxu0 0.0
  %1865 = vmatpush1.msra.mxu0 0.0
  %1866 = vmatprep.subr.mxu0 0.0
  %1867 = vmatpush1.msra.mxu0 0.0
  %1868 = vmatprep.subr.mxu0 0.0
  %1869 = vmatpush1.msra.mxu0 0.0
  %1870 = vmatprep.subr.mxu0 0.0
  %1871 = vmatpush1.msra.mxu0 0.0
  %1872 = vmatprep.mubr.f32.mxu0 0.0
  %1873 = vmatmul.mubr.f32.gmra.mrb[0].mxu0 %v1804
  %v1874 = vpop.f32.mrb[0].mxu0
  %v1875 = vadd.f32 0.0, %v1874
  %v1876 = vpop.f32.mrb[0].mxu0
  %1877 = vmatprep.mubr.f32.mxu0 0.0
  %1878 = vmatmul.mubr.f32.gmra.mrb[0].mxu0 %v1805
  %v1879 = vpop.f32.mrb[0].mxu0
  %v1880 = vadd.f32 0.0, %v1879
  %v1881 = vpop.f32.mrb[0].mxu0
  %1882 = vmatprep.mubr.f32.mxu0 0.0
  %1883 = vmatmul.mubr.f32.gmra.mrb[0].mxu0 %v1806
  %v1884 = vpop.f32.mrb[0].mxu0
  %v1885 = vadd.f32 0.0, %v1884
  %v1886 = vpop.f32.mrb[0].mxu0
  %1887 = vmatprep.mubr.f32.mxu0 0.0
  %1888 = vmatmul.mubr.f32.gmra.mrb[0].mxu0 %v1807
  %v1889 = vpop.f32.mrb[0].mxu0
  %v1890 = vadd.f32 0.0, %v1889
  %v1891 = vpop.f32.mrb[0].mxu0
  %1892 = vdwg.mxu0
  %v1893 = vld [vmem:[%s4 + $0x80] sm:$0xff]
  %v1894 = vld [vmem:[%s4 + $0x88] sm:$0xff]
  %v1896 = vsel %vm450, %v1875, 0
  %v1899 = vsel %vm450, %v1880, 0
  %v1902 = vsel %vm450, %v1885, 0
  %v1905 = vsel %vm450, %v1890, 0
  %1907 = vmatprep.subr.mxu0 0.0
  %1908 = vmatpush1.msra.mxu0 %v1893
  %1909 = vmatprep.subr.mxu0 0.0
  %1910 = vmatpush1.msra.mxu0 %v1894
  %1911 = vmatprep.subr.mxu0 0.0
  %1912 = vmatpush1.msra.mxu0 0.0
  %1913 = vmatprep.subr.mxu0 0.0
  %1914 = vmatpush1.msra.mxu0 0.0
  %1915 = vmatprep.subr.mxu0 0.0
  %1916 = vmatpush1.msra.mxu0 0.0
  %1917 = vmatprep.subr.mxu0 0.0
  %1918 = vmatpush1.msra.mxu0 0.0
  %1919 = vmatprep.subr.mxu0 0.0
  %1920 = vmatpush1.msra.mxu0 0.0
  %1921 = vmatprep.subr.mxu0 0.0
  %1922 = vmatpush1.msra.mxu0 0.0
  %1923 = vmatprep.subr.mxu0 0.0
  %1924 = vmatpush1.msra.mxu0 0.0
  %1925 = vmatprep.subr.mxu0 0.0
  %1926 = vmatpush1.msra.mxu0 0.0
  %1927 = vmatprep.subr.mxu0 0.0
  %1928 = vmatpush1.msra.mxu0 0.0
  %1929 = vmatprep.subr.mxu0 0.0
  %1930 = vmatpush1.msra.mxu0 0.0
  %1931 = vmatprep.subr.mxu0 0.0
  %1932 = vmatpush1.msra.mxu0 0.0
  %1933 = vmatprep.subr.mxu0 0.0
  %1934 = vmatpush1.msra.mxu0 0.0
  %1935 = vmatprep.subr.mxu0 0.0
  %1936 = vmatpush1.msra.mxu0 0.0
  %1937 = vmatprep.subr.mxu0 0.0
  %1938 = vmatpush1.msra.mxu0 0.0
  %1939 = vmatprep.subr.mxu0 0.0
  %1940 = vmatpush1.msra.mxu0 0.0
  %1941 = vmatprep.subr.mxu0 0.0
  %1942 = vmatpush1.msra.mxu0 0.0
  %1943 = vmatprep.subr.mxu0 0.0
  %1944 = vmatpush1.msra.mxu0 0.0
  %1945 = vmatprep.subr.mxu0 0.0
  %1946 = vmatpush1.msra.mxu0 0.0
  %1947 = vmatprep.subr.mxu0 0.0
  %1948 = vmatpush1.msra.mxu0 0.0
  %1949 = vmatprep.subr.mxu0 0.0
  %1950 = vmatpush1.msra.mxu0 0.0
  %1951 = vmatprep.subr.mxu0 0.0
  %1952 = vmatpush1.msra.mxu0 0.0
  %1953 = vmatprep.subr.mxu0 0.0
  %1954 = vmatpush1.msra.mxu0 0.0
  %1955 = vmatprep.subr.mxu0 0.0
  %1956 = vmatpush1.msra.mxu0 0.0
  %1957 = vmatprep.subr.mxu0 0.0
  %1958 = vmatpush1.msra.mxu0 0.0
  %1959 = vmatprep.subr.mxu0 0.0
  %1960 = vmatpush1.msra.mxu0 0.0
  %1961 = vmatprep.subr.mxu0 0.0
  %1962 = vmatpush1.msra.mxu0 0.0
  %1963 = vmatprep.subr.mxu0 0.0
  %1964 = vmatpush1.msra.mxu0 0.0
  %1965 = vmatprep.subr.mxu0 0.0
  %1966 = vmatpush1.msra.mxu0 0.0
  %1967 = vmatprep.subr.mxu0 0.0
  %1968 = vmatpush1.msra.mxu0 0.0
  %1969 = vmatprep.subr.mxu0 0.0
  %1970 = vmatpush1.msra.mxu0 0.0
  %1971 = vmatprep.mubr.f32.mxu0 0.0
  %1972 = vmatmul.mubr.f32.gmra.mrb[0].mxu0 %v1896
  %v1973 = vpop.f32.mrb[0].mxu0
  %v1974 = vadd.f32 0.0, %v1973
  %v1975 = vpop.f32.mrb[0].mxu0
  %1976 = vmatprep.mubr.f32.mxu0 0.0
  %1977 = vmatmul.mubr.f32.gmra.mrb[0].mxu0 %v1899
  %v1978 = vpop.f32.mrb[0].mxu0
  %v1979 = vadd.f32 0.0, %v1978
  %v1980 = vpop.f32.mrb[0].mxu0
  %1981 = vmatprep.mubr.f32.mxu0 0.0
  %1982 = vmatmul.mubr.f32.gmra.mrb[0].mxu0 %v1902
  %v1983 = vpop.f32.mrb[0].mxu0
  %v1984 = vadd.f32 0.0, %v1983
  %v1985 = vpop.f32.mrb[0].mxu0
  %1986 = vmatprep.mubr.f32.mxu0 0.0
  %1987 = vmatmul.mubr.f32.gmra.mrb[0].mxu0 %v1905
  %v1988 = vpop.f32.mrb[0].mxu0
  %v1989 = vadd.f32 0.0, %v1988
  %v1990 = vpop.f32.mrb[0].mxu0
  %1991 = vdwg.mxu0
  %v1992 = vadd.f32 %v1799, %v1974
  %v1993 = vadd.f32 %v1800, %v1979
  %v1994 = vadd.f32 %v1801, %v1984
  %v1995 = vadd.f32 %v1802, %v1989
  %v1996 = vld [vmem:[%s5] sm:$0x1]
  %v1998 = vlaneseq
  %v1999 = vshrl.u32 %v1998, 7
  %v2000 = vsub.s32 0, %v1999
  %v2001 = vrot.slane %v1996, %v2000
  %v2003 = vadd.f32 %v1992, %v2001
  %v2004 = vadd.f32 %v1993, %v2001
  %v2005 = vadd.f32 %v1994, %v2001
  %v2006 = vadd.f32 %v1995, %v2001
  %v2007 = vmax.f32 %v2003, 0.0
  %v2008 = vmax.f32 %v2004, 0.0
  %v2009 = vmax.f32 %v2005, 0.0
  %v2010 = vmax.f32 %v2006, 0.0
  %v2011 = vld [vmem:[%s6] sm:$0xff]
  %vm2012 = vcmask 261120
  %v2014 = vsel %vm2012, %v2011, 0
  %2016 = vmatprep.subr.mxu0 0.0
  %2017 = vmatpush1.msra.mxu0 %v2007
  %2018 = vmatprep.subr.mxu0 0.0
  %2019 = vmatpush1.msra.mxu0 %v2008
  %2020 = vmatprep.subr.mxu0 0.0
  %2021 = vmatpush1.msra.mxu0 %v2009
  %2022 = vmatprep.subr.mxu0 0.0
  %2023 = vmatpush1.msra.mxu0 %v2010
  %2024 = vmatprep.subr.mxu0 0.0
  %2025 = vmatpush1.msra.mxu0 0.0
  %2026 = vmatprep.subr.mxu0 0.0
  %2027 = vmatpush1.msra.mxu0 0.0
  %2028 = vmatprep.subr.mxu0 0.0
  %2029 = vmatpush1.msra.mxu0 0.0
  %2030 = vmatprep.subr.mxu0 0.0
  %2031 = vmatpush1.msra.mxu0 0.0
  %2032 = vmatprep.subr.mxu0 0.0
  %2033 = vmatpush1.msra.mxu0 0.0
  %2034 = vmatprep.subr.mxu0 0.0
  %2035 = vmatpush1.msra.mxu0 0.0
  %2036 = vmatprep.subr.mxu0 0.0
  %2037 = vmatpush1.msra.mxu0 0.0
  %2038 = vmatprep.subr.mxu0 0.0
  %2039 = vmatpush1.msra.mxu0 0.0
  %2040 = vmatprep.subr.mxu0 0.0
  %2041 = vmatpush1.msra.mxu0 0.0
  %2042 = vmatprep.subr.mxu0 0.0
  %2043 = vmatpush1.msra.mxu0 0.0
  %2044 = vmatprep.subr.mxu0 0.0
  %2045 = vmatpush1.msra.mxu0 0.0
  %2046 = vmatprep.subr.mxu0 0.0
  %2047 = vmatpush1.msra.mxu0 0.0
  %2048 = vmatprep.subr.mxu0 0.0
  %2049 = vmatpush1.msra.mxu0 0.0
  %2050 = vmatprep.subr.mxu0 0.0
  %2051 = vmatpush1.msra.mxu0 0.0
  %2052 = vmatprep.subr.mxu0 0.0
  %2053 = vmatpush1.msra.mxu0 0.0
  %2054 = vmatprep.subr.mxu0 0.0
  %2055 = vmatpush1.msra.mxu0 0.0
  %2056 = vmatprep.subr.mxu0 0.0
  %2057 = vmatpush1.msra.mxu0 0.0
  %2058 = vmatprep.subr.mxu0 0.0
  %2059 = vmatpush1.msra.mxu0 0.0
  %2060 = vmatprep.subr.mxu0 0.0
  %2061 = vmatpush1.msra.mxu0 0.0
  %2062 = vmatprep.subr.mxu0 0.0
  %2063 = vmatpush1.msra.mxu0 0.0
  %2064 = vmatprep.subr.mxu0 0.0
  %2065 = vmatpush1.msra.mxu0 0.0
  %2066 = vmatprep.subr.mxu0 0.0
  %2067 = vmatpush1.msra.mxu0 0.0
  %2068 = vmatprep.subr.mxu0 0.0
  %2069 = vmatpush1.msra.mxu0 0.0
  %2070 = vmatprep.subr.mxu0 0.0
  %2071 = vmatpush1.msra.mxu0 0.0
  %2072 = vmatprep.subr.mxu0 0.0
  %2073 = vmatpush1.msra.mxu0 0.0
  %2074 = vmatprep.subr.mxu0 0.0
  %2075 = vmatpush1.msra.mxu0 0.0
  %2076 = vmatprep.subr.mxu0 0.0
  %2077 = vmatpush1.msra.mxu0 0.0
  %2078 = vmatprep.subr.mxu0 0.0
  %2079 = vmatpush1.msra.mxu0 0.0
  %2080 = vmatprep.mubr.f32.mxu0 0.0
  %2081 = vmatmul.mubr.f32.gmra.mrb[0].mxu0 %v2014
  %v2082 = vpop.f32.mrb[0].mxu0
  %v2083 = vadd.f32 0.0, %v2082
  %v2084 = vpop.f32.mrb[0].mxu0
  %2085 = vdwg.mxu0
  %2086 = vst.msk [vmem:[%s7] sm:$0xff] %vm2012, %v2083
  // Predicated region
  $region30: #{image_to_html_forward.2} parent=0 // pred_check
    _
  $region31: #{image_to_html_forward.2} parent=0 // pred_check_branch
    %2088 = sbr.rel (0) target = $region33
  $region32: #{image_to_html_forward.2} parent=0 // pred_region
    _
  $region33: #{image_to_html_forward.2} parent=0 // pred_fallthru
    _
  // Predicated region
  $region34: #{image_to_html_forward.2} parent=0 // pred_check
    _
  $region35: #{image_to_html_forward.2} parent=0 // pred_check_branch
    %2090 = sbr.rel (0) target = $region37
  $region36: #{image_to_html_forward.2} parent=0 // pred_region
    _
  $region37: #{image_to_html_forward.2} parent=0 // pred_fallthru
    _

// kernel: image_to_html_forward.3
$region0: #{image_to_html_forward.3}
  #allocation0 [shape = 'u32[]', space=smem, size = 0x4, offset = 0x4, fixed_abs, tag = 'smem constant byte address 0x4 - core index']
  #allocation1 [shape = 'u32[144,128]{1,0:T(1,128)}', space=vmem, size = 0x12000, scoped, tag = 'internal scratch']
  #allocation2 [shape = 'f32[16,32]{1,0:T(8,128)}', space=vmem, size = 0x2000, scoped, tag = 'scratch operand']
  %s0 = inlined_call_operand.vmem [shape: f32[16,32], index: 0, kind: input, shape index: {}]
  %s1 = inlined_call_operand.vmem [shape: f32[2,4,32], index: 1, kind: input, shape index: {}]
  %s2 = inlined_call_operand.vmem [shape: f32[8,8], index: 2, kind: input, shape index: {}]
  %s3 = inlined_call_operand.vmem [shape: f32[2,32,96], index: 3, kind: input, shape index: {}]
  %s4 = inlined_call_operand.vmem [shape: f32[2,1,96], index: 4, kind: input, shape index: {}]
  %s5 = inlined_call_operand.vmem [shape: f32[2,32,32], index: 5, kind: input, shape index: {}]
  %s6 = inlined_call_operand.vmem [shape: f32[2,1,32], index: 6, kind: input, shape index: {}]
  %s7 = inlined_call_operand.vmem [shape: f32[2,32,32], index: 7, kind: input, shape index: {}]
  %s8 = inlined_call_operand.vmem [shape: f32[2,1,32], index: 8, kind: input, shape index: {}]
  %s9 = inlined_call_operand.vmem [shape: f32[2,32,64], index: 9, kind: input, shape index: {}]
  %s10 = inlined_call_operand.vmem [shape: f32[2,1,64], index: 10, kind: input, shape index: {}]
  %s11 = inlined_call_operand.vmem [shape: f32[2,32,32], index: 11, kind: input, shape index: {}]
  %s12 = inlined_call_operand.vmem [shape: f32[2,1,32], index: 12, kind: input, shape index: {}]
  %s13 = inlined_call_operand.vmem [shape: f32[2,1,32], index: 13, kind: input, shape index: {}]
  %s14 = inlined_call_operand.vmem [shape: f32[2,1,32], index: 14, kind: input, shape index: {}]
  %s15 = inlined_call_operand.vmem [shape: f32[2,1,32], index: 15, kind: input, shape index: {}]
  %s16 = inlined_call_operand.vmem [shape: f32[2,1,32], index: 16, kind: input, shape index: {}]
  %s17 = inlined_call_operand.vmem [shape: f32[2,1,32], index: 17, kind: input, shape index: {}]
  %s18 = inlined_call_operand.vmem [shape: f32[2,1,32], index: 18, kind: input, shape index: {}]
  %s19 = inlined_call_operand.vmem [shape: f32[2,32,64], index: 19, kind: input, shape index: {}]
  %s20 = inlined_call_operand.vmem [shape: f32[2,1,64], index: 20, kind: input, shape index: {}]
  %s21 = inlined_call_operand.vmem [shape: f32[2,64,32], index: 21, kind: input, shape index: {}]
  %s22 = inlined_call_operand.vmem [shape: f32[2,1,32], index: 22, kind: input, shape index: {}]
  %s23 = inlined_call_operand.vmem [shape: f32[32,64], index: 23, kind: input, shape index: {}]
  %s24 = inlined_call_operand.vmem [shape: f32[1,64], index: 24, kind: input, shape index: {}]
  %s25 = inlined_call_operand.hbm [shape: f32[16,64], index: 25, kind: output, shape index: {}]
  %s26 = sld [smem:[#allocation0]]
  $region110: #{image_to_html_forward.3} parent=0
    _
  %s28 = ssub.s32 1, %s26
  %s29 = scalar_select 0, %s28, %s26
  $region1: #{image_to_html_forward.3} parent=0
    #allocation3 [shape = 'u8[8192]{0}', space=vmem, size = 0x2000, scoped, tag = 'output window, operand 0, single buffered']
    #allocation4 [shape = 's32[1]{0}', space=sflag, size = 0x4, scoped, tag = 'scoped memory for image_to_html_forward.3']
    %30 = vsyncpa [#allocation4], 0
    // Predicated region
    $region2: #{image_to_html_forward.3} parent=1 // pred_check
      _
    $region3: #{image_to_html_forward.3} parent=1 // pred_check_branch
      %32 = sbr.rel (0) target = $region5
    $region4: #{image_to_html_forward.3} parent=1 // pred_region
      _
    $region5: #{image_to_html_forward.3} parent=1 // pred_fallthru
      _
    // Predicated region
    $region6: #{image_to_html_forward.3} parent=1 // pred_check
      _
    $region7: #{image_to_html_forward.3} parent=1 // pred_check_branch
      %34 = sbr.rel (0) target = $region9
    $region8: #{image_to_html_forward.3} parent=1 // pred_region
      _
    $region9: #{image_to_html_forward.3} parent=1 // pred_fallthru
      _
    // Predicated region
    $region10: #{image_to_html_forward.3} parent=1 // pred_check
      _
    $region11: #{image_to_html_forward.3} parent=1 // pred_check_branch
      %36 = sbr.rel (0) target = $region13
    $region12: #{image_to_html_forward.3} parent=1 // pred_region
      _
    $region13: #{image_to_html_forward.3} parent=1 // pred_fallthru
      _
    // Predicated region
    $region14: #{image_to_html_forward.3} parent=1 // pred_check
      _
    $region15: #{image_to_html_forward.3} parent=1 // pred_check_branch
      %38 = sbr.rel (0) target = $region17
    $region16: #{image_to_html_forward.3} parent=1 // pred_region
      _
    $region17: #{image_to_html_forward.3} parent=1 // pred_fallthru
      _
    // Predicated region
    $region18: #{image_to_html_forward.3} parent=1 // pred_check
      _
    $region19: #{image_to_html_forward.3} parent=1 // pred_check_branch
      %40 = sbr.rel (0) target = $region21
    $region20: #{image_to_html_forward.3} parent=1 // pred_region
      _
    $region21: #{image_to_html_forward.3} parent=1 // pred_fallthru
      _
    // Predicated region
    $region22: #{image_to_html_forward.3} parent=1 // pred_check
      _
    $region23: #{image_to_html_forward.3} parent=1 // pred_check_branch
      %42 = sbr.rel (0) target = $region25
    $region24: #{image_to_html_forward.3} parent=1 // pred_region
      _
    $region25: #{image_to_html_forward.3} parent=1 // pred_fallthru
      _
    // Predicated region
    $region26: #{image_to_html_forward.3} parent=1 // pred_check
      _
    $region27: #{image_to_html_forward.3} parent=1 // pred_check_branch
      %44 = sbr.rel (0) target = $region29
    $region28: #{image_to_html_forward.3} parent=1 // pred_region
      _
    $region29: #{image_to_html_forward.3} parent=1 // pred_fallthru
      _
    // Predicated region
    $region30: #{image_to_html_forward.3} parent=1 // pred_check
      _
    $region31: #{image_to_html_forward.3} parent=1 // pred_check_branch
      %46 = sbr.rel (0) target = $region33
    $region32: #{image_to_html_forward.3} parent=1 // pred_region
      _
    $region33: #{image_to_html_forward.3} parent=1 // pred_fallthru
      _
    // Predicated region
    $region34: #{image_to_html_forward.3} parent=1 // pred_check
      _
    $region35: #{image_to_html_forward.3} parent=1 // pred_check_branch
      %48 = sbr.rel (0) target = $region37
    $region36: #{image_to_html_forward.3} parent=1 // pred_region
      _
    $region37: #{image_to_html_forward.3} parent=1 // pred_fallthru
      _
    // Predicated region
    $region38: #{image_to_html_forward.3} parent=1 // pred_check
      _
    $region39: #{image_to_html_forward.3} parent=1 // pred_check_branch
      %50 = sbr.rel (0) target = $region41
    $region40: #{image_to_html_forward.3} parent=1 // pred_region
      _
    $region41: #{image_to_html_forward.3} parent=1 // pred_fallthru
      _
    // Predicated region
    $region42: #{image_to_html_forward.3} parent=1 // pred_check
      _
    $region43: #{image_to_html_forward.3} parent=1 // pred_check_branch
      %52 = sbr.rel (0) target = $region45
    $region44: #{image_to_html_forward.3} parent=1 // pred_region
      _
    $region45: #{image_to_html_forward.3} parent=1 // pred_fallthru
      _
    // Predicated region
    $region46: #{image_to_html_forward.3} parent=1 // pred_check
      _
    $region47: #{image_to_html_forward.3} parent=1 // pred_check_branch
      %54 = sbr.rel (0) target = $region49
    $region48: #{image_to_html_forward.3} parent=1 // pred_region
      _
    $region49: #{image_to_html_forward.3} parent=1 // pred_fallthru
      _
    // Predicated region
    $region50: #{image_to_html_forward.3} parent=1 // pred_check
      _
    $region51: #{image_to_html_forward.3} parent=1 // pred_check_branch
      %56 = sbr.rel (0) target = $region53
    $region52: #{image_to_html_forward.3} parent=1 // pred_region
      _
    $region53: #{image_to_html_forward.3} parent=1 // pred_fallthru
      _
    // Predicated region
    $region54: #{image_to_html_forward.3} parent=1 // pred_check
      _
    $region55: #{image_to_html_forward.3} parent=1 // pred_check_branch
      %58 = sbr.rel (0) target = $region57
    $region56: #{image_to_html_forward.3} parent=1 // pred_region
      _
    $region57: #{image_to_html_forward.3} parent=1 // pred_fallthru
      _
    // Predicated region
    $region58: #{image_to_html_forward.3} parent=1 // pred_check
      _
    $region59: #{image_to_html_forward.3} parent=1 // pred_check_branch
      %60 = sbr.rel (0) target = $region61
    $region60: #{image_to_html_forward.3} parent=1 // pred_region
      _
    $region61: #{image_to_html_forward.3} parent=1 // pred_fallthru
      _
    // Predicated region
    $region62: #{image_to_html_forward.3} parent=1 // pred_check
      _
    $region63: #{image_to_html_forward.3} parent=1 // pred_check_branch
      %62 = sbr.rel (0) target = $region65
    $region64: #{image_to_html_forward.3} parent=1 // pred_region
      _
    $region65: #{image_to_html_forward.3} parent=1 // pred_fallthru
      _
    // Predicated region
    $region66: #{image_to_html_forward.3} parent=1 // pred_check
      _
    $region67: #{image_to_html_forward.3} parent=1 // pred_check_branch
      %64 = sbr.rel (0) target = $region69
    $region68: #{image_to_html_forward.3} parent=1 // pred_region
      _
    $region69: #{image_to_html_forward.3} parent=1 // pred_fallthru
      _
    // Predicated region
    $region70: #{image_to_html_forward.3} parent=1 // pred_check
      _
    $region71: #{image_to_html_forward.3} parent=1 // pred_check_branch
      %66 = sbr.rel (0) target = $region73
    $region72: #{image_to_html_forward.3} parent=1 // pred_region
      _
    $region73: #{image_to_html_forward.3} parent=1 // pred_fallthru
      _
    // Predicated region
    $region74: #{image_to_html_forward.3} parent=1 // pred_check
      _
    $region75: #{image_to_html_forward.3} parent=1 // pred_check_branch
      %68 = sbr.rel (0) target = $region77
    $region76: #{image_to_html_forward.3} parent=1 // pred_region
      _
    $region77: #{image_to_html_forward.3} parent=1 // pred_fallthru
      _
    // Predicated region
    $region78: #{image_to_html_forward.3} parent=1 // pred_check
      _
    $region79: #{image_to_html_forward.3} parent=1 // pred_check_branch
      %70 = sbr.rel (0) target = $region81
    $region80: #{image_to_html_forward.3} parent=1 // pred_region
      _
    $region81: #{image_to_html_forward.3} parent=1 // pred_fallthru
      _
    // Predicated region
    $region82: #{image_to_html_forward.3} parent=1 // pred_check
      _
    $region83: #{image_to_html_forward.3} parent=1 // pred_check_branch
      %72 = sbr.rel (0) target = $region85
    $region84: #{image_to_html_forward.3} parent=1 // pred_region
      _
    $region85: #{image_to_html_forward.3} parent=1 // pred_fallthru
      _
    // Predicated region
    $region86: #{image_to_html_forward.3} parent=1 // pred_check
      _
    $region87: #{image_to_html_forward.3} parent=1 // pred_check_branch
      %74 = sbr.rel (0) target = $region89
    $region88: #{image_to_html_forward.3} parent=1 // pred_region
      _
    $region89: #{image_to_html_forward.3} parent=1 // pred_fallthru
      _
    // Predicated region
    $region90: #{image_to_html_forward.3} parent=1 // pred_check
      _
    $region91: #{image_to_html_forward.3} parent=1 // pred_check_branch
      %76 = sbr.rel (0) target = $region93
    $region92: #{image_to_html_forward.3} parent=1 // pred_region
      _
    $region93: #{image_to_html_forward.3} parent=1 // pred_fallthru
      _
    // Predicated region
    $region94: #{image_to_html_forward.3} parent=1 // pred_check
      _
    $region95: #{image_to_html_forward.3} parent=1 // pred_check_branch
      %78 = sbr.rel (0) target = $region97
    $region96: #{image_to_html_forward.3} parent=1 // pred_region
      _
    $region97: #{image_to_html_forward.3} parent=1 // pred_fallthru
      _
    // Predicated region
    $region98: #{image_to_html_forward.3} parent=1 // pred_check
      _
    $region99: #{image_to_html_forward.3} parent=1 // pred_check_branch
      %80 = sbr.rel (0) target = $region101
    $region100: #{image_to_html_forward.3} parent=1 // pred_region
      _
    $region101: #{image_to_html_forward.3} parent=1 // pred_fallthru
      _
    %v81 = vld [vmem:[%s0] sm:$0xff]
    %v82 = vld [vmem:[%s0 + $0x8] sm:$0xff]
    %v83 = vld [vmem:[%s2] sm:$0xff]
    %v84 = vld [vmem:[%s3] sm:$0xff]
    %v85 = vld [vmem:[%s3 + $0x8] sm:$0xff]
    %v86 = vld [vmem:[%s3 + $0x10] sm:$0xff]
    %v87 = vld [vmem:[%s3 + $0x18] sm:$0xff]
    %v88 = vld [vmem:[%s4] sm:$0x1]
    %v90 = vlaneseq
    %v91 = vshrl.u32 %v90, 7
    %v92 = vsub.s32 0, %v91
    %v93 = vrot.slane %v88, %v92
    %vm95 = vcmask 261120
    %v97 = vsel %vm95, %v81, 0
    %v100 = vsel %vm95, %v82, 0
    %102 = vmatprep.subr.mxu0 0.0
    %103 = vmatpush1.msra.mxu0 %v84
    %104 = vmatprep.subr.mxu0 0.0
    %105 = vmatpush1.msra.mxu0 %v85
    %106 = vmatprep.subr.mxu0 0.0
    %107 = vmatpush1.msra.mxu0 %v86
    %108 = vmatprep.subr.mxu0 0.0
    %109 = vmatpush1.msra.mxu0 %v87
    %110 = vmatprep.subr.mxu0 0.0
    %111 = vmatpush1.msra.mxu0 0.0
    %112 = vmatprep.subr.mxu0 0.0
    %113 = vmatpush1.msra.mxu0 0.0
    %114 = vmatprep.subr.mxu0 0.0
    %115 = vmatpush1.msra.mxu0 0.0
    %116 = vmatprep.subr.mxu0 0.0
    %117 = vmatpush1.msra.mxu0 0.0
    %118 = vmatprep.subr.mxu0 0.0
    %119 = vmatpush1.msra.mxu0 0.0
    %120 = vmatprep.subr.mxu0 0.0
    %121 = vmatpush1.msra.mxu0 0.0
    %122 = vmatprep.subr.mxu0 0.0
    %123 = vmatpush1.msra.mxu0 0.0
    %124 = vmatprep.subr.mxu0 0.0
    %125 = vmatpush1.msra.mxu0 0.0
    %126 = vmatprep.subr.mxu0 0.0
    %127 = vmatpush1.msra.mxu0 0.0
    %128 = vmatprep.subr.mxu0 0.0
    %129 = vmatpush1.msra.mxu0 0.0
    %130 = vmatprep.subr.mxu0 0.0
    %131 = vmatpush1.msra.mxu0 0.0
    %132 = vmatprep.subr.mxu0 0.0
    %133 = vmatpush1.msra.mxu0 0.0
    %134 = vmatprep.subr.mxu0 0.0
    %135 = vmatpush1.msra.mxu0 0.0
    %136 = vmatprep.subr.mxu0 0.0
    %137 = vmatpush1.msra.mxu0 0.0
    %138 = vmatprep.subr.mxu0 0.0
    %139 = vmatpush1.msra.mxu0 0.0
    %140 = vmatprep.subr.mxu0 0.0
    %141 = vmatpush1.msra.mxu0 0.0
    %142 = vmatprep.subr.mxu0 0.0
    %143 = vmatpush1.msra.mxu0 0.0
    %144 = vmatprep.subr.mxu0 0.0
    %145 = vmatpush1.msra.mxu0 0.0
    %146 = vmatprep.subr.mxu0 0.0
    %147 = vmatpush1.msra.mxu0 0.0
    %148 = vmatprep.subr.mxu0 0.0
    %149 = vmatpush1.msra.mxu0 0.0
    %150 = vmatprep.subr.mxu0 0.0
    %151 = vmatpush1.msra.mxu0 0.0
    %152 = vmatprep.subr.mxu0 0.0
    %153 = vmatpush1.msra.mxu0 0.0
    %154 = vmatprep.subr.mxu0 0.0
    %155 = vmatpush1.msra.mxu0 0.0
    %156 = vmatprep.subr.mxu0 0.0
    %157 = vmatpush1.msra.mxu0 0.0
    %158 = vmatprep.subr.mxu0 0.0
    %159 = vmatpush1.msra.mxu0 0.0
    %160 = vmatprep.subr.mxu0 0.0
    %161 = vmatpush1.msra.mxu0 0.0
    %162 = vmatprep.subr.mxu0 0.0
    %163 = vmatpush1.msra.mxu0 0.0
    %164 = vmatprep.subr.mxu0 0.0
    %165 = vmatpush1.msra.mxu0 0.0
    %166 = vmatprep.mubr.f32.mxu0 0.0
    %167 = vmatmul.mubr.f32.gmra.mrb[0].mxu0 %v97
    %v168 = vpop.f32.mrb[0].mxu0
    %v169 = vadd.f32 %v93, %v168
    %v170 = vpop.f32.mrb[0].mxu0
    %171 = vmatprep.mubr.f32.mxu0 0.0
    %172 = vmatmul.mubr.f32.gmra.mrb[0].mxu0 %v100
    %v173 = vpop.f32.mrb[0].mxu0
    %v174 = vadd.f32 %v93, %v173
    %v175 = vpop.f32.mrb[0].mxu0
    %176 = vdwg.mxu0
    %178 = vrot.lane.b32.xlu0 %v169, 96
    %v179 = vpop.permute.xlu0 %178
    %vm180 = vcmask 64512
    %v181 = vsel %vm180, %v169, 0
    %v183 = vsel %vm180, %v179, 0
    %185 = vmatprep.subr.mxu0 0.0
    %186 = vmatpush1.xpose.msra.mxu0 %v183
    %187 = vmatprep.subr.mxu0 0.0
    %188 = vmatpush1.xpose.msra.mxu0 0.0
    %189 = vmatprep.subr.mxu0 0.0
    %190 = vmatpush1.xpose.msra.mxu0 0.0
    %191 = vmatprep.subr.mxu0 0.0
    %192 = vmatpush1.xpose.msra.mxu0 0.0
    %193 = vmatprep.subr.mxu0 0.0
    %194 = vmatpush1.xpose.msra.mxu0 0.0
    %195 = vmatprep.subr.mxu0 0.0
    %196 = vmatpush1.xpose.msra.mxu0 0.0
    %197 = vmatprep.subr.mxu0 0.0
    %198 = vmatpush1.xpose.msra.mxu0 0.0
    %199 = vmatprep.subr.mxu0 0.0
    %200 = vmatpush1.xpose.msra.mxu0 0.0
    %201 = vmatprep.subr.mxu0 0.0
    %202 = vmatpush1.xpose.msra.mxu0 0.0
    %203 = vmatprep.subr.mxu0 0.0
    %204 = vmatpush1.xpose.msra.mxu0 0.0
    %205 = vmatprep.subr.mxu0 0.0
    %206 = vmatpush1.xpose.msra.mxu0 0.0
    %207 = vmatprep.subr.mxu0 0.0
    %208 = vmatpush1.xpose.msra.mxu0 0.0
    %209 = vmatprep.subr.mxu0 0.0
    %210 = vmatpush1.xpose.msra.mxu0 0.0
    %211 = vmatprep.subr.mxu0 0.0
    %212 = vmatpush1.xpose.msra.mxu0 0.0
    %213 = vmatprep.subr.mxu0 0.0
    %214 = vmatpush1.xpose.msra.mxu0 0.0
    %215 = vmatprep.subr.mxu0 0.0
    %216 = vmatpush1.xpose.msra.mxu0 0.0
    %217 = vmatprep.subr.mxu0 0.0
    %218 = vmatpush1.xpose.msra.mxu0 0.0
    %219 = vmatprep.subr.mxu0 0.0
    %220 = vmatpush1.xpose.msra.mxu0 0.0
    %221 = vmatprep.subr.mxu0 0.0
    %222 = vmatpush1.xpose.msra.mxu0 0.0
    %223 = vmatprep.subr.mxu0 0.0
    %224 = vmatpush1.xpose.msra.mxu0 0.0
    %225 = vmatprep.subr.mxu0 0.0
    %226 = vmatpush1.xpose.msra.mxu0 0.0
    %227 = vmatprep.subr.mxu0 0.0
    %228 = vmatpush1.xpose.msra.mxu0 0.0
    %229 = vmatprep.subr.mxu0 0.0
    %230 = vmatpush1.xpose.msra.mxu0 0.0
    %231 = vmatprep.subr.mxu0 0.0
    %232 = vmatpush1.xpose.msra.mxu0 0.0
    %233 = vmatprep.subr.mxu0 0.0
    %234 = vmatpush1.xpose.msra.mxu0 0.0
    %235 = vmatprep.subr.mxu0 0.0
    %236 = vmatpush1.xpose.msra.mxu0 0.0
    %237 = vmatprep.subr.mxu0 0.0
    %238 = vmatpush1.xpose.msra.mxu0 0.0
    %239 = vmatprep.subr.mxu0 0.0
    %240 = vmatpush1.xpose.msra.mxu0 0.0
    %241 = vmatprep.subr.mxu0 0.0
    %242 = vmatpush1.xpose.msra.mxu0 0.0
    %243 = vmatprep.subr.mxu0 0.0
    %244 = vmatpush1.xpose.msra.mxu0 0.0
    %245 = vmatprep.subr.mxu0 0.0
    %246 = vmatpush1.xpose.msra.mxu0 0.0
    %247 = vmatprep.subr.mxu0 0.0
    %248 = vmatpush1.xpose.msra.mxu0 0.0
    %249 = vmatprep.mubr.f32.mxu0 0.0
    %250 = vmatmul.mubr.f32.gmra.mrb[0].mxu0 %v181
    %v251 = vpop.f32.mrb[0].mxu0
    %v252 = vadd.f32 0.0, %v251
    %v253 = vpop.f32.mrb[0].mxu0
    %254 = vdwg.mxu0
    %v255 = vmul.f32 %v252, 0.35355338
    %v256 = vadd.f32 %v255, %v83
    %v257 = vsel %vm180, %v256, -inf
    %258 = vmax.xlane.f32.xlu0 %v257
    %v259 = vpop.xlane.xlu0 %258
    %v260 = vsub.f32 %v256, %v259
    %v261 = vmul.f32 %v260, 1.442695
    %v262 = vpow.pop %v261
    %v263 = vsel %vm180, %v262, 0.0
    %264 = vadd.xlane.f32.xlu0 %v263
    %v265 = vpop.xlane.xlu0 %264
    %v266 = vrcp.pop %v265
    %v267 = vmul.f32 %v262, %v266
    %268 = vrot.lane.b32.xlu0 %v169, 64
    %v269 = vpop.permute.xlu0 %268
    %v272 = vsel %vm180, %v267, 0
    %274 = vmatprep.subr.mxu0 0.0
    %275 = vmatpush1.msra.mxu0 %v269
    %276 = vmatprep.subr.mxu0 0.0
    %277 = vmatpush1.msra.mxu0 0.0
    %278 = vmatprep.subr.mxu0 0.0
    %279 = vmatpush1.msra.mxu0 0.0
    %280 = vmatprep.subr.mxu0 0.0
    %281 = vmatpush1.msra.mxu0 0.0
    %282 = vmatprep.subr.mxu0 0.0
    %283 = vmatpush1.msra.mxu0 0.0
    %284 = vmatprep.subr.mxu0 0.0
    %285 = vmatpush1.msra.mxu0 0.0
    %286 = vmatprep.subr.mxu0 0.0
    %287 = vmatpush1.msra.mxu0 0.0
    %288 = vmatprep.subr.mxu0 0.0
    %289 = vmatpush1.msra.mxu0 0.0
    %290 = vmatprep.subr.mxu0 0.0
    %291 = vmatpush1.msra.mxu0 0.0
    %292 = vmatprep.subr.mxu0 0.0
    %293 = vmatpush1.msra.mxu0 0.0
    %294 = vmatprep.subr.mxu0 0.0
    %295 = vmatpush1.msra.mxu0 0.0
    %296 = vmatprep.subr.mxu0 0.0
    %297 = vmatpush1.msra.mxu0 0.0
    %298 = vmatprep.subr.mxu0 0.0
    %299 = vmatpush1.msra.mxu0 0.0
    %300 = vmatprep.subr.mxu0 0.0
    %301 = vmatpush1.msra.mxu0 0.0
    %302 = vmatprep.subr.mxu0 0.0
    %303 = vmatpush1.msra.mxu0 0.0
    %304 = vmatprep.subr.mxu0 0.0
    %305 = vmatpush1.msra.mxu0 0.0
    %306 = vmatprep.subr.mxu0 0.0
    %307 = vmatpush1.msra.mxu0 0.0
    %308 = vmatprep.subr.mxu0 0.0
    %309 = vmatpush1.msra.mxu0 0.0
    %310 = vmatprep.subr.mxu0 0.0
    %311 = vmatpush1.msra.mxu0 0.0
    %312 = vmatprep.subr.mxu0 0.0
    %313 = vmatpush1.msra.mxu0 0.0
    %314 = vmatprep.subr.mxu0 0.0
    %315 = vmatpush1.msra.mxu0 0.0
    %316 = vmatprep.subr.mxu0 0.0
    %317 = vmatpush1.msra.mxu0 0.0
    %318 = vmatprep.subr.mxu0 0.0
    %319 = vmatpush1.msra.mxu0 0.0
    %320 = vmatprep.subr.mxu0 0.0
    %321 = vmatpush1.msra.mxu0 0.0
    %322 = vmatprep.subr.mxu0 0.0
    %323 = vmatpush1.msra.mxu0 0.0
    %324 = vmatprep.subr.mxu0 0.0
    %325 = vmatpush1.msra.mxu0 0.0
    %326 = vmatprep.subr.mxu0 0.0
    %327 = vmatpush1.msra.mxu0 0.0
    %328 = vmatprep.subr.mxu0 0.0
    %329 = vmatpush1.msra.mxu0 0.0
    %330 = vmatprep.subr.mxu0 0.0
    %331 = vmatpush1.msra.mxu0 0.0
    %332 = vmatprep.subr.mxu0 0.0
    %333 = vmatpush1.msra.mxu0 0.0
    %334 = vmatprep.subr.mxu0 0.0
    %335 = vmatpush1.msra.mxu0 0.0
    %336 = vmatprep.subr.mxu0 0.0
    %337 = vmatpush1.msra.mxu0 0.0
    %338 = vmatprep.mubr.f32.mxu0 0.0
    %339 = vmatmul.mubr.f32.gmra.mrb[0].mxu0 %v272
    %v340 = vpop.f32.mrb[0].mxu0
    %v341 = vadd.f32 0.0, %v340
    %v342 = vpop.f32.mrb[0].mxu0
    %343 = vdwg.mxu0
    %344 = vst.msk [vmem:[#allocation2] sm:$0xff] %vm180, %v341
    %345 = vrot.lane.b32.xlu0 %v169, 120
    %v346 = vpop.permute.xlu0 %345
    %347 = vrot.lane.b32.xlu0 %v169, 88
    %v348 = vpop.permute.xlu0 %347
    %v349 = vsel %vm180, %v346, 0
    %v351 = vsel %vm180, %v348, 0
    %353 = vmatprep.subr.mxu0 0.0
    %354 = vmatpush1.xpose.msra.mxu0 %v351
    %355 = vmatprep.subr.mxu0 0.0
    %356 = vmatpush1.xpose.msra.mxu0 0.0
    %357 = vmatprep.subr.mxu0 0.0
    %358 = vmatpush1.xpose.msra.mxu0 0.0
    %359 = vmatprep.subr.mxu0 0.0
    %360 = vmatpush1.xpose.msra.mxu0 0.0
    %361 = vmatprep.subr.mxu0 0.0
    %362 = vmatpush1.xpose.msra.mxu0 0.0
    %363 = vmatprep.subr.mxu0 0.0
    %364 = vmatpush1.xpose.msra.mxu0 0.0
    %365 = vmatprep.subr.mxu0 0.0
    %366 = vmatpush1.xpose.msra.mxu0 0.0
    %367 = vmatprep.subr.mxu0 0.0
    %368 = vmatpush1.xpose.msra.mxu0 0.0
    %369 = vmatprep.subr.mxu0 0.0
    %370 = vmatpush1.xpose.msra.mxu0 0.0
    %371 = vmatprep.subr.mxu0 0.0
    %372 = vmatpush1.xpose.msra.mxu0 0.0
    %373 = vmatprep.subr.mxu0 0.0
    %374 = vmatpush1.xpose.msra.mxu0 0.0
    %375 = vmatprep.subr.mxu0 0.0
    %376 = vmatpush1.xpose.msra.mxu0 0.0
    %377 = vmatprep.subr.mxu0 0.0
    %378 = vmatpush1.xpose.msra.mxu0 0.0
    %379 = vmatprep.subr.mxu0 0.0
    %380 = vmatpush1.xpose.msra.mxu0 0.0
    %381 = vmatprep.subr.mxu0 0.0
    %382 = vmatpush1.xpose.msra.mxu0 0.0
    %383 = vmatprep.subr.mxu0 0.0
    %384 = vmatpush1.xpose.msra.mxu0 0.0
    %385 = vmatprep.subr.mxu0 0.0
    %386 = vmatpush1.xpose.msra.mxu0 0.0
    %387 = vmatprep.subr.mxu0 0.0
    %388 = vmatpush1.xpose.msra.mxu0 0.0
    %389 = vmatprep.subr.mxu0 0.0
    %390 = vmatpush1.xpose.msra.mxu0 0.0
    %391 = vmatprep.subr.mxu0 0.0
    %392 = vmatpush1.xpose.msra.mxu0 0.0
    %393 = vmatprep.subr.mxu0 0.0
    %394 = vmatpush1.xpose.msra.mxu0 0.0
    %395 = vmatprep.subr.mxu0 0.0
    %396 = vmatpush1.xpose.msra.mxu0 0.0
    %397 = vmatprep.subr.mxu0 0.0
    %398 = vmatpush1.xpose.msra.mxu0 0.0
    %399 = vmatprep.subr.mxu0 0.0
    %400 = vmatpush1.xpose.msra.mxu0 0.0
    %401 = vmatprep.subr.mxu0 0.0
    %402 = vmatpush1.xpose.msra.mxu0 0.0
    %403 = vmatprep.subr.mxu0 0.0
    %404 = vmatpush1.xpose.msra.mxu0 0.0
    %405 = vmatprep.subr.mxu0 0.0
    %406 = vmatpush1.xpose.msra.mxu0 0.0
    %407 = vmatprep.subr.mxu0 0.0
    %408 = vmatpush1.xpose.msra.mxu0 0.0
    %409 = vmatprep.subr.mxu0 0.0
    %410 = vmatpush1.xpose.msra.mxu0 0.0
    %411 = vmatprep.subr.mxu0 0.0
    %412 = vmatpush1.xpose.msra.mxu0 0.0
    %413 = vmatprep.subr.mxu0 0.0
    %414 = vmatpush1.xpose.msra.mxu0 0.0
    %415 = vmatprep.subr.mxu0 0.0
    %416 = vmatpush1.xpose.msra.mxu0 0.0
    %417 = vmatprep.mubr.f32.mxu0 0.0
    %418 = vmatmul.mubr.f32.gmra.mrb[0].mxu0 %v349
    %v419 = vpop.f32.mrb[0].mxu0
    %v420 = vadd.f32 0.0, %v419
    %v421 = vpop.f32.mrb[0].mxu0
    %422 = vdwg.mxu0
    %v423 = vmul.f32 %v420, 0.35355338
    %v424 = vadd.f32 %v423, %v83
    %v425 = vsel %vm180, %v424, -inf
    %426 = vmax.xlane.f32.xlu0 %v425
    %v427 = vpop.xlane.xlu0 %426
    %v428 = vsub.f32 %v424, %v427
    %v429 = vmul.f32 %v428, 1.442695
    %v430 = vpow.pop %v429
    %v431 = vsel %vm180, %v430, 0.0
    %432 = vadd.xlane.f32.xlu0 %v431
    %v433 = vpop.xlane.xlu0 %432
    %v434 = vrcp.pop %v433
    %v435 = vmul.f32 %v430, %v434
    %436 = vrot.lane.b32.xlu0 %v169, 56
    %v437 = vpop.permute.xlu0 %436
    %v440 = vsel %vm180, %v435, 0
    %442 = vmatprep.subr.mxu0 0.0
    %443 = vmatpush1.msra.mxu0 %v437
    %444 = vmatprep.subr.mxu0 0.0
    %445 = vmatpush1.msra.mxu0 0.0
    %446 = vmatprep.subr.mxu0 0.0
    %447 = vmatpush1.msra.mxu0 0.0
    %448 = vmatprep.subr.mxu0 0.0
    %449 = vmatpush1.msra.mxu0 0.0
    %450 = vmatprep.subr.mxu0 0.0
    %451 = vmatpush1.msra.mxu0 0.0
    %452 = vmatprep.subr.mxu0 0.0
    %453 = vmatpush1.msra.mxu0 0.0
    %454 = vmatprep.subr.mxu0 0.0
    %455 = vmatpush1.msra.mxu0 0.0
    %456 = vmatprep.subr.mxu0 0.0
    %457 = vmatpush1.msra.mxu0 0.0
    %458 = vmatprep.subr.mxu0 0.0
    %459 = vmatpush1.msra.mxu0 0.0
    %460 = vmatprep.subr.mxu0 0.0
    %461 = vmatpush1.msra.mxu0 0.0
    %462 = vmatprep.subr.mxu0 0.0
    %463 = vmatpush1.msra.mxu0 0.0
    %464 = vmatprep.subr.mxu0 0.0
    %465 = vmatpush1.msra.mxu0 0.0
    %466 = vmatprep.subr.mxu0 0.0
    %467 = vmatpush1.msra.mxu0 0.0
    %468 = vmatprep.subr.mxu0 0.0
    %469 = vmatpush1.msra.mxu0 0.0
    %470 = vmatprep.subr.mxu0 0.0
    %471 = vmatpush1.msra.mxu0 0.0
    %472 = vmatprep.subr.mxu0 0.0
    %473 = vmatpush1.msra.mxu0 0.0
    %474 = vmatprep.subr.mxu0 0.0
    %475 = vmatpush1.msra.mxu0 0.0
    %476 = vmatprep.subr.mxu0 0.0
    %477 = vmatpush1.msra.mxu0 0.0
    %478 = vmatprep.subr.mxu0 0.0
    %479 = vmatpush1.msra.mxu0 0.0
    %480 = vmatprep.subr.mxu0 0.0
    %481 = vmatpush1.msra.mxu0 0.0
    %482 = vmatprep.subr.mxu0 0.0
    %483 = vmatpush1.msra.mxu0 0.0
    %484 = vmatprep.subr.mxu0 0.0
    %485 = vmatpush1.msra.mxu0 0.0
    %486 = vmatprep.subr.mxu0 0.0
    %487 = vmatpush1.msra.mxu0 0.0
    %488 = vmatprep.subr.mxu0 0.0
    %489 = vmatpush1.msra.mxu0 0.0
    %490 = vmatprep.subr.mxu0 0.0
    %491 = vmatpush1.msra.mxu0 0.0
    %492 = vmatprep.subr.mxu0 0.0
    %493 = vmatpush1.msra.mxu0 0.0
    %494 = vmatprep.subr.mxu0 0.0
    %495 = vmatpush1.msra.mxu0 0.0
    %496 = vmatprep.subr.mxu0 0.0
    %497 = vmatpush1.msra.mxu0 0.0
    %498 = vmatprep.subr.mxu0 0.0
    %499 = vmatpush1.msra.mxu0 0.0
    %500 = vmatprep.subr.mxu0 0.0
    %501 = vmatpush1.msra.mxu0 0.0
    %502 = vmatprep.subr.mxu0 0.0
    %503 = vmatpush1.msra.mxu0 0.0
    %504 = vmatprep.subr.mxu0 0.0
    %505 = vmatpush1.msra.mxu0 0.0
    %506 = vmatprep.mubr.f32.mxu0 0.0
    %507 = vmatmul.mubr.f32.gmra.mrb[0].mxu0 %v440
    %v508 = vpop.f32.mrb[0].mxu0
    %v509 = vadd.f32 0.0, %v508
    %v510 = vpop.f32.mrb[0].mxu0
    %511 = vdwg.mxu0
    %513 = vrot.lane.b32.xlu0 %v509, 8
    %v514 = vpop.permute.xlu0 %513
    %vm516 = vcmask 130112
    %517 = vst.msk [vmem:[#allocation2] sm:$0xff] %vm516, %v514
    %518 = vrot.lane.b32.xlu0 %v169, 112
    %v519 = vpop.permute.xlu0 %518
    %520 = vrot.lane.b32.xlu0 %v169, 80
    %v521 = vpop.permute.xlu0 %520
    %v522 = vsel %vm180, %v519, 0
    %v524 = vsel %vm180, %v521, 0
    %526 = vmatprep.subr.mxu0 0.0
    %527 = vmatpush1.xpose.msra.mxu0 %v524
    %528 = vmatprep.subr.mxu0 0.0
    %529 = vmatpush1.xpose.msra.mxu0 0.0
    %530 = vmatprep.subr.mxu0 0.0
    %531 = vmatpush1.xpose.msra.mxu0 0.0
    %532 = vmatprep.subr.mxu0 0.0
    %533 = vmatpush1.xpose.msra.mxu0 0.0
    %534 = vmatprep.subr.mxu0 0.0
    %535 = vmatpush1.xpose.msra.mxu0 0.0
    %536 = vmatprep.subr.mxu0 0.0
    %537 = vmatpush1.xpose.msra.mxu0 0.0
    %538 = vmatprep.subr.mxu0 0.0
    %539 = vmatpush1.xpose.msra.mxu0 0.0
    %540 = vmatprep.subr.mxu0 0.0
    %541 = vmatpush1.xpose.msra.mxu0 0.0
    %542 = vmatprep.subr.mxu0 0.0
    %543 = vmatpush1.xpose.msra.mxu0 0.0
    %544 = vmatprep.subr.mxu0 0.0
    %545 = vmatpush1.xpose.msra.mxu0 0.0
    %546 = vmatprep.subr.mxu0 0.0
    %547 = vmatpush1.xpose.msra.mxu0 0.0
    %548 = vmatprep.subr.mxu0 0.0
    %549 = vmatpush1.xpose.msra.mxu0 0.0
    %550 = vmatprep.subr.mxu0 0.0
    %551 = vmatpush1.xpose.msra.mxu0 0.0
    %552 = vmatprep.subr.mxu0 0.0
    %553 = vmatpush1.xpose.msra.mxu0 0.0
    %554 = vmatprep.subr.mxu0 0.0
    %555 = vmatpush1.xpose.msra.mxu0 0.0
    %556 = vmatprep.subr.mxu0 0.0
    %557 = vmatpush1.xpose.msra.mxu0 0.0
    %558 = vmatprep.subr.mxu0 0.0
    %559 = vmatpush1.xpose.msra.mxu0 0.0
    %560 = vmatprep.subr.mxu0 0.0
    %561 = vmatpush1.xpose.msra.mxu0 0.0
    %562 = vmatprep.subr.mxu0 0.0
    %563 = vmatpush1.xpose.msra.mxu0 0.0
    %564 = vmatprep.subr.mxu0 0.0
    %565 = vmatpush1.xpose.msra.mxu0 0.0
    %566 = vmatprep.subr.mxu0 0.0
    %567 = vmatpush1.xpose.msra.mxu0 0.0
    %568 = vmatprep.subr.mxu0 0.0
    %569 = vmatpush1.xpose.msra.mxu0 0.0
    %570 = vmatprep.subr.mxu0 0.0
    %571 = vmatpush1.xpose.msra.mxu0 0.0
    %572 = vmatprep.subr.mxu0 0.0
    %573 = vmatpush1.xpose.msra.mxu0 0.0
    %574 = vmatprep.subr.mxu0 0.0
    %575 = vmatpush1.xpose.msra.mxu0 0.0
    %576 = vmatprep.subr.mxu0 0.0
    %577 = vmatpush1.xpose.msra.mxu0 0.0
    %578 = vmatprep.subr.mxu0 0.0
    %579 = vmatpush1.xpose.msra.mxu0 0.0
    %580 = vmatprep.subr.mxu0 0.0
    %581 = vmatpush1.xpose.msra.mxu0 0.0
    %582 = vmatprep.subr.mxu0 0.0
    %583 = vmatpush1.xpose.msra.mxu0 0.0
    %584 = vmatprep.subr.mxu0 0.0
    %585 = vmatpush1.xpose.msra.mxu0 0.0
    %586 = vmatprep.subr.mxu0 0.0
    %587 = vmatpush1.xpose.msra.mxu0 0.0
    %588 = vmatprep.subr.mxu0 0.0
    %589 = vmatpush1.xpose.msra.mxu0 0.0
    %590 = vmatprep.mubr.f32.mxu0 0.0
    %591 = vmatmul.mubr.f32.gmra.mrb[0].mxu0 %v522
    %v592 = vpop.f32.mrb[0].mxu0
    %v593 = vadd.f32 0.0, %v592
    %v594 = vpop.f32.mrb[0].mxu0
    %595 = vdwg.mxu0
    %v596 = vmul.f32 %v593, 0.35355338
    %v597 = vadd.f32 %v596, %v83
    %v598 = vsel %vm180, %v597, -inf
    %599 = vmax.xlane.f32.xlu0 %v598
    %v600 = vpop.xlane.xlu0 %599
    %v601 = vsub.f32 %v597, %v600
    %v602 = vmul.f32 %v601, 1.442695
    %v603 = vpow.pop %v602
    %v604 = vsel %vm180, %v603, 0.0
    %605 = vadd.xlane.f32.xlu0 %v604
    %v606 = vpop.xlane.xlu0 %605
    %v607 = vrcp.pop %v606
    %v608 = vmul.f32 %v603, %v607
    %609 = vrot.lane.b32.xlu0 %v169, 48
    %v610 = vpop.permute.xlu0 %609
    %v613 = vsel %vm180, %v608, 0
    %615 = vmatprep.subr.mxu0 0.0
    %616 = vmatpush1.msra.mxu0 %v610
    %617 = vmatprep.subr.mxu0 0.0
    %618 = vmatpush1.msra.mxu0 0.0
    %619 = vmatprep.subr.mxu0 0.0
    %620 = vmatpush1.msra.mxu0 0.0
    %621 = vmatprep.subr.mxu0 0.0
    %622 = vmatpush1.msra.mxu0 0.0
    %623 = vmatprep.subr.mxu0 0.0
    %624 = vmatpush1.msra.mxu0 0.0
    %625 = vmatprep.subr.mxu0 0.0
    %626 = vmatpush1.msra.mxu0 0.0
    %627 = vmatprep.subr.mxu0 0.0
    %628 = vmatpush1.msra.mxu0 0.0
    %629 = vmatprep.subr.mxu0 0.0
    %630 = vmatpush1.msra.mxu0 0.0
    %631 = vmatprep.subr.mxu0 0.0
    %632 = vmatpush1.msra.mxu0 0.0
    %633 = vmatprep.subr.mxu0 0.0
    %634 = vmatpush1.msra.mxu0 0.0
    %635 = vmatprep.subr.mxu0 0.0
    %636 = vmatpush1.msra.mxu0 0.0
    %637 = vmatprep.subr.mxu0 0.0
    %638 = vmatpush1.msra.mxu0 0.0
    %639 = vmatprep.subr.mxu0 0.0
    %640 = vmatpush1.msra.mxu0 0.0
    %641 = vmatprep.subr.mxu0 0.0
    %642 = vmatpush1.msra.mxu0 0.0
    %643 = vmatprep.subr.mxu0 0.0
    %644 = vmatpush1.msra.mxu0 0.0
    %645 = vmatprep.subr.mxu0 0.0
    %646 = vmatpush1.msra.mxu0 0.0
    %647 = vmatprep.subr.mxu0 0.0
    %648 = vmatpush1.msra.mxu0 0.0
    %649 = vmatprep.subr.mxu0 0.0
    %650 = vmatpush1.msra.mxu0 0.0
    %651 = vmatprep.subr.mxu0 0.0
    %652 = vmatpush1.msra.mxu0 0.0
    %653 = vmatprep.subr.mxu0 0.0
    %654 = vmatpush1.msra.mxu0 0.0
    %655 = vmatprep.subr.mxu0 0.0
    %656 = vmatpush1.msra.mxu0 0.0
    %657 = vmatprep.subr.mxu0 0.0
    %658 = vmatpush1.msra.mxu0 0.0
    %659 = vmatprep.subr.mxu0 0.0
    %660 = vmatpush1.msra.mxu0 0.0
    %661 = vmatprep.subr.mxu0 0.0
    %662 = vmatpush1.msra.mxu0 0.0
    %663 = vmatprep.subr.mxu0 0.0
    %664 = vmatpush1.msra.mxu0 0.0
    %665 = vmatprep.subr.mxu0 0.0
    %666 = vmatpush1.msra.mxu0 0.0
    %667 = vmatprep.subr.mxu0 0.0
    %668 = vmatpush1.msra.mxu0 0.0
    %669 = vmatprep.subr.mxu0 0.0
    %670 = vmatpush1.msra.mxu0 0.0
    %671 = vmatprep.subr.mxu0 0.0
    %672 = vmatpush1.msra.mxu0 0.0
    %673 = vmatprep.subr.mxu0 0.0
    %674 = vmatpush1.msra.mxu0 0.0
    %675 = vmatprep.subr.mxu0 0.0
    %676 = vmatpush1.msra.mxu0 0.0
    %677 = vmatprep.subr.mxu0 0.0
    %678 = vmatpush1.msra.mxu0 0.0
    %679 = vmatprep.mubr.f32.mxu0 0.0
    %680 = vmatmul.mubr.f32.gmra.mrb[0].mxu0 %v613
    %v681 = vpop.f32.mrb[0].mxu0
    %v682 = vadd.f32 0.0, %v681
    %v683 = vpop.f32.mrb[0].mxu0
    %684 = vdwg.mxu0
    %686 = vrot.lane.b32.xlu0 %v682, 16
    %v687 = vpop.permute.xlu0 %686
    %vm689 = vcmask 195712
    %690 = vst.msk [vmem:[#allocation2] sm:$0xff] %vm689, %v687
    %691 = vrot.lane.b32.xlu0 %v169, 104
    %v692 = vpop.permute.xlu0 %691
    %693 = vrot.lane.b32.xlu0 %v169, 72
    %v694 = vpop.permute.xlu0 %693
    %v695 = vsel %vm180, %v692, 0
    %v697 = vsel %vm180, %v694, 0
    %699 = vmatprep.subr.mxu0 0.0
    %700 = vmatpush1.xpose.msra.mxu0 %v697
    %701 = vmatprep.subr.mxu0 0.0
    %702 = vmatpush1.xpose.msra.mxu0 0.0
    %703 = vmatprep.subr.mxu0 0.0
    %704 = vmatpush1.xpose.msra.mxu0 0.0
    %705 = vmatprep.subr.mxu0 0.0
    %706 = vmatpush1.xpose.msra.mxu0 0.0
    %707 = vmatprep.subr.mxu0 0.0
    %708 = vmatpush1.xpose.msra.mxu0 0.0
    %709 = vmatprep.subr.mxu0 0.0
    %710 = vmatpush1.xpose.msra.mxu0 0.0
    %711 = vmatprep.subr.mxu0 0.0
    %712 = vmatpush1.xpose.msra.mxu0 0.0
    %713 = vmatprep.subr.mxu0 0.0
    %714 = vmatpush1.xpose.msra.mxu0 0.0
    %715 = vmatprep.subr.mxu0 0.0
    %716 = vmatpush1.xpose.msra.mxu0 0.0
    %717 = vmatprep.subr.mxu0 0.0
    %718 = vmatpush1.xpose.msra.mxu0 0.0
    %719 = vmatprep.subr.mxu0 0.0
    %720 = vmatpush1.xpose.msra.mxu0 0.0
    %721 = vmatprep.subr.mxu0 0.0
    %722 = vmatpush1.xpose.msra.mxu0 0.0
    %723 = vmatprep.subr.mxu0 0.0
    %724 = vmatpush1.xpose.msra.mxu0 0.0
    %725 = vmatprep.subr.mxu0 0.0
    %726 = vmatpush1.xpose.msra.mxu0 0.0
    %727 = vmatprep.subr.mxu0 0.0
    %728 = vmatpush1.xpose.msra.mxu0 0.0
    %729 = vmatprep.subr.mxu0 0.0
    %730 = vmatpush1.xpose.msra.mxu0 0.0
    %731 = vmatprep.subr.mxu0 0.0
    %732 = vmatpush1.xpose.msra.mxu0 0.0
    %733 = vmatprep.subr.mxu0 0.0
    %734 = vmatpush1.xpose.msra.mxu0 0.0
    %735 = vmatprep.subr.mxu0 0.0
    %736 = vmatpush1.xpose.msra.mxu0 0.0
    %737 = vmatprep.subr.mxu0 0.0
    %738 = vmatpush1.xpose.msra.mxu0 0.0
    %739 = vmatprep.subr.mxu0 0.0
    %740 = vmatpush1.xpose.msra.mxu0 0.0
    %741 = vmatprep.subr.mxu0 0.0
    %742 = vmatpush1.xpose.msra.mxu0 0.0
    %743 = vmatprep.subr.mxu0 0.0
    %744 = vmatpush1.xpose.msra.mxu0 0.0
    %745 = vmatprep.subr.mxu0 0.0
    %746 = vmatpush1.xpose.msra.mxu0 0.0
    %747 = vmatprep.subr.mxu0 0.0
    %748 = vmatpush1.xpose.msra.mxu0 0.0
    %749 = vmatprep.subr.mxu0 0.0
    %750 = vmatpush1.xpose.msra.mxu0 0.0
    %751 = vmatprep.subr.mxu0 0.0
    %752 = vmatpush1.xpose.msra.mxu0 0.0
    %753 = vmatprep.subr.mxu0 0.0
    %754 = vmatpush1.xpose.msra.mxu0 0.0
    %755 = vmatprep.subr.mxu0 0.0
    %756 = vmatpush1.xpose.msra.mxu0 0.0
    %757 = vmatprep.subr.mxu0 0.0
    %758 = vmatpush1.xpose.msra.mxu0 0.0
    %759 = vmatprep.subr.mxu0 0.0
    %760 = vmatpush1.xpose.msra.mxu0 0.0
    %761 = vmatprep.subr.mxu0 0.0
    %762 = vmatpush1.xpose.msra.mxu0 0.0
    %763 = vmatprep.mubr.f32.mxu0 0.0
    %764 = vmatmul.mubr.f32.gmra.mrb[0].mxu0 %v695
    %v765 = vpop.f32.mrb[0].mxu0
    %v766 = vadd.f32 0.0, %v765
    %v767 = vpop.f32.mrb[0].mxu0
    %768 = vdwg.mxu0
    %v769 = vmul.f32 %v766, 0.35355338
    %v770 = vadd.f32 %v769, %v83
    %v771 = vsel %vm180, %v770, -inf
    %772 = vmax.xlane.f32.xlu0 %v771
    %v773 = vpop.xlane.xlu0 %772
    %v774 = vsub.f32 %v770, %v773
    %v775 = vmul.f32 %v774, 1.442695
    %v776 = vpow.pop %v775
    %v777 = vsel %vm180, %v776, 0.0
    %778 = vadd.xlane.f32.xlu0 %v777
    %v779 = vpop.xlane.xlu0 %778
    %v780 = vrcp.pop %v779
    %v781 = vmul.f32 %v776, %v780
    %782 = vrot.lane.b32.xlu0 %v169, 40
    %v783 = vpop.permute.xlu0 %782
    %v786 = vsel %vm180, %v781, 0
    %788 = vmatprep.subr.mxu0 0.0
    %789 = vmatpush1.msra.mxu0 %v783
    %790 = vmatprep.subr.mxu0 0.0
    %791 = vmatpush1.msra.mxu0 0.0
    %792 = vmatprep.subr.mxu0 0.0
    %793 = vmatpush1.msra.mxu0 0.0
    %794 = vmatprep.subr.mxu0 0.0
    %795 = vmatpush1.msra.mxu0 0.0
    %796 = vmatprep.subr.mxu0 0.0
    %797 = vmatpush1.msra.mxu0 0.0
    %798 = vmatprep.subr.mxu0 0.0
    %799 = vmatpush1.msra.mxu0 0.0
    %800 = vmatprep.subr.mxu0 0.0
    %801 = vmatpush1.msra.mxu0 0.0
    %802 = vmatprep.subr.mxu0 0.0
    %803 = vmatpush1.msra.mxu0 0.0
    %804 = vmatprep.subr.mxu0 0.0
    %805 = vmatpush1.msra.mxu0 0.0
    %806 = vmatprep.subr.mxu0 0.0
    %807 = vmatpush1.msra.mxu0 0.0
    %808 = vmatprep.subr.mxu0 0.0
    %809 = vmatpush1.msra.mxu0 0.0
    %810 = vmatprep.subr.mxu0 0.0
    %811 = vmatpush1.msra.mxu0 0.0
    %812 = vmatprep.subr.mxu0 0.0
    %813 = vmatpush1.msra.mxu0 0.0
    %814 = vmatprep.subr.mxu0 0.0
    %815 = vmatpush1.msra.mxu0 0.0
    %816 = vmatprep.subr.mxu0 0.0
    %817 = vmatpush1.msra.mxu0 0.0
    %818 = vmatprep.subr.mxu0 0.0
    %819 = vmatpush1.msra.mxu0 0.0
    %820 = vmatprep.subr.mxu0 0.0
    %821 = vmatpush1.msra.mxu0 0.0
    %822 = vmatprep.subr.mxu0 0.0
    %823 = vmatpush1.msra.mxu0 0.0
    %824 = vmatprep.subr.mxu0 0.0
    %825 = vmatpush1.msra.mxu0 0.0
    %826 = vmatprep.subr.mxu0 0.0
    %827 = vmatpush1.msra.mxu0 0.0
    %828 = vmatprep.subr.mxu0 0.0
    %829 = vmatpush1.msra.mxu0 0.0
    %830 = vmatprep.subr.mxu0 0.0
    %831 = vmatpush1.msra.mxu0 0.0
    %832 = vmatprep.subr.mxu0 0.0
    %833 = vmatpush1.msra.mxu0 0.0
    %834 = vmatprep.subr.mxu0 0.0
    %835 = vmatpush1.msra.mxu0 0.0
    %836 = vmatprep.subr.mxu0 0.0
    %837 = vmatpush1.msra.mxu0 0.0
    %838 = vmatprep.subr.mxu0 0.0
    %839 = vmatpush1.msra.mxu0 0.0
    %840 = vmatprep.subr.mxu0 0.0
    %841 = vmatpush1.msra.mxu0 0.0
    %842 = vmatprep.subr.mxu0 0.0
    %843 = vmatpush1.msra.mxu0 0.0
    %844 = vmatprep.subr.mxu0 0.0
    %845 = vmatpush1.msra.mxu0 0.0
    %846 = vmatprep.subr.mxu0 0.0
    %847 = vmatpush1.msra.mxu0 0.0
    %848 = vmatprep.subr.mxu0 0.0
    %849 = vmatpush1.msra.mxu0 0.0
    %850 = vmatprep.subr.mxu0 0.0
    %851 = vmatpush1.msra.mxu0 0.0
    %852 = vmatprep.mubr.f32.mxu0 0.0
    %853 = vmatmul.mubr.f32.gmra.mrb[0].mxu0 %v786
    %v854 = vpop.f32.mrb[0].mxu0
    %v855 = vadd.f32 0.0, %v854
    %v856 = vpop.f32.mrb[0].mxu0
    %857 = vdwg.mxu0
    %859 = vrot.lane.b32.xlu0 %v855, 24
    %v860 = vpop.permute.xlu0 %859
    %vm862 = vcmask 261312
    %863 = vst.msk [vmem:[#allocation2] sm:$0xff] %vm862, %v860
    %865 = vrot.lane.b32.xlu0 %v174, 96
    %v866 = vpop.permute.xlu0 %865
    %v867 = vsel %vm180, %v174, 0
    %v869 = vsel %vm180, %v866, 0
    %871 = vmatprep.subr.mxu0 0.0
    %872 = vmatpush1.xpose.msra.mxu0 %v869
    %873 = vmatprep.subr.mxu0 0.0
    %874 = vmatpush1.xpose.msra.mxu0 0.0
    %875 = vmatprep.subr.mxu0 0.0
    %876 = vmatpush1.xpose.msra.mxu0 0.0
    %877 = vmatprep.subr.mxu0 0.0
    %878 = vmatpush1.xpose.msra.mxu0 0.0
    %879 = vmatprep.subr.mxu0 0.0
    %880 = vmatpush1.xpose.msra.mxu0 0.0
    %881 = vmatprep.subr.mxu0 0.0
    %882 = vmatpush1.xpose.msra.mxu0 0.0
    %883 = vmatprep.subr.mxu0 0.0
    %884 = vmatpush1.xpose.msra.mxu0 0.0
    %885 = vmatprep.subr.mxu0 0.0
    %886 = vmatpush1.xpose.msra.mxu0 0.0
    %887 = vmatprep.subr.mxu0 0.0
    %888 = vmatpush1.xpose.msra.mxu0 0.0
    %889 = vmatprep.subr.mxu0 0.0
    %890 = vmatpush1.xpose.msra.mxu0 0.0
    %891 = vmatprep.subr.mxu0 0.0
    %892 = vmatpush1.xpose.msra.mxu0 0.0
    %893 = vmatprep.subr.mxu0 0.0
    %894 = vmatpush1.xpose.msra.mxu0 0.0
    %895 = vmatprep.subr.mxu0 0.0
    %896 = vmatpush1.xpose.msra.mxu0 0.0
    %897 = vmatprep.subr.mxu0 0.0
    %898 = vmatpush1.xpose.msra.mxu0 0.0
    %899 = vmatprep.subr.mxu0 0.0
    %900 = vmatpush1.xpose.msra.mxu0 0.0
    %901 = vmatprep.subr.mxu0 0.0
    %902 = vmatpush1.xpose.msra.mxu0 0.0
    %903 = vmatprep.subr.mxu0 0.0
    %904 = vmatpush1.xpose.msra.mxu0 0.0
    %905 = vmatprep.subr.mxu0 0.0
    %906 = vmatpush1.xpose.msra.mxu0 0.0
    %907 = vmatprep.subr.mxu0 0.0
    %908 = vmatpush1.xpose.msra.mxu0 0.0
    %909 = vmatprep.subr.mxu0 0.0
    %910 = vmatpush1.xpose.msra.mxu0 0.0
    %911 = vmatprep.subr.mxu0 0.0
    %912 = vmatpush1.xpose.msra.mxu0 0.0
    %913 = vmatprep.subr.mxu0 0.0
    %914 = vmatpush1.xpose.msra.mxu0 0.0
    %915 = vmatprep.subr.mxu0 0.0
    %916 = vmatpush1.xpose.msra.mxu0 0.0
    %917 = vmatprep.subr.mxu0 0.0
    %918 = vmatpush1.xpose.msra.mxu0 0.0
    %919 = vmatprep.subr.mxu0 0.0
    %920 = vmatpush1.xpose.msra.mxu0 0.0
    %921 = vmatprep.subr.mxu0 0.0
    %922 = vmatpush1.xpose.msra.mxu0 0.0
    %923 = vmatprep.subr.mxu0 0.0
    %924 = vmatpush1.xpose.msra.mxu0 0.0
    %925 = vmatprep.subr.mxu0 0.0
    %926 = vmatpush1.xpose.msra.mxu0 0.0
    %927 = vmatprep.subr.mxu0 0.0
    %928 = vmatpush1.xpose.msra.mxu0 0.0
    %929 = vmatprep.subr.mxu0 0.0
    %930 = vmatpush1.xpose.msra.mxu0 0.0
    %931 = vmatprep.subr.mxu0 0.0
    %932 = vmatpush1.xpose.msra.mxu0 0.0
    %933 = vmatprep.subr.mxu0 0.0
    %934 = vmatpush1.xpose.msra.mxu0 0.0
    %935 = vmatprep.mubr.f32.mxu0 0.0
    %936 = vmatmul.mubr.f32.gmra.mrb[0].mxu0 %v867
    %v937 = vpop.f32.mrb[0].mxu0
    %v938 = vadd.f32 0.0, %v937
    %v939 = vpop.f32.mrb[0].mxu0
    %940 = vdwg.mxu0
    %v941 = vmul.f32 %v938, 0.35355338
    %v942 = vadd.f32 %v941, %v83
    %v943 = vsel %vm180, %v942, -inf
    %944 = vmax.xlane.f32.xlu0 %v943
    %v945 = vpop.xlane.xlu0 %944
    %v946 = vsub.f32 %v942, %v945
    %v947 = vmul.f32 %v946, 1.442695
    %v948 = vpow.pop %v947
    %v949 = vsel %vm180, %v948, 0.0
    %950 = vadd.xlane.f32.xlu0 %v949
    %v951 = vpop.xlane.xlu0 %950
    %v952 = vrcp.pop %v951
    %v953 = vmul.f32 %v948, %v952
    %954 = vrot.lane.b32.xlu0 %v174, 64
    %v955 = vpop.permute.xlu0 %954
    %v958 = vsel %vm180, %v953, 0
    %960 = vmatprep.subr.mxu0 0.0
    %961 = vmatpush1.msra.mxu0 %v955
    %962 = vmatprep.subr.mxu0 0.0
    %963 = vmatpush1.msra.mxu0 0.0
    %964 = vmatprep.subr.mxu0 0.0
    %965 = vmatpush1.msra.mxu0 0.0
    %966 = vmatprep.subr.mxu0 0.0
    %967 = vmatpush1.msra.mxu0 0.0
    %968 = vmatprep.subr.mxu0 0.0
    %969 = vmatpush1.msra.mxu0 0.0
    %970 = vmatprep.subr.mxu0 0.0
    %971 = vmatpush1.msra.mxu0 0.0
    %972 = vmatprep.subr.mxu0 0.0
    %973 = vmatpush1.msra.mxu0 0.0
    %974 = vmatprep.subr.mxu0 0.0
    %975 = vmatpush1.msra.mxu0 0.0
    %976 = vmatprep.subr.mxu0 0.0
    %977 = vmatpush1.msra.mxu0 0.0
    %978 = vmatprep.subr.mxu0 0.0
    %979 = vmatpush1.msra.mxu0 0.0
    %980 = vmatprep.subr.mxu0 0.0
    %981 = vmatpush1.msra.mxu0 0.0
    %982 = vmatprep.subr.mxu0 0.0
    %983 = vmatpush1.msra.mxu0 0.0
    %984 = vmatprep.subr.mxu0 0.0
    %985 = vmatpush1.msra.mxu0 0.0
    %986 = vmatprep.subr.mxu0 0.0
    %987 = vmatpush1.msra.mxu0 0.0
    %988 = vmatprep.subr.mxu0 0.0
    %989 = vmatpush1.msra.mxu0 0.0
    %990 = vmatprep.subr.mxu0 0.0
    %991 = vmatpush1.msra.mxu0 0.0
    %992 = vmatprep.subr.mxu0 0.0
    %993 = vmatpush1.msra.mxu0 0.0
    %994 = vmatprep.subr.mxu0 0.0
    %995 = vmatpush1.msra.mxu0 0.0
    %996 = vmatprep.subr.mxu0 0.0
    %997 = vmatpush1.msra.mxu0 0.0
    %998 = vmatprep.subr.mxu0 0.0
    %999 = vmatpush1.msra.mxu0 0.0
    %1000 = vmatprep.subr.mxu0 0.0
    %1001 = vmatpush1.msra.mxu0 0.0
    %1002 = vmatprep.subr.mxu0 0.0
    %1003 = vmatpush1.msra.mxu0 0.0
    %1004 = vmatprep.subr.mxu0 0.0
    %1005 = vmatpush1.msra.mxu0 0.0
    %1006 = vmatprep.subr.mxu0 0.0
    %1007 = vmatpush1.msra.mxu0 0.0
    %1008 = vmatprep.subr.mxu0 0.0
    %1009 = vmatpush1.msra.mxu0 0.0
    %1010 = vmatprep.subr.mxu0 0.0
    %1011 = vmatpush1.msra.mxu0 0.0
    %1012 = vmatprep.subr.mxu0 0.0
    %1013 = vmatpush1.msra.mxu0 0.0
    %1014 = vmatprep.subr.mxu0 0.0
    %1015 = vmatpush1.msra.mxu0 0.0
    %1016 = vmatprep.subr.mxu0 0.0
    %1017 = vmatpush1.msra.mxu0 0.0
    %1018 = vmatprep.subr.mxu0 0.0
    %1019 = vmatpush1.msra.mxu0 0.0
    %1020 = vmatprep.subr.mxu0 0.0
    %1021 = vmatpush1.msra.mxu0 0.0
    %1022 = vmatprep.subr.mxu0 0.0
    %1023 = vmatpush1.msra.mxu0 0.0
    %1024 = vmatprep.mubr.f32.mxu0 0.0
    %1025 = vmatmul.mubr.f32.gmra.mrb[0].mxu0 %v958
    %v1026 = vpop.f32.mrb[0].mxu0
    %v1027 = vadd.f32 0.0, %v1026
    %v1028 = vpop.f32.mrb[0].mxu0
    %1029 = vdwg.mxu0
    %1030 = vst.msk [vmem:[#allocation2 + $0x8] sm:$0xff] %vm180, %v1027
    %1031 = vrot.lane.b32.xlu0 %v174, 120
    %v1032 = vpop.permute.xlu0 %1031
    %1033 = vrot.lane.b32.xlu0 %v174, 88
    %v1034 = vpop.permute.xlu0 %1033
    %v1035 = vsel %vm180, %v1032, 0
    %v1037 = vsel %vm180, %v1034, 0
    %1039 = vmatprep.subr.mxu0 0.0
    %1040 = vmatpush1.xpose.msra.mxu0 %v1037
    %1041 = vmatprep.subr.mxu0 0.0
    %1042 = vmatpush1.xpose.msra.mxu0 0.0
    %1043 = vmatprep.subr.mxu0 0.0
    %1044 = vmatpush1.xpose.msra.mxu0 0.0
    %1045 = vmatprep.subr.mxu0 0.0
    %1046 = vmatpush1.xpose.msra.mxu0 0.0
    %1047 = vmatprep.subr.mxu0 0.0
    %1048 = vmatpush1.xpose.msra.mxu0 0.0
    %1049 = vmatprep.subr.mxu0 0.0
    %1050 = vmatpush1.xpose.msra.mxu0 0.0
    %1051 = vmatprep.subr.mxu0 0.0
    %1052 = vmatpush1.xpose.msra.mxu0 0.0
    %1053 = vmatprep.subr.mxu0 0.0
    %1054 = vmatpush1.xpose.msra.mxu0 0.0
    %1055 = vmatprep.subr.mxu0 0.0
    %1056 = vmatpush1.xpose.msra.mxu0 0.0
    %1057 = vmatprep.subr.mxu0 0.0
    %1058 = vmatpush1.xpose.msra.mxu0 0.0
    %1059 = vmatprep.subr.mxu0 0.0
    %1060 = vmatpush1.xpose.msra.mxu0 0.0
    %1061 = vmatprep.subr.mxu0 0.0
    %1062 = vmatpush1.xpose.msra.mxu0 0.0
    %1063 = vmatprep.subr.mxu0 0.0
    %1064 = vmatpush1.xpose.msra.mxu0 0.0
    %1065 = vmatprep.subr.mxu0 0.0
    %1066 = vmatpush1.xpose.msra.mxu0 0.0
    %1067 = vmatprep.subr.mxu0 0.0
    %1068 = vmatpush1.xpose.msra.mxu0 0.0
    %1069 = vmatprep.subr.mxu0 0.0
    %1070 = vmatpush1.xpose.msra.mxu0 0.0
    %1071 = vmatprep.subr.mxu0 0.0
    %1072 = vmatpush1.xpose.msra.mxu0 0.0
    %1073 = vmatprep.subr.mxu0 0.0
    %1074 = vmatpush1.xpose.msra.mxu0 0.0
    %1075 = vmatprep.subr.mxu0 0.0
    %1076 = vmatpush1.xpose.msra.mxu0 0.0
    %1077 = vmatprep.subr.mxu0 0.0
    %1078 = vmatpush1.xpose.msra.mxu0 0.0
    %1079 = vmatprep.subr.mxu0 0.0
    %1080 = vmatpush1.xpose.msra.mxu0 0.0
    %1081 = vmatprep.subr.mxu0 0.0
    %1082 = vmatpush1.xpose.msra.mxu0 0.0
    %1083 = vmatprep.subr.mxu0 0.0
    %1084 = vmatpush1.xpose.msra.mxu0 0.0
    %1085 = vmatprep.subr.mxu0 0.0
    %1086 = vmatpush1.xpose.msra.mxu0 0.0
    %1087 = vmatprep.subr.mxu0 0.0
    %1088 = vmatpush1.xpose.msra.mxu0 0.0
    %1089 = vmatprep.subr.mxu0 0.0
    %1090 = vmatpush1.xpose.msra.mxu0 0.0
    %1091 = vmatprep.subr.mxu0 0.0
    %1092 = vmatpush1.xpose.msra.mxu0 0.0
    %1093 = vmatprep.subr.mxu0 0.0
    %1094 = vmatpush1.xpose.msra.mxu0 0.0
    %1095 = vmatprep.subr.mxu0 0.0
    %1096 = vmatpush1.xpose.msra.mxu0 0.0
    %1097 = vmatprep.subr.mxu0 0.0
    %1098 = vmatpush1.xpose.msra.mxu0 0.0
    %1099 = vmatprep.subr.mxu0 0.0
    %1100 = vmatpush1.xpose.msra.mxu0 0.0
    %1101 = vmatprep.subr.mxu0 0.0
    %1102 = vmatpush1.xpose.msra.mxu0 0.0
    %1103 = vmatprep.mubr.f32.mxu0 0.0
    %1104 = vmatmul.mubr.f32.gmra.mrb[0].mxu0 %v1035
    %v1105 = vpop.f32.mrb[0].mxu0
    %v1106 = vadd.f32 0.0, %v1105
    %v1107 = vpop.f32.mrb[0].mxu0
    %1108 = vdwg.mxu0
    %v1109 = vmul.f32 %v1106, 0.35355338
    %v1110 = vadd.f32 %v1109, %v83
    %v1111 = vsel %vm180, %v1110, -inf
    %1112 = vmax.xlane.f32.xlu0 %v1111
    %v1113 = vpop.xlane.xlu0 %1112
    %v1114 = vsub.f32 %v1110, %v1113
    %v1115 = vmul.f32 %v1114, 1.442695
    %v1116 = vpow.pop %v1115
    %v1117 = vsel %vm180, %v1116, 0.0
    %1118 = vadd.xlane.f32.xlu0 %v1117
    %v1119 = vpop.xlane.xlu0 %1118
    %v1120 = vrcp.pop %v1119
    %v1121 = vmul.f32 %v1116, %v1120
    %1122 = vrot.lane.b32.xlu0 %v174, 56
    %v1123 = vpop.permute.xlu0 %1122
    %v1126 = vsel %vm180, %v1121, 0
    %1128 = vmatprep.subr.mxu0 0.0
    %1129 = vmatpush1.msra.mxu0 %v1123
    %1130 = vmatprep.subr.mxu0 0.0
    %1131 = vmatpush1.msra.mxu0 0.0
    %1132 = vmatprep.subr.mxu0 0.0
    %1133 = vmatpush1.msra.mxu0 0.0
    %1134 = vmatprep.subr.mxu0 0.0
    %1135 = vmatpush1.msra.mxu0 0.0
    %1136 = vmatprep.subr.mxu0 0.0
    %1137 = vmatpush1.msra.mxu0 0.0
    %1138 = vmatprep.subr.mxu0 0.0
    %1139 = vmatpush1.msra.mxu0 0.0
    %1140 = vmatprep.subr.mxu0 0.0
    %1141 = vmatpush1.msra.mxu0 0.0
    %1142 = vmatprep.subr.mxu0 0.0
    %1143 = vmatpush1.msra.mxu0 0.0
    %1144 = vmatprep.subr.mxu0 0.0
    %1145 = vmatpush1.msra.mxu0 0.0
    %1146 = vmatprep.subr.mxu0 0.0
    %1147 = vmatpush1.msra.mxu0 0.0
    %1148 = vmatprep.subr.mxu0 0.0
    %1149 = vmatpush1.msra.mxu0 0.0
    %1150 = vmatprep.subr.mxu0 0.0
    %1151 = vmatpush1.msra.mxu0 0.0
    %1152 = vmatprep.subr.mxu0 0.0
    %1153 = vmatpush1.msra.mxu0 0.0
    %1154 = vmatprep.subr.mxu0 0.0
    %1155 = vmatpush1.msra.mxu0 0.0
    %1156 = vmatprep.subr.mxu0 0.0
    %1157 = vmatpush1.msra.mxu0 0.0
    %1158 = vmatprep.subr.mxu0 0.0
    %1159 = vmatpush1.msra.mxu0 0.0
    %1160 = vmatprep.subr.mxu0 0.0
    %1161 = vmatpush1.msra.mxu0 0.0
    %1162 = vmatprep.subr.mxu0 0.0
    %1163 = vmatpush1.msra.mxu0 0.0
    %1164 = vmatprep.subr.mxu0 0.0
    %1165 = vmatpush1.msra.mxu0 0.0
    %1166 = vmatprep.subr.mxu0 0.0
    %1167 = vmatpush1.msra.mxu0 0.0
    %1168 = vmatprep.subr.mxu0 0.0
    %1169 = vmatpush1.msra.mxu0 0.0
    %1170 = vmatprep.subr.mxu0 0.0
    %1171 = vmatpush1.msra.mxu0 0.0
    %1172 = vmatprep.subr.mxu0 0.0
    %1173 = vmatpush1.msra.mxu0 0.0
    %1174 = vmatprep.subr.mxu0 0.0
    %1175 = vmatpush1.msra.mxu0 0.0
    %1176 = vmatprep.subr.mxu0 0.0
    %1177 = vmatpush1.msra.mxu0 0.0
    %1178 = vmatprep.subr.mxu0 0.0
    %1179 = vmatpush1.msra.mxu0 0.0
    %1180 = vmatprep.subr.mxu0 0.0
    %1181 = vmatpush1.msra.mxu0 0.0
    %1182 = vmatprep.subr.mxu0 0.0
    %1183 = vmatpush1.msra.mxu0 0.0
    %1184 = vmatprep.subr.mxu0 0.0
    %1185 = vmatpush1.msra.mxu0 0.0
    %1186 = vmatprep.subr.mxu0 0.0
    %1187 = vmatpush1.msra.mxu0 0.0
    %1188 = vmatprep.subr.mxu0 0.0
    %1189 = vmatpush1.msra.mxu0 0.0
    %1190 = vmatprep.subr.mxu0 0.0
    %1191 = vmatpush1.msra.mxu0 0.0
    %1192 = vmatprep.mubr.f32.mxu0 0.0
    %1193 = vmatmul.mubr.f32.gmra.mrb[0].mxu0 %v1126
    %v1194 = vpop.f32.mrb[0].mxu0
    %v1195 = vadd.f32 0.0, %v1194
    %v1196 = vpop.f32.mrb[0].mxu0
    %1197 = vdwg.mxu0
    %1199 = vrot.lane.b32.xlu0 %v1195, 8
    %v1200 = vpop.permute.xlu0 %1199
    %1202 = vst.msk [vmem:[#allocation2 + $0x8] sm:$0xff] %vm516, %v1200
    %1203 = vrot.lane.b32.xlu0 %v174, 112
    %v1204 = vpop.permute.xlu0 %1203
    %1205 = vrot.lane.b32.xlu0 %v174, 80
    %v1206 = vpop.permute.xlu0 %1205
    %v1207 = vsel %vm180, %v1204, 0
    %v1209 = vsel %vm180, %v1206, 0
    %1211 = vmatprep.subr.mxu0 0.0
    %1212 = vmatpush1.xpose.msra.mxu0 %v1209
    %1213 = vmatprep.subr.mxu0 0.0
    %1214 = vmatpush1.xpose.msra.mxu0 0.0
    %1215 = vmatprep.subr.mxu0 0.0
    %1216 = vmatpush1.xpose.msra.mxu0 0.0
    %1217 = vmatprep.subr.mxu0 0.0
    %1218 = vmatpush1.xpose.msra.mxu0 0.0
    %1219 = vmatprep.subr.mxu0 0.0
    %1220 = vmatpush1.xpose.msra.mxu0 0.0
    %1221 = vmatprep.subr.mxu0 0.0
    %1222 = vmatpush1.xpose.msra.mxu0 0.0
    %1223 = vmatprep.subr.mxu0 0.0
    %1224 = vmatpush1.xpose.msra.mxu0 0.0
    %1225 = vmatprep.subr.mxu0 0.0
    %1226 = vmatpush1.xpose.msra.mxu0 0.0
    %1227 = vmatprep.subr.mxu0 0.0
    %1228 = vmatpush1.xpose.msra.mxu0 0.0
    %1229 = vmatprep.subr.mxu0 0.0
    %1230 = vmatpush1.xpose.msra.mxu0 0.0
    %1231 = vmatprep.subr.mxu0 0.0
    %1232 = vmatpush1.xpose.msra.mxu0 0.0
    %1233 = vmatprep.subr.mxu0 0.0
    %1234 = vmatpush1.xpose.msra.mxu0 0.0
    %1235 = vmatprep.subr.mxu0 0.0
    %1236 = vmatpush1.xpose.msra.mxu0 0.0
    %1237 = vmatprep.subr.mxu0 0.0
    %1238 = vmatpush1.xpose.msra.mxu0 0.0
    %1239 = vmatprep.subr.mxu0 0.0
    %1240 = vmatpush1.xpose.msra.mxu0 0.0
    %1241 = vmatprep.subr.mxu0 0.0
    %1242 = vmatpush1.xpose.msra.mxu0 0.0
    %1243 = vmatprep.subr.mxu0 0.0
    %1244 = vmatpush1.xpose.msra.mxu0 0.0
    %1245 = vmatprep.subr.mxu0 0.0
    %1246 = vmatpush1.xpose.msra.mxu0 0.0
    %1247 = vmatprep.subr.mxu0 0.0
    %1248 = vmatpush1.xpose.msra.mxu0 0.0
    %1249 = vmatprep.subr.mxu0 0.0
    %1250 = vmatpush1.xpose.msra.mxu0 0.0
    %1251 = vmatprep.subr.mxu0 0.0
    %1252 = vmatpush1.xpose.msra.mxu0 0.0
    %1253 = vmatprep.subr.mxu0 0.0
    %1254 = vmatpush1.xpose.msra.mxu0 0.0
    %1255 = vmatprep.subr.mxu0 0.0
    %1256 = vmatpush1.xpose.msra.mxu0 0.0
    %1257 = vmatprep.subr.mxu0 0.0
    %1258 = vmatpush1.xpose.msra.mxu0 0.0
    %1259 = vmatprep.subr.mxu0 0.0
    %1260 = vmatpush1.xpose.msra.mxu0 0.0
    %1261 = vmatprep.subr.mxu0 0.0
    %1262 = vmatpush1.xpose.msra.mxu0 0.0
    %1263 = vmatprep.subr.mxu0 0.0
    %1264 = vmatpush1.xpose.msra.mxu0 0.0
    %1265 = vmatprep.subr.mxu0 0.0
    %1266 = vmatpush1.xpose.msra.mxu0 0.0
    %1267 = vmatprep.subr.mxu0 0.0
    %1268 = vmatpush1.xpose.msra.mxu0 0.0
    %1269 = vmatprep.subr.mxu0 0.0
    %1270 = vmatpush1.xpose.msra.mxu0 0.0
    %1271 = vmatprep.subr.mxu0 0.0
    %1272 = vmatpush1.xpose.msra.mxu0 0.0
    %1273 = vmatprep.subr.mxu0 0.0
    %1274 = vmatpush1.xpose.msra.mxu0 0.0
    %1275 = vmatprep.mubr.f32.mxu0 0.0
    %1276 = vmatmul.mubr.f32.gmra.mrb[0].mxu0 %v1207
    %v1277 = vpop.f32.mrb[0].mxu0
    %v1278 = vadd.f32 0.0, %v1277
    %v1279 = vpop.f32.mrb[0].mxu0
    %1280 = vdwg.mxu0
    %v1281 = vmul.f32 %v1278, 0.35355338
    %v1282 = vadd.f32 %v1281, %v83
    %v1283 = vsel %vm180, %v1282, -inf
    %1284 = vmax.xlane.f32.xlu0 %v1283
    %v1285 = vpop.xlane.xlu0 %1284
    %v1286 = vsub.f32 %v1282, %v1285
    %v1287 = vmul.f32 %v1286, 1.442695
    %v1288 = vpow.pop %v1287
    %v1289 = vsel %vm180, %v1288, 0.0
    %1290 = vadd.xlane.f32.xlu0 %v1289
    %v1291 = vpop.xlane.xlu0 %1290
    %v1292 = vrcp.pop %v1291
    %v1293 = vmul.f32 %v1288, %v1292
    %1294 = vrot.lane.b32.xlu0 %v174, 48
    %v1295 = vpop.permute.xlu0 %1294
    %v1298 = vsel %vm180, %v1293, 0
    %1300 = vmatprep.subr.mxu0 0.0
    %1301 = vmatpush1.msra.mxu0 %v1295
    %1302 = vmatprep.subr.mxu0 0.0
    %1303 = vmatpush1.msra.mxu0 0.0
    %1304 = vmatprep.subr.mxu0 0.0
    %1305 = vmatpush1.msra.mxu0 0.0
    %1306 = vmatprep.subr.mxu0 0.0
    %1307 = vmatpush1.msra.mxu0 0.0
    %1308 = vmatprep.subr.mxu0 0.0
    %1309 = vmatpush1.msra.mxu0 0.0
    %1310 = vmatprep.subr.mxu0 0.0
    %1311 = vmatpush1.msra.mxu0 0.0
    %1312 = vmatprep.subr.mxu0 0.0
    %1313 = vmatpush1.msra.mxu0 0.0
    %1314 = vmatprep.subr.mxu0 0.0
    %1315 = vmatpush1.msra.mxu0 0.0
    %1316 = vmatprep.subr.mxu0 0.0
    %1317 = vmatpush1.msra.mxu0 0.0
    %1318 = vmatprep.subr.mxu0 0.0
    %1319 = vmatpush1.msra.mxu0 0.0
    %1320 = vmatprep.subr.mxu0 0.0
    %1321 = vmatpush1.msra.mxu0 0.0
    %1322 = vmatprep.subr.mxu0 0.0
    %1323 = vmatpush1.msra.mxu0 0.0
    %1324 = vmatprep.subr.mxu0 0.0
    %1325 = vmatpush1.msra.mxu0 0.0
    %1326 = vmatprep.subr.mxu0 0.0
    %1327 = vmatpush1.msra.mxu0 0.0
    %1328 = vmatprep.subr.mxu0 0.0
    %1329 = vmatpush1.msra.mxu0 0.0
    %1330 = vmatprep.subr.mxu0 0.0
    %1331 = vmatpush1.msra.mxu0 0.0
    %1332 = vmatprep.subr.mxu0 0.0
    %1333 = vmatpush1.msra.mxu0 0.0
    %1334 = vmatprep.subr.mxu0 0.0
    %1335 = vmatpush1.msra.mxu0 0.0
    %1336 = vmatprep.subr.mxu0 0.0
    %1337 = vmatpush1.msra.mxu0 0.0
    %1338 = vmatprep.subr.mxu0 0.0
    %1339 = vmatpush1.msra.mxu0 0.0
    %1340 = vmatprep.subr.mxu0 0.0
    %1341 = vmatpush1.msra.mxu0 0.0
    %1342 = vmatprep.subr.mxu0 0.0
    %1343 = vmatpush1.msra.mxu0 0.0
    %1344 = vmatprep.subr.mxu0 0.0
    %1345 = vmatpush1.msra.mxu0 0.0
    %1346 = vmatprep.subr.mxu0 0.0
    %1347 = vmatpush1.msra.mxu0 0.0
    %1348 = vmatprep.subr.mxu0 0.0
    %1349 = vmatpush1.msra.mxu0 0.0
    %1350 = vmatprep.subr.mxu0 0.0
    %1351 = vmatpush1.msra.mxu0 0.0
    %1352 = vmatprep.subr.mxu0 0.0
    %1353 = vmatpush1.msra.mxu0 0.0
    %1354 = vmatprep.subr.mxu0 0.0
    %1355 = vmatpush1.msra.mxu0 0.0
    %1356 = vmatprep.subr.mxu0 0.0
    %1357 = vmatpush1.msra.mxu0 0.0
    %1358 = vmatprep.subr.mxu0 0.0
    %1359 = vmatpush1.msra.mxu0 0.0
    %1360 = vmatprep.subr.mxu0 0.0
    %1361 = vmatpush1.msra.mxu0 0.0
    %1362 = vmatprep.subr.mxu0 0.0
    %1363 = vmatpush1.msra.mxu0 0.0
    %1364 = vmatprep.mubr.f32.mxu0 0.0
    %1365 = vmatmul.mubr.f32.gmra.mrb[0].mxu0 %v1298
    %v1366 = vpop.f32.mrb[0].mxu0
    %v1367 = vadd.f32 0.0, %v1366
    %v1368 = vpop.f32.mrb[0].mxu0
    %1369 = vdwg.mxu0
    %1371 = vrot.lane.b32.xlu0 %v1367, 16
    %v1372 = vpop.permute.xlu0 %1371
    %1374 = vst.msk [vmem:[#allocation2 + $0x8] sm:$0xff] %vm689, %v1372
    %1375 = vrot.lane.b32.xlu0 %v174, 104
    %v1376 = vpop.permute.xlu0 %1375
    %1377 = vrot.lane.b32.xlu0 %v174, 72
    %v1378 = vpop.permute.xlu0 %1377
    %v1379 = vsel %vm180, %v1376, 0
    %v1381 = vsel %vm180, %v1378, 0
    %1383 = vmatprep.subr.mxu0 0.0
    %1384 = vmatpush1.xpose.msra.mxu0 %v1381
    %1385 = vmatprep.subr.mxu0 0.0
    %1386 = vmatpush1.xpose.msra.mxu0 0.0
    %1387 = vmatprep.subr.mxu0 0.0
    %1388 = vmatpush1.xpose.msra.mxu0 0.0
    %1389 = vmatprep.subr.mxu0 0.0
    %1390 = vmatpush1.xpose.msra.mxu0 0.0
    %1391 = vmatprep.subr.mxu0 0.0
    %1392 = vmatpush1.xpose.msra.mxu0 0.0
    %1393 = vmatprep.subr.mxu0 0.0
    %1394 = vmatpush1.xpose.msra.mxu0 0.0
    %1395 = vmatprep.subr.mxu0 0.0
    %1396 = vmatpush1.xpose.msra.mxu0 0.0
    %1397 = vmatprep.subr.mxu0 0.0
    %1398 = vmatpush1.xpose.msra.mxu0 0.0
    %1399 = vmatprep.subr.mxu0 0.0
    %1400 = vmatpush1.xpose.msra.mxu0 0.0
    %1401 = vmatprep.subr.mxu0 0.0
    %1402 = vmatpush1.xpose.msra.mxu0 0.0
    %1403 = vmatprep.subr.mxu0 0.0
    %1404 = vmatpush1.xpose.msra.mxu0 0.0
    %1405 = vmatprep.subr.mxu0 0.0
    %1406 = vmatpush1.xpose.msra.mxu0 0.0
    %1407 = vmatprep.subr.mxu0 0.0
    %1408 = vmatpush1.xpose.msra.mxu0 0.0
    %1409 = vmatprep.subr.mxu0 0.0
    %1410 = vmatpush1.xpose.msra.mxu0 0.0
    %1411 = vmatprep.subr.mxu0 0.0
    %1412 = vmatpush1.xpose.msra.mxu0 0.0
    %1413 = vmatprep.subr.mxu0 0.0
    %1414 = vmatpush1.xpose.msra.mxu0 0.0
    %1415 = vmatprep.subr.mxu0 0.0
    %1416 = vmatpush1.xpose.msra.mxu0 0.0
    %1417 = vmatprep.subr.mxu0 0.0
    %1418 = vmatpush1.xpose.msra.mxu0 0.0
    %1419 = vmatprep.subr.mxu0 0.0
    %1420 = vmatpush1.xpose.msra.mxu0 0.0
    %1421 = vmatprep.subr.mxu0 0.0
    %1422 = vmatpush1.xpose.msra.mxu0 0.0
    %1423 = vmatprep.subr.mxu0 0.0
    %1424 = vmatpush1.xpose.msra.mxu0 0.0
    %1425 = vmatprep.subr.mxu0 0.0
    %1426 = vmatpush1.xpose.msra.mxu0 0.0
    %1427 = vmatprep.subr.mxu0 0.0
    %1428 = vmatpush1.xpose.msra.mxu0 0.0
    %1429 = vmatprep.subr.mxu0 0.0
    %1430 = vmatpush1.xpose.msra.mxu0 0.0
    %1431 = vmatprep.subr.mxu0 0.0
    %1432 = vmatpush1.xpose.msra.mxu0 0.0
    %1433 = vmatprep.subr.mxu0 0.0
    %1434 = vmatpush1.xpose.msra.mxu0 0.0
    %1435 = vmatprep.subr.mxu0 0.0
    %1436 = vmatpush1.xpose.msra.mxu0 0.0
    %1437 = vmatprep.subr.mxu0 0.0
    %1438 = vmatpush1.xpose.msra.mxu0 0.0
    %1439 = vmatprep.subr.mxu0 0.0
    %1440 = vmatpush1.xpose.msra.mxu0 0.0
    %1441 = vmatprep.subr.mxu0 0.0
    %1442 = vmatpush1.xpose.msra.mxu0 0.0
    %1443 = vmatprep.subr.mxu0 0.0
    %1444 = vmatpush1.xpose.msra.mxu0 0.0
    %1445 = vmatprep.subr.mxu0 0.0
    %1446 = vmatpush1.xpose.msra.mxu0 0.0
    %1447 = vmatprep.mubr.f32.mxu0 0.0
    %1448 = vmatmul.mubr.f32.gmra.mrb[0].mxu0 %v1379
    %v1449 = vpop.f32.mrb[0].mxu0
    %v1450 = vadd.f32 0.0, %v1449
    %v1451 = vpop.f32.mrb[0].mxu0
    %1452 = vdwg.mxu0
    %v1453 = vmul.f32 %v1450, 0.35355338
    %v1454 = vadd.f32 %v1453, %v83
    %v1455 = vsel %vm180, %v1454, -inf
    %1456 = vmax.xlane.f32.xlu0 %v1455
    %v1457 = vpop.xlane.xlu0 %1456
    %v1458 = vsub.f32 %v1454, %v1457
    %v1459 = vmul.f32 %v1458, 1.442695
    %v1460 = vpow.pop %v1459
    %v1461 = vsel %vm180, %v1460, 0.0
    %1462 = vadd.xlane.f32.xlu0 %v1461
    %v1463 = vpop.xlane.xlu0 %1462
    %v1464 = vrcp.pop %v1463
    %v1465 = vmul.f32 %v1460, %v1464
    %1466 = vrot.lane.b32.xlu0 %v174, 40
    %v1467 = vpop.permute.xlu0 %1466
    %v1470 = vsel %vm180, %v1465, 0
    %1472 = vmatprep.subr.mxu0 0.0
    %1473 = vmatpush1.msra.mxu0 %v1467
    %1474 = vmatprep.subr.mxu0 0.0
    %1475 = vmatpush1.msra.mxu0 0.0
    %1476 = vmatprep.subr.mxu0 0.0
    %1477 = vmatpush1.msra.mxu0 0.0
    %1478 = vmatprep.subr.mxu0 0.0
    %1479 = vmatpush1.msra.mxu0 0.0
    %1480 = vmatprep.subr.mxu0 0.0
    %1481 = vmatpush1.msra.mxu0 0.0
    %1482 = vmatprep.subr.mxu0 0.0
    %1483 = vmatpush1.msra.mxu0 0.0
    %1484 = vmatprep.subr.mxu0 0.0
    %1485 = vmatpush1.msra.mxu0 0.0
    %1486 = vmatprep.subr.mxu0 0.0
    %1487 = vmatpush1.msra.mxu0 0.0
    %1488 = vmatprep.subr.mxu0 0.0
    %1489 = vmatpush1.msra.mxu0 0.0
    %1490 = vmatprep.subr.mxu0 0.0
    %1491 = vmatpush1.msra.mxu0 0.0
    %1492 = vmatprep.subr.mxu0 0.0
    %1493 = vmatpush1.msra.mxu0 0.0
    %1494 = vmatprep.subr.mxu0 0.0
    %1495 = vmatpush1.msra.mxu0 0.0
    %1496 = vmatprep.subr.mxu0 0.0
    %1497 = vmatpush1.msra.mxu0 0.0
    %1498 = vmatprep.subr.mxu0 0.0
    %1499 = vmatpush1.msra.mxu0 0.0
    %1500 = vmatprep.subr.mxu0 0.0
    %1501 = vmatpush1.msra.mxu0 0.0
    %1502 = vmatprep.subr.mxu0 0.0
    %1503 = vmatpush1.msra.mxu0 0.0
    %1504 = vmatprep.subr.mxu0 0.0
    %1505 = vmatpush1.msra.mxu0 0.0
    %1506 = vmatprep.subr.mxu0 0.0
    %1507 = vmatpush1.msra.mxu0 0.0
    %1508 = vmatprep.subr.mxu0 0.0
    %1509 = vmatpush1.msra.mxu0 0.0
    %1510 = vmatprep.subr.mxu0 0.0
    %1511 = vmatpush1.msra.mxu0 0.0
    %1512 = vmatprep.subr.mxu0 0.0
    %1513 = vmatpush1.msra.mxu0 0.0
    %1514 = vmatprep.subr.mxu0 0.0
    %1515 = vmatpush1.msra.mxu0 0.0
    %1516 = vmatprep.subr.mxu0 0.0
    %1517 = vmatpush1.msra.mxu0 0.0
    %1518 = vmatprep.subr.mxu0 0.0
    %1519 = vmatpush1.msra.mxu0 0.0
    %1520 = vmatprep.subr.mxu0 0.0
    %1521 = vmatpush1.msra.mxu0 0.0
    %1522 = vmatprep.subr.mxu0 0.0
    %1523 = vmatpush1.msra.mxu0 0.0
    %1524 = vmatprep.subr.mxu0 0.0
    %1525 = vmatpush1.msra.mxu0 0.0
    %1526 = vmatprep.subr.mxu0 0.0
    %1527 = vmatpush1.msra.mxu0 0.0
    %1528 = vmatprep.subr.mxu0 0.0
    %1529 = vmatpush1.msra.mxu0 0.0
    %1530 = vmatprep.subr.mxu0 0.0
    %1531 = vmatpush1.msra.mxu0 0.0
    %1532 = vmatprep.subr.mxu0 0.0
    %1533 = vmatpush1.msra.mxu0 0.0
    %1534 = vmatprep.subr.mxu0 0.0
    %1535 = vmatpush1.msra.mxu0 0.0
    %1536 = vmatprep.mubr.f32.mxu0 0.0
    %1537 = vmatmul.mubr.f32.gmra.mrb[0].mxu0 %v1470
    %v1538 = vpop.f32.mrb[0].mxu0
    %v1539 = vadd.f32 0.0, %v1538
    %v1540 = vpop.f32.mrb[0].mxu0
    %1541 = vdwg.mxu0
    %1543 = vrot.lane.b32.xlu0 %v1539, 24
    %v1544 = vpop.permute.xlu0 %1543
    %1546 = vst.msk [vmem:[#allocation2 + $0x8] sm:$0xff] %vm862, %v1544
    %v1547 = vld [vmem:[#allocation2] sm:$0xff]
    %v1548 = vld [vmem:[#allocation2 + $0x8] sm:$0xff]
    %v1549 = vld [vmem:[%s5] sm:$0xff]
    %v1550 = vld [vmem:[%s5 + $0x8] sm:$0xff]
    %v1551 = vld [vmem:[%s5 + $0x10] sm:$0xff]
    %v1552 = vld [vmem:[%s5 + $0x18] sm:$0xff]
    %v1553 = vld [vmem:[%s6] sm:$0x1]
    %v1555 = vlaneseq
    %v1556 = vshrl.u32 %v1555, 7
    %v1557 = vsub.s32 0, %v1556
    %v1558 = vrot.slane %v1553, %v1557
    %v1561 = vsel %vm95, %v1547, 0
    %v1564 = vsel %vm95, %v1548, 0
    %1566 = vmatprep.subr.mxu0 0.0
    %1567 = vmatpush1.msra.mxu0 %v1549
    %1568 = vmatprep.subr.mxu0 0.0
    %1569 = vmatpush1.msra.mxu0 %v1550
    %1570 = vmatprep.subr.mxu0 0.0
    %1571 = vmatpush1.msra.mxu0 %v1551
    %1572 = vmatprep.subr.mxu0 0.0
    %1573 = vmatpush1.msra.mxu0 %v1552
    %1574 = vmatprep.subr.mxu0 0.0
    %1575 = vmatpush1.msra.mxu0 0.0
    %1576 = vmatprep.subr.mxu0 0.0
    %1577 = vmatpush1.msra.mxu0 0.0
    %1578 = vmatprep.subr.mxu0 0.0
    %1579 = vmatpush1.msra.mxu0 0.0
    %1580 = vmatprep.subr.mxu0 0.0
    %1581 = vmatpush1.msra.mxu0 0.0
    %1582 = vmatprep.subr.mxu0 0.0
    %1583 = vmatpush1.msra.mxu0 0.0
    %1584 = vmatprep.subr.mxu0 0.0
    %1585 = vmatpush1.msra.mxu0 0.0
    %1586 = vmatprep.subr.mxu0 0.0
    %1587 = vmatpush1.msra.mxu0 0.0
    %1588 = vmatprep.subr.mxu0 0.0
    %1589 = vmatpush1.msra.mxu0 0.0
    %1590 = vmatprep.subr.mxu0 0.0
    %1591 = vmatpush1.msra.mxu0 0.0
    %1592 = vmatprep.subr.mxu0 0.0
    %1593 = vmatpush1.msra.mxu0 0.0
    %1594 = vmatprep.subr.mxu0 0.0
    %1595 = vmatpush1.msra.mxu0 0.0
    %1596 = vmatprep.subr.mxu0 0.0
    %1597 = vmatpush1.msra.mxu0 0.0
    %1598 = vmatprep.subr.mxu0 0.0
    %1599 = vmatpush1.msra.mxu0 0.0
    %1600 = vmatprep.subr.mxu0 0.0
    %1601 = vmatpush1.msra.mxu0 0.0
    %1602 = vmatprep.subr.mxu0 0.0
    %1603 = vmatpush1.msra.mxu0 0.0
    %1604 = vmatprep.subr.mxu0 0.0
    %1605 = vmatpush1.msra.mxu0 0.0
    %1606 = vmatprep.subr.mxu0 0.0
    %1607 = vmatpush1.msra.mxu0 0.0
    %1608 = vmatprep.subr.mxu0 0.0
    %1609 = vmatpush1.msra.mxu0 0.0
    %1610 = vmatprep.subr.mxu0 0.0
    %1611 = vmatpush1.msra.mxu0 0.0
    %1612 = vmatprep.subr.mxu0 0.0
    %1613 = vmatpush1.msra.mxu0 0.0
    %1614 = vmatprep.subr.mxu0 0.0
    %1615 = vmatpush1.msra.mxu0 0.0
    %1616 = vmatprep.subr.mxu0 0.0
    %1617 = vmatpush1.msra.mxu0 0.0
    %1618 = vmatprep.subr.mxu0 0.0
    %1619 = vmatpush1.msra.mxu0 0.0
    %1620 = vmatprep.subr.mxu0 0.0
    %1621 = vmatpush1.msra.mxu0 0.0
    %1622 = vmatprep.subr.mxu0 0.0
    %1623 = vmatpush1.msra.mxu0 0.0
    %1624 = vmatprep.subr.mxu0 0.0
    %1625 = vmatpush1.msra.mxu0 0.0
    %1626 = vmatprep.subr.mxu0 0.0
    %1627 = vmatpush1.msra.mxu0 0.0
    %1628 = vmatprep.subr.mxu0 0.0
    %1629 = vmatpush1.msra.mxu0 0.0
    %1630 = vmatprep.mubr.f32.mxu0 0.0
    %1631 = vmatmul.mubr.f32.gmra.mrb[0].mxu0 %v1561
    %v1632 = vpop.f32.mrb[0].mxu0
    %v1633 = vadd.f32 %v1558, %v1632
    %v1634 = vpop.f32.mrb[0].mxu0
    %1635 = vmatprep.mubr.f32.mxu0 0.0
    %1636 = vmatmul.mubr.f32.gmra.mrb[0].mxu0 %v1564
    %v1637 = vpop.f32.mrb[0].mxu0
    %v1638 = vadd.f32 %v1558, %v1637
    %v1639 = vpop.f32.mrb[0].mxu0
    %1640 = vdwg.mxu0
    %v1641 = vadd.f32 %v81, %v1633
    %v1642 = vadd.f32 %v82, %v1638
    %v1643 = vld [vmem:[%s13] sm:$0x1]
    %v1644 = vld [vmem:[%s14] sm:$0x1]
    %v1645 = vsel %vm95, %v1641, 0.0
    %1646 = vadd.xlane.f32.xlu0 %v1645
    %v1647 = vpop.xlane.xlu0 %1646
    %v1648 = vsel %vm95, %v1642, 0.0
    %1649 = vadd.xlane.f32.xlu0 %v1648
    %v1650 = vpop.xlane.xlu0 %1649
    %v1651 = vrcp.pop 32.0
    %v1652 = vmul.f32 %v1647, %v1651
    %v1653 = vmul.f32 %v1650, %v1651
    %v1654 = vsub.f32 %v1641, %v1652
    %v1655 = vsub.f32 %v1642, %v1653
    %v1656 = vmul.f32 %v1654, %v1654
    %v1657 = vmul.f32 %v1655, %v1655
    %v1658 = vsel %vm95, %v1656, 0.0
    %1659 = vadd.xlane.f32.xlu0 %v1658
    %v1660 = vpop.xlane.xlu0 %1659
    %v1661 = vsel %vm95, %v1657, 0.0
    %1662 = vadd.xlane.f32.xlu0 %v1661
    %v1663 = vpop.xlane.xlu0 %1662
    %v1664 = vmul.f32 %v1660, %v1651
    %v1665 = vmul.f32 %v1663, %v1651
    %v1666 = vadd.f32 %v1664, 1e-05
    %v1667 = vadd.f32 %v1665, 1e-05
    %v1668 = vrsqrt.pop %v1666
    %v1669 = vrsqrt.pop %v1667
    %v1670 = vmul.f32 %v1654, %v1668
    %v1671 = vmul.f32 %v1655, %v1669
    %v1673 = vlaneseq
    %v1674 = vshrl.u32 %v1673, 7
    %v1675 = vsub.s32 0, %v1674
    %v1676 = vrot.slane %v1643, %v1675
    %v1678 = vmul.f32 %v1670, %v1676
    %v1679 = vmul.f32 %v1671, %v1676
    %v1681 = vlaneseq
    %v1682 = vshrl.u32 %v1681, 7
    %v1683 = vsub.s32 0, %v1682
    %v1684 = vrot.slane %v1644, %v1683
    %v1686 = vadd.f32 %v1678, %v1684
    %v1687 = vadd.f32 %v1679, %v1684
    %v1688 = vld [vmem:[%s7] sm:$0xff]
    %v1689 = vld [vmem:[%s7 + $0x8] sm:$0xff]
    %v1690 = vld [vmem:[%s7 + $0x10] sm:$0xff]
    %v1691 = vld [vmem:[%s7 + $0x18] sm:$0xff]
    %v1692 = vld [vmem:[%s8] sm:$0x1]
    %v1694 = vlaneseq
    %v1695 = vshrl.u32 %v1694, 7
    %v1696 = vsub.s32 0, %v1695
    %v1697 = vrot.slane %v1692, %v1696
    %v1700 = vsel %vm95, %v1686, 0
    %v1703 = vsel %vm95, %v1687, 0
    %1705 = vmatprep.subr.mxu0 0.0
    %1706 = vmatpush1.msra.mxu0 %v1688
    %1707 = vmatprep.subr.mxu0 0.0
    %1708 = vmatpush1.msra.mxu0 %v1689
    %1709 = vmatprep.subr.mxu0 0.0
    %1710 = vmatpush1.msra.mxu0 %v1690
    %1711 = vmatprep.subr.mxu0 0.0
    %1712 = vmatpush1.msra.mxu0 %v1691
    %1713 = vmatprep.subr.mxu0 0.0
    %1714 = vmatpush1.msra.mxu0 0.0
    %1715 = vmatprep.subr.mxu0 0.0
    %1716 = vmatpush1.msra.mxu0 0.0
    %1717 = vmatprep.subr.mxu0 0.0
    %1718 = vmatpush1.msra.mxu0 0.0
    %1719 = vmatprep.subr.mxu0 0.0
    %1720 = vmatpush1.msra.mxu0 0.0
    %1721 = vmatprep.subr.mxu0 0.0
    %1722 = vmatpush1.msra.mxu0 0.0
    %1723 = vmatprep.subr.mxu0 0.0
    %1724 = vmatpush1.msra.mxu0 0.0
    %1725 = vmatprep.subr.mxu0 0.0
    %1726 = vmatpush1.msra.mxu0 0.0
    %1727 = vmatprep.subr.mxu0 0.0
    %1728 = vmatpush1.msra.mxu0 0.0
    %1729 = vmatprep.subr.mxu0 0.0
    %1730 = vmatpush1.msra.mxu0 0.0
    %1731 = vmatprep.subr.mxu0 0.0
    %1732 = vmatpush1.msra.mxu0 0.0
    %1733 = vmatprep.subr.mxu0 0.0
    %1734 = vmatpush1.msra.mxu0 0.0
    %1735 = vmatprep.subr.mxu0 0.0
    %1736 = vmatpush1.msra.mxu0 0.0
    %1737 = vmatprep.subr.mxu0 0.0
    %1738 = vmatpush1.msra.mxu0 0.0
    %1739 = vmatprep.subr.mxu0 0.0
    %1740 = vmatpush1.msra.mxu0 0.0
    %1741 = vmatprep.subr.mxu0 0.0
    %1742 = vmatpush1.msra.mxu0 0.0
    %1743 = vmatprep.subr.mxu0 0.0
    %1744 = vmatpush1.msra.mxu0 0.0
    %1745 = vmatprep.subr.mxu0 0.0
    %1746 = vmatpush1.msra.mxu0 0.0
    %1747 = vmatprep.subr.mxu0 0.0
    %1748 = vmatpush1.msra.mxu0 0.0
    %1749 = vmatprep.subr.mxu0 0.0
    %1750 = vmatpush1.msra.mxu0 0.0
    %1751 = vmatprep.subr.mxu0 0.0
    %1752 = vmatpush1.msra.mxu0 0.0
    %1753 = vmatprep.subr.mxu0 0.0
    %1754 = vmatpush1.msra.mxu0 0.0
    %1755 = vmatprep.subr.mxu0 0.0
    %1756 = vmatpush1.msra.mxu0 0.0
    %1757 = vmatprep.subr.mxu0 0.0
    %1758 = vmatpush1.msra.mxu0 0.0
    %1759 = vmatprep.subr.mxu0 0.0
    %1760 = vmatpush1.msra.mxu0 0.0
    %1761 = vmatprep.subr.mxu0 0.0
    %1762 = vmatpush1.msra.mxu0 0.0
    %1763 = vmatprep.subr.mxu0 0.0
    %1764 = vmatpush1.msra.mxu0 0.0
    %1765 = vmatprep.subr.mxu0 0.0
    %1766 = vmatpush1.msra.mxu0 0.0
    %1767 = vmatprep.subr.mxu0 0.0
    %1768 = vmatpush1.msra.mxu0 0.0
    %1769 = vmatprep.mubr.f32.mxu0 0.0
    %1770 = vmatmul.mubr.f32.gmra.mrb[0].mxu0 %v1700
    %v1771 = vpop.f32.mrb[0].mxu0
    %v1772 = vadd.f32 %v1697, %v1771
    %v1773 = vpop.f32.mrb[0].mxu0
    %1774 = vmatprep.mubr.f32.mxu0 0.0
    %1775 = vmatmul.mubr.f32.gmra.mrb[0].mxu0 %v1703
    %v1776 = vpop.f32.mrb[0].mxu0
    %v1777 = vadd.f32 %v1697, %v1776
    %v1778 = vpop.f32.mrb[0].mxu0
    %1779 = vdwg.mxu0
    %v1780 = vld [vmem:[%s1] sm:$0xf]
    %v1781 = vld [vmem:[%s9] sm:$0xff]
    %v1782 = vld [vmem:[%s9 + $0x8] sm:$0xff]
    %v1783 = vld [vmem:[%s9 + $0x10] sm:$0xff]
    %v1784 = vld [vmem:[%s9 + $0x18] sm:$0xff]
    %v1785 = vld [vmem:[%s10] sm:$0x1]
    %v1787 = vlaneseq
    %v1788 = vshrl.u32 %v1787, 7
    %v1789 = vsub.s32 0, %v1788
    %v1790 = vrot.slane %v1785, %v1789
    %v1793 = vsel %vm95, %v1780, 0
    %1795 = vmatprep.subr.mxu0 0.0
    %1796 = vmatpush1.msra.mxu0 %v1781
    %1797 = vmatprep.subr.mxu0 0.0
    %1798 = vmatpush1.msra.mxu0 %v1782
    %1799 = vmatprep.subr.mxu0 0.0
    %1800 = vmatpush1.msra.mxu0 %v1783
    %1801 = vmatprep.subr.mxu0 0.0
    %1802 = vmatpush1.msra.mxu0 %v1784
    %1803 = vmatprep.subr.mxu0 0.0
    %1804 = vmatpush1.msra.mxu0 0.0
    %1805 = vmatprep.subr.mxu0 0.0
    %1806 = vmatpush1.msra.mxu0 0.0
    %1807 = vmatprep.subr.mxu0 0.0
    %1808 = vmatpush1.msra.mxu0 0.0
    %1809 = vmatprep.subr.mxu0 0.0
    %1810 = vmatpush1.msra.mxu0 0.0
    %1811 = vmatprep.subr.mxu0 0.0
    %1812 = vmatpush1.msra.mxu0 0.0
    %1813 = vmatprep.subr.mxu0 0.0
    %1814 = vmatpush1.msra.mxu0 0.0
    %1815 = vmatprep.subr.mxu0 0.0
    %1816 = vmatpush1.msra.mxu0 0.0
    %1817 = vmatprep.subr.mxu0 0.0
    %1818 = vmatpush1.msra.mxu0 0.0
    %1819 = vmatprep.subr.mxu0 0.0
    %1820 = vmatpush1.msra.mxu0 0.0
    %1821 = vmatprep.subr.mxu0 0.0
    %1822 = vmatpush1.msra.mxu0 0.0
    %1823 = vmatprep.subr.mxu0 0.0
    %1824 = vmatpush1.msra.mxu0 0.0
    %1825 = vmatprep.subr.mxu0 0.0
    %1826 = vmatpush1.msra.mxu0 0.0
    %1827 = vmatprep.subr.mxu0 0.0
    %1828 = vmatpush1.msra.mxu0 0.0
    %1829 = vmatprep.subr.mxu0 0.0
    %1830 = vmatpush1.msra.mxu0 0.0
    %1831 = vmatprep.subr.mxu0 0.0
    %1832 = vmatpush1.msra.mxu0 0.0
    %1833 = vmatprep.subr.mxu0 0.0
    %1834 = vmatpush1.msra.mxu0 0.0
    %1835 = vmatprep.subr.mxu0 0.0
    %1836 = vmatpush1.msra.mxu0 0.0
    %1837 = vmatprep.subr.mxu0 0.0
    %1838 = vmatpush1.msra.mxu0 0.0
    %1839 = vmatprep.subr.mxu0 0.0
    %1840 = vmatpush1.msra.mxu0 0.0
    %1841 = vmatprep.subr.mxu0 0.0
    %1842 = vmatpush1.msra.mxu0 0.0
    %1843 = vmatprep.subr.mxu0 0.0
    %1844 = vmatpush1.msra.mxu0 0.0
    %1845 = vmatprep.subr.mxu0 0.0
    %1846 = vmatpush1.msra.mxu0 0.0
    %1847 = vmatprep.subr.mxu0 0.0
    %1848 = vmatpush1.msra.mxu0 0.0
    %1849 = vmatprep.subr.mxu0 0.0
    %1850 = vmatpush1.msra.mxu0 0.0
    %1851 = vmatprep.subr.mxu0 0.0
    %1852 = vmatpush1.msra.mxu0 0.0
    %1853 = vmatprep.subr.mxu0 0.0
    %1854 = vmatpush1.msra.mxu0 0.0
    %1855 = vmatprep.subr.mxu0 0.0
    %1856 = vmatpush1.msra.mxu0 0.0
    %1857 = vmatprep.subr.mxu0 0.0
    %1858 = vmatpush1.msra.mxu0 0.0
    %1859 = vmatprep.mubr.f32.mxu0 0.0
    %1860 = vmatmul.mubr.f32.gmra.mrb[0].mxu0 %v1793
    %v1861 = vpop.f32.mrb[0].mxu0
    %v1862 = vadd.f32 %v1790, %v1861
    %v1863 = vpop.f32.mrb[0].mxu0
    %1864 = vdwg.mxu0
    %v1866 = vsel %vm180, %v1772, 0
    %v1869 = vsel %vm180, %v1862, 0
    %1871 = vmatprep.subr.mxu0 0.0
    %1872 = vmatpush1.xpose.msra.mxu0 %v1869
    %1873 = vmatprep.subr.mxu0 0.0
    %1874 = vmatpush1.xpose.msra.mxu0 0.0
    %1875 = vmatprep.subr.mxu0 0.0
    %1876 = vmatpush1.xpose.msra.mxu0 0.0
    %1877 = vmatprep.subr.mxu0 0.0
    %1878 = vmatpush1.xpose.msra.mxu0 0.0
    %1879 = vmatprep.subr.mxu0 0.0
    %1880 = vmatpush1.xpose.msra.mxu0 0.0
    %1881 = vmatprep.subr.mxu0 0.0
    %1882 = vmatpush1.xpose.msra.mxu0 0.0
    %1883 = vmatprep.subr.mxu0 0.0
    %1884 = vmatpush1.xpose.msra.mxu0 0.0
    %1885 = vmatprep.subr.mxu0 0.0
    %1886 = vmatpush1.xpose.msra.mxu0 0.0
    %1887 = vmatprep.subr.mxu0 0.0
    %1888 = vmatpush1.xpose.msra.mxu0 0.0
    %1889 = vmatprep.subr.mxu0 0.0
    %1890 = vmatpush1.xpose.msra.mxu0 0.0
    %1891 = vmatprep.subr.mxu0 0.0
    %1892 = vmatpush1.xpose.msra.mxu0 0.0
    %1893 = vmatprep.subr.mxu0 0.0
    %1894 = vmatpush1.xpose.msra.mxu0 0.0
    %1895 = vmatprep.subr.mxu0 0.0
    %1896 = vmatpush1.xpose.msra.mxu0 0.0
    %1897 = vmatprep.subr.mxu0 0.0
    %1898 = vmatpush1.xpose.msra.mxu0 0.0
    %1899 = vmatprep.subr.mxu0 0.0
    %1900 = vmatpush1.xpose.msra.mxu0 0.0
    %1901 = vmatprep.subr.mxu0 0.0
    %1902 = vmatpush1.xpose.msra.mxu0 0.0
    %1903 = vmatprep.subr.mxu0 0.0
    %1904 = vmatpush1.xpose.msra.mxu0 0.0
    %1905 = vmatprep.subr.mxu0 0.0
    %1906 = vmatpush1.xpose.msra.mxu0 0.0
    %1907 = vmatprep.subr.mxu0 0.0
    %1908 = vmatpush1.xpose.msra.mxu0 0.0
    %1909 = vmatprep.subr.mxu0 0.0
    %1910 = vmatpush1.xpose.msra.mxu0 0.0
    %1911 = vmatprep.subr.mxu0 0.0
    %1912 = vmatpush1.xpose.msra.mxu0 0.0
    %1913 = vmatprep.subr.mxu0 0.0
    %1914 = vmatpush1.xpose.msra.mxu0 0.0
    %1915 = vmatprep.subr.mxu0 0.0
    %1916 = vmatpush1.xpose.msra.mxu0 0.0
    %1917 = vmatprep.subr.mxu0 0.0
    %1918 = vmatpush1.xpose.msra.mxu0 0.0
    %1919 = vmatprep.subr.mxu0 0.0
    %1920 = vmatpush1.xpose.msra.mxu0 0.0
    %1921 = vmatprep.subr.mxu0 0.0
    %1922 = vmatpush1.xpose.msra.mxu0 0.0
    %1923 = vmatprep.subr.mxu0 0.0
    %1924 = vmatpush1.xpose.msra.mxu0 0.0
    %1925 = vmatprep.subr.mxu0 0.0
    %1926 = vmatpush1.xpose.msra.mxu0 0.0
    %1927 = vmatprep.subr.mxu0 0.0
    %1928 = vmatpush1.xpose.msra.mxu0 0.0
    %1929 = vmatprep.subr.mxu0 0.0
    %1930 = vmatpush1.xpose.msra.mxu0 0.0
    %1931 = vmatprep.subr.mxu0 0.0
    %1932 = vmatpush1.xpose.msra.mxu0 0.0
    %1933 = vmatprep.subr.mxu0 0.0
    %1934 = vmatpush1.xpose.msra.mxu0 0.0
    %1935 = vmatprep.mubr.f32.mxu0 0.0
    %1936 = vmatmul.mubr.f32.gmra.mrb[0].mxu0 %v1866
    %v1937 = vpop.f32.mrb[0].mxu0
    %v1938 = vadd.f32 0.0, %v1937
    %v1939 = vpop.f32.mrb[0].mxu0
    %1940 = vdwg.mxu0
    %v1941 = vmul.f32 %v1938, 0.35355338
    %vm1942 = vcmask 31744
    %v1943 = vsel %vm1942, %v1941, -inf
    %1944 = vmax.xlane.f32.xlu0 %v1943
    %v1945 = vpop.xlane.xlu0 %1944
    %v1946 = vsub.f32 %v1941, %v1945
    %v1947 = vmul.f32 %v1946, 1.442695
    %v1948 = vpow.pop %v1947
    %v1949 = vsel %vm1942, %v1948, 0.0
    %1950 = vadd.xlane.f32.xlu0 %v1949
    %v1951 = vpop.xlane.xlu0 %1950
    %v1952 = vrcp.pop %v1951
    %v1953 = vmul.f32 %v1948, %v1952
    %1954 = vrot.lane.b32.xlu0 %v1862, 96
    %v1955 = vpop.permute.xlu0 %1954
    %v1957 = vsel %vm1942, %v1953, 0
    %vm1959 = vcmask 1043456
    %v1960 = vsel %vm1959, %v1955, 0
    %1962 = vmatprep.subr.mxu0 0.0
    %1963 = vmatpush1.msra.mxu0 %v1960
    %1964 = vmatprep.subr.mxu0 0.0
    %1965 = vmatpush1.msra.mxu0 0.0
    %1966 = vmatprep.subr.mxu0 0.0
    %1967 = vmatpush1.msra.mxu0 0.0
    %1968 = vmatprep.subr.mxu0 0.0
    %1969 = vmatpush1.msra.mxu0 0.0
    %1970 = vmatprep.subr.mxu0 0.0
    %1971 = vmatpush1.msra.mxu0 0.0
    %1972 = vmatprep.subr.mxu0 0.0
    %1973 = vmatpush1.msra.mxu0 0.0
    %1974 = vmatprep.subr.mxu0 0.0
    %1975 = vmatpush1.msra.mxu0 0.0
    %1976 = vmatprep.subr.mxu0 0.0
    %1977 = vmatpush1.msra.mxu0 0.0
    %1978 = vmatprep.subr.mxu0 0.0
    %1979 = vmatpush1.msra.mxu0 0.0
    %1980 = vmatprep.subr.mxu0 0.0
    %1981 = vmatpush1.msra.mxu0 0.0
    %1982 = vmatprep.subr.mxu0 0.0
    %1983 = vmatpush1.msra.mxu0 0.0
    %1984 = vmatprep.subr.mxu0 0.0
    %1985 = vmatpush1.msra.mxu0 0.0
    %1986 = vmatprep.subr.mxu0 0.0
    %1987 = vmatpush1.msra.mxu0 0.0
    %1988 = vmatprep.subr.mxu0 0.0
    %1989 = vmatpush1.msra.mxu0 0.0
    %1990 = vmatprep.subr.mxu0 0.0
    %1991 = vmatpush1.msra.mxu0 0.0
    %1992 = vmatprep.subr.mxu0 0.0
    %1993 = vmatpush1.msra.mxu0 0.0
    %1994 = vmatprep.subr.mxu0 0.0
    %1995 = vmatpush1.msra.mxu0 0.0
    %1996 = vmatprep.subr.mxu0 0.0
    %1997 = vmatpush1.msra.mxu0 0.0
    %1998 = vmatprep.subr.mxu0 0.0
    %1999 = vmatpush1.msra.mxu0 0.0
    %2000 = vmatprep.subr.mxu0 0.0
    %2001 = vmatpush1.msra.mxu0 0.0
    %2002 = vmatprep.subr.mxu0 0.0
    %2003 = vmatpush1.msra.mxu0 0.0
    %2004 = vmatprep.subr.mxu0 0.0
    %2005 = vmatpush1.msra.mxu0 0.0
    %2006 = vmatprep.subr.mxu0 0.0
    %2007 = vmatpush1.msra.mxu0 0.0
    %2008 = vmatprep.subr.mxu0 0.0
    %2009 = vmatpush1.msra.mxu0 0.0
    %2010 = vmatprep.subr.mxu0 0.0
    %2011 = vmatpush1.msra.mxu0 0.0
    %2012 = vmatprep.subr.mxu0 0.0
    %2013 = vmatpush1.msra.mxu0 0.0
    %2014 = vmatprep.subr.mxu0 0.0
    %2015 = vmatpush1.msra.mxu0 0.0
    %2016 = vmatprep.subr.mxu0 0.0
    %2017 = vmatpush1.msra.mxu0 0.0
    %2018 = vmatprep.subr.mxu0 0.0
    %2019 = vmatpush1.msra.mxu0 0.0
    %2020 = vmatprep.subr.mxu0 0.0
    %2021 = vmatpush1.msra.mxu0 0.0
    %2022 = vmatprep.subr.mxu0 0.0
    %2023 = vmatpush1.msra.mxu0 0.0
    %2024 = vmatprep.subr.mxu0 0.0
    %2025 = vmatpush1.msra.mxu0 0.0
    %2026 = vmatprep.mubr.f32.mxu0 0.0
    %2027 = vmatmul.mubr.f32.gmra.mrb[0].mxu0 %v1957
    %v2028 = vpop.f32.mrb[0].mxu0
    %v2029 = vadd.f32 0.0, %v2028
    %v2030 = vpop.f32.mrb[0].mxu0
    %2031 = vdwg.mxu0
    %2032 = vst.msk [vmem:[#allocation2] sm:$0xff] %vm180, %v2029
    %2033 = vrot.lane.b32.xlu0 %v1772, 120
    %v2034 = vpop.permute.xlu0 %2033
    %2035 = vrot.lane.b32.xlu0 %v1862, 120
    %v2036 = vpop.permute.xlu0 %2035
    %v2037 = vsel %vm180, %v2034, 0
    %v2039 = vsel %vm180, %v2036, 0
    %2041 = vmatprep.subr.mxu0 0.0
    %2042 = vmatpush1.xpose.msra.mxu0 %v2039
    %2043 = vmatprep.subr.mxu0 0.0
    %2044 = vmatpush1.xpose.msra.mxu0 0.0
    %2045 = vmatprep.subr.mxu0 0.0
    %2046 = vmatpush1.xpose.msra.mxu0 0.0
    %2047 = vmatprep.subr.mxu0 0.0
    %2048 = vmatpush1.xpose.msra.mxu0 0.0
    %2049 = vmatprep.subr.mxu0 0.0
    %2050 = vmatpush1.xpose.msra.mxu0 0.0
    %2051 = vmatprep.subr.mxu0 0.0
    %2052 = vmatpush1.xpose.msra.mxu0 0.0
    %2053 = vmatprep.subr.mxu0 0.0
    %2054 = vmatpush1.xpose.msra.mxu0 0.0
    %2055 = vmatprep.subr.mxu0 0.0
    %2056 = vmatpush1.xpose.msra.mxu0 0.0
    %2057 = vmatprep.subr.mxu0 0.0
    %2058 = vmatpush1.xpose.msra.mxu0 0.0
    %2059 = vmatprep.subr.mxu0 0.0
    %2060 = vmatpush1.xpose.msra.mxu0 0.0
    %2061 = vmatprep.subr.mxu0 0.0
    %2062 = vmatpush1.xpose.msra.mxu0 0.0
    %2063 = vmatprep.subr.mxu0 0.0
    %2064 = vmatpush1.xpose.msra.mxu0 0.0
    %2065 = vmatprep.subr.mxu0 0.0
    %2066 = vmatpush1.xpose.msra.mxu0 0.0
    %2067 = vmatprep.subr.mxu0 0.0
    %2068 = vmatpush1.xpose.msra.mxu0 0.0
    %2069 = vmatprep.subr.mxu0 0.0
    %2070 = vmatpush1.xpose.msra.mxu0 0.0
    %2071 = vmatprep.subr.mxu0 0.0
    %2072 = vmatpush1.xpose.msra.mxu0 0.0
    %2073 = vmatprep.subr.mxu0 0.0
    %2074 = vmatpush1.xpose.msra.mxu0 0.0
    %2075 = vmatprep.subr.mxu0 0.0
    %2076 = vmatpush1.xpose.msra.mxu0 0.0
    %2077 = vmatprep.subr.mxu0 0.0
    %2078 = vmatpush1.xpose.msra.mxu0 0.0
    %2079 = vmatprep.subr.mxu0 0.0
    %2080 = vmatpush1.xpose.msra.mxu0 0.0
    %2081 = vmatprep.subr.mxu0 0.0
    %2082 = vmatpush1.xpose.msra.mxu0 0.0
    %2083 = vmatprep.subr.mxu0 0.0
    %2084 = vmatpush1.xpose.msra.mxu0 0.0
    %2085 = vmatprep.subr.mxu0 0.0
    %2086 = vmatpush1.xpose.msra.mxu0 0.0
    %2087 = vmatprep.subr.mxu0 0.0
    %2088 = vmatpush1.xpose.msra.mxu0 0.0
    %2089 = vmatprep.subr.mxu0 0.0
    %2090 = vmatpush1.xpose.msra.mxu0 0.0
    %2091 = vmatprep.subr.mxu0 0.0
    %2092 = vmatpush1.xpose.msra.mxu0 0.0
    %2093 = vmatprep.subr.mxu0 0.0
    %2094 = vmatpush1.xpose.msra.mxu0 0.0
    %2095 = vmatprep.subr.mxu0 0.0
    %2096 = vmatpush1.xpose.msra.mxu0 0.0
    %2097 = vmatprep.subr.mxu0 0.0
    %2098 = vmatpush1.xpose.msra.mxu0 0.0
    %2099 = vmatprep.subr.mxu0 0.0
    %2100 = vmatpush1.xpose.msra.mxu0 0.0
    %2101 = vmatprep.subr.mxu0 0.0
    %2102 = vmatpush1.xpose.msra.mxu0 0.0
    %2103 = vmatprep.subr.mxu0 0.0
    %2104 = vmatpush1.xpose.msra.mxu0 0.0
    %2105 = vmatprep.mubr.f32.mxu0 0.0
    %2106 = vmatmul.mubr.f32.gmra.mrb[0].mxu0 %v2037
    %v2107 = vpop.f32.mrb[0].mxu0
    %v2108 = vadd.f32 0.0, %v2107
    %v2109 = vpop.f32.mrb[0].mxu0
    %2110 = vdwg.mxu0
    %v2111 = vmul.f32 %v2108, 0.35355338
    %v2112 = vsel %vm1942, %v2111, -inf
    %2113 = vmax.xlane.f32.xlu0 %v2112
    %v2114 = vpop.xlane.xlu0 %2113
    %v2115 = vsub.f32 %v2111, %v2114
    %v2116 = vmul.f32 %v2115, 1.442695
    %v2117 = vpow.pop %v2116
    %v2118 = vsel %vm1942, %v2117, 0.0
    %2119 = vadd.xlane.f32.xlu0 %v2118
    %v2120 = vpop.xlane.xlu0 %2119
    %v2121 = vrcp.pop %v2120
    %v2122 = vmul.f32 %v2117, %v2121
    %2123 = vrot.lane.b32.xlu0 %v1862, 88
    %v2124 = vpop.permute.xlu0 %2123
    %v2126 = vsel %vm1942, %v2122, 0
    %v2128 = vsel %vm1959, %v2124, 0
    %2130 = vmatprep.subr.mxu0 0.0
    %2131 = vmatpush1.msra.mxu0 %v2128
    %2132 = vmatprep.subr.mxu0 0.0
    %2133 = vmatpush1.msra.mxu0 0.0
    %2134 = vmatprep.subr.mxu0 0.0
    %2135 = vmatpush1.msra.mxu0 0.0
    %2136 = vmatprep.subr.mxu0 0.0
    %2137 = vmatpush1.msra.mxu0 0.0
    %2138 = vmatprep.subr.mxu0 0.0
    %2139 = vmatpush1.msra.mxu0 0.0
    %2140 = vmatprep.subr.mxu0 0.0
    %2141 = vmatpush1.msra.mxu0 0.0
    %2142 = vmatprep.subr.mxu0 0.0
    %2143 = vmatpush1.msra.mxu0 0.0
    %2144 = vmatprep.subr.mxu0 0.0
    %2145 = vmatpush1.msra.mxu0 0.0
    %2146 = vmatprep.subr.mxu0 0.0
    %2147 = vmatpush1.msra.mxu0 0.0
    %2148 = vmatprep.subr.mxu0 0.0
    %2149 = vmatpush1.msra.mxu0 0.0
    %2150 = vmatprep.subr.mxu0 0.0
    %2151 = vmatpush1.msra.mxu0 0.0
    %2152 = vmatprep.subr.mxu0 0.0
    %2153 = vmatpush1.msra.mxu0 0.0
    %2154 = vmatprep.subr.mxu0 0.0
    %2155 = vmatpush1.msra.mxu0 0.0
    %2156 = vmatprep.subr.mxu0 0.0
    %2157 = vmatpush1.msra.mxu0 0.0
    %2158 = vmatprep.subr.mxu0 0.0
    %2159 = vmatpush1.msra.mxu0 0.0
    %2160 = vmatprep.subr.mxu0 0.0
    %2161 = vmatpush1.msra.mxu0 0.0
    %2162 = vmatprep.subr.mxu0 0.0
    %2163 = vmatpush1.msra.mxu0 0.0
    %2164 = vmatprep.subr.mxu0 0.0
    %2165 = vmatpush1.msra.mxu0 0.0
    %2166 = vmatprep.subr.mxu0 0.0
    %2167 = vmatpush1.msra.mxu0 0.0
    %2168 = vmatprep.subr.mxu0 0.0
    %2169 = vmatpush1.msra.mxu0 0.0
    %2170 = vmatprep.subr.mxu0 0.0
    %2171 = vmatpush1.msra.mxu0 0.0
    %2172 = vmatprep.subr.mxu0 0.0
    %2173 = vmatpush1.msra.mxu0 0.0
    %2174 = vmatprep.subr.mxu0 0.0
    %2175 = vmatpush1.msra.mxu0 0.0
    %2176 = vmatprep.subr.mxu0 0.0
    %2177 = vmatpush1.msra.mxu0 0.0
    %2178 = vmatprep.subr.mxu0 0.0
    %2179 = vmatpush1.msra.mxu0 0.0
    %2180 = vmatprep.subr.mxu0 0.0
    %2181 = vmatpush1.msra.mxu0 0.0
    %2182 = vmatprep.subr.mxu0 0.0
    %2183 = vmatpush1.msra.mxu0 0.0
    %2184 = vmatprep.subr.mxu0 0.0
    %2185 = vmatpush1.msra.mxu0 0.0
    %2186 = vmatprep.subr.mxu0 0.0
    %2187 = vmatpush1.msra.mxu0 0.0
    %2188 = vmatprep.subr.mxu0 0.0
    %2189 = vmatpush1.msra.mxu0 0.0
    %2190 = vmatprep.subr.mxu0 0.0
    %2191 = vmatpush1.msra.mxu0 0.0
    %2192 = vmatprep.subr.mxu0 0.0
    %2193 = vmatpush1.msra.mxu0 0.0
    %2194 = vmatprep.mubr.f32.mxu0 0.0
    %2195 = vmatmul.mubr.f32.gmra.mrb[0].mxu0 %v2126
    %v2196 = vpop.f32.mrb[0].mxu0
    %v2197 = vadd.f32 0.0, %v2196
    %v2198 = vpop.f32.mrb[0].mxu0
    %2199 = vdwg.mxu0
    %2201 = vrot.lane.b32.xlu0 %v2197, 8
    %v2202 = vpop.permute.xlu0 %2201
    %2204 = vst.msk [vmem:[#allocation2] sm:$0xff] %vm516, %v2202
    %2205 = vrot.lane.b32.xlu0 %v1772, 112
    %v2206 = vpop.permute.xlu0 %2205
    %2207 = vrot.lane.b32.xlu0 %v1862, 112
    %v2208 = vpop.permute.xlu0 %2207
    %v2209 = vsel %vm180, %v2206, 0
    %v2211 = vsel %vm180, %v2208, 0
    %2213 = vmatprep.subr.mxu0 0.0
    %2214 = vmatpush1.xpose.msra.mxu0 %v2211
    %2215 = vmatprep.subr.mxu0 0.0
    %2216 = vmatpush1.xpose.msra.mxu0 0.0
    %2217 = vmatprep.subr.mxu0 0.0
    %2218 = vmatpush1.xpose.msra.mxu0 0.0
    %2219 = vmatprep.subr.mxu0 0.0
    %2220 = vmatpush1.xpose.msra.mxu0 0.0
    %2221 = vmatprep.subr.mxu0 0.0
    %2222 = vmatpush1.xpose.msra.mxu0 0.0
    %2223 = vmatprep.subr.mxu0 0.0
    %2224 = vmatpush1.xpose.msra.mxu0 0.0
    %2225 = vmatprep.subr.mxu0 0.0
    %2226 = vmatpush1.xpose.msra.mxu0 0.0
    %2227 = vmatprep.subr.mxu0 0.0
    %2228 = vmatpush1.xpose.msra.mxu0 0.0
    %2229 = vmatprep.subr.mxu0 0.0
    %2230 = vmatpush1.xpose.msra.mxu0 0.0
    %2231 = vmatprep.subr.mxu0 0.0
    %2232 = vmatpush1.xpose.msra.mxu0 0.0
    %2233 = vmatprep.subr.mxu0 0.0
    %2234 = vmatpush1.xpose.msra.mxu0 0.0
    %2235 = vmatprep.subr.mxu0 0.0
    %2236 = vmatpush1.xpose.msra.mxu0 0.0
    %2237 = vmatprep.subr.mxu0 0.0
    %2238 = vmatpush1.xpose.msra.mxu0 0.0
    %2239 = vmatprep.subr.mxu0 0.0
    %2240 = vmatpush1.xpose.msra.mxu0 0.0
    %2241 = vmatprep.subr.mxu0 0.0
    %2242 = vmatpush1.xpose.msra.mxu0 0.0
    %2243 = vmatprep.subr.mxu0 0.0
    %2244 = vmatpush1.xpose.msra.mxu0 0.0
    %2245 = vmatprep.subr.mxu0 0.0
    %2246 = vmatpush1.xpose.msra.mxu0 0.0
    %2247 = vmatprep.subr.mxu0 0.0
    %2248 = vmatpush1.xpose.msra.mxu0 0.0
    %2249 = vmatprep.subr.mxu0 0.0
    %2250 = vmatpush1.xpose.msra.mxu0 0.0
    %2251 = vmatprep.subr.mxu0 0.0
    %2252 = vmatpush1.xpose.msra.mxu0 0.0
    %2253 = vmatprep.subr.mxu0 0.0
    %2254 = vmatpush1.xpose.msra.mxu0 0.0
    %2255 = vmatprep.subr.mxu0 0.0
    %2256 = vmatpush1.xpose.msra.mxu0 0.0
    %2257 = vmatprep.subr.mxu0 0.0
    %2258 = vmatpush1.xpose.msra.mxu0 0.0
    %2259 = vmatprep.subr.mxu0 0.0
    %2260 = vmatpush1.xpose.msra.mxu0 0.0
    %2261 = vmatprep.subr.mxu0 0.0
    %2262 = vmatpush1.xpose.msra.mxu0 0.0
    %2263 = vmatprep.subr.mxu0 0.0
    %2264 = vmatpush1.xpose.msra.mxu0 0.0
    %2265 = vmatprep.subr.mxu0 0.0
    %2266 = vmatpush1.xpose.msra.mxu0 0.0
    %2267 = vmatprep.subr.mxu0 0.0
    %2268 = vmatpush1.xpose.msra.mxu0 0.0
    %2269 = vmatprep.subr.mxu0 0.0
    %2270 = vmatpush1.xpose.msra.mxu0 0.0
    %2271 = vmatprep.subr.mxu0 0.0
    %2272 = vmatpush1.xpose.msra.mxu0 0.0
    %2273 = vmatprep.subr.mxu0 0.0
    %2274 = vmatpush1.xpose.msra.mxu0 0.0
    %2275 = vmatprep.subr.mxu0 0.0
    %2276 = vmatpush1.xpose.msra.mxu0 0.0
    %2277 = vmatprep.mubr.f32.mxu0 0.0
    %2278 = vmatmul.mubr.f32.gmra.mrb[0].mxu0 %v2209
    %v2279 = vpop.f32.mrb[0].mxu0
    %v2280 = vadd.f32 0.0, %v2279
    %v2281 = vpop.f32.mrb[0].mxu0
    %2282 = vdwg.mxu0
    %v2283 = vmul.f32 %v2280, 0.35355338
    %v2284 = vsel %vm1942, %v2283, -inf
    %2285 = vmax.xlane.f32.xlu0 %v2284
    %v2286 = vpop.xlane.xlu0 %2285
    %v2287 = vsub.f32 %v2283, %v2286
    %v2288 = vmul.f32 %v2287, 1.442695
    %v2289 = vpow.pop %v2288
    %v2290 = vsel %vm1942, %v2289, 0.0
    %2291 = vadd.xlane.f32.xlu0 %v2290
    %v2292 = vpop.xlane.xlu0 %2291
    %v2293 = vrcp.pop %v2292
    %v2294 = vmul.f32 %v2289, %v2293
    %2295 = vrot.lane.b32.xlu0 %v1862, 80
    %v2296 = vpop.permute.xlu0 %2295
    %v2298 = vsel %vm1942, %v2294, 0
    %v2300 = vsel %vm1959, %v2296, 0
    %2302 = vmatprep.subr.mxu0 0.0
    %2303 = vmatpush1.msra.mxu0 %v2300
    %2304 = vmatprep.subr.mxu0 0.0
    %2305 = vmatpush1.msra.mxu0 0.0
    %2306 = vmatprep.subr.mxu0 0.0
    %2307 = vmatpush1.msra.mxu0 0.0
    %2308 = vmatprep.subr.mxu0 0.0
    %2309 = vmatpush1.msra.mxu0 0.0
    %2310 = vmatprep.subr.mxu0 0.0
    %2311 = vmatpush1.msra.mxu0 0.0
    %2312 = vmatprep.subr.mxu0 0.0
    %2313 = vmatpush1.msra.mxu0 0.0
    %2314 = vmatprep.subr.mxu0 0.0
    %2315 = vmatpush1.msra.mxu0 0.0
    %2316 = vmatprep.subr.mxu0 0.0
    %2317 = vmatpush1.msra.mxu0 0.0
    %2318 = vmatprep.subr.mxu0 0.0
    %2319 = vmatpush1.msra.mxu0 0.0
    %2320 = vmatprep.subr.mxu0 0.0
    %2321 = vmatpush1.msra.mxu0 0.0
    %2322 = vmatprep.subr.mxu0 0.0
    %2323 = vmatpush1.msra.mxu0 0.0
    %2324 = vmatprep.subr.mxu0 0.0
    %2325 = vmatpush1.msra.mxu0 0.0
    %2326 = vmatprep.subr.mxu0 0.0
    %2327 = vmatpush1.msra.mxu0 0.0
    %2328 = vmatprep.subr.mxu0 0.0
    %2329 = vmatpush1.msra.mxu0 0.0
    %2330 = vmatprep.subr.mxu0 0.0
    %2331 = vmatpush1.msra.mxu0 0.0
    %2332 = vmatprep.subr.mxu0 0.0
    %2333 = vmatpush1.msra.mxu0 0.0
    %2334 = vmatprep.subr.mxu0 0.0
    %2335 = vmatpush1.msra.mxu0 0.0
    %2336 = vmatprep.subr.mxu0 0.0
    %2337 = vmatpush1.msra.mxu0 0.0
    %2338 = vmatprep.subr.mxu0 0.0
    %2339 = vmatpush1.msra.mxu0 0.0
    %2340 = vmatprep.subr.mxu0 0.0
    %2341 = vmatpush1.msra.mxu0 0.0
    %2342 = vmatprep.subr.mxu0 0.0
    %2343 = vmatpush1.msra.mxu0 0.0
    %2344 = vmatprep.subr.mxu0 0.0
    %2345 = vmatpush1.msra.mxu0 0.0
    %2346 = vmatprep.subr.mxu0 0.0
    %2347 = vmatpush1.msra.mxu0 0.0
    %2348 = vmatprep.subr.mxu0 0.0
    %2349 = vmatpush1.msra.mxu0 0.0
    %2350 = vmatprep.subr.mxu0 0.0
    %2351 = vmatpush1.msra.mxu0 0.0
    %2352 = vmatprep.subr.mxu0 0.0
    %2353 = vmatpush1.msra.mxu0 0.0
    %2354 = vmatprep.subr.mxu0 0.0
    %2355 = vmatpush1.msra.mxu0 0.0
    %2356 = vmatprep.subr.mxu0 0.0
    %2357 = vmatpush1.msra.mxu0 0.0
    %2358 = vmatprep.subr.mxu0 0.0
    %2359 = vmatpush1.msra.mxu0 0.0
    %2360 = vmatprep.subr.mxu0 0.0
    %2361 = vmatpush1.msra.mxu0 0.0
    %2362 = vmatprep.subr.mxu0 0.0
    %2363 = vmatpush1.msra.mxu0 0.0
    %2364 = vmatprep.subr.mxu0 0.0
    %2365 = vmatpush1.msra.mxu0 0.0
    %2366 = vmatprep.mubr.f32.mxu0 0.0
    %2367 = vmatmul.mubr.f32.gmra.mrb[0].mxu0 %v2298
    %v2368 = vpop.f32.mrb[0].mxu0
    %v2369 = vadd.f32 0.0, %v2368
    %v2370 = vpop.f32.mrb[0].mxu0
    %2371 = vdwg.mxu0
    %2373 = vrot.lane.b32.xlu0 %v2369, 16
    %v2374 = vpop.permute.xlu0 %2373
    %2376 = vst.msk [vmem:[#allocation2] sm:$0xff] %vm689, %v2374
    %2377 = vrot.lane.b32.xlu0 %v1772, 104
    %v2378 = vpop.permute.xlu0 %2377
    %2379 = vrot.lane.b32.xlu0 %v1862, 104
    %v2380 = vpop.permute.xlu0 %2379
    %v2381 = vsel %vm180, %v2378, 0
    %v2383 = vsel %vm180, %v2380, 0
    %2385 = vmatprep.subr.mxu0 0.0
    %2386 = vmatpush1.xpose.msra.mxu0 %v2383
    %2387 = vmatprep.subr.mxu0 0.0
    %2388 = vmatpush1.xpose.msra.mxu0 0.0
    %2389 = vmatprep.subr.mxu0 0.0
    %2390 = vmatpush1.xpose.msra.mxu0 0.0
    %2391 = vmatprep.subr.mxu0 0.0
    %2392 = vmatpush1.xpose.msra.mxu0 0.0
    %2393 = vmatprep.subr.mxu0 0.0
    %2394 = vmatpush1.xpose.msra.mxu0 0.0
    %2395 = vmatprep.subr.mxu0 0.0
    %2396 = vmatpush1.xpose.msra.mxu0 0.0
    %2397 = vmatprep.subr.mxu0 0.0
    %2398 = vmatpush1.xpose.msra.mxu0 0.0
    %2399 = vmatprep.subr.mxu0 0.0
    %2400 = vmatpush1.xpose.msra.mxu0 0.0
    %2401 = vmatprep.subr.mxu0 0.0
    %2402 = vmatpush1.xpose.msra.mxu0 0.0
    %2403 = vmatprep.subr.mxu0 0.0
    %2404 = vmatpush1.xpose.msra.mxu0 0.0
    %2405 = vmatprep.subr.mxu0 0.0
    %2406 = vmatpush1.xpose.msra.mxu0 0.0
    %2407 = vmatprep.subr.mxu0 0.0
    %2408 = vmatpush1.xpose.msra.mxu0 0.0
    %2409 = vmatprep.subr.mxu0 0.0
    %2410 = vmatpush1.xpose.msra.mxu0 0.0
    %2411 = vmatprep.subr.mxu0 0.0
    %2412 = vmatpush1.xpose.msra.mxu0 0.0
    %2413 = vmatprep.subr.mxu0 0.0
    %2414 = vmatpush1.xpose.msra.mxu0 0.0
    %2415 = vmatprep.subr.mxu0 0.0
    %2416 = vmatpush1.xpose.msra.mxu0 0.0
    %2417 = vmatprep.subr.mxu0 0.0
    %2418 = vmatpush1.xpose.msra.mxu0 0.0
    %2419 = vmatprep.subr.mxu0 0.0
    %2420 = vmatpush1.xpose.msra.mxu0 0.0
    %2421 = vmatprep.subr.mxu0 0.0
    %2422 = vmatpush1.xpose.msra.mxu0 0.0
    %2423 = vmatprep.subr.mxu0 0.0
    %2424 = vmatpush1.xpose.msra.mxu0 0.0
    %2425 = vmatprep.subr.mxu0 0.0
    %2426 = vmatpush1.xpose.msra.mxu0 0.0
    %2427 = vmatprep.subr.mxu0 0.0
    %2428 = vmatpush1.xpose.msra.mxu0 0.0
    %2429 = vmatprep.subr.mxu0 0.0
    %2430 = vmatpush1.xpose.msra.mxu0 0.0
    %2431 = vmatprep.subr.mxu0 0.0
    %2432 = vmatpush1.xpose.msra.mxu0 0.0
    %2433 = vmatprep.subr.mxu0 0.0
    %2434 = vmatpush1.xpose.msra.mxu0 0.0
    %2435 = vmatprep.subr.mxu0 0.0
    %2436 = vmatpush1.xpose.msra.mxu0 0.0
    %2437 = vmatprep.subr.mxu0 0.0
    %2438 = vmatpush1.xpose.msra.mxu0 0.0
    %2439 = vmatprep.subr.mxu0 0.0
    %2440 = vmatpush1.xpose.msra.mxu0 0.0
    %2441 = vmatprep.subr.mxu0 0.0
    %2442 = vmatpush1.xpose.msra.mxu0 0.0
    %2443 = vmatprep.subr.mxu0 0.0
    %2444 = vmatpush1.xpose.msra.mxu0 0.0
    %2445 = vmatprep.subr.mxu0 0.0
    %2446 = vmatpush1.xpose.msra.mxu0 0.0
    %2447 = vmatprep.subr.mxu0 0.0
    %2448 = vmatpush1.xpose.msra.mxu0 0.0
    %2449 = vmatprep.mubr.f32.mxu0 0.0
    %2450 = vmatmul.mubr.f32.gmra.mrb[0].mxu0 %v2381
    %v2451 = vpop.f32.mrb[0].mxu0
    %v2452 = vadd.f32 0.0, %v2451
    %v2453 = vpop.f32.mrb[0].mxu0
    %2454 = vdwg.mxu0
    %v2455 = vmul.f32 %v2452, 0.35355338
    %v2456 = vsel %vm1942, %v2455, -inf
    %2457 = vmax.xlane.f32.xlu0 %v2456
    %v2458 = vpop.xlane.xlu0 %2457
    %v2459 = vsub.f32 %v2455, %v2458
    %v2460 = vmul.f32 %v2459, 1.442695
    %v2461 = vpow.pop %v2460
    %v2462 = vsel %vm1942, %v2461, 0.0
    %2463 = vadd.xlane.f32.xlu0 %v2462
    %v2464 = vpop.xlane.xlu0 %2463
    %v2465 = vrcp.pop %v2464
    %v2466 = vmul.f32 %v2461, %v2465
    %2467 = vrot.lane.b32.xlu0 %v1862, 72
    %v2468 = vpop.permute.xlu0 %2467
    %v2470 = vsel %vm1942, %v2466, 0
    %v2472 = vsel %vm1959, %v2468, 0
    %2474 = vmatprep.subr.mxu0 0.0
    %2475 = vmatpush1.msra.mxu0 %v2472
    %2476 = vmatprep.subr.mxu0 0.0
    %2477 = vmatpush1.msra.mxu0 0.0
    %2478 = vmatprep.subr.mxu0 0.0
    %2479 = vmatpush1.msra.mxu0 0.0
    %2480 = vmatprep.subr.mxu0 0.0
    %2481 = vmatpush1.msra.mxu0 0.0
    %2482 = vmatprep.subr.mxu0 0.0
    %2483 = vmatpush1.msra.mxu0 0.0
    %2484 = vmatprep.subr.mxu0 0.0
    %2485 = vmatpush1.msra.mxu0 0.0
    %2486 = vmatprep.subr.mxu0 0.0
    %2487 = vmatpush1.msra.mxu0 0.0
    %2488 = vmatprep.subr.mxu0 0.0
    %2489 = vmatpush1.msra.mxu0 0.0
    %2490 = vmatprep.subr.mxu0 0.0
    %2491 = vmatpush1.msra.mxu0 0.0
    %2492 = vmatprep.subr.mxu0 0.0
    %2493 = vmatpush1.msra.mxu0 0.0
    %2494 = vmatprep.subr.mxu0 0.0
    %2495 = vmatpush1.msra.mxu0 0.0
    %2496 = vmatprep.subr.mxu0 0.0
    %2497 = vmatpush1.msra.mxu0 0.0
    %2498 = vmatprep.subr.mxu0 0.0
    %2499 = vmatpush1.msra.mxu0 0.0
    %2500 = vmatprep.subr.mxu0 0.0
    %2501 = vmatpush1.msra.mxu0 0.0
    %2502 = vmatprep.subr.mxu0 0.0
    %2503 = vmatpush1.msra.mxu0 0.0
    %2504 = vmatprep.subr.mxu0 0.0
    %2505 = vmatpush1.msra.mxu0 0.0
    %2506 = vmatprep.subr.mxu0 0.0
    %2507 = vmatpush1.msra.mxu0 0.0
    %2508 = vmatprep.subr.mxu0 0.0
    %2509 = vmatpush1.msra.mxu0 0.0
    %2510 = vmatprep.subr.mxu0 0.0
    %2511 = vmatpush1.msra.mxu0 0.0
    %2512 = vmatprep.subr.mxu0 0.0
    %2513 = vmatpush1.msra.mxu0 0.0
    %2514 = vmatprep.subr.mxu0 0.0
    %2515 = vmatpush1.msra.mxu0 0.0
    %2516 = vmatprep.subr.mxu0 0.0
    %2517 = vmatpush1.msra.mxu0 0.0
    %2518 = vmatprep.subr.mxu0 0.0
    %2519 = vmatpush1.msra.mxu0 0.0
    %2520 = vmatprep.subr.mxu0 0.0
    %2521 = vmatpush1.msra.mxu0 0.0
    %2522 = vmatprep.subr.mxu0 0.0
    %2523 = vmatpush1.msra.mxu0 0.0
    %2524 = vmatprep.subr.mxu0 0.0
    %2525 = vmatpush1.msra.mxu0 0.0
    %2526 = vmatprep.subr.mxu0 0.0
    %2527 = vmatpush1.msra.mxu0 0.0
    %2528 = vmatprep.subr.mxu0 0.0
    %2529 = vmatpush1.msra.mxu0 0.0
    %2530 = vmatprep.subr.mxu0 0.0
    %2531 = vmatpush1.msra.mxu0 0.0
    %2532 = vmatprep.subr.mxu0 0.0
    %2533 = vmatpush1.msra.mxu0 0.0
    %2534 = vmatprep.subr.mxu0 0.0
    %2535 = vmatpush1.msra.mxu0 0.0
    %2536 = vmatprep.subr.mxu0 0.0
    %2537 = vmatpush1.msra.mxu0 0.0
    %2538 = vmatprep.mubr.f32.mxu0 0.0
    %2539 = vmatmul.mubr.f32.gmra.mrb[0].mxu0 %v2470
    %v2540 = vpop.f32.mrb[0].mxu0
    %v2541 = vadd.f32 0.0, %v2540
    %v2542 = vpop.f32.mrb[0].mxu0
    %2543 = vdwg.mxu0
    %2545 = vrot.lane.b32.xlu0 %v2541, 24
    %v2546 = vpop.permute.xlu0 %2545
    %2548 = vst.msk [vmem:[#allocation2] sm:$0xff] %vm862, %v2546
    %s2549 = scalar_lea.vmem %s1, 4
    %v2550 = vld [vmem:[%s2549] sm:$0xf]
    %v2551 = vld [vmem:[%s9] sm:$0xff]
    %v2552 = vld [vmem:[%s9 + $0x8] sm:$0xff]
    %v2553 = vld [vmem:[%s9 + $0x10] sm:$0xff]
    %v2554 = vld [vmem:[%s9 + $0x18] sm:$0xff]
    %v2555 = vld [vmem:[%s10] sm:$0x1]
    %v2557 = vlaneseq
    %v2558 = vshrl.u32 %v2557, 7
    %v2559 = vsub.s32 0, %v2558
    %v2560 = vrot.slane %v2555, %v2559
    %v2563 = vsel %vm95, %v2550, 0
    %2565 = vmatprep.subr.mxu0 0.0
    %2566 = vmatpush1.msra.mxu0 %v2551
    %2567 = vmatprep.subr.mxu0 0.0
    %2568 = vmatpush1.msra.mxu0 %v2552
    %2569 = vmatprep.subr.mxu0 0.0
    %2570 = vmatpush1.msra.mxu0 %v2553
    %2571 = vmatprep.subr.mxu0 0.0
    %2572 = vmatpush1.msra.mxu0 %v2554
    %2573 = vmatprep.subr.mxu0 0.0
    %2574 = vmatpush1.msra.mxu0 0.0
    %2575 = vmatprep.subr.mxu0 0.0
    %2576 = vmatpush1.msra.mxu0 0.0
    %2577 = vmatprep.subr.mxu0 0.0
    %2578 = vmatpush1.msra.mxu0 0.0
    %2579 = vmatprep.subr.mxu0 0.0
    %2580 = vmatpush1.msra.mxu0 0.0
    %2581 = vmatprep.subr.mxu0 0.0
    %2582 = vmatpush1.msra.mxu0 0.0
    %2583 = vmatprep.subr.mxu0 0.0
    %2584 = vmatpush1.msra.mxu0 0.0
    %2585 = vmatprep.subr.mxu0 0.0
    %2586 = vmatpush1.msra.mxu0 0.0
    %2587 = vmatprep.subr.mxu0 0.0
    %2588 = vmatpush1.msra.mxu0 0.0
    %2589 = vmatprep.subr.mxu0 0.0
    %2590 = vmatpush1.msra.mxu0 0.0
    %2591 = vmatprep.subr.mxu0 0.0
    %2592 = vmatpush1.msra.mxu0 0.0
    %2593 = vmatprep.subr.mxu0 0.0
    %2594 = vmatpush1.msra.mxu0 0.0
    %2595 = vmatprep.subr.mxu0 0.0
    %2596 = vmatpush1.msra.mxu0 0.0
    %2597 = vmatprep.subr.mxu0 0.0
    %2598 = vmatpush1.msra.mxu0 0.0
    %2599 = vmatprep.subr.mxu0 0.0
    %2600 = vmatpush1.msra.mxu0 0.0
    %2601 = vmatprep.subr.mxu0 0.0
    %2602 = vmatpush1.msra.mxu0 0.0
    %2603 = vmatprep.subr.mxu0 0.0
    %2604 = vmatpush1.msra.mxu0 0.0
    %2605 = vmatprep.subr.mxu0 0.0
    %2606 = vmatpush1.msra.mxu0 0.0
    %2607 = vmatprep.subr.mxu0 0.0
    %2608 = vmatpush1.msra.mxu0 0.0
    %2609 = vmatprep.subr.mxu0 0.0
    %2610 = vmatpush1.msra.mxu0 0.0
    %2611 = vmatprep.subr.mxu0 0.0
    %2612 = vmatpush1.msra.mxu0 0.0
    %2613 = vmatprep.subr.mxu0 0.0
    %2614 = vmatpush1.msra.mxu0 0.0
    %2615 = vmatprep.subr.mxu0 0.0
    %2616 = vmatpush1.msra.mxu0 0.0
    %2617 = vmatprep.subr.mxu0 0.0
    %2618 = vmatpush1.msra.mxu0 0.0
    %2619 = vmatprep.subr.mxu0 0.0
    %2620 = vmatpush1.msra.mxu0 0.0
    %2621 = vmatprep.subr.mxu0 0.0
    %2622 = vmatpush1.msra.mxu0 0.0
    %2623 = vmatprep.subr.mxu0 0.0
    %2624 = vmatpush1.msra.mxu0 0.0
    %2625 = vmatprep.subr.mxu0 0.0
    %2626 = vmatpush1.msra.mxu0 0.0
    %2627 = vmatprep.subr.mxu0 0.0
    %2628 = vmatpush1.msra.mxu0 0.0
    %2629 = vmatprep.mubr.f32.mxu0 0.0
    %2630 = vmatmul.mubr.f32.gmra.mrb[0].mxu0 %v2563
    %v2631 = vpop.f32.mrb[0].mxu0
    %v2632 = vadd.f32 %v2560, %v2631
    %v2633 = vpop.f32.mrb[0].mxu0
    %2634 = vdwg.mxu0
    %v2636 = vsel %vm180, %v1777, 0
    %v2639 = vsel %vm180, %v2632, 0
    %2641 = vmatprep.subr.mxu0 0.0
    %2642 = vmatpush1.xpose.msra.mxu0 %v2639
    %2643 = vmatprep.subr.mxu0 0.0
    %2644 = vmatpush1.xpose.msra.mxu0 0.0
    %2645 = vmatprep.subr.mxu0 0.0
    %2646 = vmatpush1.xpose.msra.mxu0 0.0
    %2647 = vmatprep.subr.mxu0 0.0
    %2648 = vmatpush1.xpose.msra.mxu0 0.0
    %2649 = vmatprep.subr.mxu0 0.0
    %2650 = vmatpush1.xpose.msra.mxu0 0.0
    %2651 = vmatprep.subr.mxu0 0.0
    %2652 = vmatpush1.xpose.msra.mxu0 0.0
    %2653 = vmatprep.subr.mxu0 0.0
    %2654 = vmatpush1.xpose.msra.mxu0 0.0
    %2655 = vmatprep.subr.mxu0 0.0
    %2656 = vmatpush1.xpose.msra.mxu0 0.0
    %2657 = vmatprep.subr.mxu0 0.0
    %2658 = vmatpush1.xpose.msra.mxu0 0.0
    %2659 = vmatprep.subr.mxu0 0.0
    %2660 = vmatpush1.xpose.msra.mxu0 0.0
    %2661 = vmatprep.subr.mxu0 0.0
    %2662 = vmatpush1.xpose.msra.mxu0 0.0
    %2663 = vmatprep.subr.mxu0 0.0
    %2664 = vmatpush1.xpose.msra.mxu0 0.0
    %2665 = vmatprep.subr.mxu0 0.0
    %2666 = vmatpush1.xpose.msra.mxu0 0.0
    %2667 = vmatprep.subr.mxu0 0.0
    %2668 = vmatpush1.xpose.msra.mxu0 0.0
    %2669 = vmatprep.subr.mxu0 0.0
    %2670 = vmatpush1.xpose.msra.mxu0 0.0
    %2671 = vmatprep.subr.mxu0 0.0
    %2672 = vmatpush1.xpose.msra.mxu0 0.0
    %2673 = vmatprep.subr.mxu0 0.0
    %2674 = vmatpush1.xpose.msra.mxu0 0.0
    %2675 = vmatprep.subr.mxu0 0.0
    %2676 = vmatpush1.xpose.msra.mxu0 0.0
    %2677 = vmatprep.subr.mxu0 0.0
    %2678 = vmatpush1.xpose.msra.mxu0 0.0
    %2679 = vmatprep.subr.mxu0 0.0
    %2680 = vmatpush1.xpose.msra.mxu0 0.0
    %2681 = vmatprep.subr.mxu0 0.0
    %2682 = vmatpush1.xpose.msra.mxu0 0.0
    %2683 = vmatprep.subr.mxu0 0.0
    %2684 = vmatpush1.xpose.msra.mxu0 0.0
    %2685 = vmatprep.subr.mxu0 0.0
    %2686 = vmatpush1.xpose.msra.mxu0 0.0
    %2687 = vmatprep.subr.mxu0 0.0
    %2688 = vmatpush1.xpose.msra.mxu0 0.0
    %2689 = vmatprep.subr.mxu0 0.0
    %2690 = vmatpush1.xpose.msra.mxu0 0.0
    %2691 = vmatprep.subr.mxu0 0.0
    %2692 = vmatpush1.xpose.msra.mxu0 0.0
    %2693 = vmatprep.subr.mxu0 0.0
    %2694 = vmatpush1.xpose.msra.mxu0 0.0
    %2695 = vmatprep.subr.mxu0 0.0
    %2696 = vmatpush1.xpose.msra.mxu0 0.0
    %2697 = vmatprep.subr.mxu0 0.0
    %2698 = vmatpush1.xpose.msra.mxu0 0.0
    %2699 = vmatprep.subr.mxu0 0.0
    %2700 = vmatpush1.xpose.msra.mxu0 0.0
    %2701 = vmatprep.subr.mxu0 0.0
    %2702 = vmatpush1.xpose.msra.mxu0 0.0
    %2703 = vmatprep.subr.mxu0 0.0
    %2704 = vmatpush1.xpose.msra.mxu0 0.0
    %2705 = vmatprep.mubr.f32.mxu0 0.0
    %2706 = vmatmul.mubr.f32.gmra.mrb[0].mxu0 %v2636
    %v2707 = vpop.f32.mrb[0].mxu0
    %v2708 = vadd.f32 0.0, %v2707
    %v2709 = vpop.f32.mrb[0].mxu0
    %2710 = vdwg.mxu0
    %v2711 = vmul.f32 %v2708, 0.35355338
    %v2712 = vsel %vm1942, %v2711, -inf
    %2713 = vmax.xlane.f32.xlu0 %v2712
    %v2714 = vpop.xlane.xlu0 %2713
    %v2715 = vsub.f32 %v2711, %v2714
    %v2716 = vmul.f32 %v2715, 1.442695
    %v2717 = vpow.pop %v2716
    %v2718 = vsel %vm1942, %v2717, 0.0
    %2719 = vadd.xlane.f32.xlu0 %v2718
    %v2720 = vpop.xlane.xlu0 %2719
    %v2721 = vrcp.pop %v2720
    %v2722 = vmul.f32 %v2717, %v2721
    %2723 = vrot.lane.b32.xlu0 %v2632, 96
    %v2724 = vpop.permute.xlu0 %2723
    %v2726 = vsel %vm1942, %v2722, 0
    %v2728 = vsel %vm1959, %v2724, 0
    %2730 = vmatprep.subr.mxu0 0.0
    %2731 = vmatpush1.msra.mxu0 %v2728
    %2732 = vmatprep.subr.mxu0 0.0
    %2733 = vmatpush1.msra.mxu0 0.0
    %2734 = vmatprep.subr.mxu0 0.0
    %2735 = vmatpush1.msra.mxu0 0.0
    %2736 = vmatprep.subr.mxu0 0.0
    %2737 = vmatpush1.msra.mxu0 0.0
    %2738 = vmatprep.subr.mxu0 0.0
    %2739 = vmatpush1.msra.mxu0 0.0
    %2740 = vmatprep.subr.mxu0 0.0
    %2741 = vmatpush1.msra.mxu0 0.0
    %2742 = vmatprep.subr.mxu0 0.0
    %2743 = vmatpush1.msra.mxu0 0.0
    %2744 = vmatprep.subr.mxu0 0.0
    %2745 = vmatpush1.msra.mxu0 0.0
    %2746 = vmatprep.subr.mxu0 0.0
    %2747 = vmatpush1.msra.mxu0 0.0
    %2748 = vmatprep.subr.mxu0 0.0
    %2749 = vmatpush1.msra.mxu0 0.0
    %2750 = vmatprep.subr.mxu0 0.0
    %2751 = vmatpush1.msra.mxu0 0.0
    %2752 = vmatprep.subr.mxu0 0.0
    %2753 = vmatpush1.msra.mxu0 0.0
    %2754 = vmatprep.subr.mxu0 0.0
    %2755 = vmatpush1.msra.mxu0 0.0
    %2756 = vmatprep.subr.mxu0 0.0
    %2757 = vmatpush1.msra.mxu0 0.0
    %2758 = vmatprep.subr.mxu0 0.0
    %2759 = vmatpush1.msra.mxu0 0.0
    %2760 = vmatprep.subr.mxu0 0.0
    %2761 = vmatpush1.msra.mxu0 0.0
    %2762 = vmatprep.subr.mxu0 0.0
    %2763 = vmatpush1.msra.mxu0 0.0
    %2764 = vmatprep.subr.mxu0 0.0
    %2765 = vmatpush1.msra.mxu0 0.0
    %2766 = vmatprep.subr.mxu0 0.0
    %2767 = vmatpush1.msra.mxu0 0.0
    %2768 = vmatprep.subr.mxu0 0.0
    %2769 = vmatpush1.msra.mxu0 0.0
    %2770 = vmatprep.subr.mxu0 0.0
    %2771 = vmatpush1.msra.mxu0 0.0
    %2772 = vmatprep.subr.mxu0 0.0
    %2773 = vmatpush1.msra.mxu0 0.0
    %2774 = vmatprep.subr.mxu0 0.0
    %2775 = vmatpush1.msra.mxu0 0.0
    %2776 = vmatprep.subr.mxu0 0.0
    %2777 = vmatpush1.msra.mxu0 0.0
    %2778 = vmatprep.subr.mxu0 0.0
    %2779 = vmatpush1.msra.mxu0 0.0
    %2780 = vmatprep.subr.mxu0 0.0
    %2781 = vmatpush1.msra.mxu0 0.0
    %2782 = vmatprep.subr.mxu0 0.0
    %2783 = vmatpush1.msra.mxu0 0.0
    %2784 = vmatprep.subr.mxu0 0.0
    %2785 = vmatpush1.msra.mxu0 0.0
    %2786 = vmatprep.subr.mxu0 0.0
    %2787 = vmatpush1.msra.mxu0 0.0
    %2788 = vmatprep.subr.mxu0 0.0
    %2789 = vmatpush1.msra.mxu0 0.0
    %2790 = vmatprep.subr.mxu0 0.0
    %2791 = vmatpush1.msra.mxu0 0.0
    %2792 = vmatprep.subr.mxu0 0.0
    %2793 = vmatpush1.msra.mxu0 0.0
    %2794 = vmatprep.mubr.f32.mxu0 0.0
    %2795 = vmatmul.mubr.f32.gmra.mrb[0].mxu0 %v2726
    %v2796 = vpop.f32.mrb[0].mxu0
    %v2797 = vadd.f32 0.0, %v2796
    %v2798 = vpop.f32.mrb[0].mxu0
    %2799 = vdwg.mxu0
    %2800 = vst.msk [vmem:[#allocation2 + $0x8] sm:$0xff] %vm180, %v2797
    %2801 = vrot.lane.b32.xlu0 %v1777, 120
    %v2802 = vpop.permute.xlu0 %2801
    %2803 = vrot.lane.b32.xlu0 %v2632, 120
    %v2804 = vpop.permute.xlu0 %2803
    %v2805 = vsel %vm180, %v2802, 0
    %v2807 = vsel %vm180, %v2804, 0
    %2809 = vmatprep.subr.mxu0 0.0
    %2810 = vmatpush1.xpose.msra.mxu0 %v2807
    %2811 = vmatprep.subr.mxu0 0.0
    %2812 = vmatpush1.xpose.msra.mxu0 0.0
    %2813 = vmatprep.subr.mxu0 0.0
    %2814 = vmatpush1.xpose.msra.mxu0 0.0
    %2815 = vmatprep.subr.mxu0 0.0
    %2816 = vmatpush1.xpose.msra.mxu0 0.0
    %2817 = vmatprep.subr.mxu0 0.0
    %2818 = vmatpush1.xpose.msra.mxu0 0.0
    %2819 = vmatprep.subr.mxu0 0.0
    %2820 = vmatpush1.xpose.msra.mxu0 0.0
    %2821 = vmatprep.subr.mxu0 0.0
    %2822 = vmatpush1.xpose.msra.mxu0 0.0
    %2823 = vmatprep.subr.mxu0 0.0
    %2824 = vmatpush1.xpose.msra.mxu0 0.0
    %2825 = vmatprep.subr.mxu0 0.0
    %2826 = vmatpush1.xpose.msra.mxu0 0.0
    %2827 = vmatprep.subr.mxu0 0.0
    %2828 = vmatpush1.xpose.msra.mxu0 0.0
    %2829 = vmatprep.subr.mxu0 0.0
    %2830 = vmatpush1.xpose.msra.mxu0 0.0
    %2831 = vmatprep.subr.mxu0 0.0
    %2832 = vmatpush1.xpose.msra.mxu0 0.0
    %2833 = vmatprep.subr.mxu0 0.0
    %2834 = vmatpush1.xpose.msra.mxu0 0.0
    %2835 = vmatprep.subr.mxu0 0.0
    %2836 = vmatpush1.xpose.msra.mxu0 0.0
    %2837 = vmatprep.subr.mxu0 0.0
    %2838 = vmatpush1.xpose.msra.mxu0 0.0
    %2839 = vmatprep.subr.mxu0 0.0
    %2840 = vmatpush1.xpose.msra.mxu0 0.0
    %2841 = vmatprep.subr.mxu0 0.0
    %2842 = vmatpush1.xpose.msra.mxu0 0.0
    %2843 = vmatprep.subr.mxu0 0.0
    %2844 = vmatpush1.xpose.msra.mxu0 0.0
    %2845 = vmatprep.subr.mxu0 0.0
    %2846 = vmatpush1.xpose.msra.mxu0 0.0
    %2847 = vmatprep.subr.mxu0 0.0
    %2848 = vmatpush1.xpose.msra.mxu0 0.0
    %2849 = vmatprep.subr.mxu0 0.0
    %2850 = vmatpush1.xpose.msra.mxu0 0.0
    %2851 = vmatprep.subr.mxu0 0.0
    %2852 = vmatpush1.xpose.msra.mxu0 0.0
    %2853 = vmatprep.subr.mxu0 0.0
    %2854 = vmatpush1.xpose.msra.mxu0 0.0
    %2855 = vmatprep.subr.mxu0 0.0
    %2856 = vmatpush1.xpose.msra.mxu0 0.0
    %2857 = vmatprep.subr.mxu0 0.0
    %2858 = vmatpush1.xpose.msra.mxu0 0.0
    %2859 = vmatprep.subr.mxu0 0.0
    %2860 = vmatpush1.xpose.msra.mxu0 0.0
    %2861 = vmatprep.subr.mxu0 0.0
    %2862 = vmatpush1.xpose.msra.mxu0 0.0
    %2863 = vmatprep.subr.mxu0 0.0
    %2864 = vmatpush1.xpose.msra.mxu0 0.0
    %2865 = vmatprep.subr.mxu0 0.0
    %2866 = vmatpush1.xpose.msra.mxu0 0.0
    %2867 = vmatprep.subr.mxu0 0.0
    %2868 = vmatpush1.xpose.msra.mxu0 0.0
    %2869 = vmatprep.subr.mxu0 0.0
    %2870 = vmatpush1.xpose.msra.mxu0 0.0
    %2871 = vmatprep.subr.mxu0 0.0
    %2872 = vmatpush1.xpose.msra.mxu0 0.0
    %2873 = vmatprep.mubr.f32.mxu0 0.0
    %2874 = vmatmul.mubr.f32.gmra.mrb[0].mxu0 %v2805
    %v2875 = vpop.f32.mrb[0].mxu0
    %v2876 = vadd.f32 0.0, %v2875
    %v2877 = vpop.f32.mrb[0].mxu0
    %2878 = vdwg.mxu0
    %v2879 = vmul.f32 %v2876, 0.35355338
    %v2880 = vsel %vm1942, %v2879, -inf
    %2881 = vmax.xlane.f32.xlu0 %v2880
    %v2882 = vpop.xlane.xlu0 %2881
    %v2883 = vsub.f32 %v2879, %v2882
    %v2884 = vmul.f32 %v2883, 1.442695
    %v2885 = vpow.pop %v2884
    %v2886 = vsel %vm1942, %v2885, 0.0
    %2887 = vadd.xlane.f32.xlu0 %v2886
    %v2888 = vpop.xlane.xlu0 %2887
    %v2889 = vrcp.pop %v2888
    %v2890 = vmul.f32 %v2885, %v2889
    %2891 = vrot.lane.b32.xlu0 %v2632, 88
    %v2892 = vpop.permute.xlu0 %2891
    %v2894 = vsel %vm1942, %v2890, 0
    %v2896 = vsel %vm1959, %v2892, 0
    %2898 = vmatprep.subr.mxu0 0.0
    %2899 = vmatpush1.msra.mxu0 %v2896
    %2900 = vmatprep.subr.mxu0 0.0
    %2901 = vmatpush1.msra.mxu0 0.0
    %2902 = vmatprep.subr.mxu0 0.0
    %2903 = vmatpush1.msra.mxu0 0.0
    %2904 = vmatprep.subr.mxu0 0.0
    %2905 = vmatpush1.msra.mxu0 0.0
    %2906 = vmatprep.subr.mxu0 0.0
    %2907 = vmatpush1.msra.mxu0 0.0
    %2908 = vmatprep.subr.mxu0 0.0
    %2909 = vmatpush1.msra.mxu0 0.0
    %2910 = vmatprep.subr.mxu0 0.0
    %2911 = vmatpush1.msra.mxu0 0.0
    %2912 = vmatprep.subr.mxu0 0.0
    %2913 = vmatpush1.msra.mxu0 0.0
    %2914 = vmatprep.subr.mxu0 0.0
    %2915 = vmatpush1.msra.mxu0 0.0
    %2916 = vmatprep.subr.mxu0 0.0
    %2917 = vmatpush1.msra.mxu0 0.0
    %2918 = vmatprep.subr.mxu0 0.0
    %2919 = vmatpush1.msra.mxu0 0.0
    %2920 = vmatprep.subr.mxu0 0.0
    %2921 = vmatpush1.msra.mxu0 0.0
    %2922 = vmatprep.subr.mxu0 0.0
    %2923 = vmatpush1.msra.mxu0 0.0
    %2924 = vmatprep.subr.mxu0 0.0
    %2925 = vmatpush1.msra.mxu0 0.0
    %2926 = vmatprep.subr.mxu0 0.0
    %2927 = vmatpush1.msra.mxu0 0.0
    %2928 = vmatprep.subr.mxu0 0.0
    %2929 = vmatpush1.msra.mxu0 0.0
    %2930 = vmatprep.subr.mxu0 0.0
    %2931 = vmatpush1.msra.mxu0 0.0
    %2932 = vmatprep.subr.mxu0 0.0
    %2933 = vmatpush1.msra.mxu0 0.0
    %2934 = vmatprep.subr.mxu0 0.0
    %2935 = vmatpush1.msra.mxu0 0.0
    %2936 = vmatprep.subr.mxu0 0.0
    %2937 = vmatpush1.msra.mxu0 0.0
    %2938 = vmatprep.subr.mxu0 0.0
    %2939 = vmatpush1.msra.mxu0 0.0
    %2940 = vmatprep.subr.mxu0 0.0
    %2941 = vmatpush1.msra.mxu0 0.0
    %2942 = vmatprep.subr.mxu0 0.0
    %2943 = vmatpush1.msra.mxu0 0.0
    %2944 = vmatprep.subr.mxu0 0.0
    %2945 = vmatpush1.msra.mxu0 0.0
    %2946 = vmatprep.subr.mxu0 0.0
    %2947 = vmatpush1.msra.mxu0 0.0
    %2948 = vmatprep.subr.mxu0 0.0
    %2949 = vmatpush1.msra.mxu0 0.0
    %2950 = vmatprep.subr.mxu0 0.0
    %2951 = vmatpush1.msra.mxu0 0.0
    %2952 = vmatprep.subr.mxu0 0.0
    %2953 = vmatpush1.msra.mxu0 0.0
    %2954 = vmatprep.subr.mxu0 0.0
    %2955 = vmatpush1.msra.mxu0 0.0
    %2956 = vmatprep.subr.mxu0 0.0
    %2957 = vmatpush1.msra.mxu0 0.0
    %2958 = vmatprep.subr.mxu0 0.0
    %2959 = vmatpush1.msra.mxu0 0.0
    %2960 = vmatprep.subr.mxu0 0.0
    %2961 = vmatpush1.msra.mxu0 0.0
    %2962 = vmatprep.mubr.f32.mxu0 0.0
    %2963 = vmatmul.mubr.f32.gmra.mrb[0].mxu0 %v2894
    %v2964 = vpop.f32.mrb[0].mxu0
    %v2965 = vadd.f32 0.0, %v2964
    %v2966 = vpop.f32.mrb[0].mxu0
    %2967 = vdwg.mxu0
    %2969 = vrot.lane.b32.xlu0 %v2965, 8
    %v2970 = vpop.permute.xlu0 %2969
    %2972 = vst.msk [vmem:[#allocation2 + $0x8] sm:$0xff] %vm516, %v2970
    %2973 = vrot.lane.b32.xlu0 %v1777, 112
    %v2974 = vpop.permute.xlu0 %2973
    %2975 = vrot.lane.b32.xlu0 %v2632, 112
    %v2976 = vpop.permute.xlu0 %2975
    %v2977 = vsel %vm180, %v2974, 0
    %v2979 = vsel %vm180, %v2976, 0
    %2981 = vmatprep.subr.mxu0 0.0
    %2982 = vmatpush1.xpose.msra.mxu0 %v2979
    %2983 = vmatprep.subr.mxu0 0.0
    %2984 = vmatpush1.xpose.msra.mxu0 0.0
    %2985 = vmatprep.subr.mxu0 0.0
    %2986 = vmatpush1.xpose.msra.mxu0 0.0
    %2987 = vmatprep.subr.mxu0 0.0
    %2988 = vmatpush1.xpose.msra.mxu0 0.0
    %2989 = vmatprep.subr.mxu0 0.0
    %2990 = vmatpush1.xpose.msra.mxu0 0.0
    %2991 = vmatprep.subr.mxu0 0.0
    %2992 = vmatpush1.xpose.msra.mxu0 0.0
    %2993 = vmatprep.subr.mxu0 0.0
    %2994 = vmatpush1.xpose.msra.mxu0 0.0
    %2995 = vmatprep.subr.mxu0 0.0
    %2996 = vmatpush1.xpose.msra.mxu0 0.0
    %2997 = vmatprep.subr.mxu0 0.0
    %2998 = vmatpush1.xpose.msra.mxu0 0.0
    %2999 = vmatprep.subr.mxu0 0.0
    %3000 = vmatpush1.xpose.msra.mxu0 0.0
    %3001 = vmatprep.subr.mxu0 0.0
    %3002 = vmatpush1.xpose.msra.mxu0 0.0
    %3003 = vmatprep.subr.mxu0 0.0
    %3004 = vmatpush1.xpose.msra.mxu0 0.0
    %3005 = vmatprep.subr.mxu0 0.0
    %3006 = vmatpush1.xpose.msra.mxu0 0.0
    %3007 = vmatprep.subr.mxu0 0.0
    %3008 = vmatpush1.xpose.msra.mxu0 0.0
    %3009 = vmatprep.subr.mxu0 0.0
    %3010 = vmatpush1.xpose.msra.mxu0 0.0
    %3011 = vmatprep.subr.mxu0 0.0
    %3012 = vmatpush1.xpose.msra.mxu0 0.0
    %3013 = vmatprep.subr.mxu0 0.0
    %3014 = vmatpush1.xpose.msra.mxu0 0.0
    %3015 = vmatprep.subr.mxu0 0.0
    %3016 = vmatpush1.xpose.msra.mxu0 0.0
    %3017 = vmatprep.subr.mxu0 0.0
    %3018 = vmatpush1.xpose.msra.mxu0 0.0
    %3019 = vmatprep.subr.mxu0 0.0
    %3020 = vmatpush1.xpose.msra.mxu0 0.0
    %3021 = vmatprep.subr.mxu0 0.0
    %3022 = vmatpush1.xpose.msra.mxu0 0.0
    %3023 = vmatprep.subr.mxu0 0.0
    %3024 = vmatpush1.xpose.msra.mxu0 0.0
    %3025 = vmatprep.subr.mxu0 0.0
    %3026 = vmatpush1.xpose.msra.mxu0 0.0
    %3027 = vmatprep.subr.mxu0 0.0
    %3028 = vmatpush1.xpose.msra.mxu0 0.0
    %3029 = vmatprep.subr.mxu0 0.0
    %3030 = vmatpush1.xpose.msra.mxu0 0.0
    %3031 = vmatprep.subr.mxu0 0.0
    %3032 = vmatpush1.xpose.msra.mxu0 0.0
    %3033 = vmatprep.subr.mxu0 0.0
    %3034 = vmatpush1.xpose.msra.mxu0 0.0
    %3035 = vmatprep.subr.mxu0 0.0
    %3036 = vmatpush1.xpose.msra.mxu0 0.0
    %3037 = vmatprep.subr.mxu0 0.0
    %3038 = vmatpush1.xpose.msra.mxu0 0.0
    %3039 = vmatprep.subr.mxu0 0.0
    %3040 = vmatpush1.xpose.msra.mxu0 0.0
    %3041 = vmatprep.subr.mxu0 0.0
    %3042 = vmatpush1.xpose.msra.mxu0 0.0
    %3043 = vmatprep.subr.mxu0 0.0
    %3044 = vmatpush1.xpose.msra.mxu0 0.0
    %3045 = vmatprep.mubr.f32.mxu0 0.0
    %3046 = vmatmul.mubr.f32.gmra.mrb[0].mxu0 %v2977
    %v3047 = vpop.f32.mrb[0].mxu0
    %v3048 = vadd.f32 0.0, %v3047
    %v3049 = vpop.f32.mrb[0].mxu0
    %3050 = vdwg.mxu0
    %v3051 = vmul.f32 %v3048, 0.35355338
    %v3052 = vsel %vm1942, %v3051, -inf
    %3053 = vmax.xlane.f32.xlu0 %v3052
    %v3054 = vpop.xlane.xlu0 %3053
    %v3055 = vsub.f32 %v3051, %v3054
    %v3056 = vmul.f32 %v3055, 1.442695
    %v3057 = vpow.pop %v3056
    %v3058 = vsel %vm1942, %v3057, 0.0
    %3059 = vadd.xlane.f32.xlu0 %v3058
    %v3060 = vpop.xlane.xlu0 %3059
    %v3061 = vrcp.pop %v3060
    %v3062 = vmul.f32 %v3057, %v3061
    %3063 = vrot.lane.b32.xlu0 %v2632, 80
    %v3064 = vpop.permute.xlu0 %3063
    %v3066 = vsel %vm1942, %v3062, 0
    %v3068 = vsel %vm1959, %v3064, 0
    %3070 = vmatprep.subr.mxu0 0.0
    %3071 = vmatpush1.msra.mxu0 %v3068
    %3072 = vmatprep.subr.mxu0 0.0
    %3073 = vmatpush1.msra.mxu0 0.0
    %3074 = vmatprep.subr.mxu0 0.0
    %3075 = vmatpush1.msra.mxu0 0.0
    %3076 = vmatprep.subr.mxu0 0.0
    %3077 = vmatpush1.msra.mxu0 0.0
    %3078 = vmatprep.subr.mxu0 0.0
    %3079 = vmatpush1.msra.mxu0 0.0
    %3080 = vmatprep.subr.mxu0 0.0
    %3081 = vmatpush1.msra.mxu0 0.0
    %3082 = vmatprep.subr.mxu0 0.0
    %3083 = vmatpush1.msra.mxu0 0.0
    %3084 = vmatprep.subr.mxu0 0.0
    %3085 = vmatpush1.msra.mxu0 0.0
    %3086 = vmatprep.subr.mxu0 0.0
    %3087 = vmatpush1.msra.mxu0 0.0
    %3088 = vmatprep.subr.mxu0 0.0
    %3089 = vmatpush1.msra.mxu0 0.0
    %3090 = vmatprep.subr.mxu0 0.0
    %3091 = vmatpush1.msra.mxu0 0.0
    %3092 = vmatprep.subr.mxu0 0.0
    %3093 = vmatpush1.msra.mxu0 0.0
    %3094 = vmatprep.subr.mxu0 0.0
    %3095 = vmatpush1.msra.mxu0 0.0
    %3096 = vmatprep.subr.mxu0 0.0
    %3097 = vmatpush1.msra.mxu0 0.0
    %3098 = vmatprep.subr.mxu0 0.0
    %3099 = vmatpush1.msra.mxu0 0.0
    %3100 = vmatprep.subr.mxu0 0.0
    %3101 = vmatpush1.msra.mxu0 0.0
    %3102 = vmatprep.subr.mxu0 0.0
    %3103 = vmatpush1.msra.mxu0 0.0
    %3104 = vmatprep.subr.mxu0 0.0
    %3105 = vmatpush1.msra.mxu0 0.0
    %3106 = vmatprep.subr.mxu0 0.0
    %3107 = vmatpush1.msra.mxu0 0.0
    %3108 = vmatprep.subr.mxu0 0.0
    %3109 = vmatpush1.msra.mxu0 0.0
    %3110 = vmatprep.subr.mxu0 0.0
    %3111 = vmatpush1.msra.mxu0 0.0
    %3112 = vmatprep.subr.mxu0 0.0
    %3113 = vmatpush1.msra.mxu0 0.0
    %3114 = vmatprep.subr.mxu0 0.0
    %3115 = vmatpush1.msra.mxu0 0.0
    %3116 = vmatprep.subr.mxu0 0.0
    %3117 = vmatpush1.msra.mxu0 0.0
    %3118 = vmatprep.subr.mxu0 0.0
    %3119 = vmatpush1.msra.mxu0 0.0
    %3120 = vmatprep.subr.mxu0 0.0
    %3121 = vmatpush1.msra.mxu0 0.0
    %3122 = vmatprep.subr.mxu0 0.0
    %3123 = vmatpush1.msra.mxu0 0.0
    %3124 = vmatprep.subr.mxu0 0.0
    %3125 = vmatpush1.msra.mxu0 0.0
    %3126 = vmatprep.subr.mxu0 0.0
    %3127 = vmatpush1.msra.mxu0 0.0
    %3128 = vmatprep.subr.mxu0 0.0
    %3129 = vmatpush1.msra.mxu0 0.0
    %3130 = vmatprep.subr.mxu0 0.0
    %3131 = vmatpush1.msra.mxu0 0.0
    %3132 = vmatprep.subr.mxu0 0.0
    %3133 = vmatpush1.msra.mxu0 0.0
    %3134 = vmatprep.mubr.f32.mxu0 0.0
    %3135 = vmatmul.mubr.f32.gmra.mrb[0].mxu0 %v3066
    %v3136 = vpop.f32.mrb[0].mxu0
    %v3137 = vadd.f32 0.0, %v3136
    %v3138 = vpop.f32.mrb[0].mxu0
    %3139 = vdwg.mxu0
    %3141 = vrot.lane.b32.xlu0 %v3137, 16
    %v3142 = vpop.permute.xlu0 %3141
    %3144 = vst.msk [vmem:[#allocation2 + $0x8] sm:$0xff] %vm689, %v3142
    %3145 = vrot.lane.b32.xlu0 %v1777, 104
    %v3146 = vpop.permute.xlu0 %3145
    %3147 = vrot.lane.b32.xlu0 %v2632, 104
    %v3148 = vpop.permute.xlu0 %3147
    %v3149 = vsel %vm180, %v3146, 0
    %v3151 = vsel %vm180, %v3148, 0
    %3153 = vmatprep.subr.mxu0 0.0
    %3154 = vmatpush1.xpose.msra.mxu0 %v3151
    %3155 = vmatprep.subr.mxu0 0.0
    %3156 = vmatpush1.xpose.msra.mxu0 0.0
    %3157 = vmatprep.subr.mxu0 0.0
    %3158 = vmatpush1.xpose.msra.mxu0 0.0
    %3159 = vmatprep.subr.mxu0 0.0
    %3160 = vmatpush1.xpose.msra.mxu0 0.0
    %3161 = vmatprep.subr.mxu0 0.0
    %3162 = vmatpush1.xpose.msra.mxu0 0.0
    %3163 = vmatprep.subr.mxu0 0.0
    %3164 = vmatpush1.xpose.msra.mxu0 0.0
    %3165 = vmatprep.subr.mxu0 0.0
    %3166 = vmatpush1.xpose.msra.mxu0 0.0
    %3167 = vmatprep.subr.mxu0 0.0
    %3168 = vmatpush1.xpose.msra.mxu0 0.0
    %3169 = vmatprep.subr.mxu0 0.0
    %3170 = vmatpush1.xpose.msra.mxu0 0.0
    %3171 = vmatprep.subr.mxu0 0.0
    %3172 = vmatpush1.xpose.msra.mxu0 0.0
    %3173 = vmatprep.subr.mxu0 0.0
    %3174 = vmatpush1.xpose.msra.mxu0 0.0
    %3175 = vmatprep.subr.mxu0 0.0
    %3176 = vmatpush1.xpose.msra.mxu0 0.0
    %3177 = vmatprep.subr.mxu0 0.0
    %3178 = vmatpush1.xpose.msra.mxu0 0.0
    %3179 = vmatprep.subr.mxu0 0.0
    %3180 = vmatpush1.xpose.msra.mxu0 0.0
    %3181 = vmatprep.subr.mxu0 0.0
    %3182 = vmatpush1.xpose.msra.mxu0 0.0
    %3183 = vmatprep.subr.mxu0 0.0
    %3184 = vmatpush1.xpose.msra.mxu0 0.0
    %3185 = vmatprep.subr.mxu0 0.0
    %3186 = vmatpush1.xpose.msra.mxu0 0.0
    %3187 = vmatprep.subr.mxu0 0.0
    %3188 = vmatpush1.xpose.msra.mxu0 0.0
    %3189 = vmatprep.subr.mxu0 0.0
    %3190 = vmatpush1.xpose.msra.mxu0 0.0
    %3191 = vmatprep.subr.mxu0 0.0
    %3192 = vmatpush1.xpose.msra.mxu0 0.0
    %3193 = vmatprep.subr.mxu0 0.0
    %3194 = vmatpush1.xpose.msra.mxu0 0.0
    %3195 = vmatprep.subr.mxu0 0.0
    %3196 = vmatpush1.xpose.msra.mxu0 0.0
    %3197 = vmatprep.subr.mxu0 0.0
    %3198 = vmatpush1.xpose.msra.mxu0 0.0
    %3199 = vmatprep.subr.mxu0 0.0
    %3200 = vmatpush1.xpose.msra.mxu0 0.0
    %3201 = vmatprep.subr.mxu0 0.0
    %3202 = vmatpush1.xpose.msra.mxu0 0.0
    %3203 = vmatprep.subr.mxu0 0.0
    %3204 = vmatpush1.xpose.msra.mxu0 0.0
    %3205 = vmatprep.subr.mxu0 0.0
    %3206 = vmatpush1.xpose.msra.mxu0 0.0
    %3207 = vmatprep.subr.mxu0 0.0
    %3208 = vmatpush1.xpose.msra.mxu0 0.0
    %3209 = vmatprep.subr.mxu0 0.0
    %3210 = vmatpush1.xpose.msra.mxu0 0.0
    %3211 = vmatprep.subr.mxu0 0.0
    %3212 = vmatpush1.xpose.msra.mxu0 0.0
    %3213 = vmatprep.subr.mxu0 0.0
    %3214 = vmatpush1.xpose.msra.mxu0 0.0
    %3215 = vmatprep.subr.mxu0 0.0
    %3216 = vmatpush1.xpose.msra.mxu0 0.0
    %3217 = vmatprep.mubr.f32.mxu0 0.0
    %3218 = vmatmul.mubr.f32.gmra.mrb[0].mxu0 %v3149
    %v3219 = vpop.f32.mrb[0].mxu0
    %v3220 = vadd.f32 0.0, %v3219
    %v3221 = vpop.f32.mrb[0].mxu0
    %3222 = vdwg.mxu0
    %v3223 = vmul.f32 %v3220, 0.35355338
    %v3224 = vsel %vm1942, %v3223, -inf
    %3225 = vmax.xlane.f32.xlu0 %v3224
    %v3226 = vpop.xlane.xlu0 %3225
    %v3227 = vsub.f32 %v3223, %v3226
    %v3228 = vmul.f32 %v3227, 1.442695
    %v3229 = vpow.pop %v3228
    %v3230 = vsel %vm1942, %v3229, 0.0
    %3231 = vadd.xlane.f32.xlu0 %v3230
    %v3232 = vpop.xlane.xlu0 %3231
    %v3233 = vrcp.pop %v3232
    %v3234 = vmul.f32 %v3229, %v3233
    %3235 = vrot.lane.b32.xlu0 %v2632, 72
    %v3236 = vpop.permute.xlu0 %3235
    %v3238 = vsel %vm1942, %v3234, 0
    %v3240 = vsel %vm1959, %v3236, 0
    %3242 = vmatprep.subr.mxu0 0.0
    %3243 = vmatpush1.msra.mxu0 %v3240
    %3244 = vmatprep.subr.mxu0 0.0
    %3245 = vmatpush1.msra.mxu0 0.0
    %3246 = vmatprep.subr.mxu0 0.0
    %3247 = vmatpush1.msra.mxu0 0.0
    %3248 = vmatprep.subr.mxu0 0.0
    %3249 = vmatpush1.msra.mxu0 0.0
    %3250 = vmatprep.subr.mxu0 0.0
    %3251 = vmatpush1.msra.mxu0 0.0
    %3252 = vmatprep.subr.mxu0 0.0
    %3253 = vmatpush1.msra.mxu0 0.0
    %3254 = vmatprep.subr.mxu0 0.0
    %3255 = vmatpush1.msra.mxu0 0.0
    %3256 = vmatprep.subr.mxu0 0.0
    %3257 = vmatpush1.msra.mxu0 0.0
    %3258 = vmatprep.subr.mxu0 0.0
    %3259 = vmatpush1.msra.mxu0 0.0
    %3260 = vmatprep.subr.mxu0 0.0
    %3261 = vmatpush1.msra.mxu0 0.0
    %3262 = vmatprep.subr.mxu0 0.0
    %3263 = vmatpush1.msra.mxu0 0.0
    %3264 = vmatprep.subr.mxu0 0.0
    %3265 = vmatpush1.msra.mxu0 0.0
    %3266 = vmatprep.subr.mxu0 0.0
    %3267 = vmatpush1.msra.mxu0 0.0
    %3268 = vmatprep.subr.mxu0 0.0
    %3269 = vmatpush1.msra.mxu0 0.0
    %3270 = vmatprep.subr.mxu0 0.0
    %3271 = vmatpush1.msra.mxu0 0.0
    %3272 = vmatprep.subr.mxu0 0.0
    %3273 = vmatpush1.msra.mxu0 0.0
    %3274 = vmatprep.subr.mxu0 0.0
    %3275 = vmatpush1.msra.mxu0 0.0
    %3276 = vmatprep.subr.mxu0 0.0
    %3277 = vmatpush1.msra.mxu0 0.0
    %3278 = vmatprep.subr.mxu0 0.0
    %3279 = vmatpush1.msra.mxu0 0.0
    %3280 = vmatprep.subr.mxu0 0.0
    %3281 = vmatpush1.msra.mxu0 0.0
    %3282 = vmatprep.subr.mxu0 0.0
    %3283 = vmatpush1.msra.mxu0 0.0
    %3284 = vmatprep.subr.mxu0 0.0
    %3285 = vmatpush1.msra.mxu0 0.0
    %3286 = vmatprep.subr.mxu0 0.0
    %3287 = vmatpush1.msra.mxu0 0.0
    %3288 = vmatprep.subr.mxu0 0.0
    %3289 = vmatpush1.msra.mxu0 0.0
    %3290 = vmatprep.subr.mxu0 0.0
    %3291 = vmatpush1.msra.mxu0 0.0
    %3292 = vmatprep.subr.mxu0 0.0
    %3293 = vmatpush1.msra.mxu0 0.0
    %3294 = vmatprep.subr.mxu0 0.0
    %3295 = vmatpush1.msra.mxu0 0.0
    %3296 = vmatprep.subr.mxu0 0.0
    %3297 = vmatpush1.msra.mxu0 0.0
    %3298 = vmatprep.subr.mxu0 0.0
    %3299 = vmatpush1.msra.mxu0 0.0
    %3300 = vmatprep.subr.mxu0 0.0
    %3301 = vmatpush1.msra.mxu0 0.0
    %3302 = vmatprep.subr.mxu0 0.0
    %3303 = vmatpush1.msra.mxu0 0.0
    %3304 = vmatprep.subr.mxu0 0.0
    %3305 = vmatpush1.msra.mxu0 0.0
    %3306 = vmatprep.mubr.f32.mxu0 0.0
    %3307 = vmatmul.mubr.f32.gmra.mrb[0].mxu0 %v3238
    %v3308 = vpop.f32.mrb[0].mxu0
    %v3309 = vadd.f32 0.0, %v3308
    %v3310 = vpop.f32.mrb[0].mxu0
    %3311 = vdwg.mxu0
    %3313 = vrot.lane.b32.xlu0 %v3309, 24
    %v3314 = vpop.permute.xlu0 %3313
    %3316 = vst.msk [vmem:[#allocation2 + $0x8] sm:$0xff] %vm862, %v3314
    %v3317 = vld [vmem:[#allocation2] sm:$0xff]
    %v3318 = vld [vmem:[#allocation2 + $0x8] sm:$0xff]
    %v3319 = vld [vmem:[%s11] sm:$0xff]
    %v3320 = vld [vmem:[%s11 + $0x8] sm:$0xff]
    %v3321 = vld [vmem:[%s11 + $0x10] sm:$0xff]
    %v3322 = vld [vmem:[%s11 + $0x18] sm:$0xff]
    %v3323 = vld [vmem:[%s12] sm:$0x1]
    %v3325 = vlaneseq
    %v3326 = vshrl.u32 %v3325, 7
    %v3327 = vsub.s32 0, %v3326
    %v3328 = vrot.slane %v3323, %v3327
    %v3331 = vsel %vm95, %v3317, 0
    %v3334 = vsel %vm95, %v3318, 0
    %3336 = vmatprep.subr.mxu0 0.0
    %3337 = vmatpush1.msra.mxu0 %v3319
    %3338 = vmatprep.subr.mxu0 0.0
    %3339 = vmatpush1.msra.mxu0 %v3320
    %3340 = vmatprep.subr.mxu0 0.0
    %3341 = vmatpush1.msra.mxu0 %v3321
    %3342 = vmatprep.subr.mxu0 0.0
    %3343 = vmatpush1.msra.mxu0 %v3322
    %3344 = vmatprep.subr.mxu0 0.0
    %3345 = vmatpush1.msra.mxu0 0.0
    %3346 = vmatprep.subr.mxu0 0.0
    %3347 = vmatpush1.msra.mxu0 0.0
    %3348 = vmatprep.subr.mxu0 0.0
    %3349 = vmatpush1.msra.mxu0 0.0
    %3350 = vmatprep.subr.mxu0 0.0
    %3351 = vmatpush1.msra.mxu0 0.0
    %3352 = vmatprep.subr.mxu0 0.0
    %3353 = vmatpush1.msra.mxu0 0.0
    %3354 = vmatprep.subr.mxu0 0.0
    %3355 = vmatpush1.msra.mxu0 0.0
    %3356 = vmatprep.subr.mxu0 0.0
    %3357 = vmatpush1.msra.mxu0 0.0
    %3358 = vmatprep.subr.mxu0 0.0
    %3359 = vmatpush1.msra.mxu0 0.0
    %3360 = vmatprep.subr.mxu0 0.0
    %3361 = vmatpush1.msra.mxu0 0.0
    %3362 = vmatprep.subr.mxu0 0.0
    %3363 = vmatpush1.msra.mxu0 0.0
    %3364 = vmatprep.subr.mxu0 0.0
    %3365 = vmatpush1.msra.mxu0 0.0
    %3366 = vmatprep.subr.mxu0 0.0
    %3367 = vmatpush1.msra.mxu0 0.0
    %3368 = vmatprep.subr.mxu0 0.0
    %3369 = vmatpush1.msra.mxu0 0.0
    %3370 = vmatprep.subr.mxu0 0.0
    %3371 = vmatpush1.msra.mxu0 0.0
    %3372 = vmatprep.subr.mxu0 0.0
    %3373 = vmatpush1.msra.mxu0 0.0
    %3374 = vmatprep.subr.mxu0 0.0
    %3375 = vmatpush1.msra.mxu0 0.0
    %3376 = vmatprep.subr.mxu0 0.0
    %3377 = vmatpush1.msra.mxu0 0.0
    %3378 = vmatprep.subr.mxu0 0.0
    %3379 = vmatpush1.msra.mxu0 0.0
    %3380 = vmatprep.subr.mxu0 0.0
    %3381 = vmatpush1.msra.mxu0 0.0
    %3382 = vmatprep.subr.mxu0 0.0
    %3383 = vmatpush1.msra.mxu0 0.0
    %3384 = vmatprep.subr.mxu0 0.0
    %3385 = vmatpush1.msra.mxu0 0.0
    %3386 = vmatprep.subr.mxu0 0.0
    %3387 = vmatpush1.msra.mxu0 0.0
    %3388 = vmatprep.subr.mxu0 0.0
    %3389 = vmatpush1.msra.mxu0 0.0
    %3390 = vmatprep.subr.mxu0 0.0
    %3391 = vmatpush1.msra.mxu0 0.0
    %3392 = vmatprep.subr.mxu0 0.0
    %3393 = vmatpush1.msra.mxu0 0.0
    %3394 = vmatprep.subr.mxu0 0.0
    %3395 = vmatpush1.msra.mxu0 0.0
    %3396 = vmatprep.subr.mxu0 0.0
    %3397 = vmatpush1.msra.mxu0 0.0
    %3398 = vmatprep.subr.mxu0 0.0
    %3399 = vmatpush1.msra.mxu0 0.0
    %3400 = vmatprep.mubr.f32.mxu0 0.0
    %3401 = vmatmul.mubr.f32.gmra.mrb[0].mxu0 %v3331
    %v3402 = vpop.f32.mrb[0].mxu0
    %v3403 = vadd.f32 %v3328, %v3402
    %v3404 = vpop.f32.mrb[0].mxu0
    %3405 = vmatprep.mubr.f32.mxu0 0.0
    %3406 = vmatmul.mubr.f32.gmra.mrb[0].mxu0 %v3334
    %v3407 = vpop.f32.mrb[0].mxu0
    %v3408 = vadd.f32 %v3328, %v3407
    %v3409 = vpop.f32.mrb[0].mxu0
    %3410 = vdwg.mxu0
    %v3411 = vadd.f32 %v1686, %v3403
    %v3412 = vadd.f32 %v1687, %v3408
    %v3413 = vld [vmem:[%s15] sm:$0x1]
    %v3414 = vld [vmem:[%s16] sm:$0x1]
    %v3415 = vsel %vm95, %v3411, 0.0
    %3416 = vadd.xlane.f32.xlu0 %v3415
    %v3417 = vpop.xlane.xlu0 %3416
    %v3418 = vsel %vm95, %v3412, 0.0
    %3419 = vadd.xlane.f32.xlu0 %v3418
    %v3420 = vpop.xlane.xlu0 %3419
    %v3421 = vmul.f32 %v3417, %v1651
    %v3422 = vmul.f32 %v3420, %v1651
    %v3423 = vsub.f32 %v3411, %v3421
    %v3424 = vsub.f32 %v3412, %v3422
    %v3425 = vmul.f32 %v3423, %v3423
    %v3426 = vmul.f32 %v3424, %v3424
    %v3427 = vsel %vm95, %v3425, 0.0
    %3428 = vadd.xlane.f32.xlu0 %v3427
    %v3429 = vpop.xlane.xlu0 %3428
    %v3430 = vsel %vm95, %v3426, 0.0
    %3431 = vadd.xlane.f32.xlu0 %v3430
    %v3432 = vpop.xlane.xlu0 %3431
    %v3433 = vmul.f32 %v3429, %v1651
    %v3434 = vmul.f32 %v3432, %v1651
    %v3435 = vadd.f32 %v3433, 1e-05
    %v3436 = vadd.f32 %v3434, 1e-05
    %v3437 = vrsqrt.pop %v3435
    %v3438 = vrsqrt.pop %v3436
    %v3439 = vmul.f32 %v3423, %v3437
    %v3440 = vmul.f32 %v3424, %v3438
    %v3442 = vlaneseq
    %v3443 = vshrl.u32 %v3442, 7
    %v3444 = vsub.s32 0, %v3443
    %v3445 = vrot.slane %v3413, %v3444
    %v3447 = vmul.f32 %v3439, %v3445
    %v3448 = vmul.f32 %v3440, %v3445
    %v3450 = vlaneseq
    %v3451 = vshrl.u32 %v3450, 7
    %v3452 = vsub.s32 0, %v3451
    %v3453 = vrot.slane %v3414, %v3452
    %v3455 = vadd.f32 %v3447, %v3453
    %v3456 = vadd.f32 %v3448, %v3453
    %v3457 = vld [vmem:[%s19] sm:$0xff]
    %v3458 = vld [vmem:[%s19 + $0x8] sm:$0xff]
    %v3459 = vld [vmem:[%s19 + $0x10] sm:$0xff]
    %v3460 = vld [vmem:[%s19 + $0x18] sm:$0xff]
    %v3461 = vld [vmem:[%s20] sm:$0x1]
    %v3463 = vlaneseq
    %v3464 = vshrl.u32 %v3463, 7
    %v3465 = vsub.s32 0, %v3464
    %v3466 = vrot.slane %v3461, %v3465
    %v3469 = vsel %vm95, %v3455, 0
    %v3472 = vsel %vm95, %v3456, 0
    %3474 = vmatprep.subr.mxu0 0.0
    %3475 = vmatpush1.msra.mxu0 %v3457
    %3476 = vmatprep.subr.mxu0 0.0
    %3477 = vmatpush1.msra.mxu0 %v3458
    %3478 = vmatprep.subr.mxu0 0.0
    %3479 = vmatpush1.msra.mxu0 %v3459
    %3480 = vmatprep.subr.mxu0 0.0
    %3481 = vmatpush1.msra.mxu0 %v3460
    %3482 = vmatprep.subr.mxu0 0.0
    %3483 = vmatpush1.msra.mxu0 0.0
    %3484 = vmatprep.subr.mxu0 0.0
    %3485 = vmatpush1.msra.mxu0 0.0
    %3486 = vmatprep.subr.mxu0 0.0
    %3487 = vmatpush1.msra.mxu0 0.0
    %3488 = vmatprep.subr.mxu0 0.0
    %3489 = vmatpush1.msra.mxu0 0.0
    %3490 = vmatprep.subr.mxu0 0.0
    %3491 = vmatpush1.msra.mxu0 0.0
    %3492 = vmatprep.subr.mxu0 0.0
    %3493 = vmatpush1.msra.mxu0 0.0
    %3494 = vmatprep.subr.mxu0 0.0
    %3495 = vmatpush1.msra.mxu0 0.0
    %3496 = vmatprep.subr.mxu0 0.0
    %3497 = vmatpush1.msra.mxu0 0.0
    %3498 = vmatprep.subr.mxu0 0.0
    %3499 = vmatpush1.msra.mxu0 0.0
    %3500 = vmatprep.subr.mxu0 0.0
    %3501 = vmatpush1.msra.mxu0 0.0
    %3502 = vmatprep.subr.mxu0 0.0
    %3503 = vmatpush1.msra.mxu0 0.0
    %3504 = vmatprep.subr.mxu0 0.0
    %3505 = vmatpush1.msra.mxu0 0.0
    %3506 = vmatprep.subr.mxu0 0.0
    %3507 = vmatpush1.msra.mxu0 0.0
    %3508 = vmatprep.subr.mxu0 0.0
    %3509 = vmatpush1.msra.mxu0 0.0
    %3510 = vmatprep.subr.mxu0 0.0
    %3511 = vmatpush1.msra.mxu0 0.0
    %3512 = vmatprep.subr.mxu0 0.0
    %3513 = vmatpush1.msra.mxu0 0.0
    %3514 = vmatprep.subr.mxu0 0.0
    %3515 = vmatpush1.msra.mxu0 0.0
    %3516 = vmatprep.subr.mxu0 0.0
    %3517 = vmatpush1.msra.mxu0 0.0
    %3518 = vmatprep.subr.mxu0 0.0
    %3519 = vmatpush1.msra.mxu0 0.0
    %3520 = vmatprep.subr.mxu0 0.0
    %3521 = vmatpush1.msra.mxu0 0.0
    %3522 = vmatprep.subr.mxu0 0.0
    %3523 = vmatpush1.msra.mxu0 0.0
    %3524 = vmatprep.subr.mxu0 0.0
    %3525 = vmatpush1.msra.mxu0 0.0
    %3526 = vmatprep.subr.mxu0 0.0
    %3527 = vmatpush1.msra.mxu0 0.0
    %3528 = vmatprep.subr.mxu0 0.0
    %3529 = vmatpush1.msra.mxu0 0.0
    %3530 = vmatprep.subr.mxu0 0.0
    %3531 = vmatpush1.msra.mxu0 0.0
    %3532 = vmatprep.subr.mxu0 0.0
    %3533 = vmatpush1.msra.mxu0 0.0
    %3534 = vmatprep.subr.mxu0 0.0
    %3535 = vmatpush1.msra.mxu0 0.0
    %3536 = vmatprep.subr.mxu0 0.0
    %3537 = vmatpush1.msra.mxu0 0.0
    %3538 = vmatprep.mubr.f32.mxu0 0.0
    %3539 = vmatmul.mubr.f32.gmra.mrb[0].mxu0 %v3469
    %v3540 = vpop.f32.mrb[0].mxu0
    %v3541 = vadd.f32 %v3466, %v3540
    %v3542 = vpop.f32.mrb[0].mxu0
    %3543 = vmatprep.mubr.f32.mxu0 0.0
    %3544 = vmatmul.mubr.f32.gmra.mrb[0].mxu0 %v3472
    %v3545 = vpop.f32.mrb[0].mxu0
    %v3546 = vadd.f32 %v3466, %v3545
    %v3547 = vpop.f32.mrb[0].mxu0
    %3548 = vdwg.mxu0
    %v3549 = vmax.f32 %v3541, 0.0
    %v3550 = vmax.f32 %v3546, 0.0
    %v3551 = vld [vmem:[%s21] sm:$0xff]
    %v3552 = vld [vmem:[%s21 + $0x8] sm:$0xff]
    %v3553 = vld [vmem:[%s21 + $0x10] sm:$0xff]
    %v3554 = vld [vmem:[%s21 + $0x18] sm:$0xff]
    %v3555 = vld [vmem:[%s21 + $0x20] sm:$0xff]
    %v3556 = vld [vmem:[%s21 + $0x28] sm:$0xff]
    %v3557 = vld [vmem:[%s21 + $0x30] sm:$0xff]
    %v3558 = vld [vmem:[%s21 + $0x38] sm:$0xff]
    %v3559 = vld [vmem:[%s22] sm:$0x1]
    %v3561 = vlaneseq
    %v3562 = vshrl.u32 %v3561, 7
    %v3563 = vsub.s32 0, %v3562
    %v3564 = vrot.slane %v3559, %v3563
    %vm3566 = vcmask 523264
    %v3568 = vsel %vm3566, %v3549, 0
    %v3571 = vsel %vm3566, %v3550, 0
    %3573 = vmatprep.subr.mxu0 0.0
    %3574 = vmatpush1.msra.mxu0 %v3551
    %3575 = vmatprep.subr.mxu0 0.0
    %3576 = vmatpush1.msra.mxu0 %v3552
    %3577 = vmatprep.subr.mxu0 0.0
    %3578 = vmatpush1.msra.mxu0 %v3553
    %3579 = vmatprep.subr.mxu0 0.0
    %3580 = vmatpush1.msra.mxu0 %v3554
    %3581 = vmatprep.subr.mxu0 0.0
    %3582 = vmatpush1.msra.mxu0 %v3555
    %3583 = vmatprep.subr.mxu0 0.0
    %3584 = vmatpush1.msra.mxu0 %v3556
    %3585 = vmatprep.subr.mxu0 0.0
    %3586 = vmatpush1.msra.mxu0 %v3557
    %3587 = vmatprep.subr.mxu0 0.0
    %3588 = vmatpush1.msra.mxu0 %v3558
    %3589 = vmatprep.subr.mxu0 0.0
    %3590 = vmatpush1.msra.mxu0 0.0
    %3591 = vmatprep.subr.mxu0 0.0
    %3592 = vmatpush1.msra.mxu0 0.0
    %3593 = vmatprep.subr.mxu0 0.0
    %3594 = vmatpush1.msra.mxu0 0.0
    %3595 = vmatprep.subr.mxu0 0.0
    %3596 = vmatpush1.msra.mxu0 0.0
    %3597 = vmatprep.subr.mxu0 0.0
    %3598 = vmatpush1.msra.mxu0 0.0
    %3599 = vmatprep.subr.mxu0 0.0
    %3600 = vmatpush1.msra.mxu0 0.0
    %3601 = vmatprep.subr.mxu0 0.0
    %3602 = vmatpush1.msra.mxu0 0.0
    %3603 = vmatprep.subr.mxu0 0.0
    %3604 = vmatpush1.msra.mxu0 0.0
    %3605 = vmatprep.subr.mxu0 0.0
    %3606 = vmatpush1.msra.mxu0 0.0
    %3607 = vmatprep.subr.mxu0 0.0
    %3608 = vmatpush1.msra.mxu0 0.0
    %3609 = vmatprep.subr.mxu0 0.0
    %3610 = vmatpush1.msra.mxu0 0.0
    %3611 = vmatprep.subr.mxu0 0.0
    %3612 = vmatpush1.msra.mxu0 0.0
    %3613 = vmatprep.subr.mxu0 0.0
    %3614 = vmatpush1.msra.mxu0 0.0
    %3615 = vmatprep.subr.mxu0 0.0
    %3616 = vmatpush1.msra.mxu0 0.0
    %3617 = vmatprep.subr.mxu0 0.0
    %3618 = vmatpush1.msra.mxu0 0.0
    %3619 = vmatprep.subr.mxu0 0.0
    %3620 = vmatpush1.msra.mxu0 0.0
    %3621 = vmatprep.subr.mxu0 0.0
    %3622 = vmatpush1.msra.mxu0 0.0
    %3623 = vmatprep.subr.mxu0 0.0
    %3624 = vmatpush1.msra.mxu0 0.0
    %3625 = vmatprep.subr.mxu0 0.0
    %3626 = vmatpush1.msra.mxu0 0.0
    %3627 = vmatprep.subr.mxu0 0.0
    %3628 = vmatpush1.msra.mxu0 0.0
    %3629 = vmatprep.subr.mxu0 0.0
    %3630 = vmatpush1.msra.mxu0 0.0
    %3631 = vmatprep.subr.mxu0 0.0
    %3632 = vmatpush1.msra.mxu0 0.0
    %3633 = vmatprep.subr.mxu0 0.0
    %3634 = vmatpush1.msra.mxu0 0.0
    %3635 = vmatprep.subr.mxu0 0.0
    %3636 = vmatpush1.msra.mxu0 0.0
    %3637 = vmatprep.mubr.f32.mxu0 0.0
    %3638 = vmatmul.mubr.f32.gmra.mrb[0].mxu0 %v3568
    %v3639 = vpop.f32.mrb[0].mxu0
    %v3640 = vadd.f32 %v3564, %v3639
    %v3641 = vpop.f32.mrb[0].mxu0
    %3642 = vmatprep.mubr.f32.mxu0 0.0
    %3643 = vmatmul.mubr.f32.gmra.mrb[0].mxu0 %v3571
    %v3644 = vpop.f32.mrb[0].mxu0
    %v3645 = vadd.f32 %v3564, %v3644
    %v3646 = vpop.f32.mrb[0].mxu0
    %3647 = vdwg.mxu0
    %v3648 = vadd.f32 %v3455, %v3640
    %v3649 = vadd.f32 %v3456, %v3645
    %v3650 = vld [vmem:[%s17] sm:$0x1]
    %v3651 = vld [vmem:[%s18] sm:$0x1]
    %v3652 = vsel %vm95, %v3648, 0.0
    %3653 = vadd.xlane.f32.xlu0 %v3652
    %v3654 = vpop.xlane.xlu0 %3653
    %v3655 = vsel %vm95, %v3649, 0.0
    %3656 = vadd.xlane.f32.xlu0 %v3655
    %v3657 = vpop.xlane.xlu0 %3656
    %v3658 = vmul.f32 %v3654, %v1651
    %v3659 = vmul.f32 %v3657, %v1651
    %v3660 = vsub.f32 %v3648, %v3658
    %v3661 = vsub.f32 %v3649, %v3659
    %v3662 = vmul.f32 %v3660, %v3660
    %v3663 = vmul.f32 %v3661, %v3661
    %v3664 = vsel %vm95, %v3662, 0.0
    %3665 = vadd.xlane.f32.xlu0 %v3664
    %v3666 = vpop.xlane.xlu0 %3665
    %v3667 = vsel %vm95, %v3663, 0.0
    %3668 = vadd.xlane.f32.xlu0 %v3667
    %v3669 = vpop.xlane.xlu0 %3668
    %v3670 = vmul.f32 %v3666, %v1651
    %v3671 = vmul.f32 %v3669, %v1651
    %v3672 = vadd.f32 %v3670, 1e-05
    %v3673 = vadd.f32 %v3671, 1e-05
    %v3674 = vrsqrt.pop %v3672
    %v3675 = vrsqrt.pop %v3673
    %v3676 = vmul.f32 %v3660, %v3674
    %v3677 = vmul.f32 %v3661, %v3675
    %v3679 = vlaneseq
    %v3680 = vshrl.u32 %v3679, 7
    %v3681 = vsub.s32 0, %v3680
    %v3682 = vrot.slane %v3650, %v3681
    %v3684 = vmul.f32 %v3676, %v3682
    %v3685 = vmul.f32 %v3677, %v3682
    %v3687 = vlaneseq
    %v3688 = vshrl.u32 %v3687, 7
    %v3689 = vsub.s32 0, %v3688
    %v3690 = vrot.slane %v3651, %v3689
    %v3692 = vadd.f32 %v3684, %v3690
    %v3693 = vadd.f32 %v3685, %v3690
    %s3694 = scalar_lea.vmem %s3, 32
    %v3695 = vld [vmem:[%s3694] sm:$0xff]
    %v3696 = vld [vmem:[%s3694 + $0x8] sm:$0xff]
    %v3697 = vld [vmem:[%s3694 + $0x10] sm:$0xff]
    %v3698 = vld [vmem:[%s3694 + $0x18] sm:$0xff]
    %s3699 = scalar_lea.vmem %s4, 1
    %v3700 = vld [vmem:[%s3699] sm:$0x1]
    %v3702 = vlaneseq
    %v3703 = vshrl.u32 %v3702, 7
    %v3704 = vsub.s32 0, %v3703
    %v3705 = vrot.slane %v3700, %v3704
    %v3708 = vsel %vm95, %v3692, 0
    %v3711 = vsel %vm95, %v3693, 0
    %3713 = vmatprep.subr.mxu0 0.0
    %3714 = vmatpush1.msra.mxu0 %v3695
    %3715 = vmatprep.subr.mxu0 0.0
    %3716 = vmatpush1.msra.mxu0 %v3696
    %3717 = vmatprep.subr.mxu0 0.0
    %3718 = vmatpush1.msra.mxu0 %v3697
    %3719 = vmatprep.subr.mxu0 0.0
    %3720 = vmatpush1.msra.mxu0 %v3698
    %3721 = vmatprep.subr.mxu0 0.0
    %3722 = vmatpush1.msra.mxu0 0.0
    %3723 = vmatprep.subr.mxu0 0.0
    %3724 = vmatpush1.msra.mxu0 0.0
    %3725 = vmatprep.subr.mxu0 0.0
    %3726 = vmatpush1.msra.mxu0 0.0
    %3727 = vmatprep.subr.mxu0 0.0
    %3728 = vmatpush1.msra.mxu0 0.0
    %3729 = vmatprep.subr.mxu0 0.0
    %3730 = vmatpush1.msra.mxu0 0.0
    %3731 = vmatprep.subr.mxu0 0.0
    %3732 = vmatpush1.msra.mxu0 0.0
    %3733 = vmatprep.subr.mxu0 0.0
    %3734 = vmatpush1.msra.mxu0 0.0
    %3735 = vmatprep.subr.mxu0 0.0
    %3736 = vmatpush1.msra.mxu0 0.0
    %3737 = vmatprep.subr.mxu0 0.0
    %3738 = vmatpush1.msra.mxu0 0.0
    %3739 = vmatprep.subr.mxu0 0.0
    %3740 = vmatpush1.msra.mxu0 0.0
    %3741 = vmatprep.subr.mxu0 0.0
    %3742 = vmatpush1.msra.mxu0 0.0
    %3743 = vmatprep.subr.mxu0 0.0
    %3744 = vmatpush1.msra.mxu0 0.0
    %3745 = vmatprep.subr.mxu0 0.0
    %3746 = vmatpush1.msra.mxu0 0.0
    %3747 = vmatprep.subr.mxu0 0.0
    %3748 = vmatpush1.msra.mxu0 0.0
    %3749 = vmatprep.subr.mxu0 0.0
    %3750 = vmatpush1.msra.mxu0 0.0
    %3751 = vmatprep.subr.mxu0 0.0
    %3752 = vmatpush1.msra.mxu0 0.0
    %3753 = vmatprep.subr.mxu0 0.0
    %3754 = vmatpush1.msra.mxu0 0.0
    %3755 = vmatprep.subr.mxu0 0.0
    %3756 = vmatpush1.msra.mxu0 0.0
    %3757 = vmatprep.subr.mxu0 0.0
    %3758 = vmatpush1.msra.mxu0 0.0
    %3759 = vmatprep.subr.mxu0 0.0
    %3760 = vmatpush1.msra.mxu0 0.0
    %3761 = vmatprep.subr.mxu0 0.0
    %3762 = vmatpush1.msra.mxu0 0.0
    %3763 = vmatprep.subr.mxu0 0.0
    %3764 = vmatpush1.msra.mxu0 0.0
    %3765 = vmatprep.subr.mxu0 0.0
    %3766 = vmatpush1.msra.mxu0 0.0
    %3767 = vmatprep.subr.mxu0 0.0
    %3768 = vmatpush1.msra.mxu0 0.0
    %3769 = vmatprep.subr.mxu0 0.0
    %3770 = vmatpush1.msra.mxu0 0.0
    %3771 = vmatprep.subr.mxu0 0.0
    %3772 = vmatpush1.msra.mxu0 0.0
    %3773 = vmatprep.subr.mxu0 0.0
    %3774 = vmatpush1.msra.mxu0 0.0
    %3775 = vmatprep.subr.mxu0 0.0
    %3776 = vmatpush1.msra.mxu0 0.0
    %3777 = vmatprep.mubr.f32.mxu0 0.0
    %3778 = vmatmul.mubr.f32.gmra.mrb[0].mxu0 %v3708
    %v3779 = vpop.f32.mrb[0].mxu0
    %v3780 = vadd.f32 %v3705, %v3779
    %v3781 = vpop.f32.mrb[0].mxu0
    %3782 = vmatprep.mubr.f32.mxu0 0.0
    %3783 = vmatmul.mubr.f32.gmra.mrb[0].mxu0 %v3711
    %v3784 = vpop.f32.mrb[0].mxu0
    %v3785 = vadd.f32 %v3705, %v3784
    %v3786 = vpop.f32.mrb[0].mxu0
    %3787 = vdwg.mxu0
    %3789 = vrot.lane.b32.xlu0 %v3780, 96
    %v3790 = vpop.permute.xlu0 %3789
    %v3791 = vsel %vm180, %v3780, 0
    %v3793 = vsel %vm180, %v3790, 0
    %3795 = vmatprep.subr.mxu0 0.0
    %3796 = vmatpush1.xpose.msra.mxu0 %v3793
    %3797 = vmatprep.subr.mxu0 0.0
    %3798 = vmatpush1.xpose.msra.mxu0 0.0
    %3799 = vmatprep.subr.mxu0 0.0
    %3800 = vmatpush1.xpose.msra.mxu0 0.0
    %3801 = vmatprep.subr.mxu0 0.0
    %3802 = vmatpush1.xpose.msra.mxu0 0.0
    %3803 = vmatprep.subr.mxu0 0.0
    %3804 = vmatpush1.xpose.msra.mxu0 0.0
    %3805 = vmatprep.subr.mxu0 0.0
    %3806 = vmatpush1.xpose.msra.mxu0 0.0
    %3807 = vmatprep.subr.mxu0 0.0
    %3808 = vmatpush1.xpose.msra.mxu0 0.0
    %3809 = vmatprep.subr.mxu0 0.0
    %3810 = vmatpush1.xpose.msra.mxu0 0.0
    %3811 = vmatprep.subr.mxu0 0.0
    %3812 = vmatpush1.xpose.msra.mxu0 0.0
    %3813 = vmatprep.subr.mxu0 0.0
    %3814 = vmatpush1.xpose.msra.mxu0 0.0
    %3815 = vmatprep.subr.mxu0 0.0
    %3816 = vmatpush1.xpose.msra.mxu0 0.0
    %3817 = vmatprep.subr.mxu0 0.0
    %3818 = vmatpush1.xpose.msra.mxu0 0.0
    %3819 = vmatprep.subr.mxu0 0.0
    %3820 = vmatpush1.xpose.msra.mxu0 0.0
    %3821 = vmatprep.subr.mxu0 0.0
    %3822 = vmatpush1.xpose.msra.mxu0 0.0
    %3823 = vmatprep.subr.mxu0 0.0
    %3824 = vmatpush1.xpose.msra.mxu0 0.0
    %3825 = vmatprep.subr.mxu0 0.0
    %3826 = vmatpush1.xpose.msra.mxu0 0.0
    %3827 = vmatprep.subr.mxu0 0.0
    %3828 = vmatpush1.xpose.msra.mxu0 0.0
    %3829 = vmatprep.subr.mxu0 0.0
    %3830 = vmatpush1.xpose.msra.mxu0 0.0
    %3831 = vmatprep.subr.mxu0 0.0
    %3832 = vmatpush1.xpose.msra.mxu0 0.0
    %3833 = vmatprep.subr.mxu0 0.0
    %3834 = vmatpush1.xpose.msra.mxu0 0.0
    %3835 = vmatprep.subr.mxu0 0.0
    %3836 = vmatpush1.xpose.msra.mxu0 0.0
    %3837 = vmatprep.subr.mxu0 0.0
    %3838 = vmatpush1.xpose.msra.mxu0 0.0
    %3839 = vmatprep.subr.mxu0 0.0
    %3840 = vmatpush1.xpose.msra.mxu0 0.0
    %3841 = vmatprep.subr.mxu0 0.0
    %3842 = vmatpush1.xpose.msra.mxu0 0.0
    %3843 = vmatprep.subr.mxu0 0.0
    %3844 = vmatpush1.xpose.msra.mxu0 0.0
    %3845 = vmatprep.subr.mxu0 0.0
    %3846 = vmatpush1.xpose.msra.mxu0 0.0
    %3847 = vmatprep.subr.mxu0 0.0
    %3848 = vmatpush1.xpose.msra.mxu0 0.0
    %3849 = vmatprep.subr.mxu0 0.0
    %3850 = vmatpush1.xpose.msra.mxu0 0.0
    %3851 = vmatprep.subr.mxu0 0.0
    %3852 = vmatpush1.xpose.msra.mxu0 0.0
    %3853 = vmatprep.subr.mxu0 0.0
    %3854 = vmatpush1.xpose.msra.mxu0 0.0
    %3855 = vmatprep.subr.mxu0 0.0
    %3856 = vmatpush1.xpose.msra.mxu0 0.0
    %3857 = vmatprep.subr.mxu0 0.0
    %3858 = vmatpush1.xpose.msra.mxu0 0.0
    %3859 = vmatprep.mubr.f32.mxu0 0.0
    %3860 = vmatmul.mubr.f32.gmra.mrb[0].mxu0 %v3791
    %v3861 = vpop.f32.mrb[0].mxu0
    %v3862 = vadd.f32 0.0, %v3861
    %v3863 = vpop.f32.mrb[0].mxu0
    %3864 = vdwg.mxu0
    %v3865 = vmul.f32 %v3862, 0.35355338
    %v3866 = vadd.f32 %v3865, %v83
    %v3867 = vsel %vm180, %v3866, -inf
    %3868 = vmax.xlane.f32.xlu0 %v3867
    %v3869 = vpop.xlane.xlu0 %3868
    %v3870 = vsub.f32 %v3866, %v3869
    %v3871 = vmul.f32 %v3870, 1.442695
    %v3872 = vpow.pop %v3871
    %v3873 = vsel %vm180, %v3872, 0.0
    %3874 = vadd.xlane.f32.xlu0 %v3873
    %v3875 = vpop.xlane.xlu0 %3874
    %v3876 = vrcp.pop %v3875
    %v3877 = vmul.f32 %v3872, %v3876
    %3878 = vrot.lane.b32.xlu0 %v3780, 64
    %v3879 = vpop.permute.xlu0 %3878
    %v3882 = vsel %vm180, %v3877, 0
    %3884 = vmatprep.subr.mxu0 0.0
    %3885 = vmatpush1.msra.mxu0 %v3879
    %3886 = vmatprep.subr.mxu0 0.0
    %3887 = vmatpush1.msra.mxu0 0.0
    %3888 = vmatprep.subr.mxu0 0.0
    %3889 = vmatpush1.msra.mxu0 0.0
    %3890 = vmatprep.subr.mxu0 0.0
    %3891 = vmatpush1.msra.mxu0 0.0
    %3892 = vmatprep.subr.mxu0 0.0
    %3893 = vmatpush1.msra.mxu0 0.0
    %3894 = vmatprep.subr.mxu0 0.0
    %3895 = vmatpush1.msra.mxu0 0.0
    %3896 = vmatprep.subr.mxu0 0.0
    %3897 = vmatpush1.msra.mxu0 0.0
    %3898 = vmatprep.subr.mxu0 0.0
    %3899 = vmatpush1.msra.mxu0 0.0
    %3900 = vmatprep.subr.mxu0 0.0
    %3901 = vmatpush1.msra.mxu0 0.0
    %3902 = vmatprep.subr.mxu0 0.0
    %3903 = vmatpush1.msra.mxu0 0.0
    %3904 = vmatprep.subr.mxu0 0.0
    %3905 = vmatpush1.msra.mxu0 0.0
    %3906 = vmatprep.subr.mxu0 0.0
    %3907 = vmatpush1.msra.mxu0 0.0
    %3908 = vmatprep.subr.mxu0 0.0
    %3909 = vmatpush1.msra.mxu0 0.0
    %3910 = vmatprep.subr.mxu0 0.0
    %3911 = vmatpush1.msra.mxu0 0.0
    %3912 = vmatprep.subr.mxu0 0.0
    %3913 = vmatpush1.msra.mxu0 0.0
    %3914 = vmatprep.subr.mxu0 0.0
    %3915 = vmatpush1.msra.mxu0 0.0
    %3916 = vmatprep.subr.mxu0 0.0
    %3917 = vmatpush1.msra.mxu0 0.0
    %3918 = vmatprep.subr.mxu0 0.0
    %3919 = vmatpush1.msra.mxu0 0.0
    %3920 = vmatprep.subr.mxu0 0.0
    %3921 = vmatpush1.msra.mxu0 0.0
    %3922 = vmatprep.subr.mxu0 0.0
    %3923 = vmatpush1.msra.mxu0 0.0
    %3924 = vmatprep.subr.mxu0 0.0
    %3925 = vmatpush1.msra.mxu0 0.0
    %3926 = vmatprep.subr.mxu0 0.0
    %3927 = vmatpush1.msra.mxu0 0.0
    %3928 = vmatprep.subr.mxu0 0.0
    %3929 = vmatpush1.msra.mxu0 0.0
    %3930 = vmatprep.subr.mxu0 0.0
    %3931 = vmatpush1.msra.mxu0 0.0
    %3932 = vmatprep.subr.mxu0 0.0
    %3933 = vmatpush1.msra.mxu0 0.0
    %3934 = vmatprep.subr.mxu0 0.0
    %3935 = vmatpush1.msra.mxu0 0.0
    %3936 = vmatprep.subr.mxu0 0.0
    %3937 = vmatpush1.msra.mxu0 0.0
    %3938 = vmatprep.subr.mxu0 0.0
    %3939 = vmatpush1.msra.mxu0 0.0
    %3940 = vmatprep.subr.mxu0 0.0
    %3941 = vmatpush1.msra.mxu0 0.0
    %3942 = vmatprep.subr.mxu0 0.0
    %3943 = vmatpush1.msra.mxu0 0.0
    %3944 = vmatprep.subr.mxu0 0.0
    %3945 = vmatpush1.msra.mxu0 0.0
    %3946 = vmatprep.subr.mxu0 0.0
    %3947 = vmatpush1.msra.mxu0 0.0
    %3948 = vmatprep.mubr.f32.mxu0 0.0
    %3949 = vmatmul.mubr.f32.gmra.mrb[0].mxu0 %v3882
    %v3950 = vpop.f32.mrb[0].mxu0
    %v3951 = vadd.f32 0.0, %v3950
    %v3952 = vpop.f32.mrb[0].mxu0
    %3953 = vdwg.mxu0
    %3954 = vst.msk [vmem:[#allocation2] sm:$0xff] %vm180, %v3951
    %3955 = vrot.lane.b32.xlu0 %v3780, 120
    %v3956 = vpop.permute.xlu0 %3955
    %3957 = vrot.lane.b32.xlu0 %v3780, 88
    %v3958 = vpop.permute.xlu0 %3957
    %v3959 = vsel %vm180, %v3956, 0
    %v3961 = vsel %vm180, %v3958, 0
    %3963 = vmatprep.subr.mxu0 0.0
    %3964 = vmatpush1.xpose.msra.mxu0 %v3961
    %3965 = vmatprep.subr.mxu0 0.0
    %3966 = vmatpush1.xpose.msra.mxu0 0.0
    %3967 = vmatprep.subr.mxu0 0.0
    %3968 = vmatpush1.xpose.msra.mxu0 0.0
    %3969 = vmatprep.subr.mxu0 0.0
    %3970 = vmatpush1.xpose.msra.mxu0 0.0
    %3971 = vmatprep.subr.mxu0 0.0
    %3972 = vmatpush1.xpose.msra.mxu0 0.0
    %3973 = vmatprep.subr.mxu0 0.0
    %3974 = vmatpush1.xpose.msra.mxu0 0.0
    %3975 = vmatprep.subr.mxu0 0.0
    %3976 = vmatpush1.xpose.msra.mxu0 0.0
    %3977 = vmatprep.subr.mxu0 0.0
    %3978 = vmatpush1.xpose.msra.mxu0 0.0
    %3979 = vmatprep.subr.mxu0 0.0
    %3980 = vmatpush1.xpose.msra.mxu0 0.0
    %3981 = vmatprep.subr.mxu0 0.0
    %3982 = vmatpush1.xpose.msra.mxu0 0.0
    %3983 = vmatprep.subr.mxu0 0.0
    %3984 = vmatpush1.xpose.msra.mxu0 0.0
    %3985 = vmatprep.subr.mxu0 0.0
    %3986 = vmatpush1.xpose.msra.mxu0 0.0
    %3987 = vmatprep.subr.mxu0 0.0
    %3988 = vmatpush1.xpose.msra.mxu0 0.0
    %3989 = vmatprep.subr.mxu0 0.0
    %3990 = vmatpush1.xpose.msra.mxu0 0.0
    %3991 = vmatprep.subr.mxu0 0.0
    %3992 = vmatpush1.xpose.msra.mxu0 0.0
    %3993 = vmatprep.subr.mxu0 0.0
    %3994 = vmatpush1.xpose.msra.mxu0 0.0
    %3995 = vmatprep.subr.mxu0 0.0
    %3996 = vmatpush1.xpose.msra.mxu0 0.0
    %3997 = vmatprep.subr.mxu0 0.0
    %3998 = vmatpush1.xpose.msra.mxu0 0.0
    %3999 = vmatprep.subr.mxu0 0.0
    %4000 = vmatpush1.xpose.msra.mxu0 0.0
    %4001 = vmatprep.subr.mxu0 0.0
    %4002 = vmatpush1.xpose.msra.mxu0 0.0
    %4003 = vmatprep.subr.mxu0 0.0
    %4004 = vmatpush1.xpose.msra.mxu0 0.0
    %4005 = vmatprep.subr.mxu0 0.0
    %4006 = vmatpush1.xpose.msra.mxu0 0.0
    %4007 = vmatprep.subr.mxu0 0.0
    %4008 = vmatpush1.xpose.msra.mxu0 0.0
    %4009 = vmatprep.subr.mxu0 0.0
    %4010 = vmatpush1.xpose.msra.mxu0 0.0
    %4011 = vmatprep.subr.mxu0 0.0
    %4012 = vmatpush1.xpose.msra.mxu0 0.0
    %4013 = vmatprep.subr.mxu0 0.0
    %4014 = vmatpush1.xpose.msra.mxu0 0.0
    %4015 = vmatprep.subr.mxu0 0.0
    %4016 = vmatpush1.xpose.msra.mxu0 0.0
    %4017 = vmatprep.subr.mxu0 0.0
    %4018 = vmatpush1.xpose.msra.mxu0 0.0
    %4019 = vmatprep.subr.mxu0 0.0
    %4020 = vmatpush1.xpose.msra.mxu0 0.0
    %4021 = vmatprep.subr.mxu0 0.0
    %4022 = vmatpush1.xpose.msra.mxu0 0.0
    %4023 = vmatprep.subr.mxu0 0.0
    %4024 = vmatpush1.xpose.msra.mxu0 0.0
    %4025 = vmatprep.subr.mxu0 0.0
    %4026 = vmatpush1.xpose.msra.mxu0 0.0
    %4027 = vmatprep.mubr.f32.mxu0 0.0
    %4028 = vmatmul.mubr.f32.gmra.mrb[0].mxu0 %v3959
    %v4029 = vpop.f32.mrb[0].mxu0
    %v4030 = vadd.f32 0.0, %v4029
    %v4031 = vpop.f32.mrb[0].mxu0
    %4032 = vdwg.mxu0
    %v4033 = vmul.f32 %v4030, 0.35355338
    %v4034 = vadd.f32 %v4033, %v83
    %v4035 = vsel %vm180, %v4034, -inf
    %4036 = vmax.xlane.f32.xlu0 %v4035
    %v4037 = vpop.xlane.xlu0 %4036
    %v4038 = vsub.f32 %v4034, %v4037
    %v4039 = vmul.f32 %v4038, 1.442695
    %v4040 = vpow.pop %v4039
    %v4041 = vsel %vm180, %v4040, 0.0
    %4042 = vadd.xlane.f32.xlu0 %v4041
    %v4043 = vpop.xlane.xlu0 %4042
    %v4044 = vrcp.pop %v4043
    %v4045 = vmul.f32 %v4040, %v4044
    %4046 = vrot.lane.b32.xlu0 %v3780, 56
    %v4047 = vpop.permute.xlu0 %4046
    %v4050 = vsel %vm180, %v4045, 0
    %4052 = vmatprep.subr.mxu0 0.0
    %4053 = vmatpush1.msra.mxu0 %v4047
    %4054 = vmatprep.subr.mxu0 0.0
    %4055 = vmatpush1.msra.mxu0 0.0
    %4056 = vmatprep.subr.mxu0 0.0
    %4057 = vmatpush1.msra.mxu0 0.0
    %4058 = vmatprep.subr.mxu0 0.0
    %4059 = vmatpush1.msra.mxu0 0.0
    %4060 = vmatprep.subr.mxu0 0.0
    %4061 = vmatpush1.msra.mxu0 0.0
    %4062 = vmatprep.subr.mxu0 0.0
    %4063 = vmatpush1.msra.mxu0 0.0
    %4064 = vmatprep.subr.mxu0 0.0
    %4065 = vmatpush1.msra.mxu0 0.0
    %4066 = vmatprep.subr.mxu0 0.0
    %4067 = vmatpush1.msra.mxu0 0.0
    %4068 = vmatprep.subr.mxu0 0.0
    %4069 = vmatpush1.msra.mxu0 0.0
    %4070 = vmatprep.subr.mxu0 0.0
    %4071 = vmatpush1.msra.mxu0 0.0
    %4072 = vmatprep.subr.mxu0 0.0
    %4073 = vmatpush1.msra.mxu0 0.0
    %4074 = vmatprep.subr.mxu0 0.0
    %4075 = vmatpush1.msra.mxu0 0.0
    %4076 = vmatprep.subr.mxu0 0.0
    %4077 = vmatpush1.msra.mxu0 0.0
    %4078 = vmatprep.subr.mxu0 0.0
    %4079 = vmatpush1.msra.mxu0 0.0
    %4080 = vmatprep.subr.mxu0 0.0
    %4081 = vmatpush1.msra.mxu0 0.0
    %4082 = vmatprep.subr.mxu0 0.0
    %4083 = vmatpush1.msra.mxu0 0.0
    %4084 = vmatprep.subr.mxu0 0.0
    %4085 = vmatpush1.msra.mxu0 0.0
    %4086 = vmatprep.subr.mxu0 0.0
    %4087 = vmatpush1.msra.mxu0 0.0
    %4088 = vmatprep.subr.mxu0 0.0
    %4089 = vmatpush1.msra.mxu0 0.0
    %4090 = vmatprep.subr.mxu0 0.0
    %4091 = vmatpush1.msra.mxu0 0.0
    %4092 = vmatprep.subr.mxu0 0.0
    %4093 = vmatpush1.msra.mxu0 0.0
    %4094 = vmatprep.subr.mxu0 0.0
    %4095 = vmatpush1.msra.mxu0 0.0
    %4096 = vmatprep.subr.mxu0 0.0
    %4097 = vmatpush1.msra.mxu0 0.0
    %4098 = vmatprep.subr.mxu0 0.0
    %4099 = vmatpush1.msra.mxu0 0.0
    %4100 = vmatprep.subr.mxu0 0.0
    %4101 = vmatpush1.msra.mxu0 0.0
    %4102 = vmatprep.subr.mxu0 0.0
    %4103 = vmatpush1.msra.mxu0 0.0
    %4104 = vmatprep.subr.mxu0 0.0
    %4105 = vmatpush1.msra.mxu0 0.0
    %4106 = vmatprep.subr.mxu0 0.0
    %4107 = vmatpush1.msra.mxu0 0.0
    %4108 = vmatprep.subr.mxu0 0.0
    %4109 = vmatpush1.msra.mxu0 0.0
    %4110 = vmatprep.subr.mxu0 0.0
    %4111 = vmatpush1.msra.mxu0 0.0
    %4112 = vmatprep.subr.mxu0 0.0
    %4113 = vmatpush1.msra.mxu0 0.0
    %4114 = vmatprep.subr.mxu0 0.0
    %4115 = vmatpush1.msra.mxu0 0.0
    %4116 = vmatprep.mubr.f32.mxu0 0.0
    %4117 = vmatmul.mubr.f32.gmra.mrb[0].mxu0 %v4050
    %v4118 = vpop.f32.mrb[0].mxu0
    %v4119 = vadd.f32 0.0, %v4118
    %v4120 = vpop.f32.mrb[0].mxu0
    %4121 = vdwg.mxu0
    %4123 = vrot.lane.b32.xlu0 %v4119, 8
    %v4124 = vpop.permute.xlu0 %4123
    %4126 = vst.msk [vmem:[#allocation2] sm:$0xff] %vm516, %v4124
    %4127 = vrot.lane.b32.xlu0 %v3780, 112
    %v4128 = vpop.permute.xlu0 %4127
    %4129 = vrot.lane.b32.xlu0 %v3780, 80
    %v4130 = vpop.permute.xlu0 %4129
    %v4131 = vsel %vm180, %v4128, 0
    %v4133 = vsel %vm180, %v4130, 0
    %4135 = vmatprep.subr.mxu0 0.0
    %4136 = vmatpush1.xpose.msra.mxu0 %v4133
    %4137 = vmatprep.subr.mxu0 0.0
    %4138 = vmatpush1.xpose.msra.mxu0 0.0
    %4139 = vmatprep.subr.mxu0 0.0
    %4140 = vmatpush1.xpose.msra.mxu0 0.0
    %4141 = vmatprep.subr.mxu0 0.0
    %4142 = vmatpush1.xpose.msra.mxu0 0.0
    %4143 = vmatprep.subr.mxu0 0.0
    %4144 = vmatpush1.xpose.msra.mxu0 0.0
    %4145 = vmatprep.subr.mxu0 0.0
    %4146 = vmatpush1.xpose.msra.mxu0 0.0
    %4147 = vmatprep.subr.mxu0 0.0
    %4148 = vmatpush1.xpose.msra.mxu0 0.0
    %4149 = vmatprep.subr.mxu0 0.0
    %4150 = vmatpush1.xpose.msra.mxu0 0.0
    %4151 = vmatprep.subr.mxu0 0.0
    %4152 = vmatpush1.xpose.msra.mxu0 0.0
    %4153 = vmatprep.subr.mxu0 0.0
    %4154 = vmatpush1.xpose.msra.mxu0 0.0
    %4155 = vmatprep.subr.mxu0 0.0
    %4156 = vmatpush1.xpose.msra.mxu0 0.0
    %4157 = vmatprep.subr.mxu0 0.0
    %4158 = vmatpush1.xpose.msra.mxu0 0.0
    %4159 = vmatprep.subr.mxu0 0.0
    %4160 = vmatpush1.xpose.msra.mxu0 0.0
    %4161 = vmatprep.subr.mxu0 0.0
    %4162 = vmatpush1.xpose.msra.mxu0 0.0
    %4163 = vmatprep.subr.mxu0 0.0
    %4164 = vmatpush1.xpose.msra.mxu0 0.0
    %4165 = vmatprep.subr.mxu0 0.0
    %4166 = vmatpush1.xpose.msra.mxu0 0.0
    %4167 = vmatprep.subr.mxu0 0.0
    %4168 = vmatpush1.xpose.msra.mxu0 0.0
    %4169 = vmatprep.subr.mxu0 0.0
    %4170 = vmatpush1.xpose.msra.mxu0 0.0
    %4171 = vmatprep.subr.mxu0 0.0
    %4172 = vmatpush1.xpose.msra.mxu0 0.0
    %4173 = vmatprep.subr.mxu0 0.0
    %4174 = vmatpush1.xpose.msra.mxu0 0.0
    %4175 = vmatprep.subr.mxu0 0.0
    %4176 = vmatpush1.xpose.msra.mxu0 0.0
    %4177 = vmatprep.subr.mxu0 0.0
    %4178 = vmatpush1.xpose.msra.mxu0 0.0
    %4179 = vmatprep.subr.mxu0 0.0
    %4180 = vmatpush1.xpose.msra.mxu0 0.0
    %4181 = vmatprep.subr.mxu0 0.0
    %4182 = vmatpush1.xpose.msra.mxu0 0.0
    %4183 = vmatprep.subr.mxu0 0.0
    %4184 = vmatpush1.xpose.msra.mxu0 0.0
    %4185 = vmatprep.subr.mxu0 0.0
    %4186 = vmatpush1.xpose.msra.mxu0 0.0
    %4187 = vmatprep.subr.mxu0 0.0
    %4188 = vmatpush1.xpose.msra.mxu0 0.0
    %4189 = vmatprep.subr.mxu0 0.0
    %4190 = vmatpush1.xpose.msra.mxu0 0.0
    %4191 = vmatprep.subr.mxu0 0.0
    %4192 = vmatpush1.xpose.msra.mxu0 0.0
    %4193 = vmatprep.subr.mxu0 0.0
    %4194 = vmatpush1.xpose.msra.mxu0 0.0
    %4195 = vmatprep.subr.mxu0 0.0
    %4196 = vmatpush1.xpose.msra.mxu0 0.0
    %4197 = vmatprep.subr.mxu0 0.0
    %4198 = vmatpush1.xpose.msra.mxu0 0.0
    %4199 = vmatprep.mubr.f32.mxu0 0.0
    %4200 = vmatmul.mubr.f32.gmra.mrb[0].mxu0 %v4131
    %v4201 = vpop.f32.mrb[0].mxu0
    %v4202 = vadd.f32 0.0, %v4201
    %v4203 = vpop.f32.mrb[0].mxu0
    %4204 = vdwg.mxu0
    %v4205 = vmul.f32 %v4202, 0.35355338
    %v4206 = vadd.f32 %v4205, %v83
    %v4207 = vsel %vm180, %v4206, -inf
    %4208 = vmax.xlane.f32.xlu0 %v4207
    %v4209 = vpop.xlane.xlu0 %4208
    %v4210 = vsub.f32 %v4206, %v4209
    %v4211 = vmul.f32 %v4210, 1.442695
    %v4212 = vpow.pop %v4211
    %v4213 = vsel %vm180, %v4212, 0.0
    %4214 = vadd.xlane.f32.xlu0 %v4213
    %v4215 = vpop.xlane.xlu0 %4214
    %v4216 = vrcp.pop %v4215
    %v4217 = vmul.f32 %v4212, %v4216
    %4218 = vrot.lane.b32.xlu0 %v3780, 48
    %v4219 = vpop.permute.xlu0 %4218
    %v4222 = vsel %vm180, %v4217, 0
    %4224 = vmatprep.subr.mxu0 0.0
    %4225 = vmatpush1.msra.mxu0 %v4219
    %4226 = vmatprep.subr.mxu0 0.0
    %4227 = vmatpush1.msra.mxu0 0.0
    %4228 = vmatprep.subr.mxu0 0.0
    %4229 = vmatpush1.msra.mxu0 0.0
    %4230 = vmatprep.subr.mxu0 0.0
    %4231 = vmatpush1.msra.mxu0 0.0
    %4232 = vmatprep.subr.mxu0 0.0
    %4233 = vmatpush1.msra.mxu0 0.0
    %4234 = vmatprep.subr.mxu0 0.0
    %4235 = vmatpush1.msra.mxu0 0.0
    %4236 = vmatprep.subr.mxu0 0.0
    %4237 = vmatpush1.msra.mxu0 0.0
    %4238 = vmatprep.subr.mxu0 0.0
    %4239 = vmatpush1.msra.mxu0 0.0
    %4240 = vmatprep.subr.mxu0 0.0
    %4241 = vmatpush1.msra.mxu0 0.0
    %4242 = vmatprep.subr.mxu0 0.0
    %4243 = vmatpush1.msra.mxu0 0.0
    %4244 = vmatprep.subr.mxu0 0.0
    %4245 = vmatpush1.msra.mxu0 0.0
    %4246 = vmatprep.subr.mxu0 0.0
    %4247 = vmatpush1.msra.mxu0 0.0
    %4248 = vmatprep.subr.mxu0 0.0
    %4249 = vmatpush1.msra.mxu0 0.0
    %4250 = vmatprep.subr.mxu0 0.0
    %4251 = vmatpush1.msra.mxu0 0.0
    %4252 = vmatprep.subr.mxu0 0.0
    %4253 = vmatpush1.msra.mxu0 0.0
    %4254 = vmatprep.subr.mxu0 0.0
    %4255 = vmatpush1.msra.mxu0 0.0
    %4256 = vmatprep.subr.mxu0 0.0
    %4257 = vmatpush1.msra.mxu0 0.0
    %4258 = vmatprep.subr.mxu0 0.0
    %4259 = vmatpush1.msra.mxu0 0.0
    %4260 = vmatprep.subr.mxu0 0.0
    %4261 = vmatpush1.msra.mxu0 0.0
    %4262 = vmatprep.subr.mxu0 0.0
    %4263 = vmatpush1.msra.mxu0 0.0
    %4264 = vmatprep.subr.mxu0 0.0
    %4265 = vmatpush1.msra.mxu0 0.0
    %4266 = vmatprep.subr.mxu0 0.0
    %4267 = vmatpush1.msra.mxu0 0.0
    %4268 = vmatprep.subr.mxu0 0.0
    %4269 = vmatpush1.msra.mxu0 0.0
    %4270 = vmatprep.subr.mxu0 0.0
    %4271 = vmatpush1.msra.mxu0 0.0
    %4272 = vmatprep.subr.mxu0 0.0
    %4273 = vmatpush1.msra.mxu0 0.0
    %4274 = vmatprep.subr.mxu0 0.0
    %4275 = vmatpush1.msra.mxu0 0.0
    %4276 = vmatprep.subr.mxu0 0.0
    %4277 = vmatpush1.msra.mxu0 0.0
    %4278 = vmatprep.subr.mxu0 0.0
    %4279 = vmatpush1.msra.mxu0 0.0
    %4280 = vmatprep.subr.mxu0 0.0
    %4281 = vmatpush1.msra.mxu0 0.0
    %4282 = vmatprep.subr.mxu0 0.0
    %4283 = vmatpush1.msra.mxu0 0.0
    %4284 = vmatprep.subr.mxu0 0.0
    %4285 = vmatpush1.msra.mxu0 0.0
    %4286 = vmatprep.subr.mxu0 0.0
    %4287 = vmatpush1.msra.mxu0 0.0
    %4288 = vmatprep.mubr.f32.mxu0 0.0
    %4289 = vmatmul.mubr.f32.gmra.mrb[0].mxu0 %v4222
    %v4290 = vpop.f32.mrb[0].mxu0
    %v4291 = vadd.f32 0.0, %v4290
    %v4292 = vpop.f32.mrb[0].mxu0
    %4293 = vdwg.mxu0
    %4295 = vrot.lane.b32.xlu0 %v4291, 16
    %v4296 = vpop.permute.xlu0 %4295
    %4298 = vst.msk [vmem:[#allocation2] sm:$0xff] %vm689, %v4296
    %4299 = vrot.lane.b32.xlu0 %v3780, 104
    %v4300 = vpop.permute.xlu0 %4299
    %4301 = vrot.lane.b32.xlu0 %v3780, 72
    %v4302 = vpop.permute.xlu0 %4301
    %v4303 = vsel %vm180, %v4300, 0
    %v4305 = vsel %vm180, %v4302, 0
    %4307 = vmatprep.subr.mxu0 0.0
    %4308 = vmatpush1.xpose.msra.mxu0 %v4305
    %4309 = vmatprep.subr.mxu0 0.0
    %4310 = vmatpush1.xpose.msra.mxu0 0.0
    %4311 = vmatprep.subr.mxu0 0.0
    %4312 = vmatpush1.xpose.msra.mxu0 0.0
    %4313 = vmatprep.subr.mxu0 0.0
    %4314 = vmatpush1.xpose.msra.mxu0 0.0
    %4315 = vmatprep.subr.mxu0 0.0
    %4316 = vmatpush1.xpose.msra.mxu0 0.0
    %4317 = vmatprep.subr.mxu0 0.0
    %4318 = vmatpush1.xpose.msra.mxu0 0.0
    %4319 = vmatprep.subr.mxu0 0.0
    %4320 = vmatpush1.xpose.msra.mxu0 0.0
    %4321 = vmatprep.subr.mxu0 0.0
    %4322 = vmatpush1.xpose.msra.mxu0 0.0
    %4323 = vmatprep.subr.mxu0 0.0
    %4324 = vmatpush1.xpose.msra.mxu0 0.0
    %4325 = vmatprep.subr.mxu0 0.0
    %4326 = vmatpush1.xpose.msra.mxu0 0.0
    %4327 = vmatprep.subr.mxu0 0.0
    %4328 = vmatpush1.xpose.msra.mxu0 0.0
    %4329 = vmatprep.subr.mxu0 0.0
    %4330 = vmatpush1.xpose.msra.mxu0 0.0
    %4331 = vmatprep.subr.mxu0 0.0
    %4332 = vmatpush1.xpose.msra.mxu0 0.0
    %4333 = vmatprep.subr.mxu0 0.0
    %4334 = vmatpush1.xpose.msra.mxu0 0.0
    %4335 = vmatprep.subr.mxu0 0.0
    %4336 = vmatpush1.xpose.msra.mxu0 0.0
    %4337 = vmatprep.subr.mxu0 0.0
    %4338 = vmatpush1.xpose.msra.mxu0 0.0
    %4339 = vmatprep.subr.mxu0 0.0
    %4340 = vmatpush1.xpose.msra.mxu0 0.0
    %4341 = vmatprep.subr.mxu0 0.0
    %4342 = vmatpush1.xpose.msra.mxu0 0.0
    %4343 = vmatprep.subr.mxu0 0.0
    %4344 = vmatpush1.xpose.msra.mxu0 0.0
    %4345 = vmatprep.subr.mxu0 0.0
    %4346 = vmatpush1.xpose.msra.mxu0 0.0
    %4347 = vmatprep.subr.mxu0 0.0
    %4348 = vmatpush1.xpose.msra.mxu0 0.0
    %4349 = vmatprep.subr.mxu0 0.0
    %4350 = vmatpush1.xpose.msra.mxu0 0.0
    %4351 = vmatprep.subr.mxu0 0.0
    %4352 = vmatpush1.xpose.msra.mxu0 0.0
    %4353 = vmatprep.subr.mxu0 0.0
    %4354 = vmatpush1.xpose.msra.mxu0 0.0
    %4355 = vmatprep.subr.mxu0 0.0
    %4356 = vmatpush1.xpose.msra.mxu0 0.0
    %4357 = vmatprep.subr.mxu0 0.0
    %4358 = vmatpush1.xpose.msra.mxu0 0.0
    %4359 = vmatprep.subr.mxu0 0.0
    %4360 = vmatpush1.xpose.msra.mxu0 0.0
    %4361 = vmatprep.subr.mxu0 0.0
    %4362 = vmatpush1.xpose.msra.mxu0 0.0
    %4363 = vmatprep.subr.mxu0 0.0
    %4364 = vmatpush1.xpose.msra.mxu0 0.0
    %4365 = vmatprep.subr.mxu0 0.0
    %4366 = vmatpush1.xpose.msra.mxu0 0.0
    %4367 = vmatprep.subr.mxu0 0.0
    %4368 = vmatpush1.xpose.msra.mxu0 0.0
    %4369 = vmatprep.subr.mxu0 0.0
    %4370 = vmatpush1.xpose.msra.mxu0 0.0
    %4371 = vmatprep.mubr.f32.mxu0 0.0
    %4372 = vmatmul.mubr.f32.gmra.mrb[0].mxu0 %v4303
    %v4373 = vpop.f32.mrb[0].mxu0
    %v4374 = vadd.f32 0.0, %v4373
    %v4375 = vpop.f32.mrb[0].mxu0
    %4376 = vdwg.mxu0
    %v4377 = vmul.f32 %v4374, 0.35355338
    %v4378 = vadd.f32 %v4377, %v83
    %v4379 = vsel %vm180, %v4378, -inf
    %4380 = vmax.xlane.f32.xlu0 %v4379
    %v4381 = vpop.xlane.xlu0 %4380
    %v4382 = vsub.f32 %v4378, %v4381
    %v4383 = vmul.f32 %v4382, 1.442695
    %v4384 = vpow.pop %v4383
    %v4385 = vsel %vm180, %v4384, 0.0
    %4386 = vadd.xlane.f32.xlu0 %v4385
    %v4387 = vpop.xlane.xlu0 %4386
    %v4388 = vrcp.pop %v4387
    %v4389 = vmul.f32 %v4384, %v4388
    %4390 = vrot.lane.b32.xlu0 %v3780, 40
    %v4391 = vpop.permute.xlu0 %4390
    %v4394 = vsel %vm180, %v4389, 0
    %4396 = vmatprep.subr.mxu0 0.0
    %4397 = vmatpush1.msra.mxu0 %v4391
    %4398 = vmatprep.subr.mxu0 0.0
    %4399 = vmatpush1.msra.mxu0 0.0
    %4400 = vmatprep.subr.mxu0 0.0
    %4401 = vmatpush1.msra.mxu0 0.0
    %4402 = vmatprep.subr.mxu0 0.0
    %4403 = vmatpush1.msra.mxu0 0.0
    %4404 = vmatprep.subr.mxu0 0.0
    %4405 = vmatpush1.msra.mxu0 0.0
    %4406 = vmatprep.subr.mxu0 0.0
    %4407 = vmatpush1.msra.mxu0 0.0
    %4408 = vmatprep.subr.mxu0 0.0
    %4409 = vmatpush1.msra.mxu0 0.0
    %4410 = vmatprep.subr.mxu0 0.0
    %4411 = vmatpush1.msra.mxu0 0.0
    %4412 = vmatprep.subr.mxu0 0.0
    %4413 = vmatpush1.msra.mxu0 0.0
    %4414 = vmatprep.subr.mxu0 0.0
    %4415 = vmatpush1.msra.mxu0 0.0
    %4416 = vmatprep.subr.mxu0 0.0
    %4417 = vmatpush1.msra.mxu0 0.0
    %4418 = vmatprep.subr.mxu0 0.0
    %4419 = vmatpush1.msra.mxu0 0.0
    %4420 = vmatprep.subr.mxu0 0.0
    %4421 = vmatpush1.msra.mxu0 0.0
    %4422 = vmatprep.subr.mxu0 0.0
    %4423 = vmatpush1.msra.mxu0 0.0
    %4424 = vmatprep.subr.mxu0 0.0
    %4425 = vmatpush1.msra.mxu0 0.0
    %4426 = vmatprep.subr.mxu0 0.0
    %4427 = vmatpush1.msra.mxu0 0.0
    %4428 = vmatprep.subr.mxu0 0.0
    %4429 = vmatpush1.msra.mxu0 0.0
    %4430 = vmatprep.subr.mxu0 0.0
    %4431 = vmatpush1.msra.mxu0 0.0
    %4432 = vmatprep.subr.mxu0 0.0
    %4433 = vmatpush1.msra.mxu0 0.0
    %4434 = vmatprep.subr.mxu0 0.0
    %4435 = vmatpush1.msra.mxu0 0.0
    %4436 = vmatprep.subr.mxu0 0.0
    %4437 = vmatpush1.msra.mxu0 0.0
    %4438 = vmatprep.subr.mxu0 0.0
    %4439 = vmatpush1.msra.mxu0 0.0
    %4440 = vmatprep.subr.mxu0 0.0
    %4441 = vmatpush1.msra.mxu0 0.0
    %4442 = vmatprep.subr.mxu0 0.0
    %4443 = vmatpush1.msra.mxu0 0.0
    %4444 = vmatprep.subr.mxu0 0.0
    %4445 = vmatpush1.msra.mxu0 0.0
    %4446 = vmatprep.subr.mxu0 0.0
    %4447 = vmatpush1.msra.mxu0 0.0
    %4448 = vmatprep.subr.mxu0 0.0
    %4449 = vmatpush1.msra.mxu0 0.0
    %4450 = vmatprep.subr.mxu0 0.0
    %4451 = vmatpush1.msra.mxu0 0.0
    %4452 = vmatprep.subr.mxu0 0.0
    %4453 = vmatpush1.msra.mxu0 0.0
    %4454 = vmatprep.subr.mxu0 0.0
    %4455 = vmatpush1.msra.mxu0 0.0
    %4456 = vmatprep.subr.mxu0 0.0
    %4457 = vmatpush1.msra.mxu0 0.0
    %4458 = vmatprep.subr.mxu0 0.0
    %4459 = vmatpush1.msra.mxu0 0.0
    %4460 = vmatprep.mubr.f32.mxu0 0.0
    %4461 = vmatmul.mubr.f32.gmra.mrb[0].mxu0 %v4394
    %v4462 = vpop.f32.mrb[0].mxu0
    %v4463 = vadd.f32 0.0, %v4462
    %v4464 = vpop.f32.mrb[0].mxu0
    %4465 = vdwg.mxu0
    %4467 = vrot.lane.b32.xlu0 %v4463, 24
    %v4468 = vpop.permute.xlu0 %4467
    %4470 = vst.msk [vmem:[#allocation2] sm:$0xff] %vm862, %v4468
    %4472 = vrot.lane.b32.xlu0 %v3785, 96
    %v4473 = vpop.permute.xlu0 %4472
    %v4474 = vsel %vm180, %v3785, 0
    %v4476 = vsel %vm180, %v4473, 0
    %4478 = vmatprep.subr.mxu0 0.0
    %4479 = vmatpush1.xpose.msra.mxu0 %v4476
    %4480 = vmatprep.subr.mxu0 0.0
    %4481 = vmatpush1.xpose.msra.mxu0 0.0
    %4482 = vmatprep.subr.mxu0 0.0
    %4483 = vmatpush1.xpose.msra.mxu0 0.0
    %4484 = vmatprep.subr.mxu0 0.0
    %4485 = vmatpush1.xpose.msra.mxu0 0.0
    %4486 = vmatprep.subr.mxu0 0.0
    %4487 = vmatpush1.xpose.msra.mxu0 0.0
    %4488 = vmatprep.subr.mxu0 0.0
    %4489 = vmatpush1.xpose.msra.mxu0 0.0
    %4490 = vmatprep.subr.mxu0 0.0
    %4491 = vmatpush1.xpose.msra.mxu0 0.0
    %4492 = vmatprep.subr.mxu0 0.0
    %4493 = vmatpush1.xpose.msra.mxu0 0.0
    %4494 = vmatprep.subr.mxu0 0.0
    %4495 = vmatpush1.xpose.msra.mxu0 0.0
    %4496 = vmatprep.subr.mxu0 0.0
    %4497 = vmatpush1.xpose.msra.mxu0 0.0
    %4498 = vmatprep.subr.mxu0 0.0
    %4499 = vmatpush1.xpose.msra.mxu0 0.0
    %4500 = vmatprep.subr.mxu0 0.0
    %4501 = vmatpush1.xpose.msra.mxu0 0.0
    %4502 = vmatprep.subr.mxu0 0.0
    %4503 = vmatpush1.xpose.msra.mxu0 0.0
    %4504 = vmatprep.subr.mxu0 0.0
    %4505 = vmatpush1.xpose.msra.mxu0 0.0
    %4506 = vmatprep.subr.mxu0 0.0
    %4507 = vmatpush1.xpose.msra.mxu0 0.0
    %4508 = vmatprep.subr.mxu0 0.0
    %4509 = vmatpush1.xpose.msra.mxu0 0.0
    %4510 = vmatprep.subr.mxu0 0.0
    %4511 = vmatpush1.xpose.msra.mxu0 0.0
    %4512 = vmatprep.subr.mxu0 0.0
    %4513 = vmatpush1.xpose.msra.mxu0 0.0
    %4514 = vmatprep.subr.mxu0 0.0
    %4515 = vmatpush1.xpose.msra.mxu0 0.0
    %4516 = vmatprep.subr.mxu0 0.0
    %4517 = vmatpush1.xpose.msra.mxu0 0.0
    %4518 = vmatprep.subr.mxu0 0.0
    %4519 = vmatpush1.xpose.msra.mxu0 0.0
    %4520 = vmatprep.subr.mxu0 0.0
    %4521 = vmatpush1.xpose.msra.mxu0 0.0
    %4522 = vmatprep.subr.mxu0 0.0
    %4523 = vmatpush1.xpose.msra.mxu0 0.0
    %4524 = vmatprep.subr.mxu0 0.0
    %4525 = vmatpush1.xpose.msra.mxu0 0.0
    %4526 = vmatprep.subr.mxu0 0.0
    %4527 = vmatpush1.xpose.msra.mxu0 0.0
    %4528 = vmatprep.subr.mxu0 0.0
    %4529 = vmatpush1.xpose.msra.mxu0 0.0
    %4530 = vmatprep.subr.mxu0 0.0
    %4531 = vmatpush1.xpose.msra.mxu0 0.0
    %4532 = vmatprep.subr.mxu0 0.0
    %4533 = vmatpush1.xpose.msra.mxu0 0.0
    %4534 = vmatprep.subr.mxu0 0.0
    %4535 = vmatpush1.xpose.msra.mxu0 0.0
    %4536 = vmatprep.subr.mxu0 0.0
    %4537 = vmatpush1.xpose.msra.mxu0 0.0
    %4538 = vmatprep.subr.mxu0 0.0
    %4539 = vmatpush1.xpose.msra.mxu0 0.0
    %4540 = vmatprep.subr.mxu0 0.0
    %4541 = vmatpush1.xpose.msra.mxu0 0.0
    %4542 = vmatprep.mubr.f32.mxu0 0.0
    %4543 = vmatmul.mubr.f32.gmra.mrb[0].mxu0 %v4474
    %v4544 = vpop.f32.mrb[0].mxu0
    %v4545 = vadd.f32 0.0, %v4544
    %v4546 = vpop.f32.mrb[0].mxu0
    %4547 = vdwg.mxu0
    %v4548 = vmul.f32 %v4545, 0.35355338
    %v4549 = vadd.f32 %v4548, %v83
    %v4550 = vsel %vm180, %v4549, -inf
    %4551 = vmax.xlane.f32.xlu0 %v4550
    %v4552 = vpop.xlane.xlu0 %4551
    %v4553 = vsub.f32 %v4549, %v4552
    %v4554 = vmul.f32 %v4553, 1.442695
    %v4555 = vpow.pop %v4554
    %v4556 = vsel %vm180, %v4555, 0.0
    %4557 = vadd.xlane.f32.xlu0 %v4556
    %v4558 = vpop.xlane.xlu0 %4557
    %v4559 = vrcp.pop %v4558
    %v4560 = vmul.f32 %v4555, %v4559
    %4561 = vrot.lane.b32.xlu0 %v3785, 64
    %v4562 = vpop.permute.xlu0 %4561
    %v4565 = vsel %vm180, %v4560, 0
    %4567 = vmatprep.subr.mxu0 0.0
    %4568 = vmatpush1.msra.mxu0 %v4562
    %4569 = vmatprep.subr.mxu0 0.0
    %4570 = vmatpush1.msra.mxu0 0.0
    %4571 = vmatprep.subr.mxu0 0.0
    %4572 = vmatpush1.msra.mxu0 0.0
    %4573 = vmatprep.subr.mxu0 0.0
    %4574 = vmatpush1.msra.mxu0 0.0
    %4575 = vmatprep.subr.mxu0 0.0
    %4576 = vmatpush1.msra.mxu0 0.0
    %4577 = vmatprep.subr.mxu0 0.0
    %4578 = vmatpush1.msra.mxu0 0.0
    %4579 = vmatprep.subr.mxu0 0.0
    %4580 = vmatpush1.msra.mxu0 0.0
    %4581 = vmatprep.subr.mxu0 0.0
    %4582 = vmatpush1.msra.mxu0 0.0
    %4583 = vmatprep.subr.mxu0 0.0
    %4584 = vmatpush1.msra.mxu0 0.0
    %4585 = vmatprep.subr.mxu0 0.0
    %4586 = vmatpush1.msra.mxu0 0.0
    %4587 = vmatprep.subr.mxu0 0.0
    %4588 = vmatpush1.msra.mxu0 0.0
    %4589 = vmatprep.subr.mxu0 0.0
    %4590 = vmatpush1.msra.mxu0 0.0
    %4591 = vmatprep.subr.mxu0 0.0
    %4592 = vmatpush1.msra.mxu0 0.0
    %4593 = vmatprep.subr.mxu0 0.0
    %4594 = vmatpush1.msra.mxu0 0.0
    %4595 = vmatprep.subr.mxu0 0.0
    %4596 = vmatpush1.msra.mxu0 0.0
    %4597 = vmatprep.subr.mxu0 0.0
    %4598 = vmatpush1.msra.mxu0 0.0
    %4599 = vmatprep.subr.mxu0 0.0
    %4600 = vmatpush1.msra.mxu0 0.0
    %4601 = vmatprep.subr.mxu0 0.0
    %4602 = vmatpush1.msra.mxu0 0.0
    %4603 = vmatprep.subr.mxu0 0.0
    %4604 = vmatpush1.msra.mxu0 0.0
    %4605 = vmatprep.subr.mxu0 0.0
    %4606 = vmatpush1.msra.mxu0 0.0
    %4607 = vmatprep.subr.mxu0 0.0
    %4608 = vmatpush1.msra.mxu0 0.0
    %4609 = vmatprep.subr.mxu0 0.0
    %4610 = vmatpush1.msra.mxu0 0.0
    %4611 = vmatprep.subr.mxu0 0.0
    %4612 = vmatpush1.msra.mxu0 0.0
    %4613 = vmatprep.subr.mxu0 0.0
    %4614 = vmatpush1.msra.mxu0 0.0
    %4615 = vmatprep.subr.mxu0 0.0
    %4616 = vmatpush1.msra.mxu0 0.0
    %4617 = vmatprep.subr.mxu0 0.0
    %4618 = vmatpush1.msra.mxu0 0.0
    %4619 = vmatprep.subr.mxu0 0.0
    %4620 = vmatpush1.msra.mxu0 0.0
    %4621 = vmatprep.subr.mxu0 0.0
    %4622 = vmatpush1.msra.mxu0 0.0
    %4623 = vmatprep.subr.mxu0 0.0
    %4624 = vmatpush1.msra.mxu0 0.0
    %4625 = vmatprep.subr.mxu0 0.0
    %4626 = vmatpush1.msra.mxu0 0.0
    %4627 = vmatprep.subr.mxu0 0.0
    %4628 = vmatpush1.msra.mxu0 0.0
    %4629 = vmatprep.subr.mxu0 0.0
    %4630 = vmatpush1.msra.mxu0 0.0
    %4631 = vmatprep.mubr.f32.mxu0 0.0
    %4632 = vmatmul.mubr.f32.gmra.mrb[0].mxu0 %v4565
    %v4633 = vpop.f32.mrb[0].mxu0
    %v4634 = vadd.f32 0.0, %v4633
    %v4635 = vpop.f32.mrb[0].mxu0
    %4636 = vdwg.mxu0
    %4637 = vst.msk [vmem:[#allocation2 + $0x8] sm:$0xff] %vm180, %v4634
    %4638 = vrot.lane.b32.xlu0 %v3785, 120
    %v4639 = vpop.permute.xlu0 %4638
    %4640 = vrot.lane.b32.xlu0 %v3785, 88
    %v4641 = vpop.permute.xlu0 %4640
    %v4642 = vsel %vm180, %v4639, 0
    %v4644 = vsel %vm180, %v4641, 0
    %4646 = vmatprep.subr.mxu0 0.0
    %4647 = vmatpush1.xpose.msra.mxu0 %v4644
    %4648 = vmatprep.subr.mxu0 0.0
    %4649 = vmatpush1.xpose.msra.mxu0 0.0
    %4650 = vmatprep.subr.mxu0 0.0
    %4651 = vmatpush1.xpose.msra.mxu0 0.0
    %4652 = vmatprep.subr.mxu0 0.0
    %4653 = vmatpush1.xpose.msra.mxu0 0.0
    %4654 = vmatprep.subr.mxu0 0.0
    %4655 = vmatpush1.xpose.msra.mxu0 0.0
    %4656 = vmatprep.subr.mxu0 0.0
    %4657 = vmatpush1.xpose.msra.mxu0 0.0
    %4658 = vmatprep.subr.mxu0 0.0
    %4659 = vmatpush1.xpose.msra.mxu0 0.0
    %4660 = vmatprep.subr.mxu0 0.0
    %4661 = vmatpush1.xpose.msra.mxu0 0.0
    %4662 = vmatprep.subr.mxu0 0.0
    %4663 = vmatpush1.xpose.msra.mxu0 0.0
    %4664 = vmatprep.subr.mxu0 0.0
    %4665 = vmatpush1.xpose.msra.mxu0 0.0
    %4666 = vmatprep.subr.mxu0 0.0
    %4667 = vmatpush1.xpose.msra.mxu0 0.0
    %4668 = vmatprep.subr.mxu0 0.0
    %4669 = vmatpush1.xpose.msra.mxu0 0.0
    %4670 = vmatprep.subr.mxu0 0.0
    %4671 = vmatpush1.xpose.msra.mxu0 0.0
    %4672 = vmatprep.subr.mxu0 0.0
    %4673 = vmatpush1.xpose.msra.mxu0 0.0
    %4674 = vmatprep.subr.mxu0 0.0
    %4675 = vmatpush1.xpose.msra.mxu0 0.0
    %4676 = vmatprep.subr.mxu0 0.0
    %4677 = vmatpush1.xpose.msra.mxu0 0.0
    %4678 = vmatprep.subr.mxu0 0.0
    %4679 = vmatpush1.xpose.msra.mxu0 0.0
    %4680 = vmatprep.subr.mxu0 0.0
    %4681 = vmatpush1.xpose.msra.mxu0 0.0
    %4682 = vmatprep.subr.mxu0 0.0
    %4683 = vmatpush1.xpose.msra.mxu0 0.0
    %4684 = vmatprep.subr.mxu0 0.0
    %4685 = vmatpush1.xpose.msra.mxu0 0.0
    %4686 = vmatprep.subr.mxu0 0.0
    %4687 = vmatpush1.xpose.msra.mxu0 0.0
    %4688 = vmatprep.subr.mxu0 0.0
    %4689 = vmatpush1.xpose.msra.mxu0 0.0
    %4690 = vmatprep.subr.mxu0 0.0
    %4691 = vmatpush1.xpose.msra.mxu0 0.0
    %4692 = vmatprep.subr.mxu0 0.0
    %4693 = vmatpush1.xpose.msra.mxu0 0.0
    %4694 = vmatprep.subr.mxu0 0.0
    %4695 = vmatpush1.xpose.msra.mxu0 0.0
    %4696 = vmatprep.subr.mxu0 0.0
    %4697 = vmatpush1.xpose.msra.mxu0 0.0
    %4698 = vmatprep.subr.mxu0 0.0
    %4699 = vmatpush1.xpose.msra.mxu0 0.0
    %4700 = vmatprep.subr.mxu0 0.0
    %4701 = vmatpush1.xpose.msra.mxu0 0.0
    %4702 = vmatprep.subr.mxu0 0.0
    %4703 = vmatpush1.xpose.msra.mxu0 0.0
    %4704 = vmatprep.subr.mxu0 0.0
    %4705 = vmatpush1.xpose.msra.mxu0 0.0
    %4706 = vmatprep.subr.mxu0 0.0
    %4707 = vmatpush1.xpose.msra.mxu0 0.0
    %4708 = vmatprep.subr.mxu0 0.0
    %4709 = vmatpush1.xpose.msra.mxu0 0.0
    %4710 = vmatprep.mubr.f32.mxu0 0.0
    %4711 = vmatmul.mubr.f32.gmra.mrb[0].mxu0 %v4642
    %v4712 = vpop.f32.mrb[0].mxu0
    %v4713 = vadd.f32 0.0, %v4712
    %v4714 = vpop.f32.mrb[0].mxu0
    %4715 = vdwg.mxu0
    %v4716 = vmul.f32 %v4713, 0.35355338
    %v4717 = vadd.f32 %v4716, %v83
    %v4718 = vsel %vm180, %v4717, -inf
    %4719 = vmax.xlane.f32.xlu0 %v4718
    %v4720 = vpop.xlane.xlu0 %4719
    %v4721 = vsub.f32 %v4717, %v4720
    %v4722 = vmul.f32 %v4721, 1.442695
    %v4723 = vpow.pop %v4722
    %v4724 = vsel %vm180, %v4723, 0.0
    %4725 = vadd.xlane.f32.xlu0 %v4724
    %v4726 = vpop.xlane.xlu0 %4725
    %v4727 = vrcp.pop %v4726
    %v4728 = vmul.f32 %v4723, %v4727
    %4729 = vrot.lane.b32.xlu0 %v3785, 56
    %v4730 = vpop.permute.xlu0 %4729
    %v4733 = vsel %vm180, %v4728, 0
    %4735 = vmatprep.subr.mxu0 0.0
    %4736 = vmatpush1.msra.mxu0 %v4730
    %4737 = vmatprep.subr.mxu0 0.0
    %4738 = vmatpush1.msra.mxu0 0.0
    %4739 = vmatprep.subr.mxu0 0.0
    %4740 = vmatpush1.msra.mxu0 0.0
    %4741 = vmatprep.subr.mxu0 0.0
    %4742 = vmatpush1.msra.mxu0 0.0
    %4743 = vmatprep.subr.mxu0 0.0
    %4744 = vmatpush1.msra.mxu0 0.0
    %4745 = vmatprep.subr.mxu0 0.0
    %4746 = vmatpush1.msra.mxu0 0.0
    %4747 = vmatprep.subr.mxu0 0.0
    %4748 = vmatpush1.msra.mxu0 0.0
    %4749 = vmatprep.subr.mxu0 0.0
    %4750 = vmatpush1.msra.mxu0 0.0
    %4751 = vmatprep.subr.mxu0 0.0
    %4752 = vmatpush1.msra.mxu0 0.0
    %4753 = vmatprep.subr.mxu0 0.0
    %4754 = vmatpush1.msra.mxu0 0.0
    %4755 = vmatprep.subr.mxu0 0.0
    %4756 = vmatpush1.msra.mxu0 0.0
    %4757 = vmatprep.subr.mxu0 0.0
    %4758 = vmatpush1.msra.mxu0 0.0
    %4759 = vmatprep.subr.mxu0 0.0
    %4760 = vmatpush1.msra.mxu0 0.0
    %4761 = vmatprep.subr.mxu0 0.0
    %4762 = vmatpush1.msra.mxu0 0.0
    %4763 = vmatprep.subr.mxu0 0.0
    %4764 = vmatpush1.msra.mxu0 0.0
    %4765 = vmatprep.subr.mxu0 0.0
    %4766 = vmatpush1.msra.mxu0 0.0
    %4767 = vmatprep.subr.mxu0 0.0
    %4768 = vmatpush1.msra.mxu0 0.0
    %4769 = vmatprep.subr.mxu0 0.0
    %4770 = vmatpush1.msra.mxu0 0.0
    %4771 = vmatprep.subr.mxu0 0.0
    %4772 = vmatpush1.msra.mxu0 0.0
    %4773 = vmatprep.subr.mxu0 0.0
    %4774 = vmatpush1.msra.mxu0 0.0
    %4775 = vmatprep.subr.mxu0 0.0
    %4776 = vmatpush1.msra.mxu0 0.0
    %4777 = vmatprep.subr.mxu0 0.0
    %4778 = vmatpush1.msra.mxu0 0.0
    %4779 = vmatprep.subr.mxu0 0.0
    %4780 = vmatpush1.msra.mxu0 0.0
    %4781 = vmatprep.subr.mxu0 0.0
    %4782 = vmatpush1.msra.mxu0 0.0
    %4783 = vmatprep.subr.mxu0 0.0
    %4784 = vmatpush1.msra.mxu0 0.0
    %4785 = vmatprep.subr.mxu0 0.0
    %4786 = vmatpush1.msra.mxu0 0.0
    %4787 = vmatprep.subr.mxu0 0.0
    %4788 = vmatpush1.msra.mxu0 0.0
    %4789 = vmatprep.subr.mxu0 0.0
    %4790 = vmatpush1.msra.mxu0 0.0
    %4791 = vmatprep.subr.mxu0 0.0
    %4792 = vmatpush1.msra.mxu0 0.0
    %4793 = vmatprep.subr.mxu0 0.0
    %4794 = vmatpush1.msra.mxu0 0.0
    %4795 = vmatprep.subr.mxu0 0.0
    %4796 = vmatpush1.msra.mxu0 0.0
    %4797 = vmatprep.subr.mxu0 0.0
    %4798 = vmatpush1.msra.mxu0 0.0
    %4799 = vmatprep.mubr.f32.mxu0 0.0
    %4800 = vmatmul.mubr.f32.gmra.mrb[0].mxu0 %v4733
    %v4801 = vpop.f32.mrb[0].mxu0
    %v4802 = vadd.f32 0.0, %v4801
    %v4803 = vpop.f32.mrb[0].mxu0
    %4804 = vdwg.mxu0
    %4806 = vrot.lane.b32.xlu0 %v4802, 8
    %v4807 = vpop.permute.xlu0 %4806
    %4809 = vst.msk [vmem:[#allocation2 + $0x8] sm:$0xff] %vm516, %v4807
    %4810 = vrot.lane.b32.xlu0 %v3785, 112
    %v4811 = vpop.permute.xlu0 %4810
    %4812 = vrot.lane.b32.xlu0 %v3785, 80
    %v4813 = vpop.permute.xlu0 %4812
    %v4814 = vsel %vm180, %v4811, 0
    %v4816 = vsel %vm180, %v4813, 0
    %4818 = vmatprep.subr.mxu0 0.0
    %4819 = vmatpush1.xpose.msra.mxu0 %v4816
    %4820 = vmatprep.subr.mxu0 0.0
    %4821 = vmatpush1.xpose.msra.mxu0 0.0
    %4822 = vmatprep.subr.mxu0 0.0
    %4823 = vmatpush1.xpose.msra.mxu0 0.0
    %4824 = vmatprep.subr.mxu0 0.0
    %4825 = vmatpush1.xpose.msra.mxu0 0.0
    %4826 = vmatprep.subr.mxu0 0.0
    %4827 = vmatpush1.xpose.msra.mxu0 0.0
    %4828 = vmatprep.subr.mxu0 0.0
    %4829 = vmatpush1.xpose.msra.mxu0 0.0
    %4830 = vmatprep.subr.mxu0 0.0
    %4831 = vmatpush1.xpose.msra.mxu0 0.0
    %4832 = vmatprep.subr.mxu0 0.0
    %4833 = vmatpush1.xpose.msra.mxu0 0.0
    %4834 = vmatprep.subr.mxu0 0.0
    %4835 = vmatpush1.xpose.msra.mxu0 0.0
    %4836 = vmatprep.subr.mxu0 0.0
    %4837 = vmatpush1.xpose.msra.mxu0 0.0
    %4838 = vmatprep.subr.mxu0 0.0
    %4839 = vmatpush1.xpose.msra.mxu0 0.0
    %4840 = vmatprep.subr.mxu0 0.0
    %4841 = vmatpush1.xpose.msra.mxu0 0.0
    %4842 = vmatprep.subr.mxu0 0.0
    %4843 = vmatpush1.xpose.msra.mxu0 0.0
    %4844 = vmatprep.subr.mxu0 0.0
    %4845 = vmatpush1.xpose.msra.mxu0 0.0
    %4846 = vmatprep.subr.mxu0 0.0
    %4847 = vmatpush1.xpose.msra.mxu0 0.0
    %4848 = vmatprep.subr.mxu0 0.0
    %4849 = vmatpush1.xpose.msra.mxu0 0.0
    %4850 = vmatprep.subr.mxu0 0.0
    %4851 = vmatpush1.xpose.msra.mxu0 0.0
    %4852 = vmatprep.subr.mxu0 0.0
    %4853 = vmatpush1.xpose.msra.mxu0 0.0
    %4854 = vmatprep.subr.mxu0 0.0
    %4855 = vmatpush1.xpose.msra.mxu0 0.0
    %4856 = vmatprep.subr.mxu0 0.0
    %4857 = vmatpush1.xpose.msra.mxu0 0.0
    %4858 = vmatprep.subr.mxu0 0.0
    %4859 = vmatpush1.xpose.msra.mxu0 0.0
    %4860 = vmatprep.subr.mxu0 0.0
    %4861 = vmatpush1.xpose.msra.mxu0 0.0
    %4862 = vmatprep.subr.mxu0 0.0
    %4863 = vmatpush1.xpose.msra.mxu0 0.0
    %4864 = vmatprep.subr.mxu0 0.0
    %4865 = vmatpush1.xpose.msra.mxu0 0.0
    %4866 = vmatprep.subr.mxu0 0.0
    %4867 = vmatpush1.xpose.msra.mxu0 0.0
    %4868 = vmatprep.subr.mxu0 0.0
    %4869 = vmatpush1.xpose.msra.mxu0 0.0
    %4870 = vmatprep.subr.mxu0 0.0
    %4871 = vmatpush1.xpose.msra.mxu0 0.0
    %4872 = vmatprep.subr.mxu0 0.0
    %4873 = vmatpush1.xpose.msra.mxu0 0.0
    %4874 = vmatprep.subr.mxu0 0.0
    %4875 = vmatpush1.xpose.msra.mxu0 0.0
    %4876 = vmatprep.subr.mxu0 0.0
    %4877 = vmatpush1.xpose.msra.mxu0 0.0
    %4878 = vmatprep.subr.mxu0 0.0
    %4879 = vmatpush1.xpose.msra.mxu0 0.0
    %4880 = vmatprep.subr.mxu0 0.0
    %4881 = vmatpush1.xpose.msra.mxu0 0.0
    %4882 = vmatprep.mubr.f32.mxu0 0.0
    %4883 = vmatmul.mubr.f32.gmra.mrb[0].mxu0 %v4814
    %v4884 = vpop.f32.mrb[0].mxu0
    %v4885 = vadd.f32 0.0, %v4884
    %v4886 = vpop.f32.mrb[0].mxu0
    %4887 = vdwg.mxu0
    %v4888 = vmul.f32 %v4885, 0.35355338
    %v4889 = vadd.f32 %v4888, %v83
    %v4890 = vsel %vm180, %v4889, -inf
    %4891 = vmax.xlane.f32.xlu0 %v4890
    %v4892 = vpop.xlane.xlu0 %4891
    %v4893 = vsub.f32 %v4889, %v4892
    %v4894 = vmul.f32 %v4893, 1.442695
    %v4895 = vpow.pop %v4894
    %v4896 = vsel %vm180, %v4895, 0.0
    %4897 = vadd.xlane.f32.xlu0 %v4896
    %v4898 = vpop.xlane.xlu0 %4897
    %v4899 = vrcp.pop %v4898
    %v4900 = vmul.f32 %v4895, %v4899
    %4901 = vrot.lane.b32.xlu0 %v3785, 48
    %v4902 = vpop.permute.xlu0 %4901
    %v4905 = vsel %vm180, %v4900, 0
    %4907 = vmatprep.subr.mxu0 0.0
    %4908 = vmatpush1.msra.mxu0 %v4902
    %4909 = vmatprep.subr.mxu0 0.0
    %4910 = vmatpush1.msra.mxu0 0.0
    %4911 = vmatprep.subr.mxu0 0.0
    %4912 = vmatpush1.msra.mxu0 0.0
    %4913 = vmatprep.subr.mxu0 0.0
    %4914 = vmatpush1.msra.mxu0 0.0
    %4915 = vmatprep.subr.mxu0 0.0
    %4916 = vmatpush1.msra.mxu0 0.0
    %4917 = vmatprep.subr.mxu0 0.0
    %4918 = vmatpush1.msra.mxu0 0.0
    %4919 = vmatprep.subr.mxu0 0.0
    %4920 = vmatpush1.msra.mxu0 0.0
    %4921 = vmatprep.subr.mxu0 0.0
    %4922 = vmatpush1.msra.mxu0 0.0
    %4923 = vmatprep.subr.mxu0 0.0
    %4924 = vmatpush1.msra.mxu0 0.0
    %4925 = vmatprep.subr.mxu0 0.0
    %4926 = vmatpush1.msra.mxu0 0.0
    %4927 = vmatprep.subr.mxu0 0.0
    %4928 = vmatpush1.msra.mxu0 0.0
    %4929 = vmatprep.subr.mxu0 0.0
    %4930 = vmatpush1.msra.mxu0 0.0
    %4931 = vmatprep.subr.mxu0 0.0
    %4932 = vmatpush1.msra.mxu0 0.0
    %4933 = vmatprep.subr.mxu0 0.0
    %4934 = vmatpush1.msra.mxu0 0.0
    %4935 = vmatprep.subr.mxu0 0.0
    %4936 = vmatpush1.msra.mxu0 0.0
    %4937 = vmatprep.subr.mxu0 0.0
    %4938 = vmatpush1.msra.mxu0 0.0
    %4939 = vmatprep.subr.mxu0 0.0
    %4940 = vmatpush1.msra.mxu0 0.0
    %4941 = vmatprep.subr.mxu0 0.0
    %4942 = vmatpush1.msra.mxu0 0.0
    %4943 = vmatprep.subr.mxu0 0.0
    %4944 = vmatpush1.msra.mxu0 0.0
    %4945 = vmatprep.subr.mxu0 0.0
    %4946 = vmatpush1.msra.mxu0 0.0
    %4947 = vmatprep.subr.mxu0 0.0
    %4948 = vmatpush1.msra.mxu0 0.0
    %4949 = vmatprep.subr.mxu0 0.0
    %4950 = vmatpush1.msra.mxu0 0.0
    %4951 = vmatprep.subr.mxu0 0.0
    %4952 = vmatpush1.msra.mxu0 0.0
    %4953 = vmatprep.subr.mxu0 0.0
    %4954 = vmatpush1.msra.mxu0 0.0
    %4955 = vmatprep.subr.mxu0 0.0
    %4956 = vmatpush1.msra.mxu0 0.0
    %4957 = vmatprep.subr.mxu0 0.0
    %4958 = vmatpush1.msra.mxu0 0.0
    %4959 = vmatprep.subr.mxu0 0.0
    %4960 = vmatpush1.msra.mxu0 0.0
    %4961 = vmatprep.subr.mxu0 0.0
    %4962 = vmatpush1.msra.mxu0 0.0
    %4963 = vmatprep.subr.mxu0 0.0
    %4964 = vmatpush1.msra.mxu0 0.0
    %4965 = vmatprep.subr.mxu0 0.0
    %4966 = vmatpush1.msra.mxu0 0.0
    %4967 = vmatprep.subr.mxu0 0.0
    %4968 = vmatpush1.msra.mxu0 0.0
    %4969 = vmatprep.subr.mxu0 0.0
    %4970 = vmatpush1.msra.mxu0 0.0
    %4971 = vmatprep.mubr.f32.mxu0 0.0
    %4972 = vmatmul.mubr.f32.gmra.mrb[0].mxu0 %v4905
    %v4973 = vpop.f32.mrb[0].mxu0
    %v4974 = vadd.f32 0.0, %v4973
    %v4975 = vpop.f32.mrb[0].mxu0
    %4976 = vdwg.mxu0
    %4978 = vrot.lane.b32.xlu0 %v4974, 16
    %v4979 = vpop.permute.xlu0 %4978
    %4981 = vst.msk [vmem:[#allocation2 + $0x8] sm:$0xff] %vm689, %v4979
    %4982 = vrot.lane.b32.xlu0 %v3785, 104
    %v4983 = vpop.permute.xlu0 %4982
    %4984 = vrot.lane.b32.xlu0 %v3785, 72
    %v4985 = vpop.permute.xlu0 %4984
    %v4986 = vsel %vm180, %v4983, 0
    %v4988 = vsel %vm180, %v4985, 0
    %4990 = vmatprep.subr.mxu0 0.0
    %4991 = vmatpush1.xpose.msra.mxu0 %v4988
    %4992 = vmatprep.subr.mxu0 0.0
    %4993 = vmatpush1.xpose.msra.mxu0 0.0
    %4994 = vmatprep.subr.mxu0 0.0
    %4995 = vmatpush1.xpose.msra.mxu0 0.0
    %4996 = vmatprep.subr.mxu0 0.0
    %4997 = vmatpush1.xpose.msra.mxu0 0.0
    %4998 = vmatprep.subr.mxu0 0.0
    %4999 = vmatpush1.xpose.msra.mxu0 0.0
    %5000 = vmatprep.subr.mxu0 0.0
    %5001 = vmatpush1.xpose.msra.mxu0 0.0
    %5002 = vmatprep.subr.mxu0 0.0
    %5003 = vmatpush1.xpose.msra.mxu0 0.0
    %5004 = vmatprep.subr.mxu0 0.0
    %5005 = vmatpush1.xpose.msra.mxu0 0.0
    %5006 = vmatprep.subr.mxu0 0.0
    %5007 = vmatpush1.xpose.msra.mxu0 0.0
    %5008 = vmatprep.subr.mxu0 0.0
    %5009 = vmatpush1.xpose.msra.mxu0 0.0
    %5010 = vmatprep.subr.mxu0 0.0
    %5011 = vmatpush1.xpose.msra.mxu0 0.0
    %5012 = vmatprep.subr.mxu0 0.0
    %5013 = vmatpush1.xpose.msra.mxu0 0.0
    %5014 = vmatprep.subr.mxu0 0.0
    %5015 = vmatpush1.xpose.msra.mxu0 0.0
    %5016 = vmatprep.subr.mxu0 0.0
    %5017 = vmatpush1.xpose.msra.mxu0 0.0
    %5018 = vmatprep.subr.mxu0 0.0
    %5019 = vmatpush1.xpose.msra.mxu0 0.0
    %5020 = vmatprep.subr.mxu0 0.0
    %5021 = vmatpush1.xpose.msra.mxu0 0.0
    %5022 = vmatprep.subr.mxu0 0.0
    %5023 = vmatpush1.xpose.msra.mxu0 0.0
    %5024 = vmatprep.subr.mxu0 0.0
    %5025 = vmatpush1.xpose.msra.mxu0 0.0
    %5026 = vmatprep.subr.mxu0 0.0
    %5027 = vmatpush1.xpose.msra.mxu0 0.0
    %5028 = vmatprep.subr.mxu0 0.0
    %5029 = vmatpush1.xpose.msra.mxu0 0.0
    %5030 = vmatprep.subr.mxu0 0.0
    %5031 = vmatpush1.xpose.msra.mxu0 0.0
    %5032 = vmatprep.subr.mxu0 0.0
    %5033 = vmatpush1.xpose.msra.mxu0 0.0
    %5034 = vmatprep.subr.mxu0 0.0
    %5035 = vmatpush1.xpose.msra.mxu0 0.0
    %5036 = vmatprep.subr.mxu0 0.0
    %5037 = vmatpush1.xpose.msra.mxu0 0.0
    %5038 = vmatprep.subr.mxu0 0.0
    %5039 = vmatpush1.xpose.msra.mxu0 0.0
    %5040 = vmatprep.subr.mxu0 0.0
    %5041 = vmatpush1.xpose.msra.mxu0 0.0
    %5042 = vmatprep.subr.mxu0 0.0
    %5043 = vmatpush1.xpose.msra.mxu0 0.0
    %5044 = vmatprep.subr.mxu0 0.0
    %5045 = vmatpush1.xpose.msra.mxu0 0.0
    %5046 = vmatprep.subr.mxu0 0.0
    %5047 = vmatpush1.xpose.msra.mxu0 0.0
    %5048 = vmatprep.subr.mxu0 0.0
    %5049 = vmatpush1.xpose.msra.mxu0 0.0
    %5050 = vmatprep.subr.mxu0 0.0
    %5051 = vmatpush1.xpose.msra.mxu0 0.0
    %5052 = vmatprep.subr.mxu0 0.0
    %5053 = vmatpush1.xpose.msra.mxu0 0.0
    %5054 = vmatprep.mubr.f32.mxu0 0.0
    %5055 = vmatmul.mubr.f32.gmra.mrb[0].mxu0 %v4986
    %v5056 = vpop.f32.mrb[0].mxu0
    %v5057 = vadd.f32 0.0, %v5056
    %v5058 = vpop.f32.mrb[0].mxu0
    %5059 = vdwg.mxu0
    %v5060 = vmul.f32 %v5057, 0.35355338
    %v5061 = vadd.f32 %v5060, %v83
    %v5062 = vsel %vm180, %v5061, -inf
    %5063 = vmax.xlane.f32.xlu0 %v5062
    %v5064 = vpop.xlane.xlu0 %5063
    %v5065 = vsub.f32 %v5061, %v5064
    %v5066 = vmul.f32 %v5065, 1.442695
    %v5067 = vpow.pop %v5066
    %v5068 = vsel %vm180, %v5067, 0.0
    %5069 = vadd.xlane.f32.xlu0 %v5068
    %v5070 = vpop.xlane.xlu0 %5069
    %v5071 = vrcp.pop %v5070
    %v5072 = vmul.f32 %v5067, %v5071
    %5073 = vrot.lane.b32.xlu0 %v3785, 40
    %v5074 = vpop.permute.xlu0 %5073
    %v5077 = vsel %vm180, %v5072, 0
    %5079 = vmatprep.subr.mxu0 0.0
    %5080 = vmatpush1.msra.mxu0 %v5074
    %5081 = vmatprep.subr.mxu0 0.0
    %5082 = vmatpush1.msra.mxu0 0.0
    %5083 = vmatprep.subr.mxu0 0.0
    %5084 = vmatpush1.msra.mxu0 0.0
    %5085 = vmatprep.subr.mxu0 0.0
    %5086 = vmatpush1.msra.mxu0 0.0
    %5087 = vmatprep.subr.mxu0 0.0
    %5088 = vmatpush1.msra.mxu0 0.0
    %5089 = vmatprep.subr.mxu0 0.0
    %5090 = vmatpush1.msra.mxu0 0.0
    %5091 = vmatprep.subr.mxu0 0.0
    %5092 = vmatpush1.msra.mxu0 0.0
    %5093 = vmatprep.subr.mxu0 0.0
    %5094 = vmatpush1.msra.mxu0 0.0
    %5095 = vmatprep.subr.mxu0 0.0
    %5096 = vmatpush1.msra.mxu0 0.0
    %5097 = vmatprep.subr.mxu0 0.0
    %5098 = vmatpush1.msra.mxu0 0.0
    %5099 = vmatprep.subr.mxu0 0.0
    %5100 = vmatpush1.msra.mxu0 0.0
    %5101 = vmatprep.subr.mxu0 0.0
    %5102 = vmatpush1.msra.mxu0 0.0
    %5103 = vmatprep.subr.mxu0 0.0
    %5104 = vmatpush1.msra.mxu0 0.0
    %5105 = vmatprep.subr.mxu0 0.0
    %5106 = vmatpush1.msra.mxu0 0.0
    %5107 = vmatprep.subr.mxu0 0.0
    %5108 = vmatpush1.msra.mxu0 0.0
    %5109 = vmatprep.subr.mxu0 0.0
    %5110 = vmatpush1.msra.mxu0 0.0
    %5111 = vmatprep.subr.mxu0 0.0
    %5112 = vmatpush1.msra.mxu0 0.0
    %5113 = vmatprep.subr.mxu0 0.0
    %5114 = vmatpush1.msra.mxu0 0.0
    %5115 = vmatprep.subr.mxu0 0.0
    %5116 = vmatpush1.msra.mxu0 0.0
    %5117 = vmatprep.subr.mxu0 0.0
    %5118 = vmatpush1.msra.mxu0 0.0
    %5119 = vmatprep.subr.mxu0 0.0
    %5120 = vmatpush1.msra.mxu0 0.0
    %5121 = vmatprep.subr.mxu0 0.0
    %5122 = vmatpush1.msra.mxu0 0.0
    %5123 = vmatprep.subr.mxu0 0.0
    %5124 = vmatpush1.msra.mxu0 0.0
    %5125 = vmatprep.subr.mxu0 0.0
    %5126 = vmatpush1.msra.mxu0 0.0
    %5127 = vmatprep.subr.mxu0 0.0
    %5128 = vmatpush1.msra.mxu0 0.0
    %5129 = vmatprep.subr.mxu0 0.0
    %5130 = vmatpush1.msra.mxu0 0.0
    %5131 = vmatprep.subr.mxu0 0.0
    %5132 = vmatpush1.msra.mxu0 0.0
    %5133 = vmatprep.subr.mxu0 0.0
    %5134 = vmatpush1.msra.mxu0 0.0
    %5135 = vmatprep.subr.mxu0 0.0
    %5136 = vmatpush1.msra.mxu0 0.0
    %5137 = vmatprep.subr.mxu0 0.0
    %5138 = vmatpush1.msra.mxu0 0.0
    %5139 = vmatprep.subr.mxu0 0.0
    %5140 = vmatpush1.msra.mxu0 0.0
    %5141 = vmatprep.subr.mxu0 0.0
    %5142 = vmatpush1.msra.mxu0 0.0
    %5143 = vmatprep.mubr.f32.mxu0 0.0
    %5144 = vmatmul.mubr.f32.gmra.mrb[0].mxu0 %v5077
    %v5145 = vpop.f32.mrb[0].mxu0
    %v5146 = vadd.f32 0.0, %v5145
    %v5147 = vpop.f32.mrb[0].mxu0
    %5148 = vdwg.mxu0
    %5150 = vrot.lane.b32.xlu0 %v5146, 24
    %v5151 = vpop.permute.xlu0 %5150
    %5153 = vst.msk [vmem:[#allocation2 + $0x8] sm:$0xff] %vm862, %v5151
    %v5154 = vld [vmem:[#allocation2] sm:$0xff]
    %v5155 = vld [vmem:[#allocation2 + $0x8] sm:$0xff]
    %s5156 = scalar_lea.vmem %s5, 32
    %v5157 = vld [vmem:[%s5156] sm:$0xff]
    %v5158 = vld [vmem:[%s5156 + $0x8] sm:$0xff]
    %v5159 = vld [vmem:[%s5156 + $0x10] sm:$0xff]
    %v5160 = vld [vmem:[%s5156 + $0x18] sm:$0xff]
    %s5161 = scalar_lea.vmem %s6, 1
    %v5162 = vld [vmem:[%s5161] sm:$0x1]
    %v5164 = vlaneseq
    %v5165 = vshrl.u32 %v5164, 7
    %v5166 = vsub.s32 0, %v5165
    %v5167 = vrot.slane %v5162, %v5166
    %v5170 = vsel %vm95, %v5154, 0
    %v5173 = vsel %vm95, %v5155, 0
    %5175 = vmatprep.subr.mxu0 0.0
    %5176 = vmatpush1.msra.mxu0 %v5157
    %5177 = vmatprep.subr.mxu0 0.0
    %5178 = vmatpush1.msra.mxu0 %v5158
    %5179 = vmatprep.subr.mxu0 0.0
    %5180 = vmatpush1.msra.mxu0 %v5159
    %5181 = vmatprep.subr.mxu0 0.0
    %5182 = vmatpush1.msra.mxu0 %v5160
    %5183 = vmatprep.subr.mxu0 0.0
    %5184 = vmatpush1.msra.mxu0 0.0
    %5185 = vmatprep.subr.mxu0 0.0
    %5186 = vmatpush1.msra.mxu0 0.0
    %5187 = vmatprep.subr.mxu0 0.0
    %5188 = vmatpush1.msra.mxu0 0.0
    %5189 = vmatprep.subr.mxu0 0.0
    %5190 = vmatpush1.msra.mxu0 0.0
    %5191 = vmatprep.subr.mxu0 0.0
    %5192 = vmatpush1.msra.mxu0 0.0
    %5193 = vmatprep.subr.mxu0 0.0
    %5194 = vmatpush1.msra.mxu0 0.0
    %5195 = vmatprep.subr.mxu0 0.0
    %5196 = vmatpush1.msra.mxu0 0.0
    %5197 = vmatprep.subr.mxu0 0.0
    %5198 = vmatpush1.msra.mxu0 0.0
    %5199 = vmatprep.subr.mxu0 0.0
    %5200 = vmatpush1.msra.mxu0 0.0
    %5201 = vmatprep.subr.mxu0 0.0
    %5202 = vmatpush1.msra.mxu0 0.0
    %5203 = vmatprep.subr.mxu0 0.0
    %5204 = vmatpush1.msra.mxu0 0.0
    %5205 = vmatprep.subr.mxu0 0.0
    %5206 = vmatpush1.msra.mxu0 0.0
    %5207 = vmatprep.subr.mxu0 0.0
    %5208 = vmatpush1.msra.mxu0 0.0
    %5209 = vmatprep.subr.mxu0 0.0
    %5210 = vmatpush1.msra.mxu0 0.0
    %5211 = vmatprep.subr.mxu0 0.0
    %5212 = vmatpush1.msra.mxu0 0.0
    %5213 = vmatprep.subr.mxu0 0.0
    %5214 = vmatpush1.msra.mxu0 0.0
    %5215 = vmatprep.subr.mxu0 0.0
    %5216 = vmatpush1.msra.mxu0 0.0
    %5217 = vmatprep.subr.mxu0 0.0
    %5218 = vmatpush1.msra.mxu0 0.0
    %5219 = vmatprep.subr.mxu0 0.0
    %5220 = vmatpush1.msra.mxu0 0.0
    %5221 = vmatprep.subr.mxu0 0.0
    %5222 = vmatpush1.msra.mxu0 0.0
    %5223 = vmatprep.subr.mxu0 0.0
    %5224 = vmatpush1.msra.mxu0 0.0
    %5225 = vmatprep.subr.mxu0 0.0
    %5226 = vmatpush1.msra.mxu0 0.0
    %5227 = vmatprep.subr.mxu0 0.0
    %5228 = vmatpush1.msra.mxu0 0.0
    %5229 = vmatprep.subr.mxu0 0.0
    %5230 = vmatpush1.msra.mxu0 0.0
    %5231 = vmatprep.subr.mxu0 0.0
    %5232 = vmatpush1.msra.mxu0 0.0
    %5233 = vmatprep.subr.mxu0 0.0
    %5234 = vmatpush1.msra.mxu0 0.0
    %5235 = vmatprep.subr.mxu0 0.0
    %5236 = vmatpush1.msra.mxu0 0.0
    %5237 = vmatprep.subr.mxu0 0.0
    %5238 = vmatpush1.msra.mxu0 0.0
    %5239 = vmatprep.mubr.f32.mxu0 0.0
    %5240 = vmatmul.mubr.f32.gmra.mrb[0].mxu0 %v5170
    %v5241 = vpop.f32.mrb[0].mxu0
    %v5242 = vadd.f32 %v5167, %v5241
    %v5243 = vpop.f32.mrb[0].mxu0
    %5244 = vmatprep.mubr.f32.mxu0 0.0
    %5245 = vmatmul.mubr.f32.gmra.mrb[0].mxu0 %v5173
    %v5246 = vpop.f32.mrb[0].mxu0
    %v5247 = vadd.f32 %v5167, %v5246
    %v5248 = vpop.f32.mrb[0].mxu0
    %5249 = vdwg.mxu0
    %v5250 = vadd.f32 %v3692, %v5242
    %v5251 = vadd.f32 %v3693, %v5247
    %s5252 = scalar_lea.vmem %s13, 1
    %v5253 = vld [vmem:[%s5252] sm:$0x1]
    %s5254 = scalar_lea.vmem %s14, 1
    %v5255 = vld [vmem:[%s5254] sm:$0x1]
    %v5256 = vsel %vm95, %v5250, 0.0
    %5257 = vadd.xlane.f32.xlu0 %v5256
    %v5258 = vpop.xlane.xlu0 %5257
    %v5259 = vsel %vm95, %v5251, 0.0
    %5260 = vadd.xlane.f32.xlu0 %v5259
    %v5261 = vpop.xlane.xlu0 %5260
    %v5262 = vmul.f32 %v5258, %v1651
    %v5263 = vmul.f32 %v5261, %v1651
    %v5264 = vsub.f32 %v5250, %v5262
    %v5265 = vsub.f32 %v5251, %v5263
    %v5266 = vmul.f32 %v5264, %v5264
    %v5267 = vmul.f32 %v5265, %v5265
    %v5268 = vsel %vm95, %v5266, 0.0
    %5269 = vadd.xlane.f32.xlu0 %v5268
    %v5270 = vpop.xlane.xlu0 %5269
    %v5271 = vsel %vm95, %v5267, 0.0
    %5272 = vadd.xlane.f32.xlu0 %v5271
    %v5273 = vpop.xlane.xlu0 %5272
    %v5274 = vmul.f32 %v5270, %v1651
    %v5275 = vmul.f32 %v5273, %v1651
    %v5276 = vadd.f32 %v5274, 1e-05
    %v5277 = vadd.f32 %v5275, 1e-05
    %v5278 = vrsqrt.pop %v5276
    %v5279 = vrsqrt.pop %v5277
    %v5280 = vmul.f32 %v5264, %v5278
    %v5281 = vmul.f32 %v5265, %v5279
    %v5283 = vlaneseq
    %v5284 = vshrl.u32 %v5283, 7
    %v5285 = vsub.s32 0, %v5284
    %v5286 = vrot.slane %v5253, %v5285
    %v5288 = vmul.f32 %v5280, %v5286
    %v5289 = vmul.f32 %v5281, %v5286
    %v5291 = vlaneseq
    %v5292 = vshrl.u32 %v5291, 7
    %v5293 = vsub.s32 0, %v5292
    %v5294 = vrot.slane %v5255, %v5293
    %v5296 = vadd.f32 %v5288, %v5294
    %v5297 = vadd.f32 %v5289, %v5294
    %s5298 = scalar_lea.vmem %s7, 32
    %v5299 = vld [vmem:[%s5298] sm:$0xff]
    %v5300 = vld [vmem:[%s5298 + $0x8] sm:$0xff]
    %v5301 = vld [vmem:[%s5298 + $0x10] sm:$0xff]
    %v5302 = vld [vmem:[%s5298 + $0x18] sm:$0xff]
    %s5303 = scalar_lea.vmem %s8, 1
    %v5304 = vld [vmem:[%s5303] sm:$0x1]
    %v5306 = vlaneseq
    %v5307 = vshrl.u32 %v5306, 7
    %v5308 = vsub.s32 0, %v5307
    %v5309 = vrot.slane %v5304, %v5308
    %v5312 = vsel %vm95, %v5296, 0
    %v5315 = vsel %vm95, %v5297, 0
    %5317 = vmatprep.subr.mxu0 0.0
    %5318 = vmatpush1.msra.mxu0 %v5299
    %5319 = vmatprep.subr.mxu0 0.0
    %5320 = vmatpush1.msra.mxu0 %v5300
    %5321 = vmatprep.subr.mxu0 0.0
    %5322 = vmatpush1.msra.mxu0 %v5301
    %5323 = vmatprep.subr.mxu0 0.0
    %5324 = vmatpush1.msra.mxu0 %v5302
    %5325 = vmatprep.subr.mxu0 0.0
    %5326 = vmatpush1.msra.mxu0 0.0
    %5327 = vmatprep.subr.mxu0 0.0
    %5328 = vmatpush1.msra.mxu0 0.0
    %5329 = vmatprep.subr.mxu0 0.0
    %5330 = vmatpush1.msra.mxu0 0.0
    %5331 = vmatprep.subr.mxu0 0.0
    %5332 = vmatpush1.msra.mxu0 0.0
    %5333 = vmatprep.subr.mxu0 0.0
    %5334 = vmatpush1.msra.mxu0 0.0
    %5335 = vmatprep.subr.mxu0 0.0
    %5336 = vmatpush1.msra.mxu0 0.0
    %5337 = vmatprep.subr.mxu0 0.0
    %5338 = vmatpush1.msra.mxu0 0.0
    %5339 = vmatprep.subr.mxu0 0.0
    %5340 = vmatpush1.msra.mxu0 0.0
    %5341 = vmatprep.subr.mxu0 0.0
    %5342 = vmatpush1.msra.mxu0 0.0
    %5343 = vmatprep.subr.mxu0 0.0
    %5344 = vmatpush1.msra.mxu0 0.0
    %5345 = vmatprep.subr.mxu0 0.0
    %5346 = vmatpush1.msra.mxu0 0.0
    %5347 = vmatprep.subr.mxu0 0.0
    %5348 = vmatpush1.msra.mxu0 0.0
    %5349 = vmatprep.subr.mxu0 0.0
    %5350 = vmatpush1.msra.mxu0 0.0
    %5351 = vmatprep.subr.mxu0 0.0
    %5352 = vmatpush1.msra.mxu0 0.0
    %5353 = vmatprep.subr.mxu0 0.0
    %5354 = vmatpush1.msra.mxu0 0.0
    %5355 = vmatprep.subr.mxu0 0.0
    %5356 = vmatpush1.msra.mxu0 0.0
    %5357 = vmatprep.subr.mxu0 0.0
    %5358 = vmatpush1.msra.mxu0 0.0
    %5359 = vmatprep.subr.mxu0 0.0
    %5360 = vmatpush1.msra.mxu0 0.0
    %5361 = vmatprep.subr.mxu0 0.0
    %5362 = vmatpush1.msra.mxu0 0.0
    %5363 = vmatprep.subr.mxu0 0.0
    %5364 = vmatpush1.msra.mxu0 0.0
    %5365 = vmatprep.subr.mxu0 0.0
    %5366 = vmatpush1.msra.mxu0 0.0
    %5367 = vmatprep.subr.mxu0 0.0
    %5368 = vmatpush1.msra.mxu0 0.0
    %5369 = vmatprep.subr.mxu0 0.0
    %5370 = vmatpush1.msra.mxu0 0.0
    %5371 = vmatprep.subr.mxu0 0.0
    %5372 = vmatpush1.msra.mxu0 0.0
    %5373 = vmatprep.subr.mxu0 0.0
    %5374 = vmatpush1.msra.mxu0 0.0
    %5375 = vmatprep.subr.mxu0 0.0
    %5376 = vmatpush1.msra.mxu0 0.0
    %5377 = vmatprep.subr.mxu0 0.0
    %5378 = vmatpush1.msra.mxu0 0.0
    %5379 = vmatprep.subr.mxu0 0.0
    %5380 = vmatpush1.msra.mxu0 0.0
    %5381 = vmatprep.mubr.f32.mxu0 0.0
    %5382 = vmatmul.mubr.f32.gmra.mrb[0].mxu0 %v5312
    %v5383 = vpop.f32.mrb[0].mxu0
    %v5384 = vadd.f32 %v5309, %v5383
    %v5385 = vpop.f32.mrb[0].mxu0
    %5386 = vmatprep.mubr.f32.mxu0 0.0
    %5387 = vmatmul.mubr.f32.gmra.mrb[0].mxu0 %v5315
    %v5388 = vpop.f32.mrb[0].mxu0
    %v5389 = vadd.f32 %v5309, %v5388
    %v5390 = vpop.f32.mrb[0].mxu0
    %5391 = vdwg.mxu0
    %v5392 = vld [vmem:[%s1] sm:$0xf]
    %s5393 = scalar_lea.vmem %s9, 32
    %v5394 = vld [vmem:[%s5393] sm:$0xff]
    %v5395 = vld [vmem:[%s5393 + $0x8] sm:$0xff]
    %v5396 = vld [vmem:[%s5393 + $0x10] sm:$0xff]
    %v5397 = vld [vmem:[%s5393 + $0x18] sm:$0xff]
    %s5398 = scalar_lea.vmem %s10, 1
    %v5399 = vld [vmem:[%s5398] sm:$0x1]
    %v5401 = vlaneseq
    %v5402 = vshrl.u32 %v5401, 7
    %v5403 = vsub.s32 0, %v5402
    %v5404 = vrot.slane %v5399, %v5403
    %v5407 = vsel %vm95, %v5392, 0
    %5409 = vmatprep.subr.mxu0 0.0
    %5410 = vmatpush1.msra.mxu0 %v5394
    %5411 = vmatprep.subr.mxu0 0.0
    %5412 = vmatpush1.msra.mxu0 %v5395
    %5413 = vmatprep.subr.mxu0 0.0
    %5414 = vmatpush1.msra.mxu0 %v5396
    %5415 = vmatprep.subr.mxu0 0.0
    %5416 = vmatpush1.msra.mxu0 %v5397
    %5417 = vmatprep.subr.mxu0 0.0
    %5418 = vmatpush1.msra.mxu0 0.0
    %5419 = vmatprep.subr.mxu0 0.0
    %5420 = vmatpush1.msra.mxu0 0.0
    %5421 = vmatprep.subr.mxu0 0.0
    %5422 = vmatpush1.msra.mxu0 0.0
    %5423 = vmatprep.subr.mxu0 0.0
    %5424 = vmatpush1.msra.mxu0 0.0
    %5425 = vmatprep.subr.mxu0 0.0
    %5426 = vmatpush1.msra.mxu0 0.0
    %5427 = vmatprep.subr.mxu0 0.0
    %5428 = vmatpush1.msra.mxu0 0.0
    %5429 = vmatprep.subr.mxu0 0.0
    %5430 = vmatpush1.msra.mxu0 0.0
    %5431 = vmatprep.subr.mxu0 0.0
    %5432 = vmatpush1.msra.mxu0 0.0
    %5433 = vmatprep.subr.mxu0 0.0
    %5434 = vmatpush1.msra.mxu0 0.0
    %5435 = vmatprep.subr.mxu0 0.0
    %5436 = vmatpush1.msra.mxu0 0.0
    %5437 = vmatprep.subr.mxu0 0.0
    %5438 = vmatpush1.msra.mxu0 0.0
    %5439 = vmatprep.subr.mxu0 0.0
    %5440 = vmatpush1.msra.mxu0 0.0
    %5441 = vmatprep.subr.mxu0 0.0
    %5442 = vmatpush1.msra.mxu0 0.0
    %5443 = vmatprep.subr.mxu0 0.0
    %5444 = vmatpush1.msra.mxu0 0.0
    %5445 = vmatprep.subr.mxu0 0.0
    %5446 = vmatpush1.msra.mxu0 0.0
    %5447 = vmatprep.subr.mxu0 0.0
    %5448 = vmatpush1.msra.mxu0 0.0
    %5449 = vmatprep.subr.mxu0 0.0
    %5450 = vmatpush1.msra.mxu0 0.0
    %5451 = vmatprep.subr.mxu0 0.0
    %5452 = vmatpush1.msra.mxu0 0.0
    %5453 = vmatprep.subr.mxu0 0.0
    %5454 = vmatpush1.msra.mxu0 0.0
    %5455 = vmatprep.subr.mxu0 0.0
    %5456 = vmatpush1.msra.mxu0 0.0
    %5457 = vmatprep.subr.mxu0 0.0
    %5458 = vmatpush1.msra.mxu0 0.0
    %5459 = vmatprep.subr.mxu0 0.0
    %5460 = vmatpush1.msra.mxu0 0.0
    %5461 = vmatprep.subr.mxu0 0.0
    %5462 = vmatpush1.msra.mxu0 0.0
    %5463 = vmatprep.subr.mxu0 0.0
    %5464 = vmatpush1.msra.mxu0 0.0
    %5465 = vmatprep.subr.mxu0 0.0
    %5466 = vmatpush1.msra.mxu0 0.0
    %5467 = vmatprep.subr.mxu0 0.0
    %5468 = vmatpush1.msra.mxu0 0.0
    %5469 = vmatprep.subr.mxu0 0.0
    %5470 = vmatpush1.msra.mxu0 0.0
    %5471 = vmatprep.subr.mxu0 0.0
    %5472 = vmatpush1.msra.mxu0 0.0
    %5473 = vmatprep.mubr.f32.mxu0 0.0
    %5474 = vmatmul.mubr.f32.gmra.mrb[0].mxu0 %v5407
    %v5475 = vpop.f32.mrb[0].mxu0
    %v5476 = vadd.f32 %v5404, %v5475
    %v5477 = vpop.f32.mrb[0].mxu0
    %5478 = vdwg.mxu0
    %v5480 = vsel %vm180, %v5384, 0
    %v5483 = vsel %vm180, %v5476, 0
    %5485 = vmatprep.subr.mxu0 0.0
    %5486 = vmatpush1.xpose.msra.mxu0 %v5483
    %5487 = vmatprep.subr.mxu0 0.0
    %5488 = vmatpush1.xpose.msra.mxu0 0.0
    %5489 = vmatprep.subr.mxu0 0.0
    %5490 = vmatpush1.xpose.msra.mxu0 0.0
    %5491 = vmatprep.subr.mxu0 0.0
    %5492 = vmatpush1.xpose.msra.mxu0 0.0
    %5493 = vmatprep.subr.mxu0 0.0
    %5494 = vmatpush1.xpose.msra.mxu0 0.0
    %5495 = vmatprep.subr.mxu0 0.0
    %5496 = vmatpush1.xpose.msra.mxu0 0.0
    %5497 = vmatprep.subr.mxu0 0.0
    %5498 = vmatpush1.xpose.msra.mxu0 0.0
    %5499 = vmatprep.subr.mxu0 0.0
    %5500 = vmatpush1.xpose.msra.mxu0 0.0
    %5501 = vmatprep.subr.mxu0 0.0
    %5502 = vmatpush1.xpose.msra.mxu0 0.0
    %5503 = vmatprep.subr.mxu0 0.0
    %5504 = vmatpush1.xpose.msra.mxu0 0.0
    %5505 = vmatprep.subr.mxu0 0.0
    %5506 = vmatpush1.xpose.msra.mxu0 0.0
    %5507 = vmatprep.subr.mxu0 0.0
    %5508 = vmatpush1.xpose.msra.mxu0 0.0
    %5509 = vmatprep.subr.mxu0 0.0
    %5510 = vmatpush1.xpose.msra.mxu0 0.0
    %5511 = vmatprep.subr.mxu0 0.0
    %5512 = vmatpush1.xpose.msra.mxu0 0.0
    %5513 = vmatprep.subr.mxu0 0.0
    %5514 = vmatpush1.xpose.msra.mxu0 0.0
    %5515 = vmatprep.subr.mxu0 0.0
    %5516 = vmatpush1.xpose.msra.mxu0 0.0
    %5517 = vmatprep.subr.mxu0 0.0
    %5518 = vmatpush1.xpose.msra.mxu0 0.0
    %5519 = vmatprep.subr.mxu0 0.0
    %5520 = vmatpush1.xpose.msra.mxu0 0.0
    %5521 = vmatprep.subr.mxu0 0.0
    %5522 = vmatpush1.xpose.msra.mxu0 0.0
    %5523 = vmatprep.subr.mxu0 0.0
    %5524 = vmatpush1.xpose.msra.mxu0 0.0
    %5525 = vmatprep.subr.mxu0 0.0
    %5526 = vmatpush1.xpose.msra.mxu0 0.0
    %5527 = vmatprep.subr.mxu0 0.0
    %5528 = vmatpush1.xpose.msra.mxu0 0.0
    %5529 = vmatprep.subr.mxu0 0.0
    %5530 = vmatpush1.xpose.msra.mxu0 0.0
    %5531 = vmatprep.subr.mxu0 0.0
    %5532 = vmatpush1.xpose.msra.mxu0 0.0
    %5533 = vmatprep.subr.mxu0 0.0
    %5534 = vmatpush1.xpose.msra.mxu0 0.0
    %5535 = vmatprep.subr.mxu0 0.0
    %5536 = vmatpush1.xpose.msra.mxu0 0.0
    %5537 = vmatprep.subr.mxu0 0.0
    %5538 = vmatpush1.xpose.msra.mxu0 0.0
    %5539 = vmatprep.subr.mxu0 0.0
    %5540 = vmatpush1.xpose.msra.mxu0 0.0
    %5541 = vmatprep.subr.mxu0 0.0
    %5542 = vmatpush1.xpose.msra.mxu0 0.0
    %5543 = vmatprep.subr.mxu0 0.0
    %5544 = vmatpush1.xpose.msra.mxu0 0.0
    %5545 = vmatprep.subr.mxu0 0.0
    %5546 = vmatpush1.xpose.msra.mxu0 0.0
    %5547 = vmatprep.subr.mxu0 0.0
    %5548 = vmatpush1.xpose.msra.mxu0 0.0
    %5549 = vmatprep.mubr.f32.mxu0 0.0
    %5550 = vmatmul.mubr.f32.gmra.mrb[0].mxu0 %v5480
    %v5551 = vpop.f32.mrb[0].mxu0
    %v5552 = vadd.f32 0.0, %v5551
    %v5553 = vpop.f32.mrb[0].mxu0
    %5554 = vdwg.mxu0
    %v5555 = vmul.f32 %v5552, 0.35355338
    %v5556 = vsel %vm1942, %v5555, -inf
    %5557 = vmax.xlane.f32.xlu0 %v5556
    %v5558 = vpop.xlane.xlu0 %5557
    %v5559 = vsub.f32 %v5555, %v5558
    %v5560 = vmul.f32 %v5559, 1.442695
    %v5561 = vpow.pop %v5560
    %v5562 = vsel %vm1942, %v5561, 0.0
    %5563 = vadd.xlane.f32.xlu0 %v5562
    %v5564 = vpop.xlane.xlu0 %5563
    %v5565 = vrcp.pop %v5564
    %v5566 = vmul.f32 %v5561, %v5565
    %5567 = vrot.lane.b32.xlu0 %v5476, 96
    %v5568 = vpop.permute.xlu0 %5567
    %v5570 = vsel %vm1942, %v5566, 0
    %v5572 = vsel %vm1959, %v5568, 0
    %5574 = vmatprep.subr.mxu0 0.0
    %5575 = vmatpush1.msra.mxu0 %v5572
    %5576 = vmatprep.subr.mxu0 0.0
    %5577 = vmatpush1.msra.mxu0 0.0
    %5578 = vmatprep.subr.mxu0 0.0
    %5579 = vmatpush1.msra.mxu0 0.0
    %5580 = vmatprep.subr.mxu0 0.0
    %5581 = vmatpush1.msra.mxu0 0.0
    %5582 = vmatprep.subr.mxu0 0.0
    %5583 = vmatpush1.msra.mxu0 0.0
    %5584 = vmatprep.subr.mxu0 0.0
    %5585 = vmatpush1.msra.mxu0 0.0
    %5586 = vmatprep.subr.mxu0 0.0
    %5587 = vmatpush1.msra.mxu0 0.0
    %5588 = vmatprep.subr.mxu0 0.0
    %5589 = vmatpush1.msra.mxu0 0.0
    %5590 = vmatprep.subr.mxu0 0.0
    %5591 = vmatpush1.msra.mxu0 0.0
    %5592 = vmatprep.subr.mxu0 0.0
    %5593 = vmatpush1.msra.mxu0 0.0
    %5594 = vmatprep.subr.mxu0 0.0
    %5595 = vmatpush1.msra.mxu0 0.0
    %5596 = vmatprep.subr.mxu0 0.0
    %5597 = vmatpush1.msra.mxu0 0.0
    %5598 = vmatprep.subr.mxu0 0.0
    %5599 = vmatpush1.msra.mxu0 0.0
    %5600 = vmatprep.subr.mxu0 0.0
    %5601 = vmatpush1.msra.mxu0 0.0
    %5602 = vmatprep.subr.mxu0 0.0
    %5603 = vmatpush1.msra.mxu0 0.0
    %5604 = vmatprep.subr.mxu0 0.0
    %5605 = vmatpush1.msra.mxu0 0.0
    %5606 = vmatprep.subr.mxu0 0.0
    %5607 = vmatpush1.msra.mxu0 0.0
    %5608 = vmatprep.subr.mxu0 0.0
    %5609 = vmatpush1.msra.mxu0 0.0
    %5610 = vmatprep.subr.mxu0 0.0
    %5611 = vmatpush1.msra.mxu0 0.0
    %5612 = vmatprep.subr.mxu0 0.0
    %5613 = vmatpush1.msra.mxu0 0.0
    %5614 = vmatprep.subr.mxu0 0.0
    %5615 = vmatpush1.msra.mxu0 0.0
    %5616 = vmatprep.subr.mxu0 0.0
    %5617 = vmatpush1.msra.mxu0 0.0
    %5618 = vmatprep.subr.mxu0 0.0
    %5619 = vmatpush1.msra.mxu0 0.0
    %5620 = vmatprep.subr.mxu0 0.0
    %5621 = vmatpush1.msra.mxu0 0.0
    %5622 = vmatprep.subr.mxu0 0.0
    %5623 = vmatpush1.msra.mxu0 0.0
    %5624 = vmatprep.subr.mxu0 0.0
    %5625 = vmatpush1.msra.mxu0 0.0
    %5626 = vmatprep.subr.mxu0 0.0
    %5627 = vmatpush1.msra.mxu0 0.0
    %5628 = vmatprep.subr.mxu0 0.0
    %5629 = vmatpush1.msra.mxu0 0.0
    %5630 = vmatprep.subr.mxu0 0.0
    %5631 = vmatpush1.msra.mxu0 0.0
    %5632 = vmatprep.subr.mxu0 0.0
    %5633 = vmatpush1.msra.mxu0 0.0
    %5634 = vmatprep.subr.mxu0 0.0
    %5635 = vmatpush1.msra.mxu0 0.0
    %5636 = vmatprep.subr.mxu0 0.0
    %5637 = vmatpush1.msra.mxu0 0.0
    %5638 = vmatprep.mubr.f32.mxu0 0.0
    %5639 = vmatmul.mubr.f32.gmra.mrb[0].mxu0 %v5570
    %v5640 = vpop.f32.mrb[0].mxu0
    %v5641 = vadd.f32 0.0, %v5640
    %v5642 = vpop.f32.mrb[0].mxu0
    %5643 = vdwg.mxu0
    %5644 = vst.msk [vmem:[#allocation2] sm:$0xff] %vm180, %v5641
    %5645 = vrot.lane.b32.xlu0 %v5384, 120
    %v5646 = vpop.permute.xlu0 %5645
    %5647 = vrot.lane.b32.xlu0 %v5476, 120
    %v5648 = vpop.permute.xlu0 %5647
    %v5649 = vsel %vm180, %v5646, 0
    %v5651 = vsel %vm180, %v5648, 0
    %5653 = vmatprep.subr.mxu0 0.0
    %5654 = vmatpush1.xpose.msra.mxu0 %v5651
    %5655 = vmatprep.subr.mxu0 0.0
    %5656 = vmatpush1.xpose.msra.mxu0 0.0
    %5657 = vmatprep.subr.mxu0 0.0
    %5658 = vmatpush1.xpose.msra.mxu0 0.0
    %5659 = vmatprep.subr.mxu0 0.0
    %5660 = vmatpush1.xpose.msra.mxu0 0.0
    %5661 = vmatprep.subr.mxu0 0.0
    %5662 = vmatpush1.xpose.msra.mxu0 0.0
    %5663 = vmatprep.subr.mxu0 0.0
    %5664 = vmatpush1.xpose.msra.mxu0 0.0
    %5665 = vmatprep.subr.mxu0 0.0
    %5666 = vmatpush1.xpose.msra.mxu0 0.0
    %5667 = vmatprep.subr.mxu0 0.0
    %5668 = vmatpush1.xpose.msra.mxu0 0.0
    %5669 = vmatprep.subr.mxu0 0.0
    %5670 = vmatpush1.xpose.msra.mxu0 0.0
    %5671 = vmatprep.subr.mxu0 0.0
    %5672 = vmatpush1.xpose.msra.mxu0 0.0
    %5673 = vmatprep.subr.mxu0 0.0
    %5674 = vmatpush1.xpose.msra.mxu0 0.0
    %5675 = vmatprep.subr.mxu0 0.0
    %5676 = vmatpush1.xpose.msra.mxu0 0.0
    %5677 = vmatprep.subr.mxu0 0.0
    %5678 = vmatpush1.xpose.msra.mxu0 0.0
    %5679 = vmatprep.subr.mxu0 0.0
    %5680 = vmatpush1.xpose.msra.mxu0 0.0
    %5681 = vmatprep.subr.mxu0 0.0
    %5682 = vmatpush1.xpose.msra.mxu0 0.0
    %5683 = vmatprep.subr.mxu0 0.0
    %5684 = vmatpush1.xpose.msra.mxu0 0.0
    %5685 = vmatprep.subr.mxu0 0.0
    %5686 = vmatpush1.xpose.msra.mxu0 0.0
    %5687 = vmatprep.subr.mxu0 0.0
    %5688 = vmatpush1.xpose.msra.mxu0 0.0
    %5689 = vmatprep.subr.mxu0 0.0
    %5690 = vmatpush1.xpose.msra.mxu0 0.0
    %5691 = vmatprep.subr.mxu0 0.0
    %5692 = vmatpush1.xpose.msra.mxu0 0.0
    %5693 = vmatprep.subr.mxu0 0.0
    %5694 = vmatpush1.xpose.msra.mxu0 0.0
    %5695 = vmatprep.subr.mxu0 0.0
    %5696 = vmatpush1.xpose.msra.mxu0 0.0
    %5697 = vmatprep.subr.mxu0 0.0
    %5698 = vmatpush1.xpose.msra.mxu0 0.0
    %5699 = vmatprep.subr.mxu0 0.0
    %5700 = vmatpush1.xpose.msra.mxu0 0.0
    %5701 = vmatprep.subr.mxu0 0.0
    %5702 = vmatpush1.xpose.msra.mxu0 0.0
    %5703 = vmatprep.subr.mxu0 0.0
    %5704 = vmatpush1.xpose.msra.mxu0 0.0
    %5705 = vmatprep.subr.mxu0 0.0
    %5706 = vmatpush1.xpose.msra.mxu0 0.0
    %5707 = vmatprep.subr.mxu0 0.0
    %5708 = vmatpush1.xpose.msra.mxu0 0.0
    %5709 = vmatprep.subr.mxu0 0.0
    %5710 = vmatpush1.xpose.msra.mxu0 0.0
    %5711 = vmatprep.subr.mxu0 0.0
    %5712 = vmatpush1.xpose.msra.mxu0 0.0
    %5713 = vmatprep.subr.mxu0 0.0
    %5714 = vmatpush1.xpose.msra.mxu0 0.0
    %5715 = vmatprep.subr.mxu0 0.0
    %5716 = vmatpush1.xpose.msra.mxu0 0.0
    %5717 = vmatprep.mubr.f32.mxu0 0.0
    %5718 = vmatmul.mubr.f32.gmra.mrb[0].mxu0 %v5649
    %v5719 = vpop.f32.mrb[0].mxu0
    %v5720 = vadd.f32 0.0, %v5719
    %v5721 = vpop.f32.mrb[0].mxu0
    %5722 = vdwg.mxu0
    %v5723 = vmul.f32 %v5720, 0.35355338
    %v5724 = vsel %vm1942, %v5723, -inf
    %5725 = vmax.xlane.f32.xlu0 %v5724
    %v5726 = vpop.xlane.xlu0 %5725
    %v5727 = vsub.f32 %v5723, %v5726
    %v5728 = vmul.f32 %v5727, 1.442695
    %v5729 = vpow.pop %v5728
    %v5730 = vsel %vm1942, %v5729, 0.0
    %5731 = vadd.xlane.f32.xlu0 %v5730
    %v5732 = vpop.xlane.xlu0 %5731
    %v5733 = vrcp.pop %v5732
    %v5734 = vmul.f32 %v5729, %v5733
    %5735 = vrot.lane.b32.xlu0 %v5476, 88
    %v5736 = vpop.permute.xlu0 %5735
    %v5738 = vsel %vm1942, %v5734, 0
    %v5740 = vsel %vm1959, %v5736, 0
    %5742 = vmatprep.subr.mxu0 0.0
    %5743 = vmatpush1.msra.mxu0 %v5740
    %5744 = vmatprep.subr.mxu0 0.0
    %5745 = vmatpush1.msra.mxu0 0.0
    %5746 = vmatprep.subr.mxu0 0.0
    %5747 = vmatpush1.msra.mxu0 0.0
    %5748 = vmatprep.subr.mxu0 0.0
    %5749 = vmatpush1.msra.mxu0 0.0
    %5750 = vmatprep.subr.mxu0 0.0
    %5751 = vmatpush1.msra.mxu0 0.0
    %5752 = vmatprep.subr.mxu0 0.0
    %5753 = vmatpush1.msra.mxu0 0.0
    %5754 = vmatprep.subr.mxu0 0.0
    %5755 = vmatpush1.msra.mxu0 0.0
    %5756 = vmatprep.subr.mxu0 0.0
    %5757 = vmatpush1.msra.mxu0 0.0
    %5758 = vmatprep.subr.mxu0 0.0
    %5759 = vmatpush1.msra.mxu0 0.0
    %5760 = vmatprep.subr.mxu0 0.0
    %5761 = vmatpush1.msra.mxu0 0.0
    %5762 = vmatprep.subr.mxu0 0.0
    %5763 = vmatpush1.msra.mxu0 0.0
    %5764 = vmatprep.subr.mxu0 0.0
    %5765 = vmatpush1.msra.mxu0 0.0
    %5766 = vmatprep.subr.mxu0 0.0
    %5767 = vmatpush1.msra.mxu0 0.0
    %5768 = vmatprep.subr.mxu0 0.0
    %5769 = vmatpush1.msra.mxu0 0.0
    %5770 = vmatprep.subr.mxu0 0.0
    %5771 = vmatpush1.msra.mxu0 0.0
    %5772 = vmatprep.subr.mxu0 0.0
    %5773 = vmatpush1.msra.mxu0 0.0
    %5774 = vmatprep.subr.mxu0 0.0
    %5775 = vmatpush1.msra.mxu0 0.0
    %5776 = vmatprep.subr.mxu0 0.0
    %5777 = vmatpush1.msra.mxu0 0.0
    %5778 = vmatprep.subr.mxu0 0.0
    %5779 = vmatpush1.msra.mxu0 0.0
    %5780 = vmatprep.subr.mxu0 0.0
    %5781 = vmatpush1.msra.mxu0 0.0
    %5782 = vmatprep.subr.mxu0 0.0
    %5783 = vmatpush1.msra.mxu0 0.0
    %5784 = vmatprep.subr.mxu0 0.0
    %5785 = vmatpush1.msra.mxu0 0.0
    %5786 = vmatprep.subr.mxu0 0.0
    %5787 = vmatpush1.msra.mxu0 0.0
    %5788 = vmatprep.subr.mxu0 0.0
    %5789 = vmatpush1.msra.mxu0 0.0
    %5790 = vmatprep.subr.mxu0 0.0
    %5791 = vmatpush1.msra.mxu0 0.0
    %5792 = vmatprep.subr.mxu0 0.0
    %5793 = vmatpush1.msra.mxu0 0.0
    %5794 = vmatprep.subr.mxu0 0.0
    %5795 = vmatpush1.msra.mxu0 0.0
    %5796 = vmatprep.subr.mxu0 0.0
    %5797 = vmatpush1.msra.mxu0 0.0
    %5798 = vmatprep.subr.mxu0 0.0
    %5799 = vmatpush1.msra.mxu0 0.0
    %5800 = vmatprep.subr.mxu0 0.0
    %5801 = vmatpush1.msra.mxu0 0.0
    %5802 = vmatprep.subr.mxu0 0.0
    %5803 = vmatpush1.msra.mxu0 0.0
    %5804 = vmatprep.subr.mxu0 0.0
    %5805 = vmatpush1.msra.mxu0 0.0
    %5806 = vmatprep.mubr.f32.mxu0 0.0
    %5807 = vmatmul.mubr.f32.gmra.mrb[0].mxu0 %v5738
    %v5808 = vpop.f32.mrb[0].mxu0
    %v5809 = vadd.f32 0.0, %v5808
    %v5810 = vpop.f32.mrb[0].mxu0
    %5811 = vdwg.mxu0
    %5813 = vrot.lane.b32.xlu0 %v5809, 8
    %v5814 = vpop.permute.xlu0 %5813
    %5816 = vst.msk [vmem:[#allocation2] sm:$0xff] %vm516, %v5814
    %5817 = vrot.lane.b32.xlu0 %v5384, 112
    %v5818 = vpop.permute.xlu0 %5817
    %5819 = vrot.lane.b32.xlu0 %v5476, 112
    %v5820 = vpop.permute.xlu0 %5819
    %v5821 = vsel %vm180, %v5818, 0
    %v5823 = vsel %vm180, %v5820, 0
    %5825 = vmatprep.subr.mxu0 0.0
    %5826 = vmatpush1.xpose.msra.mxu0 %v5823
    %5827 = vmatprep.subr.mxu0 0.0
    %5828 = vmatpush1.xpose.msra.mxu0 0.0
    %5829 = vmatprep.subr.mxu0 0.0
    %5830 = vmatpush1.xpose.msra.mxu0 0.0
    %5831 = vmatprep.subr.mxu0 0.0
    %5832 = vmatpush1.xpose.msra.mxu0 0.0
    %5833 = vmatprep.subr.mxu0 0.0
    %5834 = vmatpush1.xpose.msra.mxu0 0.0
    %5835 = vmatprep.subr.mxu0 0.0
    %5836 = vmatpush1.xpose.msra.mxu0 0.0
    %5837 = vmatprep.subr.mxu0 0.0
    %5838 = vmatpush1.xpose.msra.mxu0 0.0
    %5839 = vmatprep.subr.mxu0 0.0
    %5840 = vmatpush1.xpose.msra.mxu0 0.0
    %5841 = vmatprep.subr.mxu0 0.0
    %5842 = vmatpush1.xpose.msra.mxu0 0.0
    %5843 = vmatprep.subr.mxu0 0.0
    %5844 = vmatpush1.xpose.msra.mxu0 0.0
    %5845 = vmatprep.subr.mxu0 0.0
    %5846 = vmatpush1.xpose.msra.mxu0 0.0
    %5847 = vmatprep.subr.mxu0 0.0
    %5848 = vmatpush1.xpose.msra.mxu0 0.0
    %5849 = vmatprep.subr.mxu0 0.0
    %5850 = vmatpush1.xpose.msra.mxu0 0.0
    %5851 = vmatprep.subr.mxu0 0.0
    %5852 = vmatpush1.xpose.msra.mxu0 0.0
    %5853 = vmatprep.subr.mxu0 0.0
    %5854 = vmatpush1.xpose.msra.mxu0 0.0
    %5855 = vmatprep.subr.mxu0 0.0
    %5856 = vmatpush1.xpose.msra.mxu0 0.0
    %5857 = vmatprep.subr.mxu0 0.0
    %5858 = vmatpush1.xpose.msra.mxu0 0.0
    %5859 = vmatprep.subr.mxu0 0.0
    %5860 = vmatpush1.xpose.msra.mxu0 0.0
    %5861 = vmatprep.subr.mxu0 0.0
    %5862 = vmatpush1.xpose.msra.mxu0 0.0
    %5863 = vmatprep.subr.mxu0 0.0
    %5864 = vmatpush1.xpose.msra.mxu0 0.0
    %5865 = vmatprep.subr.mxu0 0.0
    %5866 = vmatpush1.xpose.msra.mxu0 0.0
    %5867 = vmatprep.subr.mxu0 0.0
    %5868 = vmatpush1.xpose.msra.mxu0 0.0
    %5869 = vmatprep.subr.mxu0 0.0
    %5870 = vmatpush1.xpose.msra.mxu0 0.0
    %5871 = vmatprep.subr.mxu0 0.0
    %5872 = vmatpush1.xpose.msra.mxu0 0.0
    %5873 = vmatprep.subr.mxu0 0.0
    %5874 = vmatpush1.xpose.msra.mxu0 0.0
    %5875 = vmatprep.subr.mxu0 0.0
    %5876 = vmatpush1.xpose.msra.mxu0 0.0
    %5877 = vmatprep.subr.mxu0 0.0
    %5878 = vmatpush1.xpose.msra.mxu0 0.0
    %5879 = vmatprep.subr.mxu0 0.0
    %5880 = vmatpush1.xpose.msra.mxu0 0.0
    %5881 = vmatprep.subr.mxu0 0.0
    %5882 = vmatpush1.xpose.msra.mxu0 0.0
    %5883 = vmatprep.subr.mxu0 0.0
    %5884 = vmatpush1.xpose.msra.mxu0 0.0
    %5885 = vmatprep.subr.mxu0 0.0
    %5886 = vmatpush1.xpose.msra.mxu0 0.0
    %5887 = vmatprep.subr.mxu0 0.0
    %5888 = vmatpush1.xpose.msra.mxu0 0.0
    %5889 = vmatprep.mubr.f32.mxu0 0.0
    %5890 = vmatmul.mubr.f32.gmra.mrb[0].mxu0 %v5821
    %v5891 = vpop.f32.mrb[0].mxu0
    %v5892 = vadd.f32 0.0, %v5891
    %v5893 = vpop.f32.mrb[0].mxu0
    %5894 = vdwg.mxu0
    %v5895 = vmul.f32 %v5892, 0.35355338
    %v5896 = vsel %vm1942, %v5895, -inf
    %5897 = vmax.xlane.f32.xlu0 %v5896
    %v5898 = vpop.xlane.xlu0 %5897
    %v5899 = vsub.f32 %v5895, %v5898
    %v5900 = vmul.f32 %v5899, 1.442695
    %v5901 = vpow.pop %v5900
    %v5902 = vsel %vm1942, %v5901, 0.0
    %5903 = vadd.xlane.f32.xlu0 %v5902
    %v5904 = vpop.xlane.xlu0 %5903
    %v5905 = vrcp.pop %v5904
    %v5906 = vmul.f32 %v5901, %v5905
    %5907 = vrot.lane.b32.xlu0 %v5476, 80
    %v5908 = vpop.permute.xlu0 %5907
    %v5910 = vsel %vm1942, %v5906, 0
    %v5912 = vsel %vm1959, %v5908, 0
    %5914 = vmatprep.subr.mxu0 0.0
    %5915 = vmatpush1.msra.mxu0 %v5912
    %5916 = vmatprep.subr.mxu0 0.0
    %5917 = vmatpush1.msra.mxu0 0.0
    %5918 = vmatprep.subr.mxu0 0.0
    %5919 = vmatpush1.msra.mxu0 0.0
    %5920 = vmatprep.subr.mxu0 0.0
    %5921 = vmatpush1.msra.mxu0 0.0
    %5922 = vmatprep.subr.mxu0 0.0
    %5923 = vmatpush1.msra.mxu0 0.0
    %5924 = vmatprep.subr.mxu0 0.0
    %5925 = vmatpush1.msra.mxu0 0.0
    %5926 = vmatprep.subr.mxu0 0.0
    %5927 = vmatpush1.msra.mxu0 0.0
    %5928 = vmatprep.subr.mxu0 0.0
    %5929 = vmatpush1.msra.mxu0 0.0
    %5930 = vmatprep.subr.mxu0 0.0
    %5931 = vmatpush1.msra.mxu0 0.0
    %5932 = vmatprep.subr.mxu0 0.0
    %5933 = vmatpush1.msra.mxu0 0.0
    %5934 = vmatprep.subr.mxu0 0.0
    %5935 = vmatpush1.msra.mxu0 0.0
    %5936 = vmatprep.subr.mxu0 0.0
    %5937 = vmatpush1.msra.mxu0 0.0
    %5938 = vmatprep.subr.mxu0 0.0
    %5939 = vmatpush1.msra.mxu0 0.0
    %5940 = vmatprep.subr.mxu0 0.0
    %5941 = vmatpush1.msra.mxu0 0.0
    %5942 = vmatprep.subr.mxu0 0.0
    %5943 = vmatpush1.msra.mxu0 0.0
    %5944 = vmatprep.subr.mxu0 0.0
    %5945 = vmatpush1.msra.mxu0 0.0
    %5946 = vmatprep.subr.mxu0 0.0
    %5947 = vmatpush1.msra.mxu0 0.0
    %5948 = vmatprep.subr.mxu0 0.0
    %5949 = vmatpush1.msra.mxu0 0.0
    %5950 = vmatprep.subr.mxu0 0.0
    %5951 = vmatpush1.msra.mxu0 0.0
    %5952 = vmatprep.subr.mxu0 0.0
    %5953 = vmatpush1.msra.mxu0 0.0
    %5954 = vmatprep.subr.mxu0 0.0
    %5955 = vmatpush1.msra.mxu0 0.0
    %5956 = vmatprep.subr.mxu0 0.0
    %5957 = vmatpush1.msra.mxu0 0.0
    %5958 = vmatprep.subr.mxu0 0.0
    %5959 = vmatpush1.msra.mxu0 0.0
    %5960 = vmatprep.subr.mxu0 0.0
    %5961 = vmatpush1.msra.mxu0 0.0
    %5962 = vmatprep.subr.mxu0 0.0
    %5963 = vmatpush1.msra.mxu0 0.0
    %5964 = vmatprep.subr.mxu0 0.0
    %5965 = vmatpush1.msra.mxu0 0.0
    %5966 = vmatprep.subr.mxu0 0.0
    %5967 = vmatpush1.msra.mxu0 0.0
    %5968 = vmatprep.subr.mxu0 0.0
    %5969 = vmatpush1.msra.mxu0 0.0
    %5970 = vmatprep.subr.mxu0 0.0
    %5971 = vmatpush1.msra.mxu0 0.0
    %5972 = vmatprep.subr.mxu0 0.0
    %5973 = vmatpush1.msra.mxu0 0.0
    %5974 = vmatprep.subr.mxu0 0.0
    %5975 = vmatpush1.msra.mxu0 0.0
    %5976 = vmatprep.subr.mxu0 0.0
    %5977 = vmatpush1.msra.mxu0 0.0
    %5978 = vmatprep.mubr.f32.mxu0 0.0
    %5979 = vmatmul.mubr.f32.gmra.mrb[0].mxu0 %v5910
    %v5980 = vpop.f32.mrb[0].mxu0
    %v5981 = vadd.f32 0.0, %v5980
    %v5982 = vpop.f32.mrb[0].mxu0
    %5983 = vdwg.mxu0
    %5985 = vrot.lane.b32.xlu0 %v5981, 16
    %v5986 = vpop.permute.xlu0 %5985
    %5988 = vst.msk [vmem:[#allocation2] sm:$0xff] %vm689, %v5986
    %5989 = vrot.lane.b32.xlu0 %v5384, 104
    %v5990 = vpop.permute.xlu0 %5989
    %5991 = vrot.lane.b32.xlu0 %v5476, 104
    %v5992 = vpop.permute.xlu0 %5991
    %v5993 = vsel %vm180, %v5990, 0
    %v5995 = vsel %vm180, %v5992, 0
    %5997 = vmatprep.subr.mxu0 0.0
    %5998 = vmatpush1.xpose.msra.mxu0 %v5995
    %5999 = vmatprep.subr.mxu0 0.0
    %6000 = vmatpush1.xpose.msra.mxu0 0.0
    %6001 = vmatprep.subr.mxu0 0.0
    %6002 = vmatpush1.xpose.msra.mxu0 0.0
    %6003 = vmatprep.subr.mxu0 0.0
    %6004 = vmatpush1.xpose.msra.mxu0 0.0
    %6005 = vmatprep.subr.mxu0 0.0
    %6006 = vmatpush1.xpose.msra.mxu0 0.0
    %6007 = vmatprep.subr.mxu0 0.0
    %6008 = vmatpush1.xpose.msra.mxu0 0.0
    %6009 = vmatprep.subr.mxu0 0.0
    %6010 = vmatpush1.xpose.msra.mxu0 0.0
    %6011 = vmatprep.subr.mxu0 0.0
    %6012 = vmatpush1.xpose.msra.mxu0 0.0
    %6013 = vmatprep.subr.mxu0 0.0
    %6014 = vmatpush1.xpose.msra.mxu0 0.0
    %6015 = vmatprep.subr.mxu0 0.0
    %6016 = vmatpush1.xpose.msra.mxu0 0.0
    %6017 = vmatprep.subr.mxu0 0.0
    %6018 = vmatpush1.xpose.msra.mxu0 0.0
    %6019 = vmatprep.subr.mxu0 0.0
    %6020 = vmatpush1.xpose.msra.mxu0 0.0
    %6021 = vmatprep.subr.mxu0 0.0
    %6022 = vmatpush1.xpose.msra.mxu0 0.0
    %6023 = vmatprep.subr.mxu0 0.0
    %6024 = vmatpush1.xpose.msra.mxu0 0.0
    %6025 = vmatprep.subr.mxu0 0.0
    %6026 = vmatpush1.xpose.msra.mxu0 0.0
    %6027 = vmatprep.subr.mxu0 0.0
    %6028 = vmatpush1.xpose.msra.mxu0 0.0
    %6029 = vmatprep.subr.mxu0 0.0
    %6030 = vmatpush1.xpose.msra.mxu0 0.0
    %6031 = vmatprep.subr.mxu0 0.0
    %6032 = vmatpush1.xpose.msra.mxu0 0.0
    %6033 = vmatprep.subr.mxu0 0.0
    %6034 = vmatpush1.xpose.msra.mxu0 0.0
    %6035 = vmatprep.subr.mxu0 0.0
    %6036 = vmatpush1.xpose.msra.mxu0 0.0
    %6037 = vmatprep.subr.mxu0 0.0
    %6038 = vmatpush1.xpose.msra.mxu0 0.0
    %6039 = vmatprep.subr.mxu0 0.0
    %6040 = vmatpush1.xpose.msra.mxu0 0.0
    %6041 = vmatprep.subr.mxu0 0.0
    %6042 = vmatpush1.xpose.msra.mxu0 0.0
    %6043 = vmatprep.subr.mxu0 0.0
    %6044 = vmatpush1.xpose.msra.mxu0 0.0
    %6045 = vmatprep.subr.mxu0 0.0
    %6046 = vmatpush1.xpose.msra.mxu0 0.0
    %6047 = vmatprep.subr.mxu0 0.0
    %6048 = vmatpush1.xpose.msra.mxu0 0.0
    %6049 = vmatprep.subr.mxu0 0.0
    %6050 = vmatpush1.xpose.msra.mxu0 0.0
    %6051 = vmatprep.subr.mxu0 0.0
    %6052 = vmatpush1.xpose.msra.mxu0 0.0
    %6053 = vmatprep.subr.mxu0 0.0
    %6054 = vmatpush1.xpose.msra.mxu0 0.0
    %6055 = vmatprep.subr.mxu0 0.0
    %6056 = vmatpush1.xpose.msra.mxu0 0.0
    %6057 = vmatprep.subr.mxu0 0.0
    %6058 = vmatpush1.xpose.msra.mxu0 0.0
    %6059 = vmatprep.subr.mxu0 0.0
    %6060 = vmatpush1.xpose.msra.mxu0 0.0
    %6061 = vmatprep.mubr.f32.mxu0 0.0
    %6062 = vmatmul.mubr.f32.gmra.mrb[0].mxu0 %v5993
    %v6063 = vpop.f32.mrb[0].mxu0
    %v6064 = vadd.f32 0.0, %v6063
    %v6065 = vpop.f32.mrb[0].mxu0
    %6066 = vdwg.mxu0
    %v6067 = vmul.f32 %v6064, 0.35355338
    %v6068 = vsel %vm1942, %v6067, -inf
    %6069 = vmax.xlane.f32.xlu0 %v6068
    %v6070 = vpop.xlane.xlu0 %6069
    %v6071 = vsub.f32 %v6067, %v6070
    %v6072 = vmul.f32 %v6071, 1.442695
    %v6073 = vpow.pop %v6072
    %v6074 = vsel %vm1942, %v6073, 0.0
    %6075 = vadd.xlane.f32.xlu0 %v6074
    %v6076 = vpop.xlane.xlu0 %6075
    %v6077 = vrcp.pop %v6076
    %v6078 = vmul.f32 %v6073, %v6077
    %6079 = vrot.lane.b32.xlu0 %v5476, 72
    %v6080 = vpop.permute.xlu0 %6079
    %v6082 = vsel %vm1942, %v6078, 0
    %v6084 = vsel %vm1959, %v6080, 0
    %6086 = vmatprep.subr.mxu0 0.0
    %6087 = vmatpush1.msra.mxu0 %v6084
    %6088 = vmatprep.subr.mxu0 0.0
    %6089 = vmatpush1.msra.mxu0 0.0
    %6090 = vmatprep.subr.mxu0 0.0
    %6091 = vmatpush1.msra.mxu0 0.0
    %6092 = vmatprep.subr.mxu0 0.0
    %6093 = vmatpush1.msra.mxu0 0.0
    %6094 = vmatprep.subr.mxu0 0.0
    %6095 = vmatpush1.msra.mxu0 0.0
    %6096 = vmatprep.subr.mxu0 0.0
    %6097 = vmatpush1.msra.mxu0 0.0
    %6098 = vmatprep.subr.mxu0 0.0
    %6099 = vmatpush1.msra.mxu0 0.0
    %6100 = vmatprep.subr.mxu0 0.0
    %6101 = vmatpush1.msra.mxu0 0.0
    %6102 = vmatprep.subr.mxu0 0.0
    %6103 = vmatpush1.msra.mxu0 0.0
    %6104 = vmatprep.subr.mxu0 0.0
    %6105 = vmatpush1.msra.mxu0 0.0
    %6106 = vmatprep.subr.mxu0 0.0
    %6107 = vmatpush1.msra.mxu0 0.0
    %6108 = vmatprep.subr.mxu0 0.0
    %6109 = vmatpush1.msra.mxu0 0.0
    %6110 = vmatprep.subr.mxu0 0.0
    %6111 = vmatpush1.msra.mxu0 0.0
    %6112 = vmatprep.subr.mxu0 0.0
    %6113 = vmatpush1.msra.mxu0 0.0
    %6114 = vmatprep.subr.mxu0 0.0
    %6115 = vmatpush1.msra.mxu0 0.0
    %6116 = vmatprep.subr.mxu0 0.0
    %6117 = vmatpush1.msra.mxu0 0.0
    %6118 = vmatprep.subr.mxu0 0.0
    %6119 = vmatpush1.msra.mxu0 0.0
    %6120 = vmatprep.subr.mxu0 0.0
    %6121 = vmatpush1.msra.mxu0 0.0
    %6122 = vmatprep.subr.mxu0 0.0
    %6123 = vmatpush1.msra.mxu0 0.0
    %6124 = vmatprep.subr.mxu0 0.0
    %6125 = vmatpush1.msra.mxu0 0.0
    %6126 = vmatprep.subr.mxu0 0.0
    %6127 = vmatpush1.msra.mxu0 0.0
    %6128 = vmatprep.subr.mxu0 0.0
    %6129 = vmatpush1.msra.mxu0 0.0
    %6130 = vmatprep.subr.mxu0 0.0
    %6131 = vmatpush1.msra.mxu0 0.0
    %6132 = vmatprep.subr.mxu0 0.0
    %6133 = vmatpush1.msra.mxu0 0.0
    %6134 = vmatprep.subr.mxu0 0.0
    %6135 = vmatpush1.msra.mxu0 0.0
    %6136 = vmatprep.subr.mxu0 0.0
    %6137 = vmatpush1.msra.mxu0 0.0
    %6138 = vmatprep.subr.mxu0 0.0
    %6139 = vmatpush1.msra.mxu0 0.0
    %6140 = vmatprep.subr.mxu0 0.0
    %6141 = vmatpush1.msra.mxu0 0.0
    %6142 = vmatprep.subr.mxu0 0.0
    %6143 = vmatpush1.msra.mxu0 0.0
    %6144 = vmatprep.subr.mxu0 0.0
    %6145 = vmatpush1.msra.mxu0 0.0
    %6146 = vmatprep.subr.mxu0 0.0
    %6147 = vmatpush1.msra.mxu0 0.0
    %6148 = vmatprep.subr.mxu0 0.0
    %6149 = vmatpush1.msra.mxu0 0.0
    %6150 = vmatprep.mubr.f32.mxu0 0.0
    %6151 = vmatmul.mubr.f32.gmra.mrb[0].mxu0 %v6082
    %v6152 = vpop.f32.mrb[0].mxu0
    %v6153 = vadd.f32 0.0, %v6152
    %v6154 = vpop.f32.mrb[0].mxu0
    %6155 = vdwg.mxu0
    %6157 = vrot.lane.b32.xlu0 %v6153, 24
    %v6158 = vpop.permute.xlu0 %6157
    %6160 = vst.msk [vmem:[#allocation2] sm:$0xff] %vm862, %v6158
    %v6161 = vld [vmem:[%s2549] sm:$0xf]
    %v6162 = vld [vmem:[%s5393] sm:$0xff]
    %v6163 = vld [vmem:[%s5393 + $0x8] sm:$0xff]
    %v6164 = vld [vmem:[%s5393 + $0x10] sm:$0xff]
    %v6165 = vld [vmem:[%s5393 + $0x18] sm:$0xff]
    %v6166 = vld [vmem:[%s5398] sm:$0x1]
    %v6168 = vlaneseq
    %v6169 = vshrl.u32 %v6168, 7
    %v6170 = vsub.s32 0, %v6169
    %v6171 = vrot.slane %v6166, %v6170
    %v6174 = vsel %vm95, %v6161, 0
    %6176 = vmatprep.subr.mxu0 0.0
    %6177 = vmatpush1.msra.mxu0 %v6162
    %6178 = vmatprep.subr.mxu0 0.0
    %6179 = vmatpush1.msra.mxu0 %v6163
    %6180 = vmatprep.subr.mxu0 0.0
    %6181 = vmatpush1.msra.mxu0 %v6164
    %6182 = vmatprep.subr.mxu0 0.0
    %6183 = vmatpush1.msra.mxu0 %v6165
    %6184 = vmatprep.subr.mxu0 0.0
    %6185 = vmatpush1.msra.mxu0 0.0
    %6186 = vmatprep.subr.mxu0 0.0
    %6187 = vmatpush1.msra.mxu0 0.0
    %6188 = vmatprep.subr.mxu0 0.0
    %6189 = vmatpush1.msra.mxu0 0.0
    %6190 = vmatprep.subr.mxu0 0.0
    %6191 = vmatpush1.msra.mxu0 0.0
    %6192 = vmatprep.subr.mxu0 0.0
    %6193 = vmatpush1.msra.mxu0 0.0
    %6194 = vmatprep.subr.mxu0 0.0
    %6195 = vmatpush1.msra.mxu0 0.0
    %6196 = vmatprep.subr.mxu0 0.0
    %6197 = vmatpush1.msra.mxu0 0.0
    %6198 = vmatprep.subr.mxu0 0.0
    %6199 = vmatpush1.msra.mxu0 0.0
    %6200 = vmatprep.subr.mxu0 0.0
    %6201 = vmatpush1.msra.mxu0 0.0
    %6202 = vmatprep.subr.mxu0 0.0
    %6203 = vmatpush1.msra.mxu0 0.0
    %6204 = vmatprep.subr.mxu0 0.0
    %6205 = vmatpush1.msra.mxu0 0.0
    %6206 = vmatprep.subr.mxu0 0.0
    %6207 = vmatpush1.msra.mxu0 0.0
    %6208 = vmatprep.subr.mxu0 0.0
    %6209 = vmatpush1.msra.mxu0 0.0
    %6210 = vmatprep.subr.mxu0 0.0
    %6211 = vmatpush1.msra.mxu0 0.0
    %6212 = vmatprep.subr.mxu0 0.0
    %6213 = vmatpush1.msra.mxu0 0.0
    %6214 = vmatprep.subr.mxu0 0.0
    %6215 = vmatpush1.msra.mxu0 0.0
    %6216 = vmatprep.subr.mxu0 0.0
    %6217 = vmatpush1.msra.mxu0 0.0
    %6218 = vmatprep.subr.mxu0 0.0
    %6219 = vmatpush1.msra.mxu0 0.0
    %6220 = vmatprep.subr.mxu0 0.0
    %6221 = vmatpush1.msra.mxu0 0.0
    %6222 = vmatprep.subr.mxu0 0.0
    %6223 = vmatpush1.msra.mxu0 0.0
    %6224 = vmatprep.subr.mxu0 0.0
    %6225 = vmatpush1.msra.mxu0 0.0
    %6226 = vmatprep.subr.mxu0 0.0
    %6227 = vmatpush1.msra.mxu0 0.0
    %6228 = vmatprep.subr.mxu0 0.0
    %6229 = vmatpush1.msra.mxu0 0.0
    %6230 = vmatprep.subr.mxu0 0.0
    %6231 = vmatpush1.msra.mxu0 0.0
    %6232 = vmatprep.subr.mxu0 0.0
    %6233 = vmatpush1.msra.mxu0 0.0
    %6234 = vmatprep.subr.mxu0 0.0
    %6235 = vmatpush1.msra.mxu0 0.0
    %6236 = vmatprep.subr.mxu0 0.0
    %6237 = vmatpush1.msra.mxu0 0.0
    %6238 = vmatprep.subr.mxu0 0.0
    %6239 = vmatpush1.msra.mxu0 0.0
    %6240 = vmatprep.mubr.f32.mxu0 0.0
    %6241 = vmatmul.mubr.f32.gmra.mrb[0].mxu0 %v6174
    %v6242 = vpop.f32.mrb[0].mxu0
    %v6243 = vadd.f32 %v6171, %v6242
    %v6244 = vpop.f32.mrb[0].mxu0
    %6245 = vdwg.mxu0
    %v6247 = vsel %vm180, %v5389, 0
    %v6250 = vsel %vm180, %v6243, 0
    %6252 = vmatprep.subr.mxu0 0.0
    %6253 = vmatpush1.xpose.msra.mxu0 %v6250
    %6254 = vmatprep.subr.mxu0 0.0
    %6255 = vmatpush1.xpose.msra.mxu0 0.0
    %6256 = vmatprep.subr.mxu0 0.0
    %6257 = vmatpush1.xpose.msra.mxu0 0.0
    %6258 = vmatprep.subr.mxu0 0.0
    %6259 = vmatpush1.xpose.msra.mxu0 0.0
    %6260 = vmatprep.subr.mxu0 0.0
    %6261 = vmatpush1.xpose.msra.mxu0 0.0
    %6262 = vmatprep.subr.mxu0 0.0
    %6263 = vmatpush1.xpose.msra.mxu0 0.0
    %6264 = vmatprep.subr.mxu0 0.0
    %6265 = vmatpush1.xpose.msra.mxu0 0.0
    %6266 = vmatprep.subr.mxu0 0.0
    %6267 = vmatpush1.xpose.msra.mxu0 0.0
    %6268 = vmatprep.subr.mxu0 0.0
    %6269 = vmatpush1.xpose.msra.mxu0 0.0
    %6270 = vmatprep.subr.mxu0 0.0
    %6271 = vmatpush1.xpose.msra.mxu0 0.0
    %6272 = vmatprep.subr.mxu0 0.0
    %6273 = vmatpush1.xpose.msra.mxu0 0.0
    %6274 = vmatprep.subr.mxu0 0.0
    %6275 = vmatpush1.xpose.msra.mxu0 0.0
    %6276 = vmatprep.subr.mxu0 0.0
    %6277 = vmatpush1.xpose.msra.mxu0 0.0
    %6278 = vmatprep.subr.mxu0 0.0
    %6279 = vmatpush1.xpose.msra.mxu0 0.0
    %6280 = vmatprep.subr.mxu0 0.0
    %6281 = vmatpush1.xpose.msra.mxu0 0.0
    %6282 = vmatprep.subr.mxu0 0.0
    %6283 = vmatpush1.xpose.msra.mxu0 0.0
    %6284 = vmatprep.subr.mxu0 0.0
    %6285 = vmatpush1.xpose.msra.mxu0 0.0
    %6286 = vmatprep.subr.mxu0 0.0
    %6287 = vmatpush1.xpose.msra.mxu0 0.0
    %6288 = vmatprep.subr.mxu0 0.0
    %6289 = vmatpush1.xpose.msra.mxu0 0.0
    %6290 = vmatprep.subr.mxu0 0.0
    %6291 = vmatpush1.xpose.msra.mxu0 0.0
    %6292 = vmatprep.subr.mxu0 0.0
    %6293 = vmatpush1.xpose.msra.mxu0 0.0
    %6294 = vmatprep.subr.mxu0 0.0
    %6295 = vmatpush1.xpose.msra.mxu0 0.0
    %6296 = vmatprep.subr.mxu0 0.0
    %6297 = vmatpush1.xpose.msra.mxu0 0.0
    %6298 = vmatprep.subr.mxu0 0.0
    %6299 = vmatpush1.xpose.msra.mxu0 0.0
    %6300 = vmatprep.subr.mxu0 0.0
    %6301 = vmatpush1.xpose.msra.mxu0 0.0
    %6302 = vmatprep.subr.mxu0 0.0
    %6303 = vmatpush1.xpose.msra.mxu0 0.0
    %6304 = vmatprep.subr.mxu0 0.0
    %6305 = vmatpush1.xpose.msra.mxu0 0.0
    %6306 = vmatprep.subr.mxu0 0.0
    %6307 = vmatpush1.xpose.msra.mxu0 0.0
    %6308 = vmatprep.subr.mxu0 0.0
    %6309 = vmatpush1.xpose.msra.mxu0 0.0
    %6310 = vmatprep.subr.mxu0 0.0
    %6311 = vmatpush1.xpose.msra.mxu0 0.0
    %6312 = vmatprep.subr.mxu0 0.0
    %6313 = vmatpush1.xpose.msra.mxu0 0.0
    %6314 = vmatprep.subr.mxu0 0.0
    %6315 = vmatpush1.xpose.msra.mxu0 0.0
    %6316 = vmatprep.mubr.f32.mxu0 0.0
    %6317 = vmatmul.mubr.f32.gmra.mrb[0].mxu0 %v6247
    %v6318 = vpop.f32.mrb[0].mxu0
    %v6319 = vadd.f32 0.0, %v6318
    %v6320 = vpop.f32.mrb[0].mxu0
    %6321 = vdwg.mxu0
    %v6322 = vmul.f32 %v6319, 0.35355338
    %v6323 = vsel %vm1942, %v6322, -inf
    %6324 = vmax.xlane.f32.xlu0 %v6323
    %v6325 = vpop.xlane.xlu0 %6324
    %v6326 = vsub.f32 %v6322, %v6325
    %v6327 = vmul.f32 %v6326, 1.442695
    %v6328 = vpow.pop %v6327
    %v6329 = vsel %vm1942, %v6328, 0.0
    %6330 = vadd.xlane.f32.xlu0 %v6329
    %v6331 = vpop.xlane.xlu0 %6330
    %v6332 = vrcp.pop %v6331
    %v6333 = vmul.f32 %v6328, %v6332
    %6334 = vrot.lane.b32.xlu0 %v6243, 96
    %v6335 = vpop.permute.xlu0 %6334
    %v6337 = vsel %vm1942, %v6333, 0
    %v6339 = vsel %vm1959, %v6335, 0
    %6341 = vmatprep.subr.mxu0 0.0
    %6342 = vmatpush1.msra.mxu0 %v6339
    %6343 = vmatprep.subr.mxu0 0.0
    %6344 = vmatpush1.msra.mxu0 0.0
    %6345 = vmatprep.subr.mxu0 0.0
    %6346 = vmatpush1.msra.mxu0 0.0
    %6347 = vmatprep.subr.mxu0 0.0
    %6348 = vmatpush1.msra.mxu0 0.0
    %6349 = vmatprep.subr.mxu0 0.0
    %6350 = vmatpush1.msra.mxu0 0.0
    %6351 = vmatprep.subr.mxu0 0.0
    %6352 = vmatpush1.msra.mxu0 0.0
    %6353 = vmatprep.subr.mxu0 0.0
    %6354 = vmatpush1.msra.mxu0 0.0
    %6355 = vmatprep.subr.mxu0 0.0
    %6356 = vmatpush1.msra.mxu0 0.0
    %6357 = vmatprep.subr.mxu0 0.0
    %6358 = vmatpush1.msra.mxu0 0.0
    %6359 = vmatprep.subr.mxu0 0.0
    %6360 = vmatpush1.msra.mxu0 0.0
    %6361 = vmatprep.subr.mxu0 0.0
    %6362 = vmatpush1.msra.mxu0 0.0
    %6363 = vmatprep.subr.mxu0 0.0
    %6364 = vmatpush1.msra.mxu0 0.0
    %6365 = vmatprep.subr.mxu0 0.0
    %6366 = vmatpush1.msra.mxu0 0.0
    %6367 = vmatprep.subr.mxu0 0.0
    %6368 = vmatpush1.msra.mxu0 0.0
    %6369 = vmatprep.subr.mxu0 0.0
    %6370 = vmatpush1.msra.mxu0 0.0
    %6371 = vmatprep.subr.mxu0 0.0
    %6372 = vmatpush1.msra.mxu0 0.0
    %6373 = vmatprep.subr.mxu0 0.0
    %6374 = vmatpush1.msra.mxu0 0.0
    %6375 = vmatprep.subr.mxu0 0.0
    %6376 = vmatpush1.msra.mxu0 0.0
    %6377 = vmatprep.subr.mxu0 0.0
    %6378 = vmatpush1.msra.mxu0 0.0
    %6379 = vmatprep.subr.mxu0 0.0
    %6380 = vmatpush1.msra.mxu0 0.0
    %6381 = vmatprep.subr.mxu0 0.0
    %6382 = vmatpush1.msra.mxu0 0.0
    %6383 = vmatprep.subr.mxu0 0.0
    %6384 = vmatpush1.msra.mxu0 0.0
    %6385 = vmatprep.subr.mxu0 0.0
    %6386 = vmatpush1.msra.mxu0 0.0
    %6387 = vmatprep.subr.mxu0 0.0
    %6388 = vmatpush1.msra.mxu0 0.0
    %6389 = vmatprep.subr.mxu0 0.0
    %6390 = vmatpush1.msra.mxu0 0.0
    %6391 = vmatprep.subr.mxu0 0.0
    %6392 = vmatpush1.msra.mxu0 0.0
    %6393 = vmatprep.subr.mxu0 0.0
    %6394 = vmatpush1.msra.mxu0 0.0
    %6395 = vmatprep.subr.mxu0 0.0
    %6396 = vmatpush1.msra.mxu0 0.0
    %6397 = vmatprep.subr.mxu0 0.0
    %6398 = vmatpush1.msra.mxu0 0.0
    %6399 = vmatprep.subr.mxu0 0.0
    %6400 = vmatpush1.msra.mxu0 0.0
    %6401 = vmatprep.subr.mxu0 0.0
    %6402 = vmatpush1.msra.mxu0 0.0
    %6403 = vmatprep.subr.mxu0 0.0
    %6404 = vmatpush1.msra.mxu0 0.0
    %6405 = vmatprep.mubr.f32.mxu0 0.0
    %6406 = vmatmul.mubr.f32.gmra.mrb[0].mxu0 %v6337
    %v6407 = vpop.f32.mrb[0].mxu0
    %v6408 = vadd.f32 0.0, %v6407
    %v6409 = vpop.f32.mrb[0].mxu0
    %6410 = vdwg.mxu0
    %6411 = vst.msk [vmem:[#allocation2 + $0x8] sm:$0xff] %vm180, %v6408
    %6412 = vrot.lane.b32.xlu0 %v5389, 120
    %v6413 = vpop.permute.xlu0 %6412
    %6414 = vrot.lane.b32.xlu0 %v6243, 120
    %v6415 = vpop.permute.xlu0 %6414
    %v6416 = vsel %vm180, %v6413, 0
    %v6418 = vsel %vm180, %v6415, 0
    %6420 = vmatprep.subr.mxu0 0.0
    %6421 = vmatpush1.xpose.msra.mxu0 %v6418
    %6422 = vmatprep.subr.mxu0 0.0
    %6423 = vmatpush1.xpose.msra.mxu0 0.0
    %6424 = vmatprep.subr.mxu0 0.0
    %6425 = vmatpush1.xpose.msra.mxu0 0.0
    %6426 = vmatprep.subr.mxu0 0.0
    %6427 = vmatpush1.xpose.msra.mxu0 0.0
    %6428 = vmatprep.subr.mxu0 0.0
    %6429 = vmatpush1.xpose.msra.mxu0 0.0
    %6430 = vmatprep.subr.mxu0 0.0
    %6431 = vmatpush1.xpose.msra.mxu0 0.0
    %6432 = vmatprep.subr.mxu0 0.0
    %6433 = vmatpush1.xpose.msra.mxu0 0.0
    %6434 = vmatprep.subr.mxu0 0.0
    %6435 = vmatpush1.xpose.msra.mxu0 0.0
    %6436 = vmatprep.subr.mxu0 0.0
    %6437 = vmatpush1.xpose.msra.mxu0 0.0
    %6438 = vmatprep.subr.mxu0 0.0
    %6439 = vmatpush1.xpose.msra.mxu0 0.0
    %6440 = vmatprep.subr.mxu0 0.0
    %6441 = vmatpush1.xpose.msra.mxu0 0.0
    %6442 = vmatprep.subr.mxu0 0.0
    %6443 = vmatpush1.xpose.msra.mxu0 0.0
    %6444 = vmatprep.subr.mxu0 0.0
    %6445 = vmatpush1.xpose.msra.mxu0 0.0
    %6446 = vmatprep.subr.mxu0 0.0
    %6447 = vmatpush1.xpose.msra.mxu0 0.0
    %6448 = vmatprep.subr.mxu0 0.0
    %6449 = vmatpush1.xpose.msra.mxu0 0.0
    %6450 = vmatprep.subr.mxu0 0.0
    %6451 = vmatpush1.xpose.msra.mxu0 0.0
    %6452 = vmatprep.subr.mxu0 0.0
    %6453 = vmatpush1.xpose.msra.mxu0 0.0
    %6454 = vmatprep.subr.mxu0 0.0
    %6455 = vmatpush1.xpose.msra.mxu0 0.0
    %6456 = vmatprep.subr.mxu0 0.0
    %6457 = vmatpush1.xpose.msra.mxu0 0.0
    %6458 = vmatprep.subr.mxu0 0.0
    %6459 = vmatpush1.xpose.msra.mxu0 0.0
    %6460 = vmatprep.subr.mxu0 0.0
    %6461 = vmatpush1.xpose.msra.mxu0 0.0
    %6462 = vmatprep.subr.mxu0 0.0
    %6463 = vmatpush1.xpose.msra.mxu0 0.0
    %6464 = vmatprep.subr.mxu0 0.0
    %6465 = vmatpush1.xpose.msra.mxu0 0.0
    %6466 = vmatprep.subr.mxu0 0.0
    %6467 = vmatpush1.xpose.msra.mxu0 0.0
    %6468 = vmatprep.subr.mxu0 0.0
    %6469 = vmatpush1.xpose.msra.mxu0 0.0
    %6470 = vmatprep.subr.mxu0 0.0
    %6471 = vmatpush1.xpose.msra.mxu0 0.0
    %6472 = vmatprep.subr.mxu0 0.0
    %6473 = vmatpush1.xpose.msra.mxu0 0.0
    %6474 = vmatprep.subr.mxu0 0.0
    %6475 = vmatpush1.xpose.msra.mxu0 0.0
    %6476 = vmatprep.subr.mxu0 0.0
    %6477 = vmatpush1.xpose.msra.mxu0 0.0
    %6478 = vmatprep.subr.mxu0 0.0
    %6479 = vmatpush1.xpose.msra.mxu0 0.0
    %6480 = vmatprep.subr.mxu0 0.0
    %6481 = vmatpush1.xpose.msra.mxu0 0.0
    %6482 = vmatprep.subr.mxu0 0.0
    %6483 = vmatpush1.xpose.msra.mxu0 0.0
    %6484 = vmatprep.mubr.f32.mxu0 0.0
    %6485 = vmatmul.mubr.f32.gmra.mrb[0].mxu0 %v6416
    %v6486 = vpop.f32.mrb[0].mxu0
    %v6487 = vadd.f32 0.0, %v6486
    %v6488 = vpop.f32.mrb[0].mxu0
    %6489 = vdwg.mxu0
    %v6490 = vmul.f32 %v6487, 0.35355338
    %v6491 = vsel %vm1942, %v6490, -inf
    %6492 = vmax.xlane.f32.xlu0 %v6491
    %v6493 = vpop.xlane.xlu0 %6492
    %v6494 = vsub.f32 %v6490, %v6493
    %v6495 = vmul.f32 %v6494, 1.442695
    %v6496 = vpow.pop %v6495
    %v6497 = vsel %vm1942, %v6496, 0.0
    %6498 = vadd.xlane.f32.xlu0 %v6497
    %v6499 = vpop.xlane.xlu0 %6498
    %v6500 = vrcp.pop %v6499
    %v6501 = vmul.f32 %v6496, %v6500
    %6502 = vrot.lane.b32.xlu0 %v6243, 88
    %v6503 = vpop.permute.xlu0 %6502
    %v6505 = vsel %vm1942, %v6501, 0
    %v6507 = vsel %vm1959, %v6503, 0
    %6509 = vmatprep.subr.mxu0 0.0
    %6510 = vmatpush1.msra.mxu0 %v6507
    %6511 = vmatprep.subr.mxu0 0.0
    %6512 = vmatpush1.msra.mxu0 0.0
    %6513 = vmatprep.subr.mxu0 0.0
    %6514 = vmatpush1.msra.mxu0 0.0
    %6515 = vmatprep.subr.mxu0 0.0
    %6516 = vmatpush1.msra.mxu0 0.0
    %6517 = vmatprep.subr.mxu0 0.0
    %6518 = vmatpush1.msra.mxu0 0.0
    %6519 = vmatprep.subr.mxu0 0.0
    %6520 = vmatpush1.msra.mxu0 0.0
    %6521 = vmatprep.subr.mxu0 0.0
    %6522 = vmatpush1.msra.mxu0 0.0
    %6523 = vmatprep.subr.mxu0 0.0
    %6524 = vmatpush1.msra.mxu0 0.0
    %6525 = vmatprep.subr.mxu0 0.0
    %6526 = vmatpush1.msra.mxu0 0.0
    %6527 = vmatprep.subr.mxu0 0.0
    %6528 = vmatpush1.msra.mxu0 0.0
    %6529 = vmatprep.subr.mxu0 0.0
    %6530 = vmatpush1.msra.mxu0 0.0
    %6531 = vmatprep.subr.mxu0 0.0
    %6532 = vmatpush1.msra.mxu0 0.0
    %6533 = vmatprep.subr.mxu0 0.0
    %6534 = vmatpush1.msra.mxu0 0.0
    %6535 = vmatprep.subr.mxu0 0.0
    %6536 = vmatpush1.msra.mxu0 0.0
    %6537 = vmatprep.subr.mxu0 0.0
    %6538 = vmatpush1.msra.mxu0 0.0
    %6539 = vmatprep.subr.mxu0 0.0
    %6540 = vmatpush1.msra.mxu0 0.0
    %6541 = vmatprep.subr.mxu0 0.0
    %6542 = vmatpush1.msra.mxu0 0.0
    %6543 = vmatprep.subr.mxu0 0.0
    %6544 = vmatpush1.msra.mxu0 0.0
    %6545 = vmatprep.subr.mxu0 0.0
    %6546 = vmatpush1.msra.mxu0 0.0
    %6547 = vmatprep.subr.mxu0 0.0
    %6548 = vmatpush1.msra.mxu0 0.0
    %6549 = vmatprep.subr.mxu0 0.0
    %6550 = vmatpush1.msra.mxu0 0.0
    %6551 = vmatprep.subr.mxu0 0.0
    %6552 = vmatpush1.msra.mxu0 0.0
    %6553 = vmatprep.subr.mxu0 0.0
    %6554 = vmatpush1.msra.mxu0 0.0
    %6555 = vmatprep.subr.mxu0 0.0
    %6556 = vmatpush1.msra.mxu0 0.0
    %6557 = vmatprep.subr.mxu0 0.0
    %6558 = vmatpush1.msra.mxu0 0.0
    %6559 = vmatprep.subr.mxu0 0.0
    %6560 = vmatpush1.msra.mxu0 0.0
    %6561 = vmatprep.subr.mxu0 0.0
    %6562 = vmatpush1.msra.mxu0 0.0
    %6563 = vmatprep.subr.mxu0 0.0
    %6564 = vmatpush1.msra.mxu0 0.0
    %6565 = vmatprep.subr.mxu0 0.0
    %6566 = vmatpush1.msra.mxu0 0.0
    %6567 = vmatprep.subr.mxu0 0.0
    %6568 = vmatpush1.msra.mxu0 0.0
    %6569 = vmatprep.subr.mxu0 0.0
    %6570 = vmatpush1.msra.mxu0 0.0
    %6571 = vmatprep.subr.mxu0 0.0
    %6572 = vmatpush1.msra.mxu0 0.0
    %6573 = vmatprep.mubr.f32.mxu0 0.0
    %6574 = vmatmul.mubr.f32.gmra.mrb[0].mxu0 %v6505
    %v6575 = vpop.f32.mrb[0].mxu0
    %v6576 = vadd.f32 0.0, %v6575
    %v6577 = vpop.f32.mrb[0].mxu0
    %6578 = vdwg.mxu0
    %6580 = vrot.lane.b32.xlu0 %v6576, 8
    %v6581 = vpop.permute.xlu0 %6580
    %6583 = vst.msk [vmem:[#allocation2 + $0x8] sm:$0xff] %vm516, %v6581
    %6584 = vrot.lane.b32.xlu0 %v5389, 112
    %v6585 = vpop.permute.xlu0 %6584
    %6586 = vrot.lane.b32.xlu0 %v6243, 112
    %v6587 = vpop.permute.xlu0 %6586
    %v6588 = vsel %vm180, %v6585, 0
    %v6590 = vsel %vm180, %v6587, 0
    %6592 = vmatprep.subr.mxu0 0.0
    %6593 = vmatpush1.xpose.msra.mxu0 %v6590
    %6594 = vmatprep.subr.mxu0 0.0
    %6595 = vmatpush1.xpose.msra.mxu0 0.0
    %6596 = vmatprep.subr.mxu0 0.0
    %6597 = vmatpush1.xpose.msra.mxu0 0.0
    %6598 = vmatprep.subr.mxu0 0.0
    %6599 = vmatpush1.xpose.msra.mxu0 0.0
    %6600 = vmatprep.subr.mxu0 0.0
    %6601 = vmatpush1.xpose.msra.mxu0 0.0
    %6602 = vmatprep.subr.mxu0 0.0
    %6603 = vmatpush1.xpose.msra.mxu0 0.0
    %6604 = vmatprep.subr.mxu0 0.0
    %6605 = vmatpush1.xpose.msra.mxu0 0.0
    %6606 = vmatprep.subr.mxu0 0.0
    %6607 = vmatpush1.xpose.msra.mxu0 0.0
    %6608 = vmatprep.subr.mxu0 0.0
    %6609 = vmatpush1.xpose.msra.mxu0 0.0
    %6610 = vmatprep.subr.mxu0 0.0
    %6611 = vmatpush1.xpose.msra.mxu0 0.0
    %6612 = vmatprep.subr.mxu0 0.0
    %6613 = vmatpush1.xpose.msra.mxu0 0.0
    %6614 = vmatprep.subr.mxu0 0.0
    %6615 = vmatpush1.xpose.msra.mxu0 0.0
    %6616 = vmatprep.subr.mxu0 0.0
    %6617 = vmatpush1.xpose.msra.mxu0 0.0
    %6618 = vmatprep.subr.mxu0 0.0
    %6619 = vmatpush1.xpose.msra.mxu0 0.0
    %6620 = vmatprep.subr.mxu0 0.0
    %6621 = vmatpush1.xpose.msra.mxu0 0.0
    %6622 = vmatprep.subr.mxu0 0.0
    %6623 = vmatpush1.xpose.msra.mxu0 0.0
    %6624 = vmatprep.subr.mxu0 0.0
    %6625 = vmatpush1.xpose.msra.mxu0 0.0
    %6626 = vmatprep.subr.mxu0 0.0
    %6627 = vmatpush1.xpose.msra.mxu0 0.0
    %6628 = vmatprep.subr.mxu0 0.0
    %6629 = vmatpush1.xpose.msra.mxu0 0.0
    %6630 = vmatprep.subr.mxu0 0.0
    %6631 = vmatpush1.xpose.msra.mxu0 0.0
    %6632 = vmatprep.subr.mxu0 0.0
    %6633 = vmatpush1.xpose.msra.mxu0 0.0
    %6634 = vmatprep.subr.mxu0 0.0
    %6635 = vmatpush1.xpose.msra.mxu0 0.0
    %6636 = vmatprep.subr.mxu0 0.0
    %6637 = vmatpush1.xpose.msra.mxu0 0.0
    %6638 = vmatprep.subr.mxu0 0.0
    %6639 = vmatpush1.xpose.msra.mxu0 0.0
    %6640 = vmatprep.subr.mxu0 0.0
    %6641 = vmatpush1.xpose.msra.mxu0 0.0
    %6642 = vmatprep.subr.mxu0 0.0
    %6643 = vmatpush1.xpose.msra.mxu0 0.0
    %6644 = vmatprep.subr.mxu0 0.0
    %6645 = vmatpush1.xpose.msra.mxu0 0.0
    %6646 = vmatprep.subr.mxu0 0.0
    %6647 = vmatpush1.xpose.msra.mxu0 0.0
    %6648 = vmatprep.subr.mxu0 0.0
    %6649 = vmatpush1.xpose.msra.mxu0 0.0
    %6650 = vmatprep.subr.mxu0 0.0
    %6651 = vmatpush1.xpose.msra.mxu0 0.0
    %6652 = vmatprep.subr.mxu0 0.0
    %6653 = vmatpush1.xpose.msra.mxu0 0.0
    %6654 = vmatprep.subr.mxu0 0.0
    %6655 = vmatpush1.xpose.msra.mxu0 0.0
    %6656 = vmatprep.mubr.f32.mxu0 0.0
    %6657 = vmatmul.mubr.f32.gmra.mrb[0].mxu0 %v6588
    %v6658 = vpop.f32.mrb[0].mxu0
    %v6659 = vadd.f32 0.0, %v6658
    %v6660 = vpop.f32.mrb[0].mxu0
    %6661 = vdwg.mxu0
    %v6662 = vmul.f32 %v6659, 0.35355338
    %v6663 = vsel %vm1942, %v6662, -inf
    %6664 = vmax.xlane.f32.xlu0 %v6663
    %v6665 = vpop.xlane.xlu0 %6664
    %v6666 = vsub.f32 %v6662, %v6665
    %v6667 = vmul.f32 %v6666, 1.442695
    %v6668 = vpow.pop %v6667
    %v6669 = vsel %vm1942, %v6668, 0.0
    %6670 = vadd.xlane.f32.xlu0 %v6669
    %v6671 = vpop.xlane.xlu0 %6670
    %v6672 = vrcp.pop %v6671
    %v6673 = vmul.f32 %v6668, %v6672
    %6674 = vrot.lane.b32.xlu0 %v6243, 80
    %v6675 = vpop.permute.xlu0 %6674
    %v6677 = vsel %vm1942, %v6673, 0
    %v6679 = vsel %vm1959, %v6675, 0
    %6681 = vmatprep.subr.mxu0 0.0
    %6682 = vmatpush1.msra.mxu0 %v6679
    %6683 = vmatprep.subr.mxu0 0.0
    %6684 = vmatpush1.msra.mxu0 0.0
    %6685 = vmatprep.subr.mxu0 0.0
    %6686 = vmatpush1.msra.mxu0 0.0
    %6687 = vmatprep.subr.mxu0 0.0
    %6688 = vmatpush1.msra.mxu0 0.0
    %6689 = vmatprep.subr.mxu0 0.0
    %6690 = vmatpush1.msra.mxu0 0.0
    %6691 = vmatprep.subr.mxu0 0.0
    %6692 = vmatpush1.msra.mxu0 0.0
    %6693 = vmatprep.subr.mxu0 0.0
    %6694 = vmatpush1.msra.mxu0 0.0
    %6695 = vmatprep.subr.mxu0 0.0
    %6696 = vmatpush1.msra.mxu0 0.0
    %6697 = vmatprep.subr.mxu0 0.0
    %6698 = vmatpush1.msra.mxu0 0.0
    %6699 = vmatprep.subr.mxu0 0.0
    %6700 = vmatpush1.msra.mxu0 0.0
    %6701 = vmatprep.subr.mxu0 0.0
    %6702 = vmatpush1.msra.mxu0 0.0
    %6703 = vmatprep.subr.mxu0 0.0
    %6704 = vmatpush1.msra.mxu0 0.0
    %6705 = vmatprep.subr.mxu0 0.0
    %6706 = vmatpush1.msra.mxu0 0.0
    %6707 = vmatprep.subr.mxu0 0.0
    %6708 = vmatpush1.msra.mxu0 0.0
    %6709 = vmatprep.subr.mxu0 0.0
    %6710 = vmatpush1.msra.mxu0 0.0
    %6711 = vmatprep.subr.mxu0 0.0
    %6712 = vmatpush1.msra.mxu0 0.0
    %6713 = vmatprep.subr.mxu0 0.0
    %6714 = vmatpush1.msra.mxu0 0.0
    %6715 = vmatprep.subr.mxu0 0.0
    %6716 = vmatpush1.msra.mxu0 0.0
    %6717 = vmatprep.subr.mxu0 0.0
    %6718 = vmatpush1.msra.mxu0 0.0
    %6719 = vmatprep.subr.mxu0 0.0
    %6720 = vmatpush1.msra.mxu0 0.0
    %6721 = vmatprep.subr.mxu0 0.0
    %6722 = vmatpush1.msra.mxu0 0.0
    %6723 = vmatprep.subr.mxu0 0.0
    %6724 = vmatpush1.msra.mxu0 0.0
    %6725 = vmatprep.subr.mxu0 0.0
    %6726 = vmatpush1.msra.mxu0 0.0
    %6727 = vmatprep.subr.mxu0 0.0
    %6728 = vmatpush1.msra.mxu0 0.0
    %6729 = vmatprep.subr.mxu0 0.0
    %6730 = vmatpush1.msra.mxu0 0.0
    %6731 = vmatprep.subr.mxu0 0.0
    %6732 = vmatpush1.msra.mxu0 0.0
    %6733 = vmatprep.subr.mxu0 0.0
    %6734 = vmatpush1.msra.mxu0 0.0
    %6735 = vmatprep.subr.mxu0 0.0
    %6736 = vmatpush1.msra.mxu0 0.0
    %6737 = vmatprep.subr.mxu0 0.0
    %6738 = vmatpush1.msra.mxu0 0.0
    %6739 = vmatprep.subr.mxu0 0.0
    %6740 = vmatpush1.msra.mxu0 0.0
    %6741 = vmatprep.subr.mxu0 0.0
    %6742 = vmatpush1.msra.mxu0 0.0
    %6743 = vmatprep.subr.mxu0 0.0
    %6744 = vmatpush1.msra.mxu0 0.0
    %6745 = vmatprep.mubr.f32.mxu0 0.0
    %6746 = vmatmul.mubr.f32.gmra.mrb[0].mxu0 %v6677
    %v6747 = vpop.f32.mrb[0].mxu0
    %v6748 = vadd.f32 0.0, %v6747
    %v6749 = vpop.f32.mrb[0].mxu0
    %6750 = vdwg.mxu0
    %6752 = vrot.lane.b32.xlu0 %v6748, 16
    %v6753 = vpop.permute.xlu0 %6752
    %6755 = vst.msk [vmem:[#allocation2 + $0x8] sm:$0xff] %vm689, %v6753
    %6756 = vrot.lane.b32.xlu0 %v5389, 104
    %v6757 = vpop.permute.xlu0 %6756
    %6758 = vrot.lane.b32.xlu0 %v6243, 104
    %v6759 = vpop.permute.xlu0 %6758
    %v6760 = vsel %vm180, %v6757, 0
    %v6762 = vsel %vm180, %v6759, 0
    %6764 = vmatprep.subr.mxu0 0.0
    %6765 = vmatpush1.xpose.msra.mxu0 %v6762
    %6766 = vmatprep.subr.mxu0 0.0
    %6767 = vmatpush1.xpose.msra.mxu0 0.0
    %6768 = vmatprep.subr.mxu0 0.0
    %6769 = vmatpush1.xpose.msra.mxu0 0.0
    %6770 = vmatprep.subr.mxu0 0.0
    %6771 = vmatpush1.xpose.msra.mxu0 0.0
    %6772 = vmatprep.subr.mxu0 0.0
    %6773 = vmatpush1.xpose.msra.mxu0 0.0
    %6774 = vmatprep.subr.mxu0 0.0
    %6775 = vmatpush1.xpose.msra.mxu0 0.0
    %6776 = vmatprep.subr.mxu0 0.0
    %6777 = vmatpush1.xpose.msra.mxu0 0.0
    %6778 = vmatprep.subr.mxu0 0.0
    %6779 = vmatpush1.xpose.msra.mxu0 0.0
    %6780 = vmatprep.subr.mxu0 0.0
    %6781 = vmatpush1.xpose.msra.mxu0 0.0
    %6782 = vmatprep.subr.mxu0 0.0
    %6783 = vmatpush1.xpose.msra.mxu0 0.0
    %6784 = vmatprep.subr.mxu0 0.0
    %6785 = vmatpush1.xpose.msra.mxu0 0.0
    %6786 = vmatprep.subr.mxu0 0.0
    %6787 = vmatpush1.xpose.msra.mxu0 0.0
    %6788 = vmatprep.subr.mxu0 0.0
    %6789 = vmatpush1.xpose.msra.mxu0 0.0
    %6790 = vmatprep.subr.mxu0 0.0
    %6791 = vmatpush1.xpose.msra.mxu0 0.0
    %6792 = vmatprep.subr.mxu0 0.0
    %6793 = vmatpush1.xpose.msra.mxu0 0.0
    %6794 = vmatprep.subr.mxu0 0.0
    %6795 = vmatpush1.xpose.msra.mxu0 0.0
    %6796 = vmatprep.subr.mxu0 0.0
    %6797 = vmatpush1.xpose.msra.mxu0 0.0
    %6798 = vmatprep.subr.mxu0 0.0
    %6799 = vmatpush1.xpose.msra.mxu0 0.0
    %6800 = vmatprep.subr.mxu0 0.0
    %6801 = vmatpush1.xpose.msra.mxu0 0.0
    %6802 = vmatprep.subr.mxu0 0.0
    %6803 = vmatpush1.xpose.msra.mxu0 0.0
    %6804 = vmatprep.subr.mxu0 0.0
    %6805 = vmatpush1.xpose.msra.mxu0 0.0
    %6806 = vmatprep.subr.mxu0 0.0
    %6807 = vmatpush1.xpose.msra.mxu0 0.0
    %6808 = vmatprep.subr.mxu0 0.0
    %6809 = vmatpush1.xpose.msra.mxu0 0.0
    %6810 = vmatprep.subr.mxu0 0.0
    %6811 = vmatpush1.xpose.msra.mxu0 0.0
    %6812 = vmatprep.subr.mxu0 0.0
    %6813 = vmatpush1.xpose.msra.mxu0 0.0
    %6814 = vmatprep.subr.mxu0 0.0
    %6815 = vmatpush1.xpose.msra.mxu0 0.0
    %6816 = vmatprep.subr.mxu0 0.0
    %6817 = vmatpush1.xpose.msra.mxu0 0.0
    %6818 = vmatprep.subr.mxu0 0.0
    %6819 = vmatpush1.xpose.msra.mxu0 0.0
    %6820 = vmatprep.subr.mxu0 0.0
    %6821 = vmatpush1.xpose.msra.mxu0 0.0
    %6822 = vmatprep.subr.mxu0 0.0
    %6823 = vmatpush1.xpose.msra.mxu0 0.0
    %6824 = vmatprep.subr.mxu0 0.0
    %6825 = vmatpush1.xpose.msra.mxu0 0.0
    %6826 = vmatprep.subr.mxu0 0.0
    %6827 = vmatpush1.xpose.msra.mxu0 0.0
    %6828 = vmatprep.mubr.f32.mxu0 0.0
    %6829 = vmatmul.mubr.f32.gmra.mrb[0].mxu0 %v6760
    %v6830 = vpop.f32.mrb[0].mxu0
    %v6831 = vadd.f32 0.0, %v6830
    %v6832 = vpop.f32.mrb[0].mxu0
    %6833 = vdwg.mxu0
    %v6834 = vmul.f32 %v6831, 0.35355338
    %v6835 = vsel %vm1942, %v6834, -inf
    %6836 = vmax.xlane.f32.xlu0 %v6835
    %v6837 = vpop.xlane.xlu0 %6836
    %v6838 = vsub.f32 %v6834, %v6837
    %v6839 = vmul.f32 %v6838, 1.442695
    %v6840 = vpow.pop %v6839
    %v6841 = vsel %vm1942, %v6840, 0.0
    %6842 = vadd.xlane.f32.xlu0 %v6841
    %v6843 = vpop.xlane.xlu0 %6842
    %v6844 = vrcp.pop %v6843
    %v6845 = vmul.f32 %v6840, %v6844
    %6846 = vrot.lane.b32.xlu0 %v6243, 72
    %v6847 = vpop.permute.xlu0 %6846
    %v6849 = vsel %vm1942, %v6845, 0
    %v6851 = vsel %vm1959, %v6847, 0
    %6853 = vmatprep.subr.mxu0 0.0
    %6854 = vmatpush1.msra.mxu0 %v6851
    %6855 = vmatprep.subr.mxu0 0.0
    %6856 = vmatpush1.msra.mxu0 0.0
    %6857 = vmatprep.subr.mxu0 0.0
    %6858 = vmatpush1.msra.mxu0 0.0
    %6859 = vmatprep.subr.mxu0 0.0
    %6860 = vmatpush1.msra.mxu0 0.0
    %6861 = vmatprep.subr.mxu0 0.0
    %6862 = vmatpush1.msra.mxu0 0.0
    %6863 = vmatprep.subr.mxu0 0.0
    %6864 = vmatpush1.msra.mxu0 0.0
    %6865 = vmatprep.subr.mxu0 0.0
    %6866 = vmatpush1.msra.mxu0 0.0
    %6867 = vmatprep.subr.mxu0 0.0
    %6868 = vmatpush1.msra.mxu0 0.0
    %6869 = vmatprep.subr.mxu0 0.0
    %6870 = vmatpush1.msra.mxu0 0.0
    %6871 = vmatprep.subr.mxu0 0.0
    %6872 = vmatpush1.msra.mxu0 0.0
    %6873 = vmatprep.subr.mxu0 0.0
    %6874 = vmatpush1.msra.mxu0 0.0
    %6875 = vmatprep.subr.mxu0 0.0
    %6876 = vmatpush1.msra.mxu0 0.0
    %6877 = vmatprep.subr.mxu0 0.0
    %6878 = vmatpush1.msra.mxu0 0.0
    %6879 = vmatprep.subr.mxu0 0.0
    %6880 = vmatpush1.msra.mxu0 0.0
    %6881 = vmatprep.subr.mxu0 0.0
    %6882 = vmatpush1.msra.mxu0 0.0
    %6883 = vmatprep.subr.mxu0 0.0
    %6884 = vmatpush1.msra.mxu0 0.0
    %6885 = vmatprep.subr.mxu0 0.0
    %6886 = vmatpush1.msra.mxu0 0.0
    %6887 = vmatprep.subr.mxu0 0.0
    %6888 = vmatpush1.msra.mxu0 0.0
    %6889 = vmatprep.subr.mxu0 0.0
    %6890 = vmatpush1.msra.mxu0 0.0
    %6891 = vmatprep.subr.mxu0 0.0
    %6892 = vmatpush1.msra.mxu0 0.0
    %6893 = vmatprep.subr.mxu0 0.0
    %6894 = vmatpush1.msra.mxu0 0.0
    %6895 = vmatprep.subr.mxu0 0.0
    %6896 = vmatpush1.msra.mxu0 0.0
    %6897 = vmatprep.subr.mxu0 0.0
    %6898 = vmatpush1.msra.mxu0 0.0
    %6899 = vmatprep.subr.mxu0 0.0
    %6900 = vmatpush1.msra.mxu0 0.0
    %6901 = vmatprep.subr.mxu0 0.0
    %6902 = vmatpush1.msra.mxu0 0.0
    %6903 = vmatprep.subr.mxu0 0.0
    %6904 = vmatpush1.msra.mxu0 0.0
    %6905 = vmatprep.subr.mxu0 0.0
    %6906 = vmatpush1.msra.mxu0 0.0
    %6907 = vmatprep.subr.mxu0 0.0
    %6908 = vmatpush1.msra.mxu0 0.0
    %6909 = vmatprep.subr.mxu0 0.0
    %6910 = vmatpush1.msra.mxu0 0.0
    %6911 = vmatprep.subr.mxu0 0.0
    %6912 = vmatpush1.msra.mxu0 0.0
    %6913 = vmatprep.subr.mxu0 0.0
    %6914 = vmatpush1.msra.mxu0 0.0
    %6915 = vmatprep.subr.mxu0 0.0
    %6916 = vmatpush1.msra.mxu0 0.0
    %6917 = vmatprep.mubr.f32.mxu0 0.0
    %6918 = vmatmul.mubr.f32.gmra.mrb[0].mxu0 %v6849
    %v6919 = vpop.f32.mrb[0].mxu0
    %v6920 = vadd.f32 0.0, %v6919
    %v6921 = vpop.f32.mrb[0].mxu0
    %6922 = vdwg.mxu0
    %6924 = vrot.lane.b32.xlu0 %v6920, 24
    %v6925 = vpop.permute.xlu0 %6924
    %6927 = vst.msk [vmem:[#allocation2 + $0x8] sm:$0xff] %vm862, %v6925
    %v6928 = vld [vmem:[#allocation2] sm:$0xff]
    %v6929 = vld [vmem:[#allocation2 + $0x8] sm:$0xff]
    %s6930 = scalar_lea.vmem %s11, 32
    %v6931 = vld [vmem:[%s6930] sm:$0xff]
    %v6932 = vld [vmem:[%s6930 + $0x8] sm:$0xff]
    %v6933 = vld [vmem:[%s6930 + $0x10] sm:$0xff]
    %v6934 = vld [vmem:[%s6930 + $0x18] sm:$0xff]
    %s6935 = scalar_lea.vmem %s12, 1
    %v6936 = vld [vmem:[%s6935] sm:$0x1]
    %v6938 = vlaneseq
    %v6939 = vshrl.u32 %v6938, 7
    %v6940 = vsub.s32 0, %v6939
    %v6941 = vrot.slane %v6936, %v6940
    %v6944 = vsel %vm95, %v6928, 0
    %v6947 = vsel %vm95, %v6929, 0
    %6949 = vmatprep.subr.mxu0 0.0
    %6950 = vmatpush1.msra.mxu0 %v6931
    %6951 = vmatprep.subr.mxu0 0.0
    %6952 = vmatpush1.msra.mxu0 %v6932
    %6953 = vmatprep.subr.mxu0 0.0
    %6954 = vmatpush1.msra.mxu0 %v6933
    %6955 = vmatprep.subr.mxu0 0.0
    %6956 = vmatpush1.msra.mxu0 %v6934
    %6957 = vmatprep.subr.mxu0 0.0
    %6958 = vmatpush1.msra.mxu0 0.0
    %6959 = vmatprep.subr.mxu0 0.0
    %6960 = vmatpush1.msra.mxu0 0.0
    %6961 = vmatprep.subr.mxu0 0.0
    %6962 = vmatpush1.msra.mxu0 0.0
    %6963 = vmatprep.subr.mxu0 0.0
    %6964 = vmatpush1.msra.mxu0 0.0
    %6965 = vmatprep.subr.mxu0 0.0
    %6966 = vmatpush1.msra.mxu0 0.0
    %6967 = vmatprep.subr.mxu0 0.0
    %6968 = vmatpush1.msra.mxu0 0.0
    %6969 = vmatprep.subr.mxu0 0.0
    %6970 = vmatpush1.msra.mxu0 0.0
    %6971 = vmatprep.subr.mxu0 0.0
    %6972 = vmatpush1.msra.mxu0 0.0
    %6973 = vmatprep.subr.mxu0 0.0
    %6974 = vmatpush1.msra.mxu0 0.0
    %6975 = vmatprep.subr.mxu0 0.0
    %6976 = vmatpush1.msra.mxu0 0.0
    %6977 = vmatprep.subr.mxu0 0.0
    %6978 = vmatpush1.msra.mxu0 0.0
    %6979 = vmatprep.subr.mxu0 0.0
    %6980 = vmatpush1.msra.mxu0 0.0
    %6981 = vmatprep.subr.mxu0 0.0
    %6982 = vmatpush1.msra.mxu0 0.0
    %6983 = vmatprep.subr.mxu0 0.0
    %6984 = vmatpush1.msra.mxu0 0.0
    %6985 = vmatprep.subr.mxu0 0.0
    %6986 = vmatpush1.msra.mxu0 0.0
    %6987 = vmatprep.subr.mxu0 0.0
    %6988 = vmatpush1.msra.mxu0 0.0
    %6989 = vmatprep.subr.mxu0 0.0
    %6990 = vmatpush1.msra.mxu0 0.0
    %6991 = vmatprep.subr.mxu0 0.0
    %6992 = vmatpush1.msra.mxu0 0.0
    %6993 = vmatprep.subr.mxu0 0.0
    %6994 = vmatpush1.msra.mxu0 0.0
    %6995 = vmatprep.subr.mxu0 0.0
    %6996 = vmatpush1.msra.mxu0 0.0
    %6997 = vmatprep.subr.mxu0 0.0
    %6998 = vmatpush1.msra.mxu0 0.0
    %6999 = vmatprep.subr.mxu0 0.0
    %7000 = vmatpush1.msra.mxu0 0.0
    %7001 = vmatprep.subr.mxu0 0.0
    %7002 = vmatpush1.msra.mxu0 0.0
    %7003 = vmatprep.subr.mxu0 0.0
    %7004 = vmatpush1.msra.mxu0 0.0
    %7005 = vmatprep.subr.mxu0 0.0
    %7006 = vmatpush1.msra.mxu0 0.0
    %7007 = vmatprep.subr.mxu0 0.0
    %7008 = vmatpush1.msra.mxu0 0.0
    %7009 = vmatprep.subr.mxu0 0.0
    %7010 = vmatpush1.msra.mxu0 0.0
    %7011 = vmatprep.subr.mxu0 0.0
    %7012 = vmatpush1.msra.mxu0 0.0
    %7013 = vmatprep.mubr.f32.mxu0 0.0
    %7014 = vmatmul.mubr.f32.gmra.mrb[0].mxu0 %v6944
    %v7015 = vpop.f32.mrb[0].mxu0
    %v7016 = vadd.f32 %v6941, %v7015
    %v7017 = vpop.f32.mrb[0].mxu0
    %7018 = vmatprep.mubr.f32.mxu0 0.0
    %7019 = vmatmul.mubr.f32.gmra.mrb[0].mxu0 %v6947
    %v7020 = vpop.f32.mrb[0].mxu0
    %v7021 = vadd.f32 %v6941, %v7020
    %v7022 = vpop.f32.mrb[0].mxu0
    %7023 = vdwg.mxu0
    %v7024 = vadd.f32 %v5296, %v7016
    %v7025 = vadd.f32 %v5297, %v7021
    %s7026 = scalar_lea.vmem %s15, 1
    %v7027 = vld [vmem:[%s7026] sm:$0x1]
    %s7028 = scalar_lea.vmem %s16, 1
    %v7029 = vld [vmem:[%s7028] sm:$0x1]
    %v7030 = vsel %vm95, %v7024, 0.0
    %7031 = vadd.xlane.f32.xlu0 %v7030
    %v7032 = vpop.xlane.xlu0 %7031
    %v7033 = vsel %vm95, %v7025, 0.0
    %7034 = vadd.xlane.f32.xlu0 %v7033
    %v7035 = vpop.xlane.xlu0 %7034
    %v7036 = vmul.f32 %v7032, %v1651
    %v7037 = vmul.f32 %v7035, %v1651
    %v7038 = vsub.f32 %v7024, %v7036
    %v7039 = vsub.f32 %v7025, %v7037
    %v7040 = vmul.f32 %v7038, %v7038
    %v7041 = vmul.f32 %v7039, %v7039
    %v7042 = vsel %vm95, %v7040, 0.0
    %7043 = vadd.xlane.f32.xlu0 %v7042
    %v7044 = vpop.xlane.xlu0 %7043
    %v7045 = vsel %vm95, %v7041, 0.0
    %7046 = vadd.xlane.f32.xlu0 %v7045
    %v7047 = vpop.xlane.xlu0 %7046
    %v7048 = vmul.f32 %v7044, %v1651
    %v7049 = vmul.f32 %v7047, %v1651
    %v7050 = vadd.f32 %v7048, 1e-05
    %v7051 = vadd.f32 %v7049, 1e-05
    %v7052 = vrsqrt.pop %v7050
    %v7053 = vrsqrt.pop %v7051
    %v7054 = vmul.f32 %v7038, %v7052
    %v7055 = vmul.f32 %v7039, %v7053
    %v7057 = vlaneseq
    %v7058 = vshrl.u32 %v7057, 7
    %v7059 = vsub.s32 0, %v7058
    %v7060 = vrot.slane %v7027, %v7059
    %v7062 = vmul.f32 %v7054, %v7060
    %v7063 = vmul.f32 %v7055, %v7060
    %v7065 = vlaneseq
    %v7066 = vshrl.u32 %v7065, 7
    %v7067 = vsub.s32 0, %v7066
    %v7068 = vrot.slane %v7029, %v7067
    %v7070 = vadd.f32 %v7062, %v7068
    %v7071 = vadd.f32 %v7063, %v7068
    %s7072 = scalar_lea.vmem %s19, 32
    %v7073 = vld [vmem:[%s7072] sm:$0xff]
    %v7074 = vld [vmem:[%s7072 + $0x8] sm:$0xff]
    %v7075 = vld [vmem:[%s7072 + $0x10] sm:$0xff]
    %v7076 = vld [vmem:[%s7072 + $0x18] sm:$0xff]
    %s7077 = scalar_lea.vmem %s20, 1
    %v7078 = vld [vmem:[%s7077] sm:$0x1]
    %v7080 = vlaneseq
    %v7081 = vshrl.u32 %v7080, 7
    %v7082 = vsub.s32 0, %v7081
    %v7083 = vrot.slane %v7078, %v7082
    %v7086 = vsel %vm95, %v7070, 0
    %v7089 = vsel %vm95, %v7071, 0
    %7091 = vmatprep.subr.mxu0 0.0
    %7092 = vmatpush1.msra.mxu0 %v7073
    %7093 = vmatprep.subr.mxu0 0.0
    %7094 = vmatpush1.msra.mxu0 %v7074
    %7095 = vmatprep.subr.mxu0 0.0
    %7096 = vmatpush1.msra.mxu0 %v7075
    %7097 = vmatprep.subr.mxu0 0.0
    %7098 = vmatpush1.msra.mxu0 %v7076
    %7099 = vmatprep.subr.mxu0 0.0
    %7100 = vmatpush1.msra.mxu0 0.0
    %7101 = vmatprep.subr.mxu0 0.0
    %7102 = vmatpush1.msra.mxu0 0.0
    %7103 = vmatprep.subr.mxu0 0.0
    %7104 = vmatpush1.msra.mxu0 0.0
    %7105 = vmatprep.subr.mxu0 0.0
    %7106 = vmatpush1.msra.mxu0 0.0
    %7107 = vmatprep.subr.mxu0 0.0
    %7108 = vmatpush1.msra.mxu0 0.0
    %7109 = vmatprep.subr.mxu0 0.0
    %7110 = vmatpush1.msra.mxu0 0.0
    %7111 = vmatprep.subr.mxu0 0.0
    %7112 = vmatpush1.msra.mxu0 0.0
    %7113 = vmatprep.subr.mxu0 0.0
    %7114 = vmatpush1.msra.mxu0 0.0
    %7115 = vmatprep.subr.mxu0 0.0
    %7116 = vmatpush1.msra.mxu0 0.0
    %7117 = vmatprep.subr.mxu0 0.0
    %7118 = vmatpush1.msra.mxu0 0.0
    %7119 = vmatprep.subr.mxu0 0.0
    %7120 = vmatpush1.msra.mxu0 0.0
    %7121 = vmatprep.subr.mxu0 0.0
    %7122 = vmatpush1.msra.mxu0 0.0
    %7123 = vmatprep.subr.mxu0 0.0
    %7124 = vmatpush1.msra.mxu0 0.0
    %7125 = vmatprep.subr.mxu0 0.0
    %7126 = vmatpush1.msra.mxu0 0.0
    %7127 = vmatprep.subr.mxu0 0.0
    %7128 = vmatpush1.msra.mxu0 0.0
    %7129 = vmatprep.subr.mxu0 0.0
    %7130 = vmatpush1.msra.mxu0 0.0
    %7131 = vmatprep.subr.mxu0 0.0
    %7132 = vmatpush1.msra.mxu0 0.0
    %7133 = vmatprep.subr.mxu0 0.0
    %7134 = vmatpush1.msra.mxu0 0.0
    %7135 = vmatprep.subr.mxu0 0.0
    %7136 = vmatpush1.msra.mxu0 0.0
    %7137 = vmatprep.subr.mxu0 0.0
    %7138 = vmatpush1.msra.mxu0 0.0
    %7139 = vmatprep.subr.mxu0 0.0
    %7140 = vmatpush1.msra.mxu0 0.0
    %7141 = vmatprep.subr.mxu0 0.0
    %7142 = vmatpush1.msra.mxu0 0.0
    %7143 = vmatprep.subr.mxu0 0.0
    %7144 = vmatpush1.msra.mxu0 0.0
    %7145 = vmatprep.subr.mxu0 0.0
    %7146 = vmatpush1.msra.mxu0 0.0
    %7147 = vmatprep.subr.mxu0 0.0
    %7148 = vmatpush1.msra.mxu0 0.0
    %7149 = vmatprep.subr.mxu0 0.0
    %7150 = vmatpush1.msra.mxu0 0.0
    %7151 = vmatprep.subr.mxu0 0.0
    %7152 = vmatpush1.msra.mxu0 0.0
    %7153 = vmatprep.subr.mxu0 0.0
    %7154 = vmatpush1.msra.mxu0 0.0
    %7155 = vmatprep.mubr.f32.mxu0 0.0
    %7156 = vmatmul.mubr.f32.gmra.mrb[0].mxu0 %v7086
    %v7157 = vpop.f32.mrb[0].mxu0
    %v7158 = vadd.f32 %v7083, %v7157
    %v7159 = vpop.f32.mrb[0].mxu0
    %7160 = vmatprep.mubr.f32.mxu0 0.0
    %7161 = vmatmul.mubr.f32.gmra.mrb[0].mxu0 %v7089
    %v7162 = vpop.f32.mrb[0].mxu0
    %v7163 = vadd.f32 %v7083, %v7162
    %v7164 = vpop.f32.mrb[0].mxu0
    %7165 = vdwg.mxu0
    %v7166 = vmax.f32 %v7158, 0.0
    %v7167 = vmax.f32 %v7163, 0.0
    %s7168 = scalar_lea.vmem %s21, 64
    %v7169 = vld [vmem:[%s7168] sm:$0xff]
    %v7170 = vld [vmem:[%s7168 + $0x8] sm:$0xff]
    %v7171 = vld [vmem:[%s7168 + $0x10] sm:$0xff]
    %v7172 = vld [vmem:[%s7168 + $0x18] sm:$0xff]
    %v7173 = vld [vmem:[%s7168 + $0x20] sm:$0xff]
    %v7174 = vld [vmem:[%s7168 + $0x28] sm:$0xff]
    %v7175 = vld [vmem:[%s7168 + $0x30] sm:$0xff]
    %v7176 = vld [vmem:[%s7168 + $0x38] sm:$0xff]
    %s7177 = scalar_lea.vmem %s22, 1
    %v7178 = vld [vmem:[%s7177] sm:$0x1]
    %v7180 = vlaneseq
    %v7181 = vshrl.u32 %v7180, 7
    %v7182 = vsub.s32 0, %v7181
    %v7183 = vrot.slane %v7178, %v7182
    %v7186 = vsel %vm3566, %v7166, 0
    %v7189 = vsel %vm3566, %v7167, 0
    %7191 = vmatprep.subr.mxu0 0.0
    %7192 = vmatpush1.msra.mxu0 %v7169
    %7193 = vmatprep.subr.mxu0 0.0
    %7194 = vmatpush1.msra.mxu0 %v7170
    %7195 = vmatprep.subr.mxu0 0.0
    %7196 = vmatpush1.msra.mxu0 %v7171
    %7197 = vmatprep.subr.mxu0 0.0
    %7198 = vmatpush1.msra.mxu0 %v7172
    %7199 = vmatprep.subr.mxu0 0.0
    %7200 = vmatpush1.msra.mxu0 %v7173
    %7201 = vmatprep.subr.mxu0 0.0
    %7202 = vmatpush1.msra.mxu0 %v7174
    %7203 = vmatprep.subr.mxu0 0.0
    %7204 = vmatpush1.msra.mxu0 %v7175
    %7205 = vmatprep.subr.mxu0 0.0
    %7206 = vmatpush1.msra.mxu0 %v7176
    %7207 = vmatprep.subr.mxu0 0.0
    %7208 = vmatpush1.msra.mxu0 0.0
    %7209 = vmatprep.subr.mxu0 0.0
    %7210 = vmatpush1.msra.mxu0 0.0
    %7211 = vmatprep.subr.mxu0 0.0
    %7212 = vmatpush1.msra.mxu0 0.0
    %7213 = vmatprep.subr.mxu0 0.0
    %7214 = vmatpush1.msra.mxu0 0.0
    %7215 = vmatprep.subr.mxu0 0.0
    %7216 = vmatpush1.msra.mxu0 0.0
    %7217 = vmatprep.subr.mxu0 0.0
    %7218 = vmatpush1.msra.mxu0 0.0
    %7219 = vmatprep.subr.mxu0 0.0
    %7220 = vmatpush1.msra.mxu0 0.0
    %7221 = vmatprep.subr.mxu0 0.0
    %7222 = vmatpush1.msra.mxu0 0.0
    %7223 = vmatprep.subr.mxu0 0.0
    %7224 = vmatpush1.msra.mxu0 0.0
    %7225 = vmatprep.subr.mxu0 0.0
    %7226 = vmatpush1.msra.mxu0 0.0
    %7227 = vmatprep.subr.mxu0 0.0
    %7228 = vmatpush1.msra.mxu0 0.0
    %7229 = vmatprep.subr.mxu0 0.0
    %7230 = vmatpush1.msra.mxu0 0.0
    %7231 = vmatprep.subr.mxu0 0.0
    %7232 = vmatpush1.msra.mxu0 0.0
    %7233 = vmatprep.subr.mxu0 0.0
    %7234 = vmatpush1.msra.mxu0 0.0
    %7235 = vmatprep.subr.mxu0 0.0
    %7236 = vmatpush1.msra.mxu0 0.0
    %7237 = vmatprep.subr.mxu0 0.0
    %7238 = vmatpush1.msra.mxu0 0.0
    %7239 = vmatprep.subr.mxu0 0.0
    %7240 = vmatpush1.msra.mxu0 0.0
    %7241 = vmatprep.subr.mxu0 0.0
    %7242 = vmatpush1.msra.mxu0 0.0
    %7243 = vmatprep.subr.mxu0 0.0
    %7244 = vmatpush1.msra.mxu0 0.0
    %7245 = vmatprep.subr.mxu0 0.0
    %7246 = vmatpush1.msra.mxu0 0.0
    %7247 = vmatprep.subr.mxu0 0.0
    %7248 = vmatpush1.msra.mxu0 0.0
    %7249 = vmatprep.subr.mxu0 0.0
    %7250 = vmatpush1.msra.mxu0 0.0
    %7251 = vmatprep.subr.mxu0 0.0
    %7252 = vmatpush1.msra.mxu0 0.0
    %7253 = vmatprep.subr.mxu0 0.0
    %7254 = vmatpush1.msra.mxu0 0.0
    %7255 = vmatprep.mubr.f32.mxu0 0.0
    %7256 = vmatmul.mubr.f32.gmra.mrb[0].mxu0 %v7186
    %v7257 = vpop.f32.mrb[0].mxu0
    %v7258 = vadd.f32 %v7183, %v7257
    %v7259 = vpop.f32.mrb[0].mxu0
    %7260 = vmatprep.mubr.f32.mxu0 0.0
    %7261 = vmatmul.mubr.f32.gmra.mrb[0].mxu0 %v7189
    %v7262 = vpop.f32.mrb[0].mxu0
    %v7263 = vadd.f32 %v7183, %v7262
    %v7264 = vpop.f32.mrb[0].mxu0
    %7265 = vdwg.mxu0
    %v7266 = vadd.f32 %v7070, %v7258
    %v7267 = vadd.f32 %v7071, %v7263
    %s7268 = scalar_lea.vmem %s17, 1
    %v7269 = vld [vmem:[%s7268] sm:$0x1]
    %s7270 = scalar_lea.vmem %s18, 1
    %v7271 = vld [vmem:[%s7270] sm:$0x1]
    %v7272 = vsel %vm95, %v7266, 0.0
    %7273 = vadd.xlane.f32.xlu0 %v7272
    %v7274 = vpop.xlane.xlu0 %7273
    %v7275 = vsel %vm95, %v7267, 0.0
    %7276 = vadd.xlane.f32.xlu0 %v7275
    %v7277 = vpop.xlane.xlu0 %7276
    %v7278 = vmul.f32 %v7274, %v1651
    %v7279 = vmul.f32 %v7277, %v1651
    %v7280 = vsub.f32 %v7266, %v7278
    %v7281 = vsub.f32 %v7267, %v7279
    %v7282 = vmul.f32 %v7280, %v7280
    %v7283 = vmul.f32 %v7281, %v7281
    %v7284 = vsel %vm95, %v7282, 0.0
    %7285 = vadd.xlane.f32.xlu0 %v7284
    %v7286 = vpop.xlane.xlu0 %7285
    %v7287 = vsel %vm95, %v7283, 0.0
    %7288 = vadd.xlane.f32.xlu0 %v7287
    %v7289 = vpop.xlane.xlu0 %7288
    %v7290 = vmul.f32 %v7286, %v1651
    %v7291 = vmul.f32 %v7289, %v1651
    %v7292 = vadd.f32 %v7290, 1e-05
    %v7293 = vadd.f32 %v7291, 1e-05
    %v7294 = vrsqrt.pop %v7292
    %v7295 = vrsqrt.pop %v7293
    %v7296 = vmul.f32 %v7280, %v7294
    %v7297 = vmul.f32 %v7281, %v7295
    %v7299 = vlaneseq
    %v7300 = vshrl.u32 %v7299, 7
    %v7301 = vsub.s32 0, %v7300
    %v7302 = vrot.slane %v7269, %v7301
    %v7304 = vmul.f32 %v7296, %v7302
    %v7305 = vmul.f32 %v7297, %v7302
    %v7307 = vlaneseq
    %v7308 = vshrl.u32 %v7307, 7
    %v7309 = vsub.s32 0, %v7308
    %v7310 = vrot.slane %v7271, %v7309
    %v7312 = vadd.f32 %v7304, %v7310
    %v7313 = vadd.f32 %v7305, %v7310
    %v7314 = vld [vmem:[%s23] sm:$0xff]
    %v7315 = vld [vmem:[%s23 + $0x8] sm:$0xff]
    %v7316 = vld [vmem:[%s23 + $0x10] sm:$0xff]
    %v7317 = vld [vmem:[%s23 + $0x18] sm:$0xff]
    %v7318 = vld [vmem:[%s24] sm:$0x1]
    %v7320 = vlaneseq
    %v7321 = vshrl.u32 %v7320, 7
    %v7322 = vsub.s32 0, %v7321
    %v7323 = vrot.slane %v7318, %v7322
    %v7326 = vsel %vm95, %v7312, 0
    %v7329 = vsel %vm95, %v7313, 0
    %7331 = vmatprep.subr.mxu0 0.0
    %7332 = vmatpush1.msra.mxu0 %v7314
    %7333 = vmatprep.subr.mxu0 0.0
    %7334 = vmatpush1.msra.mxu0 %v7315
    %7335 = vmatprep.subr.mxu0 0.0
    %7336 = vmatpush1.msra.mxu0 %v7316
    %7337 = vmatprep.subr.mxu0 0.0
    %7338 = vmatpush1.msra.mxu0 %v7317
    %7339 = vmatprep.subr.mxu0 0.0
    %7340 = vmatpush1.msra.mxu0 0.0
    %7341 = vmatprep.subr.mxu0 0.0
    %7342 = vmatpush1.msra.mxu0 0.0
    %7343 = vmatprep.subr.mxu0 0.0
    %7344 = vmatpush1.msra.mxu0 0.0
    %7345 = vmatprep.subr.mxu0 0.0
    %7346 = vmatpush1.msra.mxu0 0.0
    %7347 = vmatprep.subr.mxu0 0.0
    %7348 = vmatpush1.msra.mxu0 0.0
    %7349 = vmatprep.subr.mxu0 0.0
    %7350 = vmatpush1.msra.mxu0 0.0
    %7351 = vmatprep.subr.mxu0 0.0
    %7352 = vmatpush1.msra.mxu0 0.0
    %7353 = vmatprep.subr.mxu0 0.0
    %7354 = vmatpush1.msra.mxu0 0.0
    %7355 = vmatprep.subr.mxu0 0.0
    %7356 = vmatpush1.msra.mxu0 0.0
    %7357 = vmatprep.subr.mxu0 0.0
    %7358 = vmatpush1.msra.mxu0 0.0
    %7359 = vmatprep.subr.mxu0 0.0
    %7360 = vmatpush1.msra.mxu0 0.0
    %7361 = vmatprep.subr.mxu0 0.0
    %7362 = vmatpush1.msra.mxu0 0.0
    %7363 = vmatprep.subr.mxu0 0.0
    %7364 = vmatpush1.msra.mxu0 0.0
    %7365 = vmatprep.subr.mxu0 0.0
    %7366 = vmatpush1.msra.mxu0 0.0
    %7367 = vmatprep.subr.mxu0 0.0
    %7368 = vmatpush1.msra.mxu0 0.0
    %7369 = vmatprep.subr.mxu0 0.0
    %7370 = vmatpush1.msra.mxu0 0.0
    %7371 = vmatprep.subr.mxu0 0.0
    %7372 = vmatpush1.msra.mxu0 0.0
    %7373 = vmatprep.subr.mxu0 0.0
    %7374 = vmatpush1.msra.mxu0 0.0
    %7375 = vmatprep.subr.mxu0 0.0
    %7376 = vmatpush1.msra.mxu0 0.0
    %7377 = vmatprep.subr.mxu0 0.0
    %7378 = vmatpush1.msra.mxu0 0.0
    %7379 = vmatprep.subr.mxu0 0.0
    %7380 = vmatpush1.msra.mxu0 0.0
    %7381 = vmatprep.subr.mxu0 0.0
    %7382 = vmatpush1.msra.mxu0 0.0
    %7383 = vmatprep.subr.mxu0 0.0
    %7384 = vmatpush1.msra.mxu0 0.0
    %7385 = vmatprep.subr.mxu0 0.0
    %7386 = vmatpush1.msra.mxu0 0.0
    %7387 = vmatprep.subr.mxu0 0.0
    %7388 = vmatpush1.msra.mxu0 0.0
    %7389 = vmatprep.subr.mxu0 0.0
    %7390 = vmatpush1.msra.mxu0 0.0
    %7391 = vmatprep.subr.mxu0 0.0
    %7392 = vmatpush1.msra.mxu0 0.0
    %7393 = vmatprep.subr.mxu0 0.0
    %7394 = vmatpush1.msra.mxu0 0.0
    %7395 = vmatprep.mubr.f32.mxu0 0.0
    %7396 = vmatmul.mubr.f32.gmra.mrb[0].mxu0 %v7326
    %v7397 = vpop.f32.mrb[0].mxu0
    %v7398 = vadd.f32 %v7323, %v7397
    %v7399 = vpop.f32.mrb[0].mxu0
    %7400 = vmatprep.mubr.f32.mxu0 0.0
    %7401 = vmatmul.mubr.f32.gmra.mrb[0].mxu0 %v7329
    %v7402 = vpop.f32.mrb[0].mxu0
    %v7403 = vadd.f32 %v7323, %v7402
    %v7404 = vpop.f32.mrb[0].mxu0
    %7405 = vdwg.mxu0
    %7406 = vst.msk [vmem:[#allocation3] sm:$0xff] %vm3566, %v7398
    %7407 = vst.msk [vmem:[#allocation3 + $0x8] sm:$0xff] %vm3566, %v7403
    // Predicated region
    $region102: #{image_to_html_forward.3} parent=1 // pred_check
      _
    $region103: #{image_to_html_forward.3} parent=1 // pred_check_branch
      %7409 = sbr.rel (0) target = $region105
    $region104: #{image_to_html_forward.3} parent=1 // pred_region
      %s7411 = ssub.s32 256, 256
      %7412 = vsyncadd [#allocation4], %s7411
      %s7413 = sshll.u32 [#allocation3], 4
      %s7414 = int_to_ptr.vmem [resolvable:$true] %s7413
      %7419 = dma.vmem_to_hbm [thread:$0]  %s7414, 256, %s25, [#allocation4], 128, 128, 8
    $region105: #{image_to_html_forward.3} parent=1 // pred_fallthru
      _
    // Predicated region
    $region106: #{image_to_html_forward.3} parent=1 // pred_check
      _
    $region107: #{image_to_html_forward.3} parent=1 // pred_check_branch
      %7421 = sbr.rel (0) target = $region109
    $region108: #{image_to_html_forward.3} parent=1 // pred_region
      %7422 = dma.done [#allocation4], 256
    $region109: #{image_to_html_forward.3} parent=1 // pred_fallthru
      _
    %7423 = vsyncpa [#allocation4], 1

</llo_original>
